<compile_context>
chip_gen: v6e
topology: v6e:2x2x1
jax: 0.10.0
libtpu: 0.0.40
codegen_flags: <defaults>
</compile_context>

<pallas_src>
import functools

import jax
import jax.numpy as jnp
from jax import lax
from jax.experimental import pallas as pl
from jax.experimental.pallas import tpu as pltpu

LEAKY_SLOPE = 0.01   # nn.LeakyReLU default
BN_EPS = 1e-5        # nn.BatchNorm1d default
LANE = 128


def _rup(x, m):
    return (x + m - 1) // m * m


def _row_tile(m, cap=256):
    """Largest row-tile <= cap dividing m with tile % 8 == 0 (or tile == m)."""
    cap = min(cap, m)
    for t in range(cap, 0, -1):
        if m % t == 0 and (t % 8 == 0 or t == m):
            return t
    return m


def _conv_geom(D, H, W, ksize, stride, pad):
    kd, kh, kw = ksize
    sd, sh, sw = stride
    pd, ph, pw = pad
    OD = (D + 2 * pd - kd) // sd + 1
    OH = (H + 2 * ph - kh) // sh + 1
    OW = (W + 2 * pw - kw) // sw + 1
    Wp = W + 2 * pw
    return OD, OH, OW, Wp, sh * Wp


# ---------------------------------------------------------------------------
# Conv kernel: grid = (N, OD, kd).  kh*kw taps unrolled in-kernel, each a
# contiguous chunk of the flattened padded (H, W) plane -> one big MXU GEMM.
# Output is a "W-frame": row (h * row_stride + v) holds the W-dense output at
# base column v; valid outputs live at v = w*sw, w in [0, OW).
# Fuses LeakyReLU and masked per-channel BN sum/sumsq partials.
# ---------------------------------------------------------------------------
def _conv_plane_kernel(x_ref, w_ref, *rest, kh, kw, wp, row_stride, ow,
                       leaky, want_stats):
    if want_stats:
        o_ref, st_ref, acc_ref = rest
    else:
        o_ref, acc_ref = rest

    t = pl.program_id(2)

    @pl.when(t == 0)
    def _init():
        acc_ref[...] = jnp.zeros_like(acc_ref)

    m = acc_ref.shape[0]
    khw = kh * kw
    contrib = None
    for b in range(kh):                          # kh, kw <= 3, fully unrolled
        for c in range(kw):
            xc = x_ref[0, 0, pl.ds(b * wp + c, m), :]        # (M, Cin_p) bf16
            part = jnp.dot(xc, w_ref[t * khw + b * kw + c],
                           preferred_element_type=jnp.float32)
            contrib = part if contrib is None else contrib + part
    acc_ref[...] += contrib

    @pl.when(t == pl.num_programs(2) - 1)
    def _finish():
        y = acc_ref[...]
        if leaky:
            y = jnp.where(y >= 0, y, LEAKY_SLOPE * y)
        o_ref[0, 0] = y.astype(o_ref.dtype)
        if want_stats:
            # stats convs are stride-1: valid columns are (r % Wp) < OW
            col = lax.broadcasted_iota(jnp.int32, (m, 1), 0) % row_stride
            ym = jnp.where(col < ow, y, 0.0)
            st_ref[0, 0, 0:1, :] = jnp.sum(ym, axis=0, keepdims=True)
            st_ref[0, 0, 1:2, :] = jnp.sum(ym * ym, axis=0, keepdims=True)


def conv3d(x, w_flat, *, ksize, stride, pad, leaky, want_stats):
    """x: (N, D, H, W, Cin_p) bf16, w_flat: (kd*kh*kw, Cin_p, Cout_p) bf16.

    Returns y_frame: (N, OD, OH*row_stride, Cout_p) f32  [+ stats (N, OD, 2, Cout_p)].
    """
    N, D, H, W, cin_p = x.shape
    kd, kh, kw = ksize
    sd, sh, sw = stride
    pd, ph, pw = pad
    OD, OH, OW, Wp, row_stride = _conv_geom(D, H, W, ksize, stride, pad)
    cout_p = w_flat.shape[-1]
    M = OH * row_stride

    # zero-pad D/H/W once; `sh` extra H rows give slack so every per-tap
    # contiguous chunk of the flattened plane stays in bounds.
    xp = jnp.pad(x, ((0, 0), (pd, pd), (ph, ph + sh), (pw, pw), (0, 0)))
    Dp = D + 2 * pd
    rows = (H + 2 * ph + sh) * Wp
    x2 = xp.reshape(N, Dp, rows, cin_p)

    kernel = functools.partial(_conv_plane_kernel, kh=kh, kw=kw, wp=Wp,
                               row_stride=row_stride, ow=OW,
                               leaky=leaky, want_stats=want_stats)

    in_specs = [
        # one padded, flattened (H, W) plane per depth tap (block size 1 on
        # N / D -> block index == element offset)
        pl.BlockSpec((1, 1, rows, cin_p),
                     lambda n, d, t: (n, d * sd + t, 0, 0)),
        # full packed weight stays resident in VMEM (constant block index)
        pl.BlockSpec((kd * kh * kw, cin_p, cout_p), lambda n, d, t: (0, 0, 0)),
    ]
    y_spec = pl.BlockSpec((1, 1, M, cout_p), lambda n, d, t: (n, d, 0, 0))
    if want_stats:
        out_shape = (jax.ShapeDtypeStruct((N, OD, M, cout_p), jnp.float32),
                     jax.ShapeDtypeStruct((N, OD, 2, cout_p), jnp.float32))
        out_specs = (y_spec,
                     pl.BlockSpec((1, 1, 2, cout_p), lambda n, d, t: (n, d, 0, 0)))
    else:
        out_shape = jax.ShapeDtypeStruct((N, OD, M, cout_p), jnp.float32)
        out_specs = y_spec

    return pl.pallas_call(
        kernel,
        out_shape=out_shape,
        grid=(N, OD, kd),
        in_specs=in_specs,
        out_specs=out_specs,
        scratch_shapes=[pltpu.VMEM((M, cout_p), jnp.float32)],
        compiler_params=pltpu.CompilerParams(
            dimension_semantics=("parallel", "parallel", "arbitrary")),
    )(x2, w_flat)


def frame_to_output(y_frame, OH, OW, row_stride, sw):
    """Extract the logical (N, OD, OH, OW, C) output from a conv W-frame."""
    N, OD, _, cp = y_frame.shape
    y = y_frame.reshape(N, OD, OH, row_stride, cp)
    return y[:, :, :, 0:OW * sw:sw, :]


# ---------------------------------------------------------------------------
# BN finalize (tiny, plain JAX) + tiled BN-apply kernels (also strip W-frame)
# ---------------------------------------------------------------------------
def bn_finalize(stats, count):
    """stats: (N, OD, 2, Cp) partial sum / sumsq -> mean, rstd each (1, 1, Cp)."""
    s = jnp.sum(stats, axis=(0, 1))                      # (2, Cp) f32
    mean = s[0] / count
    var = jnp.maximum(s[1] / count - mean * mean, 0.0)   # clamp cancellation
    rstd = lax.rsqrt(var + BN_EPS)
    return mean.reshape(1, 1, -1), rstd.reshape(1, 1, -1)


def _bn_apply_kernel(y_ref, mu_ref, rs_ref, o_ref, *, ow):
    y = y_ref[:, :ow, :]
    o_ref[...] = ((y - mu_ref[...]) * rs_ref[...]).astype(o_ref.dtype)


def bn_apply(y_frame, mean, rstd, oh, ow, out_dtype):
    """(N, OD, OH*Wp, Cp) f32 frame -> normalized (N*OD*OH, OW, Cp) out_dtype."""
    N, OD, mwp, cp = y_frame.shape
    wp = mwp // oh
    R = N * OD * oh
    tile = _row_tile(R)
    row_in = pl.BlockSpec((tile, wp, cp), lambda i: (i, 0, 0))
    row_out = pl.BlockSpec((tile, ow, cp), lambda i: (i, 0, 0))
    vec = pl.BlockSpec((1, 1, cp), lambda i: (0, 0, 0))
    return pl.pallas_call(
        functools.partial(_bn_apply_kernel, ow=ow),
        out_shape=jax.ShapeDtypeStruct((R, ow, cp), out_dtype),
        grid=(R // tile,),
        in_specs=[row_in, vec, vec],
        out_specs=row_out,
        compiler_params=pltpu.CompilerParams(dimension_semantics=("parallel",)),
    )(y_frame.reshape(R, wp, cp), mean, rstd)


def _bn_add_kernel(y_ref, s_ref, my_ref, ry_ref, ms_ref, rs_ref, o_ref, *, ow):
    yn = (y_ref[:, :ow, :] - my_ref[...]) * ry_ref[...]
    sn = (s_ref[:, :ow, :] - ms_ref[...]) * rs_ref[...]
    o_ref[...] = (yn + sn).astype(o_ref.dtype)


def bn_add_apply(y_frame, my, ry, s_frame, ms, rs, oh, ow):
    """Fused bn2(main) + bn0_2(shortcut) + residual add -> (N*OD*OH, OW, Cp) f32."""
    N, OD, mwp, cp = y_frame.shape
    wp = mwp // oh
    R = N * OD * oh
    tile = _row_tile(R)
    row_in = pl.BlockSpec((tile, wp, cp), lambda i: (i, 0, 0))
    row_out = pl.BlockSpec((tile, ow, cp), lambda i: (i, 0, 0))
    vec = pl.BlockSpec((1, 1, cp), lambda i: (0, 0, 0))
    return pl.pallas_call(
        functools.partial(_bn_add_kernel, ow=ow),
        out_shape=jax.ShapeDtypeStruct((R, ow, cp), jnp.float32),
        grid=(R // tile,),
        in_specs=[row_in, row_in, vec, vec, vec, vec],
        out_specs=row_out,
        compiler_params=pltpu.CompilerParams(dimension_semantics=("parallel",)),
    )(y_frame.reshape(R, wp, cp), s_frame.reshape(R, wp, cp), my, ry, ms, rs)


# ---------------------------------------------------------------------------
# Weight packing (done once, in __init__)
# ---------------------------------------------------------------------------
def _pack_weight(w, cin_p, cout_p):
    """(kd, kh, kw, Cin, Cout) f32 -> (kd*kh*kw, Cin_p, Cout_p) bf16."""
    kd, kh, kw, cin, cout = w.shape
    wp = jnp.pad(w, ((0, 0), (0, 0), (0, 0), (0, cin_p - cin), (0, cout_p - cout)))
    return wp.reshape(kd * kh * kw, cin_p, cout_p).astype(jnp.bfloat16)


# ---------------------------------------------------------------------------
# ResBlock
# ---------------------------------------------------------------------------
class ResBlockPallas:
    def __init__(self, in_filters, out_filters, key, *, pooling=True,
                 height_pooling=False):
        self.pooling = pooling
        self.in_filters = in_filters
        self.out_filters = out_filters
        self.cin_p = _rup(in_filters, LANE)
        self.cout_p = _rup(out_filters, LANE)
        k1, k2, k3, k4, k5 = jax.random.split(key, 5)

        def init(k, shape):
            fan_in = shape[0] * shape[1] * shape[2] * shape[3]
            return jax.random.normal(k, shape, jnp.float32) * (2.0 / fan_in) ** 0.5

        # logical f32 weights (kept for the pure-JAX reference check)
        self.w_conv1_l = init(k1, (3, 1, 3, in_filters, out_filters))    # conv3x1
        self.w_conv1_2_l = init(k2, (3, 1, 3, out_filters, out_filters))
        self.w_conv2_l = init(k3, (1, 3, 3, in_filters, out_filters))    # conv1x3
        self.w_conv3_l = init(k4, (1, 3, 3, out_filters, out_filters))
        # packed / channel-padded / bf16 weights for the Pallas kernels
        self.w_conv1 = _pack_weight(self.w_conv1_l, self.cin_p, self.cout_p)
        self.w_conv1_2 = _pack_weight(self.w_conv1_2_l, self.cout_p, self.cout_p)
        self.w_conv2 = _pack_weight(self.w_conv2_l, self.cin_p, self.cout_p)
        self.w_conv3 = _pack_weight(self.w_conv3_l, self.cout_p, self.cout_p)
        if pooling:
            self.pool_stride = (2, 2, 2) if height_pooling else (2, 2, 1)
            self.w_pool_l = init(k5, (3, 3, 3, out_filters, out_filters))
            self.w_pool = _pack_weight(self.w_pool_l, self.cout_p, self.cout_p)
        # NOTE: dropout_rate / drop_out are never used in the reference forward().

    def __call__(self, x):
        N, D, H, W, _ = x.shape
        count = N * D * H * W
        # pad channels to the 128-lane width once, cast to bf16 once
        xb = jnp.pad(x, ((0, 0),) * 4 + ((0, self.cin_p - self.in_filters),)
                     ).astype(jnp.bfloat16)

        # ---- shortcut branch: conv3x1 -> leaky(+stats) -> bn0 -> conv3x1 -> leaky(+stats)
        y1, st1 = conv3d(xb, self.w_conv1, ksize=(3, 1, 3), stride=(1, 1, 1),
                         pad=(1, 0, 1), leaky=True, want_stats=True)
        m1, r1 = bn_finalize(st1, count)
        sc = bn_apply(y1, m1, r1, H, W, jnp.bfloat16).reshape(N, D, H, W, self.cout_p)
        y12, st12 = conv3d(sc, self.w_conv1_2, ksize=(3, 1, 3), stride=(1, 1, 1),
                           pad=(1, 0, 1), leaky=True, want_stats=True)
        m12, r12 = bn_finalize(st12, count)

        # ---- main branch: conv1x3 -> leaky(+stats) -> bn1 -> conv1x3 -> leaky(+stats)
        y2, st2 = conv3d(xb, self.w_conv2, ksize=(1, 3, 3), stride=(1, 1, 1),
                         pad=(0, 1, 1), leaky=True, want_stats=True)
        m2, r2 = bn_finalize(st2, count)
        ra = bn_apply(y2, m2, r2, H, W, jnp.bfloat16).reshape(N, D, H, W, self.cout_p)
        y3, st3 = conv3d(ra, self.w_conv3, ksize=(1, 3, 3), stride=(1, 1, 1),
                         pad=(0, 1, 1), leaky=True, want_stats=True)
        m3, r3 = bn_finalize(st3, count)

        # ---- fused bn2(main) + bn0_2(shortcut) + residual add
        resA_full = bn_add_apply(y3, m3, r3, y12, m12, r12, H, W
                                 ).reshape(N, D, H, W, self.cout_p)      # f32
        resA = resA_full[..., :self.out_filters]

        if self.pooling:
            # SparseConv3d(k=3, stride=(2,2,1) or 2, pad=1, bias=False) dense analog
            ks, st, pd = (3, 3, 3), self.pool_stride, (1, 1, 1)
            yB = conv3d(resA_full.astype(jnp.bfloat16), self.w_pool,
                        ksize=ks, stride=st, pad=pd, leaky=False, want_stats=False)
            _, OHp, OWp, _, row_stride = _conv_geom(D, H, W, ks, st, pd)
            resB = frame_to_output(yB, OHp, OWp, row_stride, st[2])
            resB = resB[..., :self.out_filters]
            return resB, resA
        return resA


# ---------------------------------------------------------------------------
# Pure-JAX reference (mirrors the bf16 casts at kernel boundaries)
# ---------------------------------------------------------------------------
def reference_forward(block, x):
    def conv(inp, w, stride, pad):
        lhs = inp.astype(jnp.float32)
        rhs = w.astype(jnp.bfloat16).astype(jnp.float32)   # mirror bf16 weight rounding
        dn = lax.conv_dimension_numbers(lhs.shape, rhs.shape, ("NDHWC", "DHWIO", "NDHWC"))
        return lax.conv_general_dilated(lhs, rhs, stride, [(p, p) for p in pad],
                                        dimension_numbers=dn,
                                        precision=lax.Precision.HIGHEST)

    def leaky(v):
        return jnp.where(v >= 0, v, LEAKY_SLOPE * v)

    def bn(v):
        f = v.reshape(-1, v.shape[-1])
        mean = jnp.mean(f, axis=0)
        var = jnp.maximum(jnp.mean(f * f, axis=0) - mean * mean, 0.0)
        return ((f - mean) * lax.rsqrt(var + BN_EPS)).reshape(v.shape)

    xb = x.astype(jnp.bfloat16)
    sc = bn(leaky(conv(xb, block.w_conv1_l, (1, 1, 1), (1, 0, 1))))
    sc = bn(leaky(conv(sc.astype(jnp.bfloat16), block.w_conv1_2_l, (1, 1, 1), (1, 0, 1))))
    ra = bn(leaky(conv(xb, block.w_conv2_l, (1, 1, 1), (0, 1, 1))))
    ra = bn(leaky(conv(ra.astype(jnp.bfloat16), block.w_conv3_l, (1, 1, 1), (0, 1, 1))))
    resA = ra + sc
    resB = conv(resA.astype(jnp.bfloat16), block.w_pool_l, block.pool_stride, (1, 1, 1))
    return resB, resA


if __name__ == "__main__":
    key = jax.random.PRNGKey(0)
    kx, kp = jax.random.split(key)
    N, D, H, W = 2, 4, 8, 8
    in_filters, out_filters = 4, 8
    x = jax.random.normal(kx, (N, D, H, W, in_filters), dtype=jnp.float32)

    block = ResBlockPallas(in_filters, out_filters, kp, pooling=True,
                           height_pooling=False)
    fwd = jax.jit(lambda inp: block(inp))
    resB, resA = fwd(x)
    jax.block_until_ready((resB, resA))

    assert resA.shape == (N, D, H, W, out_filters)
    assert resB.shape == (N, 2, 4, 8, out_filters)
    assert bool(jnp.all(jnp.isfinite(resA))) and bool(jnp.all(jnp.isfinite(resB)))

    resB_ref, resA_ref = jax.jit(lambda inp: reference_forward(block, inp))(x)
    assert bool(jnp.allclose(resA, resA_ref, rtol=1e-2, atol=1e-2)), "resA mismatch vs reference"
    assert bool(jnp.allclose(resB, resB_ref, rtol=1e-2, atol=1e-2)), "resB mismatch vs reference"

    print("KERNEL_OK")
</pallas_src>

<mosaic_0001>
module attributes {stable_mosaic.version = 11 : i64} {
  func.func @_conv_plane_kernel(%arg0: i32, %arg1: i32, %arg2: i32, %arg3: memref<1x1x110x128xbf16, #tpu.memory_space<vmem>>, %arg4: memref<9x128x128xbf16, #tpu.memory_space<vmem>>, %arg5: memref<1x1x80x128xf32, #tpu.memory_space<vmem>>, %arg6: memref<1x1x2x128xf32, #tpu.memory_space<vmem>>, %arg7: memref<80x128xf32, #tpu.memory_space<vmem>>) attributes {dimension_semantics = [#tpu.dimension_semantics<parallel>, #tpu.dimension_semantics<parallel>, #tpu.dimension_semantics<arbitrary>], iteration_bounds = array<i64: 2, 4, 1>, scalar_prefetch = 0 : i64, scratch_operands = 1 : i64, tpu.core_type = #tpu.core_type<tc>, window_params = [{transform_indices = @transform_0, window_bounds = array<i64: 1, 1, 110, 128>}, {pipeline_mode = #tpu.pipeline_mode<synchronous>, transform_indices = @transform_1, window_bounds = array<i64: 9, 128, 128>}, {transform_indices = @transform_2, window_bounds = array<i64: 1, 1, 80, 128>}, {transform_indices = @transform_3, window_bounds = array<i64: 1, 1, 2, 128>}]} {
    %c0_i32 = arith.constant 0 : i32
    %0 = arith.cmpi eq, %arg2, %c0_i32 : i32
    %1 = arith.extui %0 : i1 to i32
    %c0_i32_0 = arith.constant 0 : i32
    %2 = arith.cmpi ne, %1, %c0_i32_0 : i32
    scf.if %2 {
      %cst_82 = arith.constant 0.000000e+00 : f32
      %98 = vector.broadcast %cst_82 : f32 to vector<80x128xf32>
      %c0_83 = arith.constant 0 : index
      %c0_84 = arith.constant 0 : index
      %99 = vector.load %arg7[%c0_83, %c0_84] : memref<80x128xf32, #tpu.memory_space<vmem>>, vector<80x128xf32>
      tpu.vector_store %arg7[%c0_83, %c0_84], %98 {strides = array<i32>} : memref<80x128xf32, #tpu.memory_space<vmem>>, vector<80x128xf32>,
    } else {
    }
    %c0 = arith.constant 0 : index
    %c0_1 = arith.constant 0 : index
    %c0_2 = arith.constant 0 : index
    %c0_3 = arith.constant 0 : index
    %3 = vector.load %arg3[%c0, %c0_1, %c0_2, %c0_3] : memref<1x1x110x128xbf16, #tpu.memory_space<vmem>>, vector<1x1x80x128xbf16>
    %4 = vector.shape_cast %3 : vector<1x1x80x128xbf16> to vector<80x128xbf16>
    %c9_i32 = arith.constant 9 : i32
    %5 = arith.muli %arg2, %c9_i32 : i32
    %c0_i32_4 = arith.constant 0 : i32
    %6 = arith.addi %5, %c0_i32_4 : i32
    %c0_i32_5 = arith.constant 0 : i32
    %7 = arith.addi %6, %c0_i32_5 : i32
    %8 = arith.index_cast %7 : i32 to index
    %c0_6 = arith.constant 0 : index
    %c0_7 = arith.constant 0 : index
    %9 = vector.load %arg4[%8, %c0_6, %c0_7] : memref<9x128x128xbf16, #tpu.memory_space<vmem>>, vector<1x128x128xbf16>
    %10 = vector.shape_cast %9 : vector<1x128x128xbf16> to vector<128x128xbf16>
    %cst = arith.constant dense<0.000000e+00> : vector<80x128xf32>
    %11 = tpu.matmul %4, %10, %cst {dimension_numbers = #tpu.dot_dimension_numbers<[1], [0], [0], [1], [0, 0, 1, 1], [], []>} : vector<80x128xbf16>, vector<128x128xbf16>, vector<80x128xf32> -> vector<80x128xf32>
    %c0_8 = arith.constant 0 : index
    %c0_9 = arith.constant 0 : index
    %c1 = arith.constant 1 : index
    %c0_10 = arith.constant 0 : index
    %12 = vector.load %arg3[%c0_8, %c0_9, %c1, %c0_10] : memref<1x1x110x128xbf16, #tpu.memory_space<vmem>>, vector<1x1x80x128xbf16>
    %13 = vector.shape_cast %12 : vector<1x1x80x128xbf16> to vector<80x128xbf16>
    %c9_i32_11 = arith.constant 9 : i32
    %14 = arith.muli %arg2, %c9_i32_11 : i32
    %c0_i32_12 = arith.constant 0 : i32
    %15 = arith.addi %14, %c0_i32_12 : i32
    %c1_i32 = arith.constant 1 : i32
    %16 = arith.addi %15, %c1_i32 : i32
    %17 = arith.index_cast %16 : i32 to index
    %c0_13 = arith.constant 0 : index
    %c0_14 = arith.constant 0 : index
    %18 = vector.load %arg4[%17, %c0_13, %c0_14] : memref<9x128x128xbf16, #tpu.memory_space<vmem>>, vector<1x128x128xbf16>
    %19 = vector.shape_cast %18 : vector<1x128x128xbf16> to vector<128x128xbf16>
    %cst_15 = arith.constant dense<0.000000e+00> : vector<80x128xf32>
    %20 = tpu.matmul %13, %19, %cst_15 {dimension_numbers = #tpu.dot_dimension_numbers<[1], [0], [0], [1], [0, 0, 1, 1], [], []>} : vector<80x128xbf16>, vector<128x128xbf16>, vector<80x128xf32> -> vector<80x128xf32>
    %21 = arith.addf %11, %20 : vector<80x128xf32>
    %c0_16 = arith.constant 0 : index
    %c0_17 = arith.constant 0 : index
    %c2 = arith.constant 2 : index
    %c0_18 = arith.constant 0 : index
    %22 = vector.load %arg3[%c0_16, %c0_17, %c2, %c0_18] : memref<1x1x110x128xbf16, #tpu.memory_space<vmem>>, vector<1x1x80x128xbf16>
    %23 = vector.shape_cast %22 : vector<1x1x80x128xbf16> to vector<80x128xbf16>
    %c9_i32_19 = arith.constant 9 : i32
    %24 = arith.muli %arg2, %c9_i32_19 : i32
    %c0_i32_20 = arith.constant 0 : i32
    %25 = arith.addi %24, %c0_i32_20 : i32
    %c2_i32 = arith.constant 2 : i32
    %26 = arith.addi %25, %c2_i32 : i32
    %27 = arith.index_cast %26 : i32 to index
    %c0_21 = arith.constant 0 : index
    %c0_22 = arith.constant 0 : index
    %28 = vector.load %arg4[%27, %c0_21, %c0_22] : memref<9x128x128xbf16, #tpu.memory_space<vmem>>, vector<1x128x128xbf16>
    %29 = vector.shape_cast %28 : vector<1x128x128xbf16> to vector<128x128xbf16>
    %cst_23 = arith.constant dense<0.000000e+00> : vector<80x128xf32>
    %30 = tpu.matmul %23, %29, %cst_23 {dimension_numbers = #tpu.dot_dimension_numbers<[1], [0], [0], [1], [0, 0, 1, 1], [], []>} : vector<80x128xbf16>, vector<128x128xbf16>, vector<80x128xf32> -> vector<80x128xf32>
    %31 = arith.addf %21, %30 : vector<80x128xf32>
    %c0_24 = arith.constant 0 : index
    %c0_25 = arith.constant 0 : index
    %c10 = arith.constant 10 : index
    %c0_26 = arith.constant 0 : index
    %32 = vector.load %arg3[%c0_24, %c0_25, %c10, %c0_26] : memref<1x1x110x128xbf16, #tpu.memory_space<vmem>>, vector<1x1x80x128xbf16>
    %33 = vector.shape_cast %32 : vector<1x1x80x128xbf16> to vector<80x128xbf16>
    %c9_i32_27 = arith.constant 9 : i32
    %34 = arith.muli %arg2, %c9_i32_27 : i32
    %c3_i32 = arith.constant 3 : i32
    %35 = arith.addi %34, %c3_i32 : i32
    %c0_i32_28 = arith.constant 0 : i32
    %36 = arith.addi %35, %c0_i32_28 : i32
    %37 = arith.index_cast %36 : i32 to index
    %c0_29 = arith.constant 0 : index
    %c0_30 = arith.constant 0 : index
    %38 = vector.load %arg4[%37, %c0_29, %c0_30] : memref<9x128x128xbf16, #tpu.memory_space<vmem>>, vector<1x128x128xbf16>
    %39 = vector.shape_cast %38 : vector<1x128x128xbf16> to vector<128x128xbf16>
    %cst_31 = arith.constant dense<0.000000e+00> : vector<80x128xf32>
    %40 = tpu.matmul %33, %39, %cst_31 {dimension_numbers = #tpu.dot_dimension_numbers<[1], [0], [0], [1], [0, 0, 1, 1], [], []>} : vector<80x128xbf16>, vector<128x128xbf16>, vector<80x128xf32> -> vector<80x128xf32>
    %41 = arith.addf %31, %40 : vector<80x128xf32>
    %c0_32 = arith.constant 0 : index
    %c0_33 = arith.constant 0 : index
    %c11 = arith.constant 11 : index
    %c0_34 = arith.constant 0 : index
    %42 = vector.load %arg3[%c0_32, %c0_33, %c11, %c0_34] : memref<1x1x110x128xbf16, #tpu.memory_space<vmem>>, vector<1x1x80x128xbf16>
    %43 = vector.shape_cast %42 : vector<1x1x80x128xbf16> to vector<80x128xbf16>
    %c9_i32_35 = arith.constant 9 : i32
    %44 = arith.muli %arg2, %c9_i32_35 : i32
    %c3_i32_36 = arith.constant 3 : i32
    %45 = arith.addi %44, %c3_i32_36 : i32
    %c1_i32_37 = arith.constant 1 : i32
    %46 = arith.addi %45, %c1_i32_37 : i32
    %47 = arith.index_cast %46 : i32 to index
    %c0_38 = arith.constant 0 : index
    %c0_39 = arith.constant 0 : index
    %48 = vector.load %arg4[%47, %c0_38, %c0_39] : memref<9x128x128xbf16, #tpu.memory_space<vmem>>, vector<1x128x128xbf16>
    %49 = vector.shape_cast %48 : vector<1x128x128xbf16> to vector<128x128xbf16>
    %cst_40 = arith.constant dense<0.000000e+00> : vector<80x128xf32>
    %50 = tpu.matmul %43, %49, %cst_40 {dimension_numbers = #tpu.dot_dimension_numbers<[1], [0], [0], [1], [0, 0, 1, 1], [], []>} : vector<80x128xbf16>, vector<128x128xbf16>, vector<80x128xf32> -> vector<80x128xf32>
    %51 = arith.addf %41, %50 : vector<80x128xf32>
    %c0_41 = arith.constant 0 : index
    %c0_42 = arith.constant 0 : index
    %c12 = arith.constant 12 : index
    %c0_43 = arith.constant 0 : index
    %52 = vector.load %arg3[%c0_41, %c0_42, %c12, %c0_43] : memref<1x1x110x128xbf16, #tpu.memory_space<vmem>>, vector<1x1x80x128xbf16>
    %53 = vector.shape_cast %52 : vector<1x1x80x128xbf16> to vector<80x128xbf16>
    %c9_i32_44 = arith.constant 9 : i32
    %54 = arith.muli %arg2, %c9_i32_44 : i32
    %c3_i32_45 = arith.constant 3 : i32
    %55 = arith.addi %54, %c3_i32_45 : i32
    %c2_i32_46 = arith.constant 2 : i32
    %56 = arith.addi %55, %c2_i32_46 : i32
    %57 = arith.index_cast %56 : i32 to index
    %c0_47 = arith.constant 0 : index
    %c0_48 = arith.constant 0 : index
    %58 = vector.load %arg4[%57, %c0_47, %c0_48] : memref<9x128x128xbf16, #tpu.memory_space<vmem>>, vector<1x128x128xbf16>
    %59 = vector.shape_cast %58 : vector<1x128x128xbf16> to vector<128x128xbf16>
    %cst_49 = arith.constant dense<0.000000e+00> : vector<80x128xf32>
    %60 = tpu.matmul %53, %59, %cst_49 {dimension_numbers = #tpu.dot_dimension_numbers<[1], [0], [0], [1], [0, 0, 1, 1], [], []>} : vector<80x128xbf16>, vector<128x128xbf16>, vector<80x128xf32> -> vector<80x128xf32>
    %61 = arith.addf %51, %60 : vector<80x128xf32>
    %c0_50 = arith.constant 0 : index
    %c0_51 = arith.constant 0 : index
    %c20 = arith.constant 20 : index
    %c0_52 = arith.constant 0 : index
    %62 = vector.load %arg3[%c0_50, %c0_51, %c20, %c0_52] : memref<1x1x110x128xbf16, #tpu.memory_space<vmem>>, vector<1x1x80x128xbf16>
    %63 = vector.shape_cast %62 : vector<1x1x80x128xbf16> to vector<80x128xbf16>
    %c9_i32_53 = arith.constant 9 : i32
    %64 = arith.muli %arg2, %c9_i32_53 : i32
    %c6_i32 = arith.constant 6 : i32
    %65 = arith.addi %64, %c6_i32 : i32
    %c0_i32_54 = arith.constant 0 : i32
    %66 = arith.addi %65, %c0_i32_54 : i32
    %67 = arith.index_cast %66 : i32 to index
    %c0_55 = arith.constant 0 : index
    %c0_56 = arith.constant 0 : index
    %68 = vector.load %arg4[%67, %c0_55, %c0_56] : memref<9x128x128xbf16, #tpu.memory_space<vmem>>, vector<1x128x128xbf16>
    %69 = vector.shape_cast %68 : vector<1x128x128xbf16> to vector<128x128xbf16>
    %cst_57 = arith.constant dense<0.000000e+00> : vector<80x128xf32>
    %70 = tpu.matmul %63, %69, %cst_57 {dimension_numbers = #tpu.dot_dimension_numbers<[1], [0], [0], [1], [0, 0, 1, 1], [], []>} : vector<80x128xbf16>, vector<128x128xbf16>, vector<80x128xf32> -> vector<80x128xf32>
    %71 = arith.addf %61, %70 : vector<80x128xf32>
    %c0_58 = arith.constant 0 : index
    %c0_59 = arith.constant 0 : index
    %c21 = arith.constant 21 : index
    %c0_60 = arith.constant 0 : index
    %72 = vector.load %arg3[%c0_58, %c0_59, %c21, %c0_60] : memref<1x1x110x128xbf16, #tpu.memory_space<vmem>>, vector<1x1x80x128xbf16>
    %73 = vector.shape_cast %72 : vector<1x1x80x128xbf16> to vector<80x128xbf16>
    %c9_i32_61 = arith.constant 9 : i32
    %74 = arith.muli %arg2, %c9_i32_61 : i32
    %c6_i32_62 = arith.constant 6 : i32
    %75 = arith.addi %74, %c6_i32_62 : i32
    %c1_i32_63 = arith.constant 1 : i32
    %76 = arith.addi %75, %c1_i32_63 : i32
    %77 = arith.index_cast %76 : i32 to index
    %c0_64 = arith.constant 0 : index
    %c0_65 = arith.constant 0 : index
    %78 = vector.load %arg4[%77, %c0_64, %c0_65] : memref<9x128x128xbf16, #tpu.memory_space<vmem>>, vector<1x128x128xbf16>
    %79 = vector.shape_cast %78 : vector<1x128x128xbf16> to vector<128x128xbf16>
    %cst_66 = arith.constant dense<0.000000e+00> : vector<80x128xf32>
    %80 = tpu.matmul %73, %79, %cst_66 {dimension_numbers = #tpu.dot_dimension_numbers<[1], [0], [0], [1], [0, 0, 1, 1], [], []>} : vector<80x128xbf16>, vector<128x128xbf16>, vector<80x128xf32> -> vector<80x128xf32>
    %81 = arith.addf %71, %80 : vector<80x128xf32>
    %c0_67 = arith.constant 0 : index
    %c0_68 = arith.constant 0 : index
    %c22 = arith.constant 22 : index
    %c0_69 = arith.constant 0 : index
    %82 = vector.load %arg3[%c0_67, %c0_68, %c22, %c0_69] : memref<1x1x110x128xbf16, #tpu.memory_space<vmem>>, vector<1x1x80x128xbf16>
    %83 = vector.shape_cast %82 : vector<1x1x80x128xbf16> to vector<80x128xbf16>
    %c9_i32_70 = arith.constant 9 : i32
    %84 = arith.muli %arg2, %c9_i32_70 : i32
    %c6_i32_71 = arith.constant 6 : i32
    %85 = arith.addi %84, %c6_i32_71 : i32
    %c2_i32_72 = arith.constant 2 : i32
    %86 = arith.addi %85, %c2_i32_72 : i32
    %87 = arith.index_cast %86 : i32 to index
    %c0_73 = arith.constant 0 : index
    %c0_74 = arith.constant 0 : index
    %88 = vector.load %arg4[%87, %c0_73, %c0_74] : memref<9x128x128xbf16, #tpu.memory_space<vmem>>, vector<1x128x128xbf16>
    %89 = vector.shape_cast %88 : vector<1x128x128xbf16> to vector<128x128xbf16>
    %cst_75 = arith.constant dense<0.000000e+00> : vector<80x128xf32>
    %90 = tpu.matmul %83, %89, %cst_75 {dimension_numbers = #tpu.dot_dimension_numbers<[1], [0], [0], [1], [0, 0, 1, 1], [], []>} : vector<80x128xbf16>, vector<128x128xbf16>, vector<80x128xf32> -> vector<80x128xf32>
    %91 = arith.addf %81, %90 : vector<80x128xf32>
    %c0_76 = arith.constant 0 : index
    %c0_77 = arith.constant 0 : index
    %92 = vector.load %arg7[%c0_76, %c0_77] : memref<80x128xf32, #tpu.memory_space<vmem>>, vector<80x128xf32>
    %93 = arith.addf %92, %91 : vector<80x128xf32>
    %c0_78 = arith.constant 0 : index
    %c0_79 = arith.constant 0 : index
    %94 = vector.load %arg7[%c0_78, %c0_79] : memref<80x128xf32, #tpu.memory_space<vmem>>, vector<80x128xf32>
    tpu.vector_store %arg7[%c0_78, %c0_79], %93 {strides = array<i32>} : memref<80x128xf32, #tpu.memory_space<vmem>>, vector<80x128xf32>,
    %c0_i32_80 = arith.constant 0 : i32
    %95 = arith.cmpi eq, %arg2, %c0_i32_80 : i32
    %96 = arith.extui %95 : i1 to i32
    %c0_i32_81 = arith.constant 0 : i32
    %97 = arith.cmpi ne, %96, %c0_i32_81 : i32
    scf.if %97 {
      %c0_82 = arith.constant 0 : index
      %c0_83 = arith.constant 0 : index
      %98 = vector.load %arg7[%c0_82, %c0_83] : memref<80x128xf32, #tpu.memory_space<vmem>>, vector<80x128xf32>
      %cst_84 = arith.constant 0.000000e+00 : f32
      %99 = vector.broadcast %cst_84 : f32 to vector<80x128xf32>
      %100 = arith.cmpf oge, %98, %99 : vector<80x128xf32>
      %cst_85 = arith.constant 0.00999999977 : f32
      %101 = vector.broadcast %cst_85 : f32 to vector<80x128xf32>
      %102 = arith.mulf %101, %98 : vector<80x128xf32>
      %103 = arith.select %100, %98, %102 : vector<80x128xi1>, vector<80x128xf32>
      %c0_86 = arith.constant 0 : index
      %c0_87 = arith.constant 0 : index
      %c0_88 = arith.constant 0 : index
      %c0_89 = arith.constant 0 : index
      %104 = vector.load %arg5[%c0_86, %c0_87, %c0_88, %c0_89] : memref<1x1x80x128xf32, #tpu.memory_space<vmem>>, vector<1x1x80x128xf32>
      %105 = vector.shape_cast %104 : vector<1x1x80x128xf32> to vector<80x128xf32>
      %106 = vector.shape_cast %103 : vector<80x128xf32> to vector<1x1x80x128xf32>
      tpu.vector_store %arg5[%c0_86, %c0_87, %c0_88, %c0_89], %106 {strides = array<i32>} : memref<1x1x80x128xf32, #tpu.memory_space<vmem>>, vector<1x1x80x128xf32>,
      %107 = tpu.iota {dimensions = array<i32: 0>} : vector<80x1xi32>
      %c10_i32 = arith.constant 10 : i32
      %c0_i32_90 = arith.constant 0 : i32
      %108 = arith.cmpi eq, %c10_i32, %c0_i32_90 : i32
      %c1_i32_91 = arith.constant 1 : i32
      %109 = arith.select %108, %c1_i32_91, %c10_i32 : i32
      %110 = vector.broadcast %109 : i32 to vector<80x1xi32>
      %111 = arith.remsi %107, %110 : vector<80x1xi32>
      %c0_i32_92 = arith.constant 0 : i32
      %112 = vector.broadcast %c0_i32_92 : i32 to vector<80x1xi32>
      %113 = arith.cmpi ne, %111, %112 : vector<80x1xi32>
      %c0_i32_93 = arith.constant 0 : i32
      %114 = vector.broadcast %c0_i32_93 : i32 to vector<80x1xi32>
      %115 = arith.cmpi slt, %111, %114 : vector<80x1xi32>
      %c0_i32_94 = arith.constant 0 : i32
      %116 = arith.cmpi slt, %109, %c0_i32_94 : i32
      %117 = vector.broadcast %116 : i1 to vector<80x1xi1>
      %118 = vector.broadcast %117 : vector<80x1xi1> to vector<80x1xi1>
      %119 = arith.xori %115, %118 : vector<80x1xi1>
      %120 = arith.andi %119, %113 : vector<80x1xi1>
      %121 = vector.broadcast %109 : i32 to vector<80x1xi32>
      %122 = arith.addi %111, %121 : vector<80x1xi32>
      %123 = arith.select %120, %122, %111 : vector<80x1xi1>, vector<80x1xi32>
      %c8_i32 = arith.constant 8 : i32
      %124 = vector.broadcast %c8_i32 : i32 to vector<80x1xi32>
      %125 = arith.cmpi slt, %123, %124 : vector<80x1xi32>
      %cst_95 = arith.constant 0.000000e+00 : f32
      %126 = vector.shape_cast %125 : vector<80x1xi1> to vector<80x1xi1>
      %127 = vector.broadcast %126 : vector<80x1xi1> to vector<80x128xi1>
      %128 = vector.broadcast %cst_95 : f32 to vector<80x128xf32>
      %129 = arith.select %127, %103, %128 : vector<80x128xi1>, vector<80x128xf32>
      %cst_96 = arith.constant dense<0.000000e+00> : vector<128xf32>
      %130 = vector.multi_reduction <add>, %129, %cst_96 [0] : vector<80x128xf32> to vector<128xf32>
      %131 = vector.shape_cast %130 : vector<128xf32> to vector<1x128xf32>
      %c0_97 = arith.constant 0 : index
      %c0_98 = arith.constant 0 : index
      %c0_99 = arith.constant 0 : index
      %c0_100 = arith.constant 0 : index
      %132 = vector.load %arg6[%c0_97, %c0_98, %c0_99, %c0_100] : memref<1x1x2x128xf32, #tpu.memory_space<vmem>>, vector<1x1x1x128xf32>
      %133 = vector.shape_cast %132 : vector<1x1x1x128xf32> to vector<1x128xf32>
      %134 = vector.shape_cast %131 : vector<1x128xf32> to vector<1x1x1x128xf32>
      tpu.vector_store %arg6[%c0_97, %c0_98, %c0_99, %c0_100], %134 {strides = array<i32>} : memref<1x1x2x128xf32, #tpu.memory_space<vmem>>, vector<1x1x1x128xf32>,
      %135 = arith.mulf %129, %129 : vector<80x128xf32>
      %cst_101 = arith.constant dense<0.000000e+00> : vector<128xf32>
      %136 = vector.multi_reduction <add>, %135, %cst_101 [0] : vector<80x128xf32> to vector<128xf32>
      %137 = vector.shape_cast %136 : vector<128xf32> to vector<1x128xf32>
      %c0_102 = arith.constant 0 : index
      %c0_103 = arith.constant 0 : index
      %c1_104 = arith.constant 1 : index
      %c0_105 = arith.constant 0 : index
      %138 = vector.load %arg6[%c0_102, %c0_103, %c1_104, %c0_105] : memref<1x1x2x128xf32, #tpu.memory_space<vmem>>, vector<1x1x1x128xf32>
      %139 = vector.shape_cast %138 : vector<1x1x1x128xf32> to vector<1x128xf32>
      %140 = vector.shape_cast %137 : vector<1x128xf32> to vector<1x1x1x128xf32>
      tpu.vector_store %arg6[%c0_102, %c0_103, %c1_104, %c0_105], %140 {strides = array<i32>} : memref<1x1x2x128xf32, #tpu.memory_space<vmem>>, vector<1x1x1x128xf32>,
    } else {
    }
    return
  }
  func.func @transform_0(%arg0: i32, %arg1: i32, %arg2: i32) -> (i32, i32, i32, i32) {
    %c1_i32 = arith.constant 1 : i32
    %0 = arith.muli %arg1, %c1_i32 : i32
    %1 = arith.addi %0, %arg2 : i32
    %c0_i32 = arith.constant 0 : i32
    %c0_i32_0 = arith.constant 0 : i32
    %c0_i32_1 = arith.constant 0 : i32
    return %arg0, %1, %c0_i32, %c0_i32_0 : i32, i32, i32, i32
  }
  func.func @transform_1(%arg0: i32, %arg1: i32, %arg2: i32) -> (i32, i32, i32) {
    %c0_i32 = arith.constant 0 : i32
    %c0_i32_0 = arith.constant 0 : i32
    %c0_i32_1 = arith.constant 0 : i32
    %c0_i32_2 = arith.constant 0 : i32
    return %c0_i32, %c0_i32_0, %c0_i32_1 : i32, i32, i32
  }
  func.func @transform_2(%arg0: i32, %arg1: i32, %arg2: i32) -> (i32, i32, i32, i32) {
    %c0_i32 = arith.constant 0 : i32
    %c0_i32_0 = arith.constant 0 : i32
    %c0_i32_1 = arith.constant 0 : i32
    return %arg0, %arg1, %c0_i32, %c0_i32_0 : i32, i32, i32, i32
  }
  func.func @transform_3(%arg0: i32, %arg1: i32, %arg2: i32) -> (i32, i32, i32, i32) {
    %c0_i32 = arith.constant 0 : i32
    %c0_i32_0 = arith.constant 0 : i32
    %c0_i32_1 = arith.constant 0 : i32
    return %arg0, %arg1, %c0_i32, %c0_i32_0 : i32, i32, i32, i32
  }
}

module attributes {stable_mosaic.version = 11 : i64} {
  func.func @_conv_plane_kernel(%arg0: i32, %arg1: i32, %arg2: i32, %arg3: memref<1x1x90x128xbf16, #tpu.memory_space<vmem>>, %arg4: memref<9x128x128xbf16, #tpu.memory_space<vmem>>, %arg5: memref<1x1x80x128xf32, #tpu.memory_space<vmem>>, %arg6: memref<1x1x2x128xf32, #tpu.memory_space<vmem>>, %arg7: memref<80x128xf32, #tpu.memory_space<vmem>>) attributes {dimension_semantics = [#tpu.dimension_semantics<parallel>, #tpu.dimension_semantics<parallel>, #tpu.dimension_semantics<arbitrary>], iteration_bounds = array<i64: 2, 4, 3>, scalar_prefetch = 0 : i64, scratch_operands = 1 : i64, tpu.core_type = #tpu.core_type<tc>, window_params = [{transform_indices = @transform_0, window_bounds = array<i64: 1, 1, 90, 128>}, {pipeline_mode = #tpu.pipeline_mode<synchronous>, transform_indices = @transform_1, window_bounds = array<i64: 9, 128, 128>}, {transform_indices = @transform_2, window_bounds = array<i64: 1, 1, 80, 128>}, {transform_indices = @transform_3, window_bounds = array<i64: 1, 1, 2, 128>}]} {
    %c0_i32 = arith.constant 0 : i32
    %0 = arith.cmpi eq, %arg2, %c0_i32 : i32
    %1 = arith.extui %0 : i1 to i32
    %c0_i32_0 = arith.constant 0 : i32
    %2 = arith.cmpi ne, %1, %c0_i32_0 : i32
    scf.if %2 {
      %cst_30 = arith.constant 0.000000e+00 : f32
      %38 = vector.broadcast %cst_30 : f32 to vector<80x128xf32>
      %c0_31 = arith.constant 0 : index
      %c0_32 = arith.constant 0 : index
      %39 = vector.load %arg7[%c0_31, %c0_32] : memref<80x128xf32, #tpu.memory_space<vmem>>, vector<80x128xf32>
      tpu.vector_store %arg7[%c0_31, %c0_32], %38 {strides = array<i32>} : memref<80x128xf32, #tpu.memory_space<vmem>>, vector<80x128xf32>,
    } else {
    }
    %c0 = arith.constant 0 : index
    %c0_1 = arith.constant 0 : index
    %c0_2 = arith.constant 0 : index
    %c0_3 = arith.constant 0 : index
    %3 = vector.load %arg3[%c0, %c0_1, %c0_2, %c0_3] : memref<1x1x90x128xbf16, #tpu.memory_space<vmem>>, vector<1x1x80x128xbf16>
    %4 = vector.shape_cast %3 : vector<1x1x80x128xbf16> to vector<80x128xbf16>
    %c3_i32 = arith.constant 3 : i32
    %5 = arith.muli %arg2, %c3_i32 : i32
    %c0_i32_4 = arith.constant 0 : i32
    %6 = arith.addi %5, %c0_i32_4 : i32
    %c0_i32_5 = arith.constant 0 : i32
    %7 = arith.addi %6, %c0_i32_5 : i32
    %8 = arith.index_cast %7 : i32 to index
    %c0_6 = arith.constant 0 : index
    %c0_7 = arith.constant 0 : index
    %9 = vector.load %arg4[%8, %c0_6, %c0_7] : memref<9x128x128xbf16, #tpu.memory_space<vmem>>, vector<1x128x128xbf16>
    %10 = vector.shape_cast %9 : vector<1x128x128xbf16> to vector<128x128xbf16>
    %cst = arith.constant dense<0.000000e+00> : vector<80x128xf32>
    %11 = tpu.matmul %4, %10, %cst {dimension_numbers = #tpu.dot_dimension_numbers<[1], [0], [0], [1], [0, 0, 1, 1], [], []>} : vector<80x128xbf16>, vector<128x128xbf16>, vector<80x128xf32> -> vector<80x128xf32>
    %c0_8 = arith.constant 0 : index
    %c0_9 = arith.constant 0 : index
    %c1 = arith.constant 1 : index
    %c0_10 = arith.constant 0 : index
    %12 = vector.load %arg3[%c0_8, %c0_9, %c1, %c0_10] : memref<1x1x90x128xbf16, #tpu.memory_space<vmem>>, vector<1x1x80x128xbf16>
    %13 = vector.shape_cast %12 : vector<1x1x80x128xbf16> to vector<80x128xbf16>
    %c3_i32_11 = arith.constant 3 : i32
    %14 = arith.muli %arg2, %c3_i32_11 : i32
    %c0_i32_12 = arith.constant 0 : i32
    %15 = arith.addi %14, %c0_i32_12 : i32
    %c1_i32 = arith.constant 1 : i32
    %16 = arith.addi %15, %c1_i32 : i32
    %17 = arith.index_cast %16 : i32 to index
    %c0_13 = arith.constant 0 : index
    %c0_14 = arith.constant 0 : index
    %18 = vector.load %arg4[%17, %c0_13, %c0_14] : memref<9x128x128xbf16, #tpu.memory_space<vmem>>, vector<1x128x128xbf16>
    %19 = vector.shape_cast %18 : vector<1x128x128xbf16> to vector<128x128xbf16>
    %cst_15 = arith.constant dense<0.000000e+00> : vector<80x128xf32>
    %20 = tpu.matmul %13, %19, %cst_15 {dimension_numbers = #tpu.dot_dimension_numbers<[1], [0], [0], [1], [0, 0, 1, 1], [], []>} : vector<80x128xbf16>, vector<128x128xbf16>, vector<80x128xf32> -> vector<80x128xf32>
    %21 = arith.addf %11, %20 : vector<80x128xf32>
    %c0_16 = arith.constant 0 : index
    %c0_17 = arith.constant 0 : index
    %c2 = arith.constant 2 : index
    %c0_18 = arith.constant 0 : index
    %22 = vector.load %arg3[%c0_16, %c0_17, %c2, %c0_18] : memref<1x1x90x128xbf16, #tpu.memory_space<vmem>>, vector<1x1x80x128xbf16>
    %23 = vector.shape_cast %22 : vector<1x1x80x128xbf16> to vector<80x128xbf16>
    %c3_i32_19 = arith.constant 3 : i32
    %24 = arith.muli %arg2, %c3_i32_19 : i32
    %c0_i32_20 = arith.constant 0 : i32
    %25 = arith.addi %24, %c0_i32_20 : i32
    %c2_i32 = arith.constant 2 : i32
    %26 = arith.addi %25, %c2_i32 : i32
    %27 = arith.index_cast %26 : i32 to index
    %c0_21 = arith.constant 0 : index
    %c0_22 = arith.constant 0 : index
    %28 = vector.load %arg4[%27, %c0_21, %c0_22] : memref<9x128x128xbf16, #tpu.memory_space<vmem>>, vector<1x128x128xbf16>
    %29 = vector.shape_cast %28 : vector<1x128x128xbf16> to vector<128x128xbf16>
    %cst_23 = arith.constant dense<0.000000e+00> : vector<80x128xf32>
    %30 = tpu.matmul %23, %29, %cst_23 {dimension_numbers = #tpu.dot_dimension_numbers<[1], [0], [0], [1], [0, 0, 1, 1], [], []>} : vector<80x128xbf16>, vector<128x128xbf16>, vector<80x128xf32> -> vector<80x128xf32>
    %31 = arith.addf %21, %30 : vector<80x128xf32>
    %c0_24 = arith.constant 0 : index
    %c0_25 = arith.constant 0 : index
    %32 = vector.load %arg7[%c0_24, %c0_25] : memref<80x128xf32, #tpu.memory_space<vmem>>, vector<80x128xf32>
    %33 = arith.addf %32, %31 : vector<80x128xf32>
    %c0_26 = arith.constant 0 : index
    %c0_27 = arith.constant 0 : index
    %34 = vector.load %arg7[%c0_26, %c0_27] : memref<80x128xf32, #tpu.memory_space<vmem>>, vector<80x128xf32>
    tpu.vector_store %arg7[%c0_26, %c0_27], %33 {strides = array<i32>} : memref<80x128xf32, #tpu.memory_space<vmem>>, vector<80x128xf32>,
    %c2_i32_28 = arith.constant 2 : i32
    %35 = arith.cmpi eq, %arg2, %c2_i32_28 : i32
    %36 = arith.extui %35 : i1 to i32
    %c0_i32_29 = arith.constant 0 : i32
    %37 = arith.cmpi ne, %36, %c0_i32_29 : i32
    scf.if %37 {
      %c0_30 = arith.constant 0 : index
      %c0_31 = arith.constant 0 : index
      %38 = vector.load %arg7[%c0_30, %c0_31] : memref<80x128xf32, #tpu.memory_space<vmem>>, vector<80x128xf32>
      %cst_32 = arith.constant 0.000000e+00 : f32
      %39 = vector.broadcast %cst_32 : f32 to vector<80x128xf32>
      %40 = arith.cmpf oge, %38, %39 : vector<80x128xf32>
      %cst_33 = arith.constant 0.00999999977 : f32
      %41 = vector.broadcast %cst_33 : f32 to vector<80x128xf32>
      %42 = arith.mulf %41, %38 : vector<80x128xf32>
      %43 = arith.select %40, %38, %42 : vector<80x128xi1>, vector<80x128xf32>
      %c0_34 = arith.constant 0 : index
      %c0_35 = arith.constant 0 : index
      %c0_36 = arith.constant 0 : index
      %c0_37 = arith.constant 0 : index
      %44 = vector.load %arg5[%c0_34, %c0_35, %c0_36, %c0_37] : memref<1x1x80x128xf32, #tpu.memory_space<vmem>>, vector<1x1x80x128xf32>
      %45 = vector.shape_cast %44 : vector<1x1x80x128xf32> to vector<80x128xf32>
      %46 = vector.shape_cast %43 : vector<80x128xf32> to vector<1x1x80x128xf32>
      tpu.vector_store %arg5[%c0_34, %c0_35, %c0_36, %c0_37], %46 {strides = array<i32>} : memref<1x1x80x128xf32, #tpu.memory_space<vmem>>, vector<1x1x80x128xf32>,
      %47 = tpu.iota {dimensions = array<i32: 0>} : vector<80x1xi32>
      %c10_i32 = arith.constant 10 : i32
      %c0_i32_38 = arith.constant 0 : i32
      %48 = arith.cmpi eq, %c10_i32, %c0_i32_38 : i32
      %c1_i32_39 = arith.constant 1 : i32
      %49 = arith.select %48, %c1_i32_39, %c10_i32 : i32
      %50 = vector.broadcast %49 : i32 to vector<80x1xi32>
      %51 = arith.remsi %47, %50 : vector<80x1xi32>
      %c0_i32_40 = arith.constant 0 : i32
      %52 = vector.broadcast %c0_i32_40 : i32 to vector<80x1xi32>
      %53 = arith.cmpi ne, %51, %52 : vector<80x1xi32>
      %c0_i32_41 = arith.constant 0 : i32
      %54 = vector.broadcast %c0_i32_41 : i32 to vector<80x1xi32>
      %55 = arith.cmpi slt, %51, %54 : vector<80x1xi32>
      %c0_i32_42 = arith.constant 0 : i32
      %56 = arith.cmpi slt, %49, %c0_i32_42 : i32
      %57 = vector.broadcast %56 : i1 to vector<80x1xi1>
      %58 = vector.broadcast %57 : vector<80x1xi1> to vector<80x1xi1>
      %59 = arith.xori %55, %58 : vector<80x1xi1>
      %60 = arith.andi %59, %53 : vector<80x1xi1>
      %61 = vector.broadcast %49 : i32 to vector<80x1xi32>
      %62 = arith.addi %51, %61 : vector<80x1xi32>
      %63 = arith.select %60, %62, %51 : vector<80x1xi1>, vector<80x1xi32>
      %c8_i32 = arith.constant 8 : i32
      %64 = vector.broadcast %c8_i32 : i32 to vector<80x1xi32>
      %65 = arith.cmpi slt, %63, %64 : vector<80x1xi32>
      %cst_43 = arith.constant 0.000000e+00 : f32
      %66 = vector.shape_cast %65 : vector<80x1xi1> to vector<80x1xi1>
      %67 = vector.broadcast %66 : vector<80x1xi1> to vector<80x128xi1>
      %68 = vector.broadcast %cst_43 : f32 to vector<80x128xf32>
      %69 = arith.select %67, %43, %68 : vector<80x128xi1>, vector<80x128xf32>
      %cst_44 = arith.constant dense<0.000000e+00> : vector<128xf32>
      %70 = vector.multi_reduction <add>, %69, %cst_44 [0] : vector<80x128xf32> to vector<128xf32>
      %71 = vector.shape_cast %70 : vector<128xf32> to vector<1x128xf32>
      %c0_45 = arith.constant 0 : index
      %c0_46 = arith.constant 0 : index
      %c0_47 = arith.constant 0 : index
      %c0_48 = arith.constant 0 : index
      %72 = vector.load %arg6[%c0_45, %c0_46, %c0_47, %c0_48] : memref<1x1x2x128xf32, #tpu.memory_space<vmem>>, vector<1x1x1x128xf32>
      %73 = vector.shape_cast %72 : vector<1x1x1x128xf32> to vector<1x128xf32>
      %74 = vector.shape_cast %71 : vector<1x128xf32> to vector<1x1x1x128xf32>
      tpu.vector_store %arg6[%c0_45, %c0_46, %c0_47, %c0_48], %74 {strides = array<i32>} : memref<1x1x2x128xf32, #tpu.memory_space<vmem>>, vector<1x1x1x128xf32>,
      %75 = arith.mulf %69, %69 : vector<80x128xf32>
      %cst_49 = arith.constant dense<0.000000e+00> : vector<128xf32>
      %76 = vector.multi_reduction <add>, %75, %cst_49 [0] : vector<80x128xf32> to vector<128xf32>
      %77 = vector.shape_cast %76 : vector<128xf32> to vector<1x128xf32>
      %c0_50 = arith.constant 0 : index
      %c0_51 = arith.constant 0 : index
      %c1_52 = arith.constant 1 : index
      %c0_53 = arith.constant 0 : index
      %78 = vector.load %arg6[%c0_50, %c0_51, %c1_52, %c0_53] : memref<1x1x2x128xf32, #tpu.memory_space<vmem>>, vector<1x1x1x128xf32>
      %79 = vector.shape_cast %78 : vector<1x1x1x128xf32> to vector<1x128xf32>
      %80 = vector.shape_cast %77 : vector<1x128xf32> to vector<1x1x1x128xf32>
      tpu.vector_store %arg6[%c0_50, %c0_51, %c1_52, %c0_53], %80 {strides = array<i32>} : memref<1x1x2x128xf32, #tpu.memory_space<vmem>>, vector<1x1x1x128xf32>,
    } else {
    }
    return
  }
  func.func @transform_0(%arg0: i32, %arg1: i32, %arg2: i32) -> (i32, i32, i32, i32) {
    %c1_i32 = arith.constant 1 : i32
    %0 = arith.muli %arg1, %c1_i32 : i32
    %1 = arith.addi %0, %arg2 : i32
    %c0_i32 = arith.constant 0 : i32
    %c0_i32_0 = arith.constant 0 : i32
    %c0_i32_1 = arith.constant 0 : i32
    return %arg0, %1, %c0_i32, %c0_i32_0 : i32, i32, i32, i32
  }
  func.func @transform_1(%arg0: i32, %arg1: i32, %arg2: i32) -> (i32, i32, i32) {
    %c0_i32 = arith.constant 0 : i32
    %c0_i32_0 = arith.constant 0 : i32
    %c0_i32_1 = arith.constant 0 : i32
    %c0_i32_2 = arith.constant 0 : i32
    return %c0_i32, %c0_i32_0, %c0_i32_1 : i32, i32, i32
  }
  func.func @transform_2(%arg0: i32, %arg1: i32, %arg2: i32) -> (i32, i32, i32, i32) {
    %c0_i32 = arith.constant 0 : i32
    %c0_i32_0 = arith.constant 0 : i32
    %c0_i32_1 = arith.constant 0 : i32
    return %arg0, %arg1, %c0_i32, %c0_i32_0 : i32, i32, i32, i32
  }
  func.func @transform_3(%arg0: i32, %arg1: i32, %arg2: i32) -> (i32, i32, i32, i32) {
    %c0_i32 = arith.constant 0 : i32
    %c0_i32_0 = arith.constant 0 : i32
    %c0_i32_1 = arith.constant 0 : i32
    return %arg0, %arg1, %c0_i32, %c0_i32_0 : i32, i32, i32, i32
  }
}

module attributes {stable_mosaic.version = 11 : i64} {
  func.func @_bn_apply_kernel(%arg0: i32, %arg1: memref<64x10x128xf32, #tpu.memory_space<vmem>>, %arg2: memref<1x1x128xf32, #tpu.memory_space<vmem>>, %arg3: memref<1x1x128xf32, #tpu.memory_space<vmem>>, %arg4: memref<64x8x128xbf16, #tpu.memory_space<vmem>>) attributes {dimension_semantics = [#tpu.dimension_semantics<parallel>], iteration_bounds = array<i64: 1>, scalar_prefetch = 0 : i64, scratch_operands = 0 : i64, tpu.core_type = #tpu.core_type<tc>, window_params = [{transform_indices = @transform_0, window_bounds = array<i64: 64, 10, 128>}, {pipeline_mode = #tpu.pipeline_mode<synchronous>, transform_indices = @transform_1, window_bounds = array<i64: 1, 1, 128>}, {pipeline_mode = #tpu.pipeline_mode<synchronous>, transform_indices = @transform_2, window_bounds = array<i64: 1, 1, 128>}, {transform_indices = @transform_3, window_bounds = array<i64: 64, 8, 128>}]} {
    %c0 = arith.constant 0 : index
    %c0_0 = arith.constant 0 : index
    %c0_1 = arith.constant 0 : index
    %0 = vector.load %arg1[%c0, %c0_0, %c0_1] : memref<64x10x128xf32, #tpu.memory_space<vmem>>, vector<64x8x128xf32>
    %c0_2 = arith.constant 0 : index
    %c0_3 = arith.constant 0 : index
    %c0_4 = arith.constant 0 : index
    %1 = vector.load %arg2[%c0_2, %c0_3, %c0_4] : memref<1x1x128xf32, #tpu.memory_space<vmem>>, vector<1x1x128xf32>
    %2 = vector.broadcast %1 : vector<1x1x128xf32> to vector<64x8x128xf32>
    %3 = arith.subf %0, %2 : vector<64x8x128xf32>
    %c0_5 = arith.constant 0 : index
    %c0_6 = arith.constant 0 : index
    %c0_7 = arith.constant 0 : index
    %4 = vector.load %arg3[%c0_5, %c0_6, %c0_7] : memref<1x1x128xf32, #tpu.memory_space<vmem>>, vector<1x1x128xf32>
    %5 = vector.broadcast %4 : vector<1x1x128xf32> to vector<64x8x128xf32>
    %6 = arith.mulf %3, %5 : vector<64x8x128xf32>
    %7 = arith.truncf %6 : vector<64x8x128xf32> to vector<64x8x128xbf16>
    %c0_8 = arith.constant 0 : index
    %c0_9 = arith.constant 0 : index
    %c0_10 = arith.constant 0 : index
    %8 = vector.load %arg4[%c0_8, %c0_9, %c0_10] : memref<64x8x128xbf16, #tpu.memory_space<vmem>>, vector<64x8x128xbf16>
    tpu.vector_store %arg4[%c0_8, %c0_9, %c0_10], %7 {strides = array<i32>} : memref<64x8x128xbf16, #tpu.memory_space<vmem>>, vector<64x8x128xbf16>,
    return
  }
  func.func @transform_0(%arg0: i32) -> (i32, i32, i32) {
    %c0_i32 = arith.constant 0 : i32
    %c0_i32_0 = arith.constant 0 : i32
    %c0_i32_1 = arith.constant 0 : i32
    return %arg0, %c0_i32, %c0_i32_0 : i32, i32, i32
  }
  func.func @transform_1(%arg0: i32) -> (i32, i32, i32) {
    %c0_i32 = arith.constant 0 : i32
    %c0_i32_0 = arith.constant 0 : i32
    %c0_i32_1 = arith.constant 0 : i32
    %c0_i32_2 = arith.constant 0 : i32
    return %c0_i32, %c0_i32_0, %c0_i32_1 : i32, i32, i32
  }
  func.func @transform_2(%arg0: i32) -> (i32, i32, i32) {
    %c0_i32 = arith.constant 0 : i32
    %c0_i32_0 = arith.constant 0 : i32
    %c0_i32_1 = arith.constant 0 : i32
    %c0_i32_2 = arith.constant 0 : i32
    return %c0_i32, %c0_i32_0, %c0_i32_1 : i32, i32, i32
  }
  func.func @transform_3(%arg0: i32) -> (i32, i32, i32) {
    %c0_i32 = arith.constant 0 : i32
    %c0_i32_0 = arith.constant 0 : i32
    %c0_i32_1 = arith.constant 0 : i32
    return %arg0, %c0_i32, %c0_i32_0 : i32, i32, i32
  }
}

module attributes {stable_mosaic.version = 11 : i64} {
  func.func @_bn_add_kernel(%arg0: i32, %arg1: memref<64x10x128xf32, #tpu.memory_space<vmem>>, %arg2: memref<64x10x128xf32, #tpu.memory_space<vmem>>, %arg3: memref<1x1x128xf32, #tpu.memory_space<vmem>>, %arg4: memref<1x1x128xf32, #tpu.memory_space<vmem>>, %arg5: memref<1x1x128xf32, #tpu.memory_space<vmem>>, %arg6: memref<1x1x128xf32, #tpu.memory_space<vmem>>, %arg7: memref<64x8x128xf32, #tpu.memory_space<vmem>>) attributes {dimension_semantics = [#tpu.dimension_semantics<parallel>], iteration_bounds = array<i64: 1>, scalar_prefetch = 0 : i64, scratch_operands = 0 : i64, tpu.core_type = #tpu.core_type<tc>, window_params = [{transform_indices = @transform_0, window_bounds = array<i64: 64, 10, 128>}, {transform_indices = @transform_1, window_bounds = array<i64: 64, 10, 128>}, {pipeline_mode = #tpu.pipeline_mode<synchronous>, transform_indices = @transform_2, window_bounds = array<i64: 1, 1, 128>}, {pipeline_mode = #tpu.pipeline_mode<synchronous>, transform_indices = @transform_3, window_bounds = array<i64: 1, 1, 128>}, {pipeline_mode = #tpu.pipeline_mode<synchronous>, transform_indices = @transform_4, window_bounds = array<i64: 1, 1, 128>}, {pipeline_mode = #tpu.pipeline_mode<synchronous>, transform_indices = @transform_5, window_bounds = array<i64: 1, 1, 128>}, {transform_indices = @transform_6, window_bounds = array<i64: 64, 8, 128>}]} {
    %c0 = arith.constant 0 : index
    %c0_0 = arith.constant 0 : index
    %c0_1 = arith.constant 0 : index
    %0 = vector.load %arg1[%c0, %c0_0, %c0_1] : memref<64x10x128xf32, #tpu.memory_space<vmem>>, vector<64x8x128xf32>
    %c0_2 = arith.constant 0 : index
    %c0_3 = arith.constant 0 : index
    %c0_4 = arith.constant 0 : index
    %1 = vector.load %arg3[%c0_2, %c0_3, %c0_4] : memref<1x1x128xf32, #tpu.memory_space<vmem>>, vector<1x1x128xf32>
    %2 = vector.broadcast %1 : vector<1x1x128xf32> to vector<64x8x128xf32>
    %3 = arith.subf %0, %2 : vector<64x8x128xf32>
    %c0_5 = arith.constant 0 : index
    %c0_6 = arith.constant 0 : index
    %c0_7 = arith.constant 0 : index
    %4 = vector.load %arg4[%c0_5, %c0_6, %c0_7] : memref<1x1x128xf32, #tpu.memory_space<vmem>>, vector<1x1x128xf32>
    %5 = vector.broadcast %4 : vector<1x1x128xf32> to vector<64x8x128xf32>
    %6 = arith.mulf %3, %5 : vector<64x8x128xf32>
    %c0_8 = arith.constant 0 : index
    %c0_9 = arith.constant 0 : index
    %c0_10 = arith.constant 0 : index
    %7 = vector.load %arg2[%c0_8, %c0_9, %c0_10] : memref<64x10x128xf32, #tpu.memory_space<vmem>>, vector<64x8x128xf32>
    %c0_11 = arith.constant 0 : index
    %c0_12 = arith.constant 0 : index
    %c0_13 = arith.constant 0 : index
    %8 = vector.load %arg5[%c0_11, %c0_12, %c0_13] : memref<1x1x128xf32, #tpu.memory_space<vmem>>, vector<1x1x128xf32>
    %9 = vector.broadcast %8 : vector<1x1x128xf32> to vector<64x8x128xf32>
    %10 = arith.subf %7, %9 : vector<64x8x128xf32>
    %c0_14 = arith.constant 0 : index
    %c0_15 = arith.constant 0 : index
    %c0_16 = arith.constant 0 : index
    %11 = vector.load %arg6[%c0_14, %c0_15, %c0_16] : memref<1x1x128xf32, #tpu.memory_space<vmem>>, vector<1x1x128xf32>
    %12 = vector.broadcast %11 : vector<1x1x128xf32> to vector<64x8x128xf32>
    %13 = arith.mulf %10, %12 : vector<64x8x128xf32>
    %14 = arith.addf %6, %13 : vector<64x8x128xf32>
    %c0_17 = arith.constant 0 : index
    %c0_18 = arith.constant 0 : index
    %c0_19 = arith.constant 0 : index
    %15 = vector.load %arg7[%c0_17, %c0_18, %c0_19] : memref<64x8x128xf32, #tpu.memory_space<vmem>>, vector<64x8x128xf32>
    tpu.vector_store %arg7[%c0_17, %c0_18, %c0_19], %14 {strides = array<i32>} : memref<64x8x128xf32, #tpu.memory_space<vmem>>, vector<64x8x128xf32>,
    return
  }
  func.func @transform_0(%arg0: i32) -> (i32, i32, i32) {
    %c0_i32 = arith.constant 0 : i32
    %c0_i32_0 = arith.constant 0 : i32
    %c0_i32_1 = arith.constant 0 : i32
    return %arg0, %c0_i32, %c0_i32_0 : i32, i32, i32
  }
  func.func @transform_1(%arg0: i32) -> (i32, i32, i32) {
    %c0_i32 = arith.constant 0 : i32
    %c0_i32_0 = arith.constant 0 : i32
    %c0_i32_1 = arith.constant 0 : i32
    return %arg0, %c0_i32, %c0_i32_0 : i32, i32, i32
  }
  func.func @transform_2(%arg0: i32) -> (i32, i32, i32) {
    %c0_i32 = arith.constant 0 : i32
    %c0_i32_0 = arith.constant 0 : i32
    %c0_i32_1 = arith.constant 0 : i32
    %c0_i32_2 = arith.constant 0 : i32
    return %c0_i32, %c0_i32_0, %c0_i32_1 : i32, i32, i32
  }
  func.func @transform_3(%arg0: i32) -> (i32, i32, i32) {
    %c0_i32 = arith.constant 0 : i32
    %c0_i32_0 = arith.constant 0 : i32
    %c0_i32_1 = arith.constant 0 : i32
    %c0_i32_2 = arith.constant 0 : i32
    return %c0_i32, %c0_i32_0, %c0_i32_1 : i32, i32, i32
  }
  func.func @transform_4(%arg0: i32) -> (i32, i32, i32) {
    %c0_i32 = arith.constant 0 : i32
    %c0_i32_0 = arith.constant 0 : i32
    %c0_i32_1 = arith.constant 0 : i32
    %c0_i32_2 = arith.constant 0 : i32
    return %c0_i32, %c0_i32_0, %c0_i32_1 : i32, i32, i32
  }
  func.func @transform_5(%arg0: i32) -> (i32, i32, i32) {
    %c0_i32 = arith.constant 0 : i32
    %c0_i32_0 = arith.constant 0 : i32
    %c0_i32_1 = arith.constant 0 : i32
    %c0_i32_2 = arith.constant 0 : i32
    return %c0_i32, %c0_i32_0, %c0_i32_1 : i32, i32, i32
  }
  func.func @transform_6(%arg0: i32) -> (i32, i32, i32) {
    %c0_i32 = arith.constant 0 : i32
    %c0_i32_0 = arith.constant 0 : i32
    %c0_i32_1 = arith.constant 0 : i32
    return %arg0, %c0_i32, %c0_i32_0 : i32, i32, i32
  }
}

module attributes {stable_mosaic.version = 11 : i64} {
  func.func @_conv_plane_kernel(%arg0: i32, %arg1: i32, %arg2: i32, %arg3: memref<1x1x120x128xbf16, #tpu.memory_space<vmem>>, %arg4: memref<27x128x128xbf16, #tpu.memory_space<vmem>>, %arg5: memref<1x1x80x128xf32, #tpu.memory_space<vmem>>, %arg6: memref<80x128xf32, #tpu.memory_space<vmem>>) attributes {dimension_semantics = [#tpu.dimension_semantics<parallel>, #tpu.dimension_semantics<parallel>, #tpu.dimension_semantics<arbitrary>], iteration_bounds = array<i64: 2, 2, 3>, scalar_prefetch = 0 : i64, scratch_operands = 1 : i64, tpu.core_type = #tpu.core_type<tc>, window_params = [{transform_indices = @transform_0, window_bounds = array<i64: 1, 1, 120, 128>}, {pipeline_mode = #tpu.pipeline_mode<synchronous>, transform_indices = @transform_1, window_bounds = array<i64: 27, 128, 128>}, {transform_indices = @transform_2, window_bounds = array<i64: 1, 1, 80, 128>}]} {
    %c0_i32 = arith.constant 0 : i32
    %0 = arith.cmpi eq, %arg2, %c0_i32 : i32
    %1 = arith.extui %0 : i1 to i32
    %c0_i32_0 = arith.constant 0 : i32
    %2 = arith.cmpi ne, %1, %c0_i32_0 : i32
    scf.if %2 {
      %cst_82 = arith.constant 0.000000e+00 : f32
      %98 = vector.broadcast %cst_82 : f32 to vector<80x128xf32>
      %c0_83 = arith.constant 0 : index
      %c0_84 = arith.constant 0 : index
      %99 = vector.load %arg6[%c0_83, %c0_84] : memref<80x128xf32, #tpu.memory_space<vmem>>, vector<80x128xf32>
      tpu.vector_store %arg6[%c0_83, %c0_84], %98 {strides = array<i32>} : memref<80x128xf32, #tpu.memory_space<vmem>>, vector<80x128xf32>,
    } else {
    }
    %c0 = arith.constant 0 : index
    %c0_1 = arith.constant 0 : index
    %c0_2 = arith.constant 0 : index
    %c0_3 = arith.constant 0 : index
    %3 = vector.load %arg3[%c0, %c0_1, %c0_2, %c0_3] : memref<1x1x120x128xbf16, #tpu.memory_space<vmem>>, vector<1x1x80x128xbf16>
    %4 = vector.shape_cast %3 : vector<1x1x80x128xbf16> to vector<80x128xbf16>
    %c9_i32 = arith.constant 9 : i32
    %5 = arith.muli %arg2, %c9_i32 : i32
    %c0_i32_4 = arith.constant 0 : i32
    %6 = arith.addi %5, %c0_i32_4 : i32
    %c0_i32_5 = arith.constant 0 : i32
    %7 = arith.addi %6, %c0_i32_5 : i32
    %8 = arith.index_cast %7 : i32 to index
    %c0_6 = arith.constant 0 : index
    %c0_7 = arith.constant 0 : index
    %9 = vector.load %arg4[%8, %c0_6, %c0_7] : memref<27x128x128xbf16, #tpu.memory_space<vmem>>, vector<1x128x128xbf16>
    %10 = vector.shape_cast %9 : vector<1x128x128xbf16> to vector<128x128xbf16>
    %cst = arith.constant dense<0.000000e+00> : vector<80x128xf32>
    %11 = tpu.matmul %4, %10, %cst {dimension_numbers = #tpu.dot_dimension_numbers<[1], [0], [0], [1], [0, 0, 1, 1], [], []>} : vector<80x128xbf16>, vector<128x128xbf16>, vector<80x128xf32> -> vector<80x128xf32>
    %c0_8 = arith.constant 0 : index
    %c0_9 = arith.constant 0 : index
    %c1 = arith.constant 1 : index
    %c0_10 = arith.constant 0 : index
    %12 = vector.load %arg3[%c0_8, %c0_9, %c1, %c0_10] : memref<1x1x120x128xbf16, #tpu.memory_space<vmem>>, vector<1x1x80x128xbf16>
    %13 = vector.shape_cast %12 : vector<1x1x80x128xbf16> to vector<80x128xbf16>
    %c9_i32_11 = arith.constant 9 : i32
    %14 = arith.muli %arg2, %c9_i32_11 : i32
    %c0_i32_12 = arith.constant 0 : i32
    %15 = arith.addi %14, %c0_i32_12 : i32
    %c1_i32 = arith.constant 1 : i32
    %16 = arith.addi %15, %c1_i32 : i32
    %17 = arith.index_cast %16 : i32 to index
    %c0_13 = arith.constant 0 : index
    %c0_14 = arith.constant 0 : index
    %18 = vector.load %arg4[%17, %c0_13, %c0_14] : memref<27x128x128xbf16, #tpu.memory_space<vmem>>, vector<1x128x128xbf16>
    %19 = vector.shape_cast %18 : vector<1x128x128xbf16> to vector<128x128xbf16>
    %cst_15 = arith.constant dense<0.000000e+00> : vector<80x128xf32>
    %20 = tpu.matmul %13, %19, %cst_15 {dimension_numbers = #tpu.dot_dimension_numbers<[1], [0], [0], [1], [0, 0, 1, 1], [], []>} : vector<80x128xbf16>, vector<128x128xbf16>, vector<80x128xf32> -> vector<80x128xf32>
    %21 = arith.addf %11, %20 : vector<80x128xf32>
    %c0_16 = arith.constant 0 : index
    %c0_17 = arith.constant 0 : index
    %c2 = arith.constant 2 : index
    %c0_18 = arith.constant 0 : index
    %22 = vector.load %arg3[%c0_16, %c0_17, %c2, %c0_18] : memref<1x1x120x128xbf16, #tpu.memory_space<vmem>>, vector<1x1x80x128xbf16>
    %23 = vector.shape_cast %22 : vector<1x1x80x128xbf16> to vector<80x128xbf16>
    %c9_i32_19 = arith.constant 9 : i32
    %24 = arith.muli %arg2, %c9_i32_19 : i32
    %c0_i32_20 = arith.constant 0 : i32
    %25 = arith.addi %24, %c0_i32_20 : i32
    %c2_i32 = arith.constant 2 : i32
    %26 = arith.addi %25, %c2_i32 : i32
    %27 = arith.index_cast %26 : i32 to index
    %c0_21 = arith.constant 0 : index
    %c0_22 = arith.constant 0 : index
    %28 = vector.load %arg4[%27, %c0_21, %c0_22] : memref<27x128x128xbf16, #tpu.memory_space<vmem>>, vector<1x128x128xbf16>
    %29 = vector.shape_cast %28 : vector<1x128x128xbf16> to vector<128x128xbf16>
    %cst_23 = arith.constant dense<0.000000e+00> : vector<80x128xf32>
    %30 = tpu.matmul %23, %29, %cst_23 {dimension_numbers = #tpu.dot_dimension_numbers<[1], [0], [0], [1], [0, 0, 1, 1], [], []>} : vector<80x128xbf16>, vector<128x128xbf16>, vector<80x128xf32> -> vector<80x128xf32>
    %31 = arith.addf %21, %30 : vector<80x128xf32>
    %c0_24 = arith.constant 0 : index
    %c0_25 = arith.constant 0 : index
    %c10 = arith.constant 10 : index
    %c0_26 = arith.constant 0 : index
    %32 = vector.load %arg3[%c0_24, %c0_25, %c10, %c0_26] : memref<1x1x120x128xbf16, #tpu.memory_space<vmem>>, vector<1x1x80x128xbf16>
    %33 = vector.shape_cast %32 : vector<1x1x80x128xbf16> to vector<80x128xbf16>
    %c9_i32_27 = arith.constant 9 : i32
    %34 = arith.muli %arg2, %c9_i32_27 : i32
    %c3_i32 = arith.constant 3 : i32
    %35 = arith.addi %34, %c3_i32 : i32
    %c0_i32_28 = arith.constant 0 : i32
    %36 = arith.addi %35, %c0_i32_28 : i32
    %37 = arith.index_cast %36 : i32 to index
    %c0_29 = arith.constant 0 : index
    %c0_30 = arith.constant 0 : index
    %38 = vector.load %arg4[%37, %c0_29, %c0_30] : memref<27x128x128xbf16, #tpu.memory_space<vmem>>, vector<1x128x128xbf16>
    %39 = vector.shape_cast %38 : vector<1x128x128xbf16> to vector<128x128xbf16>
    %cst_31 = arith.constant dense<0.000000e+00> : vector<80x128xf32>
    %40 = tpu.matmul %33, %39, %cst_31 {dimension_numbers = #tpu.dot_dimension_numbers<[1], [0], [0], [1], [0, 0, 1, 1], [], []>} : vector<80x128xbf16>, vector<128x128xbf16>, vector<80x128xf32> -> vector<80x128xf32>
    %41 = arith.addf %31, %40 : vector<80x128xf32>
    %c0_32 = arith.constant 0 : index
    %c0_33 = arith.constant 0 : index
    %c11 = arith.constant 11 : index
    %c0_34 = arith.constant 0 : index
    %42 = vector.load %arg3[%c0_32, %c0_33, %c11, %c0_34] : memref<1x1x120x128xbf16, #tpu.memory_space<vmem>>, vector<1x1x80x128xbf16>
    %43 = vector.shape_cast %42 : vector<1x1x80x128xbf16> to vector<80x128xbf16>
    %c9_i32_35 = arith.constant 9 : i32
    %44 = arith.muli %arg2, %c9_i32_35 : i32
    %c3_i32_36 = arith.constant 3 : i32
    %45 = arith.addi %44, %c3_i32_36 : i32
    %c1_i32_37 = arith.constant 1 : i32
    %46 = arith.addi %45, %c1_i32_37 : i32
    %47 = arith.index_cast %46 : i32 to index
    %c0_38 = arith.constant 0 : index
    %c0_39 = arith.constant 0 : index
    %48 = vector.load %arg4[%47, %c0_38, %c0_39] : memref<27x128x128xbf16, #tpu.memory_space<vmem>>, vector<1x128x128xbf16>
    %49 = vector.shape_cast %48 : vector<1x128x128xbf16> to vector<128x128xbf16>
    %cst_40 = arith.constant dense<0.000000e+00> : vector<80x128xf32>
    %50 = tpu.matmul %43, %49, %cst_40 {dimension_numbers = #tpu.dot_dimension_numbers<[1], [0], [0], [1], [0, 0, 1, 1], [], []>} : vector<80x128xbf16>, vector<128x128xbf16>, vector<80x128xf32> -> vector<80x128xf32>
    %51 = arith.addf %41, %50 : vector<80x128xf32>
    %c0_41 = arith.constant 0 : index
    %c0_42 = arith.constant 0 : index
    %c12 = arith.constant 12 : index
    %c0_43 = arith.constant 0 : index
    %52 = vector.load %arg3[%c0_41, %c0_42, %c12, %c0_43] : memref<1x1x120x128xbf16, #tpu.memory_space<vmem>>, vector<1x1x80x128xbf16>
    %53 = vector.shape_cast %52 : vector<1x1x80x128xbf16> to vector<80x128xbf16>
    %c9_i32_44 = arith.constant 9 : i32
    %54 = arith.muli %arg2, %c9_i32_44 : i32
    %c3_i32_45 = arith.constant 3 : i32
    %55 = arith.addi %54, %c3_i32_45 : i32
    %c2_i32_46 = arith.constant 2 : i32
    %56 = arith.addi %55, %c2_i32_46 : i32
    %57 = arith.index_cast %56 : i32 to index
    %c0_47 = arith.constant 0 : index
    %c0_48 = arith.constant 0 : index
    %58 = vector.load %arg4[%57, %c0_47, %c0_48] : memref<27x128x128xbf16, #tpu.memory_space<vmem>>, vector<1x128x128xbf16>
    %59 = vector.shape_cast %58 : vector<1x128x128xbf16> to vector<128x128xbf16>
    %cst_49 = arith.constant dense<0.000000e+00> : vector<80x128xf32>
    %60 = tpu.matmul %53, %59, %cst_49 {dimension_numbers = #tpu.dot_dimension_numbers<[1], [0], [0], [1], [0, 0, 1, 1], [], []>} : vector<80x128xbf16>, vector<128x128xbf16>, vector<80x128xf32> -> vector<80x128xf32>
    %61 = arith.addf %51, %60 : vector<80x128xf32>
    %c0_50 = arith.constant 0 : index
    %c0_51 = arith.constant 0 : index
    %c20 = arith.constant 20 : index
    %c0_52 = arith.constant 0 : index
    %62 = vector.load %arg3[%c0_50, %c0_51, %c20, %c0_52] : memref<1x1x120x128xbf16, #tpu.memory_space<vmem>>, vector<1x1x80x128xbf16>
    %63 = vector.shape_cast %62 : vector<1x1x80x128xbf16> to vector<80x128xbf16>
    %c9_i32_53 = arith.constant 9 : i32
    %64 = arith.muli %arg2, %c9_i32_53 : i32
    %c6_i32 = arith.constant 6 : i32
    %65 = arith.addi %64, %c6_i32 : i32
    %c0_i32_54 = arith.constant 0 : i32
    %66 = arith.addi %65, %c0_i32_54 : i32
    %67 = arith.index_cast %66 : i32 to index
    %c0_55 = arith.constant 0 : index
    %c0_56 = arith.constant 0 : index
    %68 = vector.load %arg4[%67, %c0_55, %c0_56] : memref<27x128x128xbf16, #tpu.memory_space<vmem>>, vector<1x128x128xbf16>
    %69 = vector.shape_cast %68 : vector<1x128x128xbf16> to vector<128x128xbf16>
    %cst_57 = arith.constant dense<0.000000e+00> : vector<80x128xf32>
    %70 = tpu.matmul %63, %69, %cst_57 {dimension_numbers = #tpu.dot_dimension_numbers<[1], [0], [0], [1], [0, 0, 1, 1], [], []>} : vector<80x128xbf16>, vector<128x128xbf16>, vector<80x128xf32> -> vector<80x128xf32>
    %71 = arith.addf %61, %70 : vector<80x128xf32>
    %c0_58 = arith.constant 0 : index
    %c0_59 = arith.constant 0 : index
    %c21 = arith.constant 21 : index
    %c0_60 = arith.constant 0 : index
    %72 = vector.load %arg3[%c0_58, %c0_59, %c21, %c0_60] : memref<1x1x120x128xbf16, #tpu.memory_space<vmem>>, vector<1x1x80x128xbf16>
    %73 = vector.shape_cast %72 : vector<1x1x80x128xbf16> to vector<80x128xbf16>
    %c9_i32_61 = arith.constant 9 : i32
    %74 = arith.muli %arg2, %c9_i32_61 : i32
    %c6_i32_62 = arith.constant 6 : i32
    %75 = arith.addi %74, %c6_i32_62 : i32
    %c1_i32_63 = arith.constant 1 : i32
    %76 = arith.addi %75, %c1_i32_63 : i32
    %77 = arith.index_cast %76 : i32 to index
    %c0_64 = arith.constant 0 : index
    %c0_65 = arith.constant 0 : index
    %78 = vector.load %arg4[%77, %c0_64, %c0_65] : memref<27x128x128xbf16, #tpu.memory_space<vmem>>, vector<1x128x128xbf16>
    %79 = vector.shape_cast %78 : vector<1x128x128xbf16> to vector<128x128xbf16>
    %cst_66 = arith.constant dense<0.000000e+00> : vector<80x128xf32>
    %80 = tpu.matmul %73, %79, %cst_66 {dimension_numbers = #tpu.dot_dimension_numbers<[1], [0], [0], [1], [0, 0, 1, 1], [], []>} : vector<80x128xbf16>, vector<128x128xbf16>, vector<80x128xf32> -> vector<80x128xf32>
    %81 = arith.addf %71, %80 : vector<80x128xf32>
    %c0_67 = arith.constant 0 : index
    %c0_68 = arith.constant 0 : index
    %c22 = arith.constant 22 : index
    %c0_69 = arith.constant 0 : index
    %82 = vector.load %arg3[%c0_67, %c0_68, %c22, %c0_69] : memref<1x1x120x128xbf16, #tpu.memory_space<vmem>>, vector<1x1x80x128xbf16>
    %83 = vector.shape_cast %82 : vector<1x1x80x128xbf16> to vector<80x128xbf16>
    %c9_i32_70 = arith.constant 9 : i32
    %84 = arith.muli %arg2, %c9_i32_70 : i32
    %c6_i32_71 = arith.constant 6 : i32
    %85 = arith.addi %84, %c6_i32_71 : i32
    %c2_i32_72 = arith.constant 2 : i32
    %86 = arith.addi %85, %c2_i32_72 : i32
    %87 = arith.index_cast %86 : i32 to index
    %c0_73 = arith.constant 0 : index
    %c0_74 = arith.constant 0 : index
    %88 = vector.load %arg4[%87, %c0_73, %c0_74] : memref<27x128x128xbf16, #tpu.memory_space<vmem>>, vector<1x128x128xbf16>
    %89 = vector.shape_cast %88 : vector<1x128x128xbf16> to vector<128x128xbf16>
    %cst_75 = arith.constant dense<0.000000e+00> : vector<80x128xf32>
    %90 = tpu.matmul %83, %89, %cst_75 {dimension_numbers = #tpu.dot_dimension_numbers<[1], [0], [0], [1], [0, 0, 1, 1], [], []>} : vector<80x128xbf16>, vector<128x128xbf16>, vector<80x128xf32> -> vector<80x128xf32>
    %91 = arith.addf %81, %90 : vector<80x128xf32>
    %c0_76 = arith.constant 0 : index
    %c0_77 = arith.constant 0 : index
    %92 = vector.load %arg6[%c0_76, %c0_77] : memref<80x128xf32, #tpu.memory_space<vmem>>, vector<80x128xf32>
    %93 = arith.addf %92, %91 : vector<80x128xf32>
    %c0_78 = arith.constant 0 : index
    %c0_79 = arith.constant 0 : index
    %94 = vector.load %arg6[%c0_78, %c0_79] : memref<80x128xf32, #tpu.memory_space<vmem>>, vector<80x128xf32>
    tpu.vector_store %arg6[%c0_78, %c0_79], %93 {strides = array<i32>} : memref<80x128xf32, #tpu.memory_space<vmem>>, vector<80x128xf32>,
    %c2_i32_80 = arith.constant 2 : i32
    %95 = arith.cmpi eq, %arg2, %c2_i32_80 : i32
    %96 = arith.extui %95 : i1 to i32
    %c0_i32_81 = arith.constant 0 : i32
    %97 = arith.cmpi ne, %96, %c0_i32_81 : i32
    scf.if %97 {
      %c0_82 = arith.constant 0 : index
      %c0_83 = arith.constant 0 : index
      %98 = vector.load %arg6[%c0_82, %c0_83] : memref<80x128xf32, #tpu.memory_space<vmem>>, vector<80x128xf32>
      %c0_84 = arith.constant 0 : index
      %c0_85 = arith.constant 0 : index
      %c0_86 = arith.constant 0 : index
      %c0_87 = arith.constant 0 : index
      %99 = vector.load %arg5[%c0_84, %c0_85, %c0_86, %c0_87] : memref<1x1x80x128xf32, #tpu.memory_space<vmem>>, vector<1x1x80x128xf32>
      %100 = vector.shape_cast %99 : vector<1x1x80x128xf32> to vector<80x128xf32>
      %101 = vector.shape_cast %98 : vector<80x128xf32> to vector<1x1x80x128xf32>
      tpu.vector_store %arg5[%c0_84, %c0_85, %c0_86, %c0_87], %101 {strides = array<i32>} : memref<1x1x80x128xf32, #tpu.memory_space<vmem>>, vector<1x1x80x128xf32>,
    } else {
    }
    return
  }
  func.func @transform_0(%arg0: i32, %arg1: i32, %arg2: i32) -> (i32, i32, i32, i32) {
    %c2_i32 = arith.constant 2 : i32
    %0 = arith.muli %arg1, %c2_i32 : i32
    %1 = arith.addi %0, %arg2 : i32
    %c0_i32 = arith.constant 0 : i32
    %c0_i32_0 = arith.constant 0 : i32
    %c0_i32_1 = arith.constant 0 : i32
    return %arg0, %1, %c0_i32, %c0_i32_0 : i32, i32, i32, i32
  }
  func.func @transform_1(%arg0: i32, %arg1: i32, %arg2: i32) -> (i32, i32, i32) {
    %c0_i32 = arith.constant 0 : i32
    %c0_i32_0 = arith.constant 0 : i32
    %c0_i32_1 = arith.constant 0 : i32
    %c0_i32_2 = arith.constant 0 : i32
    return %c0_i32, %c0_i32_0, %c0_i32_1 : i32, i32, i32
  }
  func.func @transform_2(%arg0: i32, %arg1: i32, %arg2: i32) -> (i32, i32, i32, i32) {
    %c0_i32 = arith.constant 0 : i32
    %c0_i32_0 = arith.constant 0 : i32
    %c0_i32_1 = arith.constant 0 : i32
    return %arg0, %arg1, %c0_i32, %c0_i32_0 : i32, i32, i32, i32
  }
}

</mosaic_0001>

<llo_original>
// kernel: _lambda_.8
$region0: #{_lambda_.8}
  #allocation0 [shape = 'u32[]', space=smem, size = 0x4, offset = 0x4, fixed_abs, tag = 'smem constant byte address 0x4 - core index']
  #allocation1 [shape = 'u32[144,128]{1,0:T(1,128)}', space=vmem, size = 0x12000, scoped, tag = 'internal scratch']
  #allocation2 [shape = 'f32[80,128]{1,0:T(8,128)}', space=vmem, size = 0xa000, scoped, tag = 'scratch operand']
  %s0 = inlined_call_operand.vmem [shape: bf16[2,6,90,128], index: 0, kind: input, shape index: {}]
  %s1 = inlined_call_operand.vmem [shape: bf16[9,128,128], index: 1, kind: input, shape index: {}]
  %s2 = inlined_call_operand.vmem [shape: f32[2,4,80,128], index: 2, kind: output, shape index: {0}]
  %s3 = inlined_call_operand.vmem [shape: f32[2,4,2,128], index: 3, kind: output, shape index: {1}]
  %4 = xla_tuple %s2, %s3
  %s5 = sld [smem:[#allocation0]]
  $region57: #{_lambda_.8} parent=0
    _
  %s7 = ssub.s32 1, %s5
  %s8 = scalar_select 0, %s7, %s5
  loop: start=0, step=1, limit=26
  $region2: #{_lambda_.8} parent=0 // loop_pre_header
    _
  $region3: #{_lambda_.8} parent=0 // loop_header
    %s10 = sphi 0, %s14
    %p11 = scmp.ge.s32.totalorder %s10, 26
    %s17 = sphi 0, %s36
    %s18 = sphi 0, %s32
    %s19 = sphi 0, %s28
    %s20 = sphi 0, %s17
    %s21 = sphi 0, %s18
    %s22 = sphi 0, %s19
    %s23 = sphi 0, %s20
    %s24 = sphi 0, %s21
    %s25 = sphi 0, %s22
    %s43 = sphi 0, %s45
    %s46 = sphi 0, %s43
    %s47 = sphi 0, %s46
    %s63 = sphi 0, %s47
    %s67 = sphi 0, %s67
    %s69 = sphi 0, %s67
    %s70 = sphi 0, %s69
    %s84 = sphi 0, %s70
    %s92 = sphi 0, %s94
    %s95 = sphi 0, %s92
    %s96 = sphi 0, %s95
    %s112 = sphi 0, %s96
    %s120 = sphi 0, %s122
    %s123 = sphi 0, %s120
    %s124 = sphi 0, %s123
    %s140 = sphi 0, %s124
  $region4: #{_lambda_.8} parent=0 // loop_header_branch
    %13 = sbr.rel (%p11) target = $region8
  $region5: #{_lambda_.8} parent=0 // loop_body
    %s15 = ssub.s32 %s10, 1
    %s16 = ssub.s32 %s10, 2
    %s26 = sadd.s32 1, %s19
    %p27 = scmp.ge.s32.totalorder %s26, 3
    %s28 = scalar_select %p27, 0, %s26
    %s29 = sadd.s32 1, %s18
    %s30 = scalar_select %p27, %s29, %s18
    %p31 = scmp.ge.s32.totalorder %s30, 4
    %s32 = scalar_select %p31, 0, %s30
    %s33 = sadd.s32 1, %s17
    %s34 = scalar_select %p31, %s33, %s17
    %p35 = scmp.ge.s32.totalorder %s34, 2
    %s36 = scalar_select %p35, 0, %s34
    %s37 = sadd.s32 %s18, %s19
    %s38 = sadd.s32 %s32, %s28
    %s39 = ssub.s32 %s17, %s36
    %s40 = ssub.s32 %s37, %s38
    %s41 = sor.u32 %s39, %s40
    %p42 = scmp.eq.s32.totalorder %s41, 0
    %s44 = sadd.s32 %s43, 1
    %s45 = scalar_select %p42, %s43, %s44
    %p48 = pneg %p42
    %p49 = scmp.eq.s32.totalorder %s10, 23
    %p50 = por %p48, %p49
    %p51 = scmp.ne.s32.totalorder %s43, %s46
    %p52 = scmp.eq.s32.totalorder %s10, 0
    %p53 = por %p51, %p52
    %p54 = scmp.ne.s32.totalorder %s43, %s46
    %p55 = scmp.eq.s32.totalorder %s15, 23
    %p56 = por %p54, %p55
    %p57 = scmp.ne.s32.totalorder %s46, %s47
    %p58 = scmp.eq.s32.totalorder %s15, 0
    %p59 = por %p57, %p58
    %p60 = scmp.ne.s32.totalorder %s46, %s47
    %p61 = scmp.eq.s32.totalorder %s16, 23
    %p62 = por %p60, %p61
    %p64 = scmp.ne.s32.totalorder %s47, %s63
    %p65 = scmp.eq.s32.totalorder %s16, 0
    %p66 = por %p64, %p65
    %s68 = sadd.s32 %s67, 1
    %p71 = scmp.eq.s32.totalorder %s10, 23
    %p72 = scmp.ne.s32.totalorder %s67, %s69
    %p73 = scmp.eq.s32.totalorder %s10, 0
    %p74 = por %p72, %p73
    %p75 = scmp.ne.s32.totalorder %s67, %s69
    %p76 = scmp.eq.s32.totalorder %s15, 23
    %p77 = por %p75, %p76
    %p78 = scmp.ne.s32.totalorder %s69, %s70
    %p79 = scmp.eq.s32.totalorder %s15, 0
    %p80 = por %p78, %p79
    %p81 = scmp.ne.s32.totalorder %s69, %s70
    %p82 = scmp.eq.s32.totalorder %s16, 23
    %p83 = por %p81, %p82
    %p85 = scmp.ne.s32.totalorder %s70, %s84
    %p86 = scmp.eq.s32.totalorder %s16, 0
    %p87 = por %p85, %p86
    %s88 = ssub.s32 %s17, %s36
    %s89 = ssub.s32 %s18, %s32
    %s90 = sor.u32 %s88, %s89
    %p91 = scmp.eq.s32.totalorder %s90, 0
    %s93 = sadd.s32 %s92, 1
    %s94 = scalar_select %p91, %s92, %s93
    %p97 = pneg %p91
    %p98 = scmp.eq.s32.totalorder %s10, 23
    %p99 = por %p97, %p98
    %p100 = scmp.ne.s32.totalorder %s92, %s95
    %p101 = scmp.eq.s32.totalorder %s10, 0
    %p102 = por %p100, %p101
    %p103 = scmp.ne.s32.totalorder %s92, %s95
    %p104 = scmp.eq.s32.totalorder %s15, 23
    %p105 = por %p103, %p104
    %p106 = scmp.ne.s32.totalorder %s95, %s96
    %p107 = scmp.eq.s32.totalorder %s15, 0
    %p108 = por %p106, %p107
    %p109 = scmp.ne.s32.totalorder %s95, %s96
    %p110 = scmp.eq.s32.totalorder %s16, 23
    %p111 = por %p109, %p110
    %p113 = scmp.ne.s32.totalorder %s96, %s112
    %p114 = scmp.eq.s32.totalorder %s16, 0
    %p115 = por %p113, %p114
    %s116 = ssub.s32 %s17, %s36
    %s117 = ssub.s32 %s18, %s32
    %s118 = sor.u32 %s116, %s117
    %p119 = scmp.eq.s32.totalorder %s118, 0
    %s121 = sadd.s32 %s120, 1
    %s122 = scalar_select %p119, %s120, %s121
    %p125 = pneg %p119
    %p126 = scmp.eq.s32.totalorder %s10, 23
    %p127 = por %p125, %p126
    %p128 = scmp.ne.s32.totalorder %s120, %s123
    %p129 = scmp.eq.s32.totalorder %s10, 0
    %p130 = por %p128, %p129
    %p131 = scmp.ne.s32.totalorder %s120, %s123
    %p132 = scmp.eq.s32.totalorder %s15, 23
    %p133 = por %p131, %p132
    %p134 = scmp.ne.s32.totalorder %s123, %s124
    %p135 = scmp.eq.s32.totalorder %s15, 0
    %p136 = por %p134, %p135
    %p137 = scmp.ne.s32.totalorder %s123, %s124
    %p138 = scmp.eq.s32.totalorder %s16, 23
    %p139 = por %p137, %p138
    %p141 = scmp.ne.s32.totalorder %s124, %s140
    %p142 = scmp.eq.s32.totalorder %s16, 0
    %p143 = por %p141, %p142
    %p144 = scmp.le.s32.totalorder 1, %s10
    %p145 = scmp.lt.s32.totalorder %s10, 25
    %p146 = pnand %p144, %p145
    %p147 = pneg %p146
    // Predicated region
    $region9: #{_lambda_.8} parent=5 // pred_check
      _
    $region10: #{_lambda_.8} parent=5 // pred_check_branch
      %149 = sbr.rel (%p146) target = $region12
    $region11: #{_lambda_.8} parent=5 // pred_region
      %s150 = ssub.s32 %s10, 1
      // Predicated region
      $region13: #{_lambda_.8} parent=11 // pred_check
        %p151 = pneg %p80
      $region14: #{_lambda_.8} parent=11 // pred_check_branch
        %153 = sbr.rel (%p151) target = $region16
      $region15: #{_lambda_.8} parent=11 // pred_region
        _
      $region16: #{_lambda_.8} parent=11 // pred_fallthru
        _
    $region12: #{_lambda_.8} parent=5 // pred_fallthru
      _
    %p154 = scmp.lt.s32.totalorder %s10, 24
    // Predicated region
    $region17: #{_lambda_.8} parent=5 // pred_check
      %p155 = pneg %p154
    $region18: #{_lambda_.8} parent=5 // pred_check_branch
      %157 = sbr.rel (%p155) target = $region20
    $region19: #{_lambda_.8} parent=5 // pred_region
      // Predicated region
      $region21: #{_lambda_.8} parent=19 // pred_check
        %p158 = pneg %p53
      $region22: #{_lambda_.8} parent=19 // pred_check_branch
        %160 = sbr.rel (%p158) target = $region24
      $region23: #{_lambda_.8} parent=19 // pred_region
        %s161 = sadd.s32 %s18, %s19
        %p162 = scmp.lt.s32.totalorder %s17, 1
        %s163 = scalar_select %p162, %s17, 1
        %p164 = scmp.lt.s32.totalorder %s161, 5
        %s165 = scalar_select %p164, %s161, 5
        %s166 = smul.addr %s165, 12
        %s167 = smul.addr %s163, 72
        %s168 = sadd.s32 %s166, %s167
        %s169 = smul.addr %s168, 4
        %s170 = scalar_lea.vmem %s0, %s169
        %s171 = sadd.s32 %s18, %s19
      $region24: #{_lambda_.8} parent=19 // pred_fallthru
        _
    $region20: #{_lambda_.8} parent=5 // pred_fallthru
      _
    %p172 = scmp.le.s32.totalorder 1, %s10
    %p173 = scmp.lt.s32.totalorder %s10, 25
    %p174 = pnand %p172, %p173
    %p175 = pneg %p174
    // Predicated region
    $region25: #{_lambda_.8} parent=5 // pred_check
      _
    $region26: #{_lambda_.8} parent=5 // pred_check_branch
      %177 = sbr.rel (%p174) target = $region28
    $region27: #{_lambda_.8} parent=5 // pred_region
      %s178 = ssub.s32 %s10, 1
      %s179 = sadd.s32 %s21, %s22
      %p180 = scmp.lt.s32.totalorder %s20, 1
      %s181 = scalar_select %p180, %s20, 1
      %p182 = scmp.lt.s32.totalorder %s179, 5
      %s183 = scalar_select %p182, %s179, 5
      %s184 = smul.addr %s183, 12
      %s185 = smul.addr %s181, 72
      %s186 = sadd.s32 %s184, %s185
      %s187 = smul.addr %s186, 4
      %s188 = scalar_lea.vmem %s0, %s187
      %p189 = pneg %p59
      %p190 = pneg %p56
      %p191 = pneg %p80
      %p192 = pneg %p77
      %p193 = pneg %p108
      %p194 = pneg %p105
      %p195 = scmp.lt.s32.totalorder %s20, 1
      %s196 = scalar_select %p195, %s20, 1
      %p197 = scmp.lt.s32.totalorder %s21, 3
      %s198 = scalar_select %p197, %s21, 3
      %s199 = smul.addr %s198, 10
      %s200 = smul.addr %s196, 40
      %s201 = sadd.s32 %s199, %s200
      %s202 = smul.addr %s201, 8
      %s203 = scalar_lea.vmem %s2, %s202
      %p204 = pneg %p136
      %p205 = pneg %p133
      %p206 = scmp.lt.s32.totalorder %s20, 1
      %s207 = scalar_select %p206, %s20, 1
      %p208 = scmp.lt.s32.totalorder %s21, 3
      %s209 = scalar_select %p208, %s21, 3
      %s210 = smul.addr %s207, 4
      %s211 = sadd.s32 %s209, %s210
      %s212 = smul.addr %s211, 2
      %s213 = scalar_lea.vmem %s3, %s212
      %s214 = sadd.s32 %s21, %s22
      %p215 = scmp.lt.s32.totalorder %s20, 1
      %s216 = scalar_select %p215, %s20, 1
      %p217 = scmp.lt.s32.totalorder %s214, 5
      %s218 = scalar_select %p217, %s214, 5
      %s219 = smul.addr %s218, 12
      %s220 = smul.addr %s216, 72
      %s221 = sadd.s32 %s219, %s220
      %s222 = smul.addr %s221, 4
      %s223 = scalar_lea.vmem %s0, %s222
      %s224 = sadd.s32 %s21, %s22
      %p225 = scmp.lt.s32.totalorder %s20, 1
      %s226 = scalar_select %p225, %s20, 1
      %p227 = scmp.lt.s32.totalorder %s21, 3
      %s228 = scalar_select %p227, %s21, 3
      %s229 = smul.addr %s228, 10
      %s230 = smul.addr %s226, 40
      %s231 = sadd.s32 %s229, %s230
      %s232 = smul.addr %s231, 8
      %s233 = scalar_lea.vmem %s2, %s232
      %p234 = scmp.lt.s32.totalorder %s20, 1
      %s235 = scalar_select %p234, %s20, 1
      %p236 = scmp.lt.s32.totalorder %s21, 3
      %s237 = scalar_select %p236, %s21, 3
      %s238 = smul.addr %s235, 4
      %s239 = sadd.s32 %s237, %s238
      %s240 = smul.addr %s239, 2
      %s241 = scalar_lea.vmem %s3, %s240
      %p243 = scmp.eq.s32.totalorder %s22, 0
      // Predicated region
      $region29: #{_lambda_.8} parent=27 // pred_check
        %p244 = pneg %p243
      $region30: #{_lambda_.8} parent=27 // pred_check_branch
        %246 = sbr.rel (%p244) target = $region32
      $region31: #{_lambda_.8} parent=27 // pred_region
        %247 = vst [vmem:[#allocation2] sm:$0xff] 0.0
        %248 = vst [vmem:[#allocation2 + $0x8] sm:$0xff] 0.0
        %249 = vst [vmem:[#allocation2 + $0x10] sm:$0xff] 0.0
        %250 = vst [vmem:[#allocation2 + $0x18] sm:$0xff] 0.0
        %251 = vst [vmem:[#allocation2 + $0x20] sm:$0xff] 0.0
        %252 = vst [vmem:[#allocation2 + $0x28] sm:$0xff] 0.0
        %253 = vst [vmem:[#allocation2 + $0x30] sm:$0xff] 0.0
        %254 = vst [vmem:[#allocation2 + $0x38] sm:$0xff] 0.0
        %255 = vst [vmem:[#allocation2 + $0x40] sm:$0xff] 0.0
        %256 = vst [vmem:[#allocation2 + $0x48] sm:$0xff] 0.0
      $region32: #{_lambda_.8} parent=27 // pred_fallthru
        _
      %v257 = vld [vmem:[%s223] sm:$0xf]
      %v258 = vld [vmem:[%s223 + $0x4] sm:$0xf]
      %v259 = vld [vmem:[%s223 + $0x8] sm:$0xf]
      %v260 = vld [vmem:[%s223 + $0xc] sm:$0xf]
      %v261 = vld [vmem:[%s223 + $0x10] sm:$0xf]
      %v262 = vld [vmem:[%s223 + $0x14] sm:$0xf]
      %v263 = vld [vmem:[%s223 + $0x18] sm:$0xf]
      %v264 = vld [vmem:[%s223 + $0x1c] sm:$0xf]
      %v265 = vld [vmem:[%s223 + $0x20] sm:$0xf]
      %v266 = vld [vmem:[%s223 + $0x24] sm:$0xf]
      %s267 = smul.u32 %s22, 3
      %s268 = smul.u32 %s267, 16
      %s269 = smul.addr %s268, 4
      %s270 = scalar_lea.vmem %s1, %s269
      %v271 = vld [vmem:[%s270] sm:$0xf]
      %v272 = vld [vmem:[%s270 + $0x4] sm:$0xf]
      %v273 = vld [vmem:[%s270 + $0x8] sm:$0xf]
      %v274 = vld [vmem:[%s270 + $0xc] sm:$0xf]
      %v275 = vld [vmem:[%s270 + $0x10] sm:$0xf]
      %v276 = vld [vmem:[%s270 + $0x14] sm:$0xf]
      %v277 = vld [vmem:[%s270 + $0x18] sm:$0xf]
      %v278 = vld [vmem:[%s270 + $0x1c] sm:$0xf]
      %v279 = vld [vmem:[%s270 + $0x20] sm:$0xf]
      %v280 = vld [vmem:[%s270 + $0x24] sm:$0xf]
      %v281 = vld [vmem:[%s270 + $0x28] sm:$0xf]
      %v282 = vld [vmem:[%s270 + $0x2c] sm:$0xf]
      %v283 = vld [vmem:[%s270 + $0x30] sm:$0xf]
      %v284 = vld [vmem:[%s270 + $0x34] sm:$0xf]
      %v285 = vld [vmem:[%s270 + $0x38] sm:$0xf]
      %v286 = vld [vmem:[%s270 + $0x3c] sm:$0xf]
      %v287 = vld [vmem:[%s223 + $0x28] sm:$0x1]
      %s288 = sadd.s32 %s267, 1
      %s289 = smul.u32 %s288, 16
      %s290 = smul.addr %s289, 4
      %s291 = scalar_lea.vmem %s1, %s290
      %v292 = vld [vmem:[%s291] sm:$0xf]
      %v293 = vld [vmem:[%s291 + $0x4] sm:$0xf]
      %v294 = vld [vmem:[%s291 + $0x8] sm:$0xf]
      %v295 = vld [vmem:[%s291 + $0xc] sm:$0xf]
      %v296 = vld [vmem:[%s291 + $0x10] sm:$0xf]
      %v297 = vld [vmem:[%s291 + $0x14] sm:$0xf]
      %v298 = vld [vmem:[%s291 + $0x18] sm:$0xf]
      %v299 = vld [vmem:[%s291 + $0x1c] sm:$0xf]
      %v300 = vld [vmem:[%s291 + $0x20] sm:$0xf]
      %v301 = vld [vmem:[%s291 + $0x24] sm:$0xf]
      %v302 = vld [vmem:[%s291 + $0x28] sm:$0xf]
      %v303 = vld [vmem:[%s291 + $0x2c] sm:$0xf]
      %v304 = vld [vmem:[%s291 + $0x30] sm:$0xf]
      %v305 = vld [vmem:[%s291 + $0x34] sm:$0xf]
      %v306 = vld [vmem:[%s291 + $0x38] sm:$0xf]
      %v307 = vld [vmem:[%s291 + $0x3c] sm:$0xf]
      %v319 = vunpack.c.l.b16 %v257
      %v320 = vunpack.c.l.b16 %v258
      %v321 = vunpack.c.l.b16 %v259
      %v322 = vunpack.c.l.b16 %v260
      %v323 = vunpack.c.l.b16 %v261
      %v324 = vunpack.c.l.b16 %v262
      %v325 = vunpack.c.l.b16 %v263
      %v326 = vunpack.c.l.b16 %v264
      %v327 = vunpack.c.l.b16 %v265
      %v328 = vunpack.c.l.b16 %v266
      %v329 = vunpack.c.l.b16 %v287
      %v330 = vpack.c.b16 %v320, %v319
      %v331 = vpack.c.b16 %v322, %v321
      %v332 = vpack.c.b16 %v324, %v323
      %v333 = vpack.c.b16 %v326, %v325
      %v334 = vpack.c.b16 %v328, %v327
      %v335 = vpack.c.b16 %v329, %v329
      %vm336 = vsmask.f32 7424
      %v338 = vshrl.u32 %v330, 16
      %v340 = vshll.u32 %v330, 16
      %v342 = vrot.slane %v340, 1
      %v343 = vor.u32 %v338, %v342
      %v345 = vshll.u32 %v331, 16
      %v347 = vrot.slane %v345, 1
      %v348 = vsel %vm336, %v343, %v347
      %v349 = vshrl.u32 %v331, 16
      %v351 = vor.u32 %v349, %v347
      %v353 = vshll.u32 %v332, 16
      %v355 = vrot.slane %v353, 1
      %v356 = vsel %vm336, %v351, %v355
      %v357 = vshrl.u32 %v332, 16
      %v359 = vor.u32 %v357, %v355
      %v361 = vshll.u32 %v333, 16
      %v363 = vrot.slane %v361, 1
      %v364 = vsel %vm336, %v359, %v363
      %v365 = vshrl.u32 %v333, 16
      %v367 = vor.u32 %v365, %v363
      %v369 = vshll.u32 %v334, 16
      %v371 = vrot.slane %v369, 1
      %v372 = vsel %vm336, %v367, %v371
      %v373 = vshrl.u32 %v334, 16
      %v375 = vor.u32 %v373, %v371
      %v377 = vshll.u32 %v335, 16
      %v379 = vrot.slane %v377, 1
      %v380 = vsel %vm336, %v375, %v379
      %v402 = vunpack.c.l.b16 %v292
      %v403 = vunpack.c.l.b16 %v293
      %v404 = vunpack.c.l.b16 %v294
      %v405 = vunpack.c.l.b16 %v295
      %v406 = vunpack.c.l.b16 %v296
      %v407 = vunpack.c.l.b16 %v297
      %v408 = vunpack.c.l.b16 %v298
      %v409 = vunpack.c.l.b16 %v299
      %v410 = vunpack.c.l.b16 %v300
      %v411 = vunpack.c.l.b16 %v301
      %v412 = vunpack.c.l.b16 %v302
      %v413 = vunpack.c.l.b16 %v303
      %v414 = vunpack.c.l.b16 %v304
      %v415 = vunpack.c.l.b16 %v305
      %v416 = vunpack.c.l.b16 %v306
      %v417 = vunpack.c.l.b16 %v307
      %v418 = vpack.c.b16 %v403, %v402
      %v419 = vpack.c.b16 %v405, %v404
      %v420 = vpack.c.b16 %v407, %v406
      %v421 = vpack.c.b16 %v409, %v408
      %v422 = vpack.c.b16 %v411, %v410
      %v423 = vpack.c.b16 %v413, %v412
      %v424 = vpack.c.b16 %v415, %v414
      %v425 = vpack.c.b16 %v417, %v416
      %434 = vmatprep.subr.bf16.mxu0 0
      %435 = vmatpush1.bf16.msra.mxu0 %v425
      %436 = vmatprep.subr.bf16.mxu0 0
      %437 = vmatpush1.bf16.msra.mxu0 %v424
      %438 = vmatprep.subr.bf16.mxu0 0
      %439 = vmatpush1.bf16.msra.mxu0 %v423
      %440 = vmatprep.subr.bf16.mxu0 0
      %441 = vmatpush1.bf16.msra.mxu0 %v422
      %442 = vmatprep.subr.bf16.mxu0 0
      %443 = vmatpush1.bf16.msra.mxu0 %v421
      %444 = vmatprep.subr.bf16.mxu0 0
      %445 = vmatpush1.bf16.msra.mxu0 %v420
      %446 = vmatprep.subr.bf16.mxu0 0
      %447 = vmatpush1.bf16.msra.mxu0 %v419
      %448 = vmatprep.subr.bf16.mxu0 0
      %449 = vmatpush1.bf16.msra.mxu0 %v418
      %450 = vmatprep.subr.bf16.mxu0 0
      %451 = vmatpush2.bf16.msra.mxu0 0
      %452 = vmatprep.subr.bf16.mxu0 0
      %453 = vmatpush2.bf16.msra.mxu0 0
      %454 = vmatprep.subr.bf16.mxu0 0
      %455 = vmatpush2.bf16.msra.mxu0 0
      %456 = vmatprep.subr.bf16.mxu0 0
      %457 = vmatpush2.bf16.msra.mxu0 0
      %458 = vmatprep.subr.bf16.mxu0 0
      %459 = vmatpush2.bf16.msra.mxu0 0
      %460 = vmatprep.subr.bf16.mxu0 0
      %461 = vmatpush2.bf16.msra.mxu0 0
      %462 = vmatprep.subr.bf16.mxu0 0
      %463 = vmatpush2.bf16.msra.mxu0 0
      %464 = vmatprep.subr.bf16.mxu0 0
      %465 = vmatpush2.bf16.msra.mxu0 0
      %466 = vmatprep.mubr.bf16.mxu0 0
      %467 = vmatmul.mubr.bf16.gmra.mxu0 %v348
      %v468 = vpop.f32.mrf.mxu0
      %v469 = vadd.f32 0.0, %v468
      %v470 = vpop.f32.mrf.mxu0
      %v471 = vpop.f32.mrf.mxu0
      %v472 = vadd.f32 0.0, %v471
      %v473 = vpop.f32.mrf.mxu0
      %474 = vmatprep.mubr.bf16.mxu0 0
      %475 = vmatmul.mubr.bf16.gmra.mxu0 %v356
      %v476 = vpop.f32.mrf.mxu0
      %v477 = vadd.f32 0.0, %v476
      %v478 = vpop.f32.mrf.mxu0
      %v479 = vpop.f32.mrf.mxu0
      %v480 = vadd.f32 0.0, %v479
      %v481 = vpop.f32.mrf.mxu0
      %482 = vmatprep.mubr.bf16.mxu0 0
      %483 = vmatmul.mubr.bf16.gmra.mxu0 %v364
      %v484 = vpop.f32.mrf.mxu0
      %v485 = vadd.f32 0.0, %v484
      %v486 = vpop.f32.mrf.mxu0
      %v487 = vpop.f32.mrf.mxu0
      %v488 = vadd.f32 0.0, %v487
      %v489 = vpop.f32.mrf.mxu0
      %490 = vmatprep.mubr.bf16.mxu0 0
      %491 = vmatmul.mubr.bf16.gmra.mxu0 %v372
      %v492 = vpop.f32.mrf.mxu0
      %v493 = vadd.f32 0.0, %v492
      %v494 = vpop.f32.mrf.mxu0
      %v495 = vpop.f32.mrf.mxu0
      %v496 = vadd.f32 0.0, %v495
      %v497 = vpop.f32.mrf.mxu0
      %498 = vmatprep.mubr.bf16.mxu0 0
      %499 = vmatmul.mubr.bf16.gmra.mxu0 %v380
      %v500 = vpop.f32.mrf.mxu0
      %v501 = vadd.f32 0.0, %v500
      %v502 = vpop.f32.mrf.mxu0
      %v503 = vpop.f32.mrf.mxu0
      %v504 = vadd.f32 0.0, %v503
      %v505 = vpop.f32.mrf.mxu0
      %506 = vdwg.mxu0
      %v528 = vunpack.c.l.b16 %v271
      %v529 = vunpack.c.l.b16 %v272
      %v530 = vunpack.c.l.b16 %v273
      %v531 = vunpack.c.l.b16 %v274
      %v532 = vunpack.c.l.b16 %v275
      %v533 = vunpack.c.l.b16 %v276
      %v534 = vunpack.c.l.b16 %v277
      %v535 = vunpack.c.l.b16 %v278
      %v536 = vunpack.c.l.b16 %v279
      %v537 = vunpack.c.l.b16 %v280
      %v538 = vunpack.c.l.b16 %v281
      %v539 = vunpack.c.l.b16 %v282
      %v540 = vunpack.c.l.b16 %v283
      %v541 = vunpack.c.l.b16 %v284
      %v542 = vunpack.c.l.b16 %v285
      %v543 = vunpack.c.l.b16 %v286
      %v544 = vpack.c.b16 %v529, %v528
      %v545 = vpack.c.b16 %v531, %v530
      %v546 = vpack.c.b16 %v533, %v532
      %v547 = vpack.c.b16 %v535, %v534
      %v548 = vpack.c.b16 %v537, %v536
      %v549 = vpack.c.b16 %v539, %v538
      %v550 = vpack.c.b16 %v541, %v540
      %v551 = vpack.c.b16 %v543, %v542
      %560 = vmatprep.subr.bf16.mxu0 0
      %561 = vmatpush1.bf16.msra.mxu0 %v551
      %562 = vmatprep.subr.bf16.mxu0 0
      %563 = vmatpush1.bf16.msra.mxu0 %v550
      %564 = vmatprep.subr.bf16.mxu0 0
      %565 = vmatpush1.bf16.msra.mxu0 %v549
      %566 = vmatprep.subr.bf16.mxu0 0
      %567 = vmatpush1.bf16.msra.mxu0 %v548
      %568 = vmatprep.subr.bf16.mxu0 0
      %569 = vmatpush1.bf16.msra.mxu0 %v547
      %570 = vmatprep.subr.bf16.mxu0 0
      %571 = vmatpush1.bf16.msra.mxu0 %v546
      %572 = vmatprep.subr.bf16.mxu0 0
      %573 = vmatpush1.bf16.msra.mxu0 %v545
      %574 = vmatprep.subr.bf16.mxu0 0
      %575 = vmatpush1.bf16.msra.mxu0 %v544
      %576 = vmatprep.subr.bf16.mxu0 0
      %577 = vmatpush2.bf16.msra.mxu0 0
      %578 = vmatprep.subr.bf16.mxu0 0
      %579 = vmatpush2.bf16.msra.mxu0 0
      %580 = vmatprep.subr.bf16.mxu0 0
      %581 = vmatpush2.bf16.msra.mxu0 0
      %582 = vmatprep.subr.bf16.mxu0 0
      %583 = vmatpush2.bf16.msra.mxu0 0
      %584 = vmatprep.subr.bf16.mxu0 0
      %585 = vmatpush2.bf16.msra.mxu0 0
      %586 = vmatprep.subr.bf16.mxu0 0
      %587 = vmatpush2.bf16.msra.mxu0 0
      %588 = vmatprep.subr.bf16.mxu0 0
      %589 = vmatpush2.bf16.msra.mxu0 0
      %590 = vmatprep.subr.bf16.mxu0 0
      %591 = vmatpush2.bf16.msra.mxu0 0
      %592 = vmatprep.mubr.bf16.mxu0 0
      %593 = vmatmul.mubr.bf16.gmra.mxu0 %v330
      %v594 = vpop.f32.mrf.mxu0
      %v595 = vadd.f32 %v469, %v594
      %v596 = vpop.f32.mrf.mxu0
      %v597 = vpop.f32.mrf.mxu0
      %v598 = vadd.f32 %v472, %v597
      %v599 = vpop.f32.mrf.mxu0
      %600 = vmatprep.mubr.bf16.mxu0 0
      %601 = vmatmul.mubr.bf16.gmra.mxu0 %v331
      %v602 = vpop.f32.mrf.mxu0
      %v603 = vadd.f32 %v477, %v602
      %v604 = vpop.f32.mrf.mxu0
      %v605 = vpop.f32.mrf.mxu0
      %v606 = vadd.f32 %v480, %v605
      %v607 = vpop.f32.mrf.mxu0
      %608 = vmatprep.mubr.bf16.mxu0 0
      %609 = vmatmul.mubr.bf16.gmra.mxu0 %v332
      %v610 = vpop.f32.mrf.mxu0
      %v611 = vadd.f32 %v485, %v610
      %v612 = vpop.f32.mrf.mxu0
      %v613 = vpop.f32.mrf.mxu0
      %v614 = vadd.f32 %v488, %v613
      %v615 = vpop.f32.mrf.mxu0
      %616 = vmatprep.mubr.bf16.mxu0 0
      %617 = vmatmul.mubr.bf16.gmra.mxu0 %v333
      %v618 = vpop.f32.mrf.mxu0
      %v619 = vadd.f32 %v493, %v618
      %v620 = vpop.f32.mrf.mxu0
      %v621 = vpop.f32.mrf.mxu0
      %v622 = vadd.f32 %v496, %v621
      %v623 = vpop.f32.mrf.mxu0
      %624 = vmatprep.mubr.bf16.mxu0 0
      %625 = vmatmul.mubr.bf16.gmra.mxu0 %v334
      %v626 = vpop.f32.mrf.mxu0
      %v627 = vadd.f32 %v501, %v626
      %v628 = vpop.f32.mrf.mxu0
      %v629 = vpop.f32.mrf.mxu0
      %v630 = vadd.f32 %v504, %v629
      %v631 = vpop.f32.mrf.mxu0
      %632 = vdwg.mxu0
      %v633 = vld [vmem:[%s223] sm:$0xe]
      %s634 = sadd.s32 %s267, 2
      %s635 = smul.u32 %s634, 16
      %s636 = smul.addr %s635, 4
      %s637 = scalar_lea.vmem %s1, %s636
      %v638 = vld [vmem:[%s637] sm:$0xf]
      %v639 = vld [vmem:[%s637 + $0x4] sm:$0xf]
      %v640 = vld [vmem:[%s637 + $0x8] sm:$0xf]
      %v641 = vld [vmem:[%s637 + $0xc] sm:$0xf]
      %v642 = vld [vmem:[%s637 + $0x10] sm:$0xf]
      %v643 = vld [vmem:[%s637 + $0x14] sm:$0xf]
      %v644 = vld [vmem:[%s637 + $0x18] sm:$0xf]
      %v645 = vld [vmem:[%s637 + $0x1c] sm:$0xf]
      %v646 = vld [vmem:[%s637 + $0x20] sm:$0xf]
      %v647 = vld [vmem:[%s637 + $0x24] sm:$0xf]
      %v648 = vld [vmem:[%s637 + $0x28] sm:$0xf]
      %v649 = vld [vmem:[%s637 + $0x2c] sm:$0xf]
      %v650 = vld [vmem:[%s637 + $0x30] sm:$0xf]
      %v651 = vld [vmem:[%s637 + $0x34] sm:$0xf]
      %v652 = vld [vmem:[%s637 + $0x38] sm:$0xf]
      %v653 = vld [vmem:[%s637 + $0x3c] sm:$0xf]
      %v655 = vunpack.c.l.b16 %v633
      %v656 = vpack.c.b16 %v320, %v655
      %vm657 = vcmask 1046528
      %v658 = vrot.slane %v656, 1
      %v659 = vrot.slane %v331, 1
      %v660 = vsel %vm657, %v658, %v659
      %v661 = vrot.slane %v332, 1
      %v662 = vsel %vm657, %v659, %v661
      %v663 = vrot.slane %v333, 1
      %v664 = vsel %vm657, %v661, %v663
      %v665 = vrot.slane %v334, 1
      %v666 = vsel %vm657, %v663, %v665
      %v667 = vrot.slane %v335, 1
      %v668 = vsel %vm657, %v665, %v667
      %v690 = vunpack.c.l.b16 %v638
      %v691 = vunpack.c.l.b16 %v639
      %v692 = vunpack.c.l.b16 %v640
      %v693 = vunpack.c.l.b16 %v641
      %v694 = vunpack.c.l.b16 %v642
      %v695 = vunpack.c.l.b16 %v643
      %v696 = vunpack.c.l.b16 %v644
      %v697 = vunpack.c.l.b16 %v645
      %v698 = vunpack.c.l.b16 %v646
      %v699 = vunpack.c.l.b16 %v647
      %v700 = vunpack.c.l.b16 %v648
      %v701 = vunpack.c.l.b16 %v649
      %v702 = vunpack.c.l.b16 %v650
      %v703 = vunpack.c.l.b16 %v651
      %v704 = vunpack.c.l.b16 %v652
      %v705 = vunpack.c.l.b16 %v653
      %v706 = vpack.c.b16 %v691, %v690
      %v707 = vpack.c.b16 %v693, %v692
      %v708 = vpack.c.b16 %v695, %v694
      %v709 = vpack.c.b16 %v697, %v696
      %v710 = vpack.c.b16 %v699, %v698
      %v711 = vpack.c.b16 %v701, %v700
      %v712 = vpack.c.b16 %v703, %v702
      %v713 = vpack.c.b16 %v705, %v704
      %722 = vmatprep.subr.bf16.mxu0 0
      %723 = vmatpush1.bf16.msra.mxu0 %v713
      %724 = vmatprep.subr.bf16.mxu0 0
      %725 = vmatpush1.bf16.msra.mxu0 %v712
      %726 = vmatprep.subr.bf16.mxu0 0
      %727 = vmatpush1.bf16.msra.mxu0 %v711
      %728 = vmatprep.subr.bf16.mxu0 0
      %729 = vmatpush1.bf16.msra.mxu0 %v710
      %730 = vmatprep.subr.bf16.mxu0 0
      %731 = vmatpush1.bf16.msra.mxu0 %v709
      %732 = vmatprep.subr.bf16.mxu0 0
      %733 = vmatpush1.bf16.msra.mxu0 %v708
      %734 = vmatprep.subr.bf16.mxu0 0
      %735 = vmatpush1.bf16.msra.mxu0 %v707
      %736 = vmatprep.subr.bf16.mxu0 0
      %737 = vmatpush1.bf16.msra.mxu0 %v706
      %738 = vmatprep.subr.bf16.mxu0 0
      %739 = vmatpush2.bf16.msra.mxu0 0
      %740 = vmatprep.subr.bf16.mxu0 0
      %741 = vmatpush2.bf16.msra.mxu0 0
      %742 = vmatprep.subr.bf16.mxu0 0
      %743 = vmatpush2.bf16.msra.mxu0 0
      %744 = vmatprep.subr.bf16.mxu0 0
      %745 = vmatpush2.bf16.msra.mxu0 0
      %746 = vmatprep.subr.bf16.mxu0 0
      %747 = vmatpush2.bf16.msra.mxu0 0
      %748 = vmatprep.subr.bf16.mxu0 0
      %749 = vmatpush2.bf16.msra.mxu0 0
      %750 = vmatprep.subr.bf16.mxu0 0
      %751 = vmatpush2.bf16.msra.mxu0 0
      %752 = vmatprep.subr.bf16.mxu0 0
      %753 = vmatpush2.bf16.msra.mxu0 0
      %754 = vmatprep.mubr.bf16.mxu0 0
      %755 = vmatmul.mubr.bf16.gmra.mxu0 %v660
      %v756 = vpop.f32.mrf.mxu0
      %v757 = vadd.f32 0.0, %v756
      %v758 = vpop.f32.mrf.mxu0
      %v759 = vpop.f32.mrf.mxu0
      %v760 = vadd.f32 0.0, %v759
      %v761 = vpop.f32.mrf.mxu0
      %762 = vmatprep.mubr.bf16.mxu0 0
      %763 = vmatmul.mubr.bf16.gmra.mxu0 %v662
      %v764 = vpop.f32.mrf.mxu0
      %v765 = vadd.f32 0.0, %v764
      %v766 = vpop.f32.mrf.mxu0
      %v767 = vpop.f32.mrf.mxu0
      %v768 = vadd.f32 0.0, %v767
      %v769 = vpop.f32.mrf.mxu0
      %770 = vmatprep.mubr.bf16.mxu0 0
      %771 = vmatmul.mubr.bf16.gmra.mxu0 %v664
      %v772 = vpop.f32.mrf.mxu0
      %v773 = vadd.f32 0.0, %v772
      %v774 = vpop.f32.mrf.mxu0
      %v775 = vpop.f32.mrf.mxu0
      %v776 = vadd.f32 0.0, %v775
      %v777 = vpop.f32.mrf.mxu0
      %778 = vmatprep.mubr.bf16.mxu0 0
      %779 = vmatmul.mubr.bf16.gmra.mxu0 %v666
      %v780 = vpop.f32.mrf.mxu0
      %v781 = vadd.f32 0.0, %v780
      %v782 = vpop.f32.mrf.mxu0
      %v783 = vpop.f32.mrf.mxu0
      %v784 = vadd.f32 0.0, %v783
      %v785 = vpop.f32.mrf.mxu0
      %786 = vmatprep.mubr.bf16.mxu0 0
      %787 = vmatmul.mubr.bf16.gmra.mxu0 %v668
      %v788 = vpop.f32.mrf.mxu0
      %v789 = vadd.f32 0.0, %v788
      %v790 = vpop.f32.mrf.mxu0
      %v791 = vpop.f32.mrf.mxu0
      %v792 = vadd.f32 0.0, %v791
      %v793 = vpop.f32.mrf.mxu0
      %794 = vdwg.mxu0
      %v795 = vadd.f32 %v595, %v757
      %v796 = vadd.f32 %v598, %v760
      %v797 = vadd.f32 %v603, %v765
      %v798 = vadd.f32 %v606, %v768
      %v799 = vadd.f32 %v611, %v773
      %v800 = vadd.f32 %v614, %v776
      %v801 = vadd.f32 %v619, %v781
      %v802 = vadd.f32 %v622, %v784
      %v803 = vadd.f32 %v627, %v789
      %v804 = vadd.f32 %v630, %v792
      %v805 = vld [vmem:[#allocation2] sm:$0xff]
      %v806 = vld [vmem:[#allocation2 + $0x8] sm:$0xff]
      %v807 = vld [vmem:[#allocation2 + $0x10] sm:$0xff]
      %v808 = vld [vmem:[#allocation2 + $0x18] sm:$0xff]
      %v809 = vld [vmem:[#allocation2 + $0x20] sm:$0xff]
      %v810 = vld [vmem:[#allocation2 + $0x28] sm:$0xff]
      %v811 = vld [vmem:[#allocation2 + $0x30] sm:$0xff]
      %v812 = vld [vmem:[#allocation2 + $0x38] sm:$0xff]
      %v813 = vld [vmem:[#allocation2 + $0x40] sm:$0xff]
      %v814 = vld [vmem:[#allocation2 + $0x48] sm:$0xff]
      %v815 = vadd.f32 %v805, %v795
      %v816 = vadd.f32 %v806, %v796
      %v817 = vadd.f32 %v807, %v797
      %v818 = vadd.f32 %v808, %v798
      %v819 = vadd.f32 %v809, %v799
      %v820 = vadd.f32 %v810, %v800
      %v821 = vadd.f32 %v811, %v801
      %v822 = vadd.f32 %v812, %v802
      %v823 = vadd.f32 %v813, %v803
      %v824 = vadd.f32 %v814, %v804
      %825 = vst [vmem:[#allocation2] sm:$0xff] %v815
      %826 = vst [vmem:[#allocation2 + $0x8] sm:$0xff] %v816
      %827 = vst [vmem:[#allocation2 + $0x10] sm:$0xff] %v817
      %828 = vst [vmem:[#allocation2 + $0x18] sm:$0xff] %v818
      %829 = vst [vmem:[#allocation2 + $0x20] sm:$0xff] %v819
      %830 = vst [vmem:[#allocation2 + $0x28] sm:$0xff] %v820
      %831 = vst [vmem:[#allocation2 + $0x30] sm:$0xff] %v821
      %832 = vst [vmem:[#allocation2 + $0x38] sm:$0xff] %v822
      %833 = vst [vmem:[#allocation2 + $0x40] sm:$0xff] %v823
      %834 = vst [vmem:[#allocation2 + $0x48] sm:$0xff] %v824
      %p835 = scmp.eq.s32.totalorder %s22, 2
      // Predicated region
      $region33: #{_lambda_.8} parent=27 // pred_check
        %p836 = pneg %p835
      $region34: #{_lambda_.8} parent=27 // pred_check_branch
        %838 = sbr.rel (%p836) target = $region36
      $region35: #{_lambda_.8} parent=27 // pred_region
        %v839 = vld [vmem:[#allocation2] sm:$0xff]
        %v840 = vld [vmem:[#allocation2 + $0x8] sm:$0xff]
        %v841 = vld [vmem:[#allocation2 + $0x10] sm:$0xff]
        %v842 = vld [vmem:[#allocation2 + $0x18] sm:$0xff]
        %v843 = vld [vmem:[#allocation2 + $0x20] sm:$0xff]
        %v844 = vld [vmem:[#allocation2 + $0x28] sm:$0xff]
        %v845 = vld [vmem:[#allocation2 + $0x30] sm:$0xff]
        %v846 = vld [vmem:[#allocation2 + $0x38] sm:$0xff]
        %v847 = vld [vmem:[#allocation2 + $0x40] sm:$0xff]
        %v848 = vld [vmem:[#allocation2 + $0x48] sm:$0xff]
        %vm849 = vcmp.ge.f32.partialorder %v839, 0.0
        %vm850 = vcmp.ge.f32.partialorder %v840, 0.0
        %vm851 = vcmp.ge.f32.partialorder %v841, 0.0
        %vm852 = vcmp.ge.f32.partialorder %v842, 0.0
        %vm853 = vcmp.ge.f32.partialorder %v843, 0.0
        %vm854 = vcmp.ge.f32.partialorder %v844, 0.0
        %vm855 = vcmp.ge.f32.partialorder %v845, 0.0
        %vm856 = vcmp.ge.f32.partialorder %v846, 0.0
        %vm857 = vcmp.ge.f32.partialorder %v847, 0.0
        %vm858 = vcmp.ge.f32.partialorder %v848, 0.0
        %v859 = vmul.f32 %v839, 0.01
        %v860 = vmul.f32 %v840, 0.01
        %v861 = vmul.f32 %v841, 0.01
        %v862 = vmul.f32 %v842, 0.01
        %v863 = vmul.f32 %v843, 0.01
        %v864 = vmul.f32 %v844, 0.01
        %v865 = vmul.f32 %v845, 0.01
        %v866 = vmul.f32 %v846, 0.01
        %v867 = vmul.f32 %v847, 0.01
        %v868 = vmul.f32 %v848, 0.01
        %v869 = vsel %vm849, %v839, %v859
        %v870 = vsel %vm850, %v840, %v860
        %v871 = vsel %vm851, %v841, %v861
        %v872 = vsel %vm852, %v842, %v862
        %v873 = vsel %vm853, %v843, %v863
        %v874 = vsel %vm854, %v844, %v864
        %v875 = vsel %vm855, %v845, %v865
        %v876 = vsel %vm856, %v846, %v866
        %v877 = vsel %vm857, %v847, %v867
        %v878 = vsel %vm858, %v848, %v868
        %879 = vst [vmem:[%s233] sm:$0xff] %v869
        %880 = vst [vmem:[%s233 + $0x8] sm:$0xff] %v870
        %881 = vst [vmem:[%s233 + $0x10] sm:$0xff] %v871
        %882 = vst [vmem:[%s233 + $0x18] sm:$0xff] %v872
        %883 = vst [vmem:[%s233 + $0x20] sm:$0xff] %v873
        %884 = vst [vmem:[%s233 + $0x28] sm:$0xff] %v874
        %885 = vst [vmem:[%s233 + $0x30] sm:$0xff] %v875
        %886 = vst [vmem:[%s233 + $0x38] sm:$0xff] %v876
        %887 = vst [vmem:[%s233 + $0x40] sm:$0xff] %v877
        %888 = vst [vmem:[%s233 + $0x48] sm:$0xff] %v878
        %v889 = vlaneseq
        %v890 = vshrl.u32 %v889, 7
        %v891 = vadd.s32 %v890, 8
        %v892 = vadd.s32 %v890, 16
        %v893 = vadd.s32 %v890, 24
        %v894 = vadd.s32 %v890, 32
        %v895 = vadd.s32 %v890, 40
        %v896 = vadd.s32 %v890, 48
        %v897 = vadd.s32 %v890, 56
        %v898 = vadd.s32 %v890, 64
        %v899 = vadd.s32 %v890, 72
        %vm900 = vcmp.lt.s32.totalorder %v890, 0
        %v901 = vsub.s32 0, %v890
        %v902 = vsel %vm900, %v901, %v890
        %v903 = vmul.u32.u64.compose %v902, 3435973837
        %v904 = vextract.low.u32 %v903
        %v905 = vextract.high.u32 %v903
        %v906 = vshrl.u32 %v905, 3
        %v907 = vmul.u32 %v906, 10
        %v908 = vsub.s32 %v902, %v907
        %v909 = vsub.s32 0, %v908
        %v910 = vsel %vm900, %v909, %v908
        %vm911 = vcmp.lt.s32.totalorder %v891, 0
        %v912 = vsub.s32 0, %v891
        %v913 = vsel %vm911, %v912, %v891
        %v914 = vmul.u32.u64.compose %v913, 3435973837
        %v915 = vextract.low.u32 %v914
        %v916 = vextract.high.u32 %v914
        %v917 = vshrl.u32 %v916, 3
        %v918 = vmul.u32 %v917, 10
        %v919 = vsub.s32 %v913, %v918
        %v920 = vsub.s32 0, %v919
        %v921 = vsel %vm911, %v920, %v919
        %vm922 = vcmp.lt.s32.totalorder %v892, 0
        %v923 = vsub.s32 0, %v892
        %v924 = vsel %vm922, %v923, %v892
        %v925 = vmul.u32.u64.compose %v924, 3435973837
        %v926 = vextract.low.u32 %v925
        %v927 = vextract.high.u32 %v925
        %v928 = vshrl.u32 %v927, 3
        %v929 = vmul.u32 %v928, 10
        %v930 = vsub.s32 %v924, %v929
        %v931 = vsub.s32 0, %v930
        %v932 = vsel %vm922, %v931, %v930
        %vm933 = vcmp.lt.s32.totalorder %v893, 0
        %v934 = vsub.s32 0, %v893
        %v935 = vsel %vm933, %v934, %v893
        %v936 = vmul.u32.u64.compose %v935, 3435973837
        %v937 = vextract.low.u32 %v936
        %v938 = vextract.high.u32 %v936
        %v939 = vshrl.u32 %v938, 3
        %v940 = vmul.u32 %v939, 10
        %v941 = vsub.s32 %v935, %v940
        %v942 = vsub.s32 0, %v941
        %v943 = vsel %vm933, %v942, %v941
        %vm944 = vcmp.lt.s32.totalorder %v894, 0
        %v945 = vsub.s32 0, %v894
        %v946 = vsel %vm944, %v945, %v894
        %v947 = vmul.u32.u64.compose %v946, 3435973837
        %v948 = vextract.low.u32 %v947
        %v949 = vextract.high.u32 %v947
        %v950 = vshrl.u32 %v949, 3
        %v951 = vmul.u32 %v950, 10
        %v952 = vsub.s32 %v946, %v951
        %v953 = vsub.s32 0, %v952
        %v954 = vsel %vm944, %v953, %v952
        %vm955 = vcmp.lt.s32.totalorder %v895, 0
        %v956 = vsub.s32 0, %v895
        %v957 = vsel %vm955, %v956, %v895
        %v958 = vmul.u32.u64.compose %v957, 3435973837
        %v959 = vextract.low.u32 %v958
        %v960 = vextract.high.u32 %v958
        %v961 = vshrl.u32 %v960, 3
        %v962 = vmul.u32 %v961, 10
        %v963 = vsub.s32 %v957, %v962
        %v964 = vsub.s32 0, %v963
        %v965 = vsel %vm955, %v964, %v963
        %vm966 = vcmp.lt.s32.totalorder %v896, 0
        %v967 = vsub.s32 0, %v896
        %v968 = vsel %vm966, %v967, %v896
        %v969 = vmul.u32.u64.compose %v968, 3435973837
        %v970 = vextract.low.u32 %v969
        %v971 = vextract.high.u32 %v969
        %v972 = vshrl.u32 %v971, 3
        %v973 = vmul.u32 %v972, 10
        %v974 = vsub.s32 %v968, %v973
        %v975 = vsub.s32 0, %v974
        %v976 = vsel %vm966, %v975, %v974
        %vm977 = vcmp.lt.s32.totalorder %v897, 0
        %v978 = vsub.s32 0, %v897
        %v979 = vsel %vm977, %v978, %v897
        %v980 = vmul.u32.u64.compose %v979, 3435973837
        %v981 = vextract.low.u32 %v980
        %v982 = vextract.high.u32 %v980
        %v983 = vshrl.u32 %v982, 3
        %v984 = vmul.u32 %v983, 10
        %v985 = vsub.s32 %v979, %v984
        %v986 = vsub.s32 0, %v985
        %v987 = vsel %vm977, %v986, %v985
        %vm988 = vcmp.lt.s32.totalorder %v898, 0
        %v989 = vsub.s32 0, %v898
        %v990 = vsel %vm988, %v989, %v898
        %v991 = vmul.u32.u64.compose %v990, 3435973837
        %v992 = vextract.low.u32 %v991
        %v993 = vextract.high.u32 %v991
        %v994 = vshrl.u32 %v993, 3
        %v995 = vmul.u32 %v994, 10
        %v996 = vsub.s32 %v990, %v995
        %v997 = vsub.s32 0, %v996
        %v998 = vsel %vm988, %v997, %v996
        %vm999 = vcmp.lt.s32.totalorder %v899, 0
        %v1000 = vsub.s32 0, %v899
        %v1001 = vsel %vm999, %v1000, %v899
        %v1002 = vmul.u32.u64.compose %v1001, 3435973837
        %v1003 = vextract.low.u32 %v1002
        %v1004 = vextract.high.u32 %v1002
        %v1005 = vshrl.u32 %v1004, 3
        %v1006 = vmul.u32 %v1005, 10
        %v1007 = vsub.s32 %v1001, %v1006
        %v1008 = vsub.s32 0, %v1007
        %v1009 = vsel %vm999, %v1008, %v1007
        %vm1010 = vcmp.ne.s32.totalorder %v910, 0
        %vm1011 = vcmp.ne.s32.totalorder %v921, 0
        %vm1012 = vcmp.ne.s32.totalorder %v932, 0
        %vm1013 = vcmp.ne.s32.totalorder %v943, 0
        %vm1014 = vcmp.ne.s32.totalorder %v954, 0
        %vm1015 = vcmp.ne.s32.totalorder %v965, 0
        %vm1016 = vcmp.ne.s32.totalorder %v976, 0
        %vm1017 = vcmp.ne.s32.totalorder %v987, 0
        %vm1018 = vcmp.ne.s32.totalorder %v998, 0
        %vm1019 = vcmp.ne.s32.totalorder %v1009, 0
        %vm1020 = vcmp.lt.s32.totalorder %v910, 0
        %vm1021 = vcmp.lt.s32.totalorder %v921, 0
        %vm1022 = vcmp.lt.s32.totalorder %v932, 0
        %vm1023 = vcmp.lt.s32.totalorder %v943, 0
        %vm1024 = vcmp.lt.s32.totalorder %v954, 0
        %vm1025 = vcmp.lt.s32.totalorder %v965, 0
        %vm1026 = vcmp.lt.s32.totalorder %v976, 0
        %vm1027 = vcmp.lt.s32.totalorder %v987, 0
        %vm1028 = vcmp.lt.s32.totalorder %v998, 0
        %vm1029 = vcmp.lt.s32.totalorder %v1009, 0
        %vm1030 = vmand %vm1020, %vm1010
        %vm1031 = vmand %vm1021, %vm1011
        %vm1032 = vmand %vm1022, %vm1012
        %vm1033 = vmand %vm1023, %vm1013
        %vm1034 = vmand %vm1024, %vm1014
        %vm1035 = vmand %vm1025, %vm1015
        %vm1036 = vmand %vm1026, %vm1016
        %vm1037 = vmand %vm1027, %vm1017
        %vm1038 = vmand %vm1028, %vm1018
        %vm1039 = vmand %vm1029, %vm1019
        %v1040 = vadd.s32 %v910, 10
        %v1041 = vadd.s32 %v921, 10
        %v1042 = vadd.s32 %v932, 10
        %v1043 = vadd.s32 %v943, 10
        %v1044 = vadd.s32 %v954, 10
        %v1045 = vadd.s32 %v965, 10
        %v1046 = vadd.s32 %v976, 10
        %v1047 = vadd.s32 %v987, 10
        %v1048 = vadd.s32 %v998, 10
        %v1049 = vadd.s32 %v1009, 10
        %v1050 = vsel %vm1030, %v1040, %v910
        %v1051 = vsel %vm1031, %v1041, %v921
        %v1052 = vsel %vm1032, %v1042, %v932
        %v1053 = vsel %vm1033, %v1043, %v943
        %v1054 = vsel %vm1034, %v1044, %v954
        %v1055 = vsel %vm1035, %v1045, %v965
        %v1056 = vsel %vm1036, %v1046, %v976
        %v1057 = vsel %vm1037, %v1047, %v987
        %v1058 = vsel %vm1038, %v1048, %v998
        %v1059 = vsel %vm1039, %v1049, %v1009
        %vm1060 = vcmp.lt.s32.totalorder %v1050, 8
        %vm1061 = vcmp.lt.s32.totalorder %v1051, 8
        %vm1062 = vcmp.lt.s32.totalorder %v1052, 8
        %vm1063 = vcmp.lt.s32.totalorder %v1053, 8
        %vm1064 = vcmp.lt.s32.totalorder %v1054, 8
        %vm1065 = vcmp.lt.s32.totalorder %v1055, 8
        %vm1066 = vcmp.lt.s32.totalorder %v1056, 8
        %vm1067 = vcmp.lt.s32.totalorder %v1057, 8
        %vm1068 = vcmp.lt.s32.totalorder %v1058, 8
        %vm1069 = vcmp.lt.s32.totalorder %v1059, 8
        %v1070 = vsel %vm1060, 1, 0
        %v1071 = vsel %vm1061, 1, 0
        %v1072 = vsel %vm1062, 1, 0
        %v1073 = vsel %vm1063, 1, 0
        %v1074 = vsel %vm1064, 1, 0
        %v1075 = vsel %vm1065, 1, 0
        %v1076 = vsel %vm1066, 1, 0
        %v1077 = vsel %vm1067, 1, 0
        %v1078 = vsel %vm1068, 1, 0
        %v1079 = vsel %vm1069, 1, 0
        %vm1080 = vcmp.eq.s32.totalorder %v1070, 1
        %vm1081 = vcmp.eq.s32.totalorder %v1071, 1
        %vm1082 = vcmp.eq.s32.totalorder %v1072, 1
        %vm1083 = vcmp.eq.s32.totalorder %v1073, 1
        %vm1084 = vcmp.eq.s32.totalorder %v1074, 1
        %vm1085 = vcmp.eq.s32.totalorder %v1075, 1
        %vm1086 = vcmp.eq.s32.totalorder %v1076, 1
        %vm1087 = vcmp.eq.s32.totalorder %v1077, 1
        %vm1088 = vcmp.eq.s32.totalorder %v1078, 1
        %vm1089 = vcmp.eq.s32.totalorder %v1079, 1
        %v1090 = vsel %vm1080, %v869, 0.0
        %v1091 = vsel %vm1081, %v870, 0.0
        %v1092 = vsel %vm1082, %v871, 0.0
        %v1093 = vsel %vm1083, %v872, 0.0
        %v1094 = vsel %vm1084, %v873, 0.0
        %v1095 = vsel %vm1085, %v874, 0.0
        %v1096 = vsel %vm1086, %v875, 0.0
        %v1097 = vsel %vm1087, %v876, 0.0
        %v1098 = vsel %vm1088, %v877, 0.0
        %v1099 = vsel %vm1089, %v878, 0.0
        %v1100 = vadd.f32 %v1090, %v1091
        %v1101 = vadd.f32 %v1100, %v1092
        %v1102 = vadd.f32 %v1101, %v1093
        %v1103 = vadd.f32 %v1102, %v1094
        %v1104 = vadd.f32 %v1103, %v1095
        %v1105 = vadd.f32 %v1104, %v1096
        %v1106 = vadd.f32 %v1105, %v1097
        %v1107 = vadd.f32 %v1106, %v1098
        %v1108 = vadd.f32 %v1107, %v1099
        %v1109 = vrot.slane %v1108, 4
        %v1110 = vadd.f32 %v1108, %v1109
        %v1111 = vrot.slane %v1110, 2
        %v1112 = vadd.f32 %v1110, %v1111
        %v1113 = vrot.slane %v1112, 1
        %v1114 = vadd.f32 %v1112, %v1113
        %1115 = vst [vmem:[%s241] sm:$0x1] %v1114
        %v1116 = vmul.f32 %v1090, %v1090
        %v1117 = vmul.f32 %v1091, %v1091
        %v1118 = vmul.f32 %v1092, %v1092
        %v1119 = vmul.f32 %v1093, %v1093
        %v1120 = vmul.f32 %v1094, %v1094
        %v1121 = vmul.f32 %v1095, %v1095
        %v1122 = vmul.f32 %v1096, %v1096
        %v1123 = vmul.f32 %v1097, %v1097
        %v1124 = vmul.f32 %v1098, %v1098
        %v1125 = vmul.f32 %v1099, %v1099
        %v1126 = vadd.f32 %v1116, %v1117
        %v1127 = vadd.f32 %v1126, %v1118
        %v1128 = vadd.f32 %v1127, %v1119
        %v1129 = vadd.f32 %v1128, %v1120
        %v1130 = vadd.f32 %v1129, %v1121
        %v1131 = vadd.f32 %v1130, %v1122
        %v1132 = vadd.f32 %v1131, %v1123
        %v1133 = vadd.f32 %v1132, %v1124
        %v1134 = vadd.f32 %v1133, %v1125
        %v1135 = vrot.slane %v1134, 4
        %v1136 = vadd.f32 %v1134, %v1135
        %v1137 = vrot.slane %v1136, 2
        %v1138 = vadd.f32 %v1136, %v1137
        %v1139 = vrot.slane %v1138, 1
        %v1140 = vadd.f32 %v1138, %v1139
        %1141 = vst [vmem:[%s241 + $0x1] sm:$0x1] %v1140
      $region36: #{_lambda_.8} parent=27 // pred_fallthru
        _
      %p1142 = scmp.lt.s32.totalorder %s20, 1
      %s1143 = scalar_select %p1142, %s20, 1
      %p1144 = scmp.lt.s32.totalorder %s21, 3
      %s1145 = scalar_select %p1144, %s21, 3
      %s1146 = smul.addr %s1145, 10
      %s1147 = smul.addr %s1143, 40
      %s1148 = sadd.s32 %s1146, %s1147
      %s1149 = smul.addr %s1148, 8
      %s1150 = scalar_lea.vmem %s2, %s1149
      %p1151 = scmp.lt.s32.totalorder %s20, 1
      %s1152 = scalar_select %p1151, %s20, 1
      %p1153 = scmp.lt.s32.totalorder %s21, 3
      %s1154 = scalar_select %p1153, %s21, 3
      %s1155 = smul.addr %s1152, 4
      %s1156 = sadd.s32 %s1154, %s1155
      %s1157 = smul.addr %s1156, 2
      %s1158 = scalar_lea.vmem %s3, %s1157
      // Predicated region
      $region37: #{_lambda_.8} parent=27 // pred_check
        %p1159 = pneg %p105
      $region38: #{_lambda_.8} parent=27 // pred_check_branch
        %1161 = sbr.rel (%p1159) target = $region40
      $region39: #{_lambda_.8} parent=27 // pred_region
        _
      $region40: #{_lambda_.8} parent=27 // pred_fallthru
        _
      // Predicated region
      $region41: #{_lambda_.8} parent=27 // pred_check
        %p1162 = pneg %p133
      $region42: #{_lambda_.8} parent=27 // pred_check_branch
        %1164 = sbr.rel (%p1162) target = $region44
      $region43: #{_lambda_.8} parent=27 // pred_region
        _
      $region44: #{_lambda_.8} parent=27 // pred_fallthru
        _
    $region28: #{_lambda_.8} parent=5 // pred_fallthru
      _
    %p1165 = scmp.le.s32.totalorder 2, %s10
    // Predicated region
    $region45: #{_lambda_.8} parent=5 // pred_check
      %p1166 = pneg %p1165
    $region46: #{_lambda_.8} parent=5 // pred_check_branch
      %1168 = sbr.rel (%p1166) target = $region48
    $region47: #{_lambda_.8} parent=5 // pred_region
      %s1169 = ssub.s32 %s10, 2
      // Predicated region
      $region49: #{_lambda_.8} parent=47 // pred_check
        %p1170 = pneg %p111
      $region50: #{_lambda_.8} parent=47 // pred_check_branch
        %1172 = sbr.rel (%p1170) target = $region52
      $region51: #{_lambda_.8} parent=47 // pred_region
        %p1173 = scmp.lt.s32.totalorder %s23, 1
        %s1174 = scalar_select %p1173, %s23, 1
        %p1175 = scmp.lt.s32.totalorder %s24, 3
        %s1176 = scalar_select %p1175, %s24, 3
        %s1177 = smul.addr %s1176, 10
        %s1178 = smul.addr %s1174, 40
        %s1179 = sadd.s32 %s1177, %s1178
        %s1180 = smul.addr %s1179, 8
        %s1181 = scalar_lea.vmem %s2, %s1180
      $region52: #{_lambda_.8} parent=47 // pred_fallthru
        _
      // Predicated region
      $region53: #{_lambda_.8} parent=47 // pred_check
        %p1182 = pneg %p139
      $region54: #{_lambda_.8} parent=47 // pred_check_branch
        %1184 = sbr.rel (%p1182) target = $region56
      $region55: #{_lambda_.8} parent=47 // pred_region
        %p1185 = scmp.lt.s32.totalorder %s23, 1
        %s1186 = scalar_select %p1185, %s23, 1
        %p1187 = scmp.lt.s32.totalorder %s24, 3
        %s1188 = scalar_select %p1187, %s24, 3
        %s1189 = smul.addr %s1186, 4
        %s1190 = sadd.s32 %s1188, %s1189
        %s1191 = smul.addr %s1190, 2
        %s1192 = scalar_lea.vmem %s3, %s1191
      $region56: #{_lambda_.8} parent=47 // pred_fallthru
        _
    $region48: #{_lambda_.8} parent=5 // pred_fallthru
      _
  $region6: #{_lambda_.8} parent=0 // loop_footer
    %s14 = sadd.s32 1, %s10
  $region7: #{_lambda_.8} parent=0 // loop_footer_branch
    %9 = sbr.rel target = $region3
  $region8: #{_lambda_.8} parent=0 // loop_exit
    _

// kernel: _lambda_.9
$region0: #{_lambda_.9}
  #allocation0 [shape = 'u32[]', space=smem, size = 0x4, offset = 0x4, fixed_abs, tag = 'smem constant byte address 0x4 - core index']
  #allocation1 [shape = 'u32[144,128]{1,0:T(1,128)}', space=vmem, size = 0x12000, scoped, tag = 'internal scratch']
  %s0 = inlined_call_operand.vmem [shape: f32[64,10,128], index: 0, kind: input, shape index: {}]
  %s1 = inlined_call_operand.vmem [shape: f32[1,1,128], index: 1, kind: input, shape index: {}]
  %s2 = inlined_call_operand.vmem [shape: f32[1,1,128], index: 2, kind: input, shape index: {}]
  %s3 = inlined_call_operand.vmem [shape: bf16[64,8,128], index: 3, kind: output, shape index: {}]
  %s4 = sld [smem:[#allocation0]]
  $region22: #{_lambda_.9} parent=0
    _
  %s6 = ssub.s32 1, %s4
  %s7 = scalar_select 0, %s6, %s4
  // Predicated region
  $region2: #{_lambda_.9} parent=0 // pred_check
    _
  $region3: #{_lambda_.9} parent=0 // pred_check_branch
    %9 = sbr.rel (0) target = $region5
  $region4: #{_lambda_.9} parent=0 // pred_region
    _
  $region5: #{_lambda_.9} parent=0 // pred_fallthru
    _
  // Predicated region
  $region6: #{_lambda_.9} parent=0 // pred_check
    _
  $region7: #{_lambda_.9} parent=0 // pred_check_branch
    %11 = sbr.rel (0) target = $region9
  $region8: #{_lambda_.9} parent=0 // pred_region
    _
  $region9: #{_lambda_.9} parent=0 // pred_fallthru
    _
  // Predicated region
  $region10: #{_lambda_.9} parent=0 // pred_check
    _
  $region11: #{_lambda_.9} parent=0 // pred_check_branch
    %13 = sbr.rel (0) target = $region13
  $region12: #{_lambda_.9} parent=0 // pred_region
    _
  $region13: #{_lambda_.9} parent=0 // pred_fallthru
    _
  %v14 = vld [vmem:[%s0] sm:$0xff]
  %v15 = vld [vmem:[%s0 + $0x10] sm:$0xff]
  %v16 = vld [vmem:[%s0 + $0x20] sm:$0xff]
  %v17 = vld [vmem:[%s0 + $0x30] sm:$0xff]
  %v18 = vld [vmem:[%s0 + $0x40] sm:$0xff]
  %v19 = vld [vmem:[%s0 + $0x50] sm:$0xff]
  %v20 = vld [vmem:[%s0 + $0x60] sm:$0xff]
  %v21 = vld [vmem:[%s0 + $0x70] sm:$0xff]
  %v22 = vld [vmem:[%s0 + $0x80] sm:$0xff]
  %v23 = vld [vmem:[%s0 + $0x90] sm:$0xff]
  %v24 = vld [vmem:[%s0 + $0xa0] sm:$0xff]
  %v25 = vld [vmem:[%s0 + $0xb0] sm:$0xff]
  %v26 = vld [vmem:[%s0 + $0xc0] sm:$0xff]
  %v27 = vld [vmem:[%s0 + $0xd0] sm:$0xff]
  %v28 = vld [vmem:[%s0 + $0xe0] sm:$0xff]
  %v29 = vld [vmem:[%s0 + $0xf0] sm:$0xff]
  %v30 = vld [vmem:[%s0 + $0x100] sm:$0xff]
  %v31 = vld [vmem:[%s0 + $0x110] sm:$0xff]
  %v32 = vld [vmem:[%s0 + $0x120] sm:$0xff]
  %v33 = vld [vmem:[%s0 + $0x130] sm:$0xff]
  %v34 = vld [vmem:[%s0 + $0x140] sm:$0xff]
  %v35 = vld [vmem:[%s0 + $0x150] sm:$0xff]
  %v36 = vld [vmem:[%s0 + $0x160] sm:$0xff]
  %v37 = vld [vmem:[%s0 + $0x170] sm:$0xff]
  %v38 = vld [vmem:[%s0 + $0x180] sm:$0xff]
  %v39 = vld [vmem:[%s0 + $0x190] sm:$0xff]
  %v40 = vld [vmem:[%s0 + $0x1a0] sm:$0xff]
  %v41 = vld [vmem:[%s0 + $0x1b0] sm:$0xff]
  %v42 = vld [vmem:[%s0 + $0x1c0] sm:$0xff]
  %v43 = vld [vmem:[%s0 + $0x1d0] sm:$0xff]
  %v44 = vld [vmem:[%s0 + $0x1e0] sm:$0xff]
  %v45 = vld [vmem:[%s0 + $0x1f0] sm:$0xff]
  %v46 = vld [vmem:[%s0 + $0x200] sm:$0xff]
  %v47 = vld [vmem:[%s0 + $0x210] sm:$0xff]
  %v48 = vld [vmem:[%s0 + $0x220] sm:$0xff]
  %v49 = vld [vmem:[%s0 + $0x230] sm:$0xff]
  %v50 = vld [vmem:[%s0 + $0x240] sm:$0xff]
  %v51 = vld [vmem:[%s0 + $0x250] sm:$0xff]
  %v52 = vld [vmem:[%s0 + $0x260] sm:$0xff]
  %v53 = vld [vmem:[%s0 + $0x270] sm:$0xff]
  %v54 = vld [vmem:[%s0 + $0x280] sm:$0xff]
  %v55 = vld [vmem:[%s0 + $0x290] sm:$0xff]
  %v56 = vld [vmem:[%s0 + $0x2a0] sm:$0xff]
  %v57 = vld [vmem:[%s0 + $0x2b0] sm:$0xff]
  %v58 = vld [vmem:[%s0 + $0x2c0] sm:$0xff]
  %v59 = vld [vmem:[%s0 + $0x2d0] sm:$0xff]
  %v60 = vld [vmem:[%s0 + $0x2e0] sm:$0xff]
  %v61 = vld [vmem:[%s0 + $0x2f0] sm:$0xff]
  %v62 = vld [vmem:[%s0 + $0x300] sm:$0xff]
  %v63 = vld [vmem:[%s0 + $0x310] sm:$0xff]
  %v64 = vld [vmem:[%s0 + $0x320] sm:$0xff]
  %v65 = vld [vmem:[%s0 + $0x330] sm:$0xff]
  %v66 = vld [vmem:[%s0 + $0x340] sm:$0xff]
  %v67 = vld [vmem:[%s0 + $0x350] sm:$0xff]
  %v68 = vld [vmem:[%s0 + $0x360] sm:$0xff]
  %v69 = vld [vmem:[%s0 + $0x370] sm:$0xff]
  %v70 = vld [vmem:[%s0 + $0x380] sm:$0xff]
  %v71 = vld [vmem:[%s0 + $0x390] sm:$0xff]
  %v72 = vld [vmem:[%s0 + $0x3a0] sm:$0xff]
  %v73 = vld [vmem:[%s0 + $0x3b0] sm:$0xff]
  %v74 = vld [vmem:[%s0 + $0x3c0] sm:$0xff]
  %v75 = vld [vmem:[%s0 + $0x3d0] sm:$0xff]
  %v76 = vld [vmem:[%s0 + $0x3e0] sm:$0xff]
  %v77 = vld [vmem:[%s0 + $0x3f0] sm:$0xff]
  %v78 = vld [vmem:[%s1] sm:$0x1]
  %v80 = vlaneseq
  %v81 = vshrl.u32 %v80, 7
  %v82 = vsub.s32 0, %v81
  %v83 = vrot.slane %v78, %v82
  %v85 = vsub.f32 %v14, %v83
  %v86 = vsub.f32 %v15, %v83
  %v87 = vsub.f32 %v16, %v83
  %v88 = vsub.f32 %v17, %v83
  %v89 = vsub.f32 %v18, %v83
  %v90 = vsub.f32 %v19, %v83
  %v91 = vsub.f32 %v20, %v83
  %v92 = vsub.f32 %v21, %v83
  %v93 = vsub.f32 %v22, %v83
  %v94 = vsub.f32 %v23, %v83
  %v95 = vsub.f32 %v24, %v83
  %v96 = vsub.f32 %v25, %v83
  %v97 = vsub.f32 %v26, %v83
  %v98 = vsub.f32 %v27, %v83
  %v99 = vsub.f32 %v28, %v83
  %v100 = vsub.f32 %v29, %v83
  %v101 = vsub.f32 %v30, %v83
  %v102 = vsub.f32 %v31, %v83
  %v103 = vsub.f32 %v32, %v83
  %v104 = vsub.f32 %v33, %v83
  %v105 = vsub.f32 %v34, %v83
  %v106 = vsub.f32 %v35, %v83
  %v107 = vsub.f32 %v36, %v83
  %v108 = vsub.f32 %v37, %v83
  %v109 = vsub.f32 %v38, %v83
  %v110 = vsub.f32 %v39, %v83
  %v111 = vsub.f32 %v40, %v83
  %v112 = vsub.f32 %v41, %v83
  %v113 = vsub.f32 %v42, %v83
  %v114 = vsub.f32 %v43, %v83
  %v115 = vsub.f32 %v44, %v83
  %v116 = vsub.f32 %v45, %v83
  %v117 = vsub.f32 %v46, %v83
  %v118 = vsub.f32 %v47, %v83
  %v119 = vsub.f32 %v48, %v83
  %v120 = vsub.f32 %v49, %v83
  %v121 = vsub.f32 %v50, %v83
  %v122 = vsub.f32 %v51, %v83
  %v123 = vsub.f32 %v52, %v83
  %v124 = vsub.f32 %v53, %v83
  %v125 = vsub.f32 %v54, %v83
  %v126 = vsub.f32 %v55, %v83
  %v127 = vsub.f32 %v56, %v83
  %v128 = vsub.f32 %v57, %v83
  %v129 = vsub.f32 %v58, %v83
  %v130 = vsub.f32 %v59, %v83
  %v131 = vsub.f32 %v60, %v83
  %v132 = vsub.f32 %v61, %v83
  %v133 = vsub.f32 %v62, %v83
  %v134 = vsub.f32 %v63, %v83
  %v135 = vsub.f32 %v64, %v83
  %v136 = vsub.f32 %v65, %v83
  %v137 = vsub.f32 %v66, %v83
  %v138 = vsub.f32 %v67, %v83
  %v139 = vsub.f32 %v68, %v83
  %v140 = vsub.f32 %v69, %v83
  %v141 = vsub.f32 %v70, %v83
  %v142 = vsub.f32 %v71, %v83
  %v143 = vsub.f32 %v72, %v83
  %v144 = vsub.f32 %v73, %v83
  %v145 = vsub.f32 %v74, %v83
  %v146 = vsub.f32 %v75, %v83
  %v147 = vsub.f32 %v76, %v83
  %v148 = vsub.f32 %v77, %v83
  %v149 = vld [vmem:[%s2] sm:$0x1]
  %v151 = vlaneseq
  %v152 = vshrl.u32 %v151, 7
  %v153 = vsub.s32 0, %v152
  %v154 = vrot.slane %v149, %v153
  %v156 = vmul.f32 %v85, %v154
  %v157 = vmul.f32 %v86, %v154
  %v158 = vmul.f32 %v87, %v154
  %v159 = vmul.f32 %v88, %v154
  %v160 = vmul.f32 %v89, %v154
  %v161 = vmul.f32 %v90, %v154
  %v162 = vmul.f32 %v91, %v154
  %v163 = vmul.f32 %v92, %v154
  %v164 = vmul.f32 %v93, %v154
  %v165 = vmul.f32 %v94, %v154
  %v166 = vmul.f32 %v95, %v154
  %v167 = vmul.f32 %v96, %v154
  %v168 = vmul.f32 %v97, %v154
  %v169 = vmul.f32 %v98, %v154
  %v170 = vmul.f32 %v99, %v154
  %v171 = vmul.f32 %v100, %v154
  %v172 = vmul.f32 %v101, %v154
  %v173 = vmul.f32 %v102, %v154
  %v174 = vmul.f32 %v103, %v154
  %v175 = vmul.f32 %v104, %v154
  %v176 = vmul.f32 %v105, %v154
  %v177 = vmul.f32 %v106, %v154
  %v178 = vmul.f32 %v107, %v154
  %v179 = vmul.f32 %v108, %v154
  %v180 = vmul.f32 %v109, %v154
  %v181 = vmul.f32 %v110, %v154
  %v182 = vmul.f32 %v111, %v154
  %v183 = vmul.f32 %v112, %v154
  %v184 = vmul.f32 %v113, %v154
  %v185 = vmul.f32 %v114, %v154
  %v186 = vmul.f32 %v115, %v154
  %v187 = vmul.f32 %v116, %v154
  %v188 = vmul.f32 %v117, %v154
  %v189 = vmul.f32 %v118, %v154
  %v190 = vmul.f32 %v119, %v154
  %v191 = vmul.f32 %v120, %v154
  %v192 = vmul.f32 %v121, %v154
  %v193 = vmul.f32 %v122, %v154
  %v194 = vmul.f32 %v123, %v154
  %v195 = vmul.f32 %v124, %v154
  %v196 = vmul.f32 %v125, %v154
  %v197 = vmul.f32 %v126, %v154
  %v198 = vmul.f32 %v127, %v154
  %v199 = vmul.f32 %v128, %v154
  %v200 = vmul.f32 %v129, %v154
  %v201 = vmul.f32 %v130, %v154
  %v202 = vmul.f32 %v131, %v154
  %v203 = vmul.f32 %v132, %v154
  %v204 = vmul.f32 %v133, %v154
  %v205 = vmul.f32 %v134, %v154
  %v206 = vmul.f32 %v135, %v154
  %v207 = vmul.f32 %v136, %v154
  %v208 = vmul.f32 %v137, %v154
  %v209 = vmul.f32 %v138, %v154
  %v210 = vmul.f32 %v139, %v154
  %v211 = vmul.f32 %v140, %v154
  %v212 = vmul.f32 %v141, %v154
  %v213 = vmul.f32 %v142, %v154
  %v214 = vmul.f32 %v143, %v154
  %v215 = vmul.f32 %v144, %v154
  %v216 = vmul.f32 %v145, %v154
  %v217 = vmul.f32 %v146, %v154
  %v218 = vmul.f32 %v147, %v154
  %v219 = vmul.f32 %v148, %v154
  %v220 = vpack.c.bf16 %v156, %v156
  %v221 = vpack.c.bf16 %v157, %v157
  %v222 = vpack.c.bf16 %v158, %v158
  %v223 = vpack.c.bf16 %v159, %v159
  %v224 = vpack.c.bf16 %v160, %v160
  %v225 = vpack.c.bf16 %v161, %v161
  %v226 = vpack.c.bf16 %v162, %v162
  %v227 = vpack.c.bf16 %v163, %v163
  %v228 = vpack.c.bf16 %v164, %v164
  %v229 = vpack.c.bf16 %v165, %v165
  %v230 = vpack.c.bf16 %v166, %v166
  %v231 = vpack.c.bf16 %v167, %v167
  %v232 = vpack.c.bf16 %v168, %v168
  %v233 = vpack.c.bf16 %v169, %v169
  %v234 = vpack.c.bf16 %v170, %v170
  %v235 = vpack.c.bf16 %v171, %v171
  %v236 = vpack.c.bf16 %v172, %v172
  %v237 = vpack.c.bf16 %v173, %v173
  %v238 = vpack.c.bf16 %v174, %v174
  %v239 = vpack.c.bf16 %v175, %v175
  %v240 = vpack.c.bf16 %v176, %v176
  %v241 = vpack.c.bf16 %v177, %v177
  %v242 = vpack.c.bf16 %v178, %v178
  %v243 = vpack.c.bf16 %v179, %v179
  %v244 = vpack.c.bf16 %v180, %v180
  %v245 = vpack.c.bf16 %v181, %v181
  %v246 = vpack.c.bf16 %v182, %v182
  %v247 = vpack.c.bf16 %v183, %v183
  %v248 = vpack.c.bf16 %v184, %v184
  %v249 = vpack.c.bf16 %v185, %v185
  %v250 = vpack.c.bf16 %v186, %v186
  %v251 = vpack.c.bf16 %v187, %v187
  %v252 = vpack.c.bf16 %v188, %v188
  %v253 = vpack.c.bf16 %v189, %v189
  %v254 = vpack.c.bf16 %v190, %v190
  %v255 = vpack.c.bf16 %v191, %v191
  %v256 = vpack.c.bf16 %v192, %v192
  %v257 = vpack.c.bf16 %v193, %v193
  %v258 = vpack.c.bf16 %v194, %v194
  %v259 = vpack.c.bf16 %v195, %v195
  %v260 = vpack.c.bf16 %v196, %v196
  %v261 = vpack.c.bf16 %v197, %v197
  %v262 = vpack.c.bf16 %v198, %v198
  %v263 = vpack.c.bf16 %v199, %v199
  %v264 = vpack.c.bf16 %v200, %v200
  %v265 = vpack.c.bf16 %v201, %v201
  %v266 = vpack.c.bf16 %v202, %v202
  %v267 = vpack.c.bf16 %v203, %v203
  %v268 = vpack.c.bf16 %v204, %v204
  %v269 = vpack.c.bf16 %v205, %v205
  %v270 = vpack.c.bf16 %v206, %v206
  %v271 = vpack.c.bf16 %v207, %v207
  %v272 = vpack.c.bf16 %v208, %v208
  %v273 = vpack.c.bf16 %v209, %v209
  %v274 = vpack.c.bf16 %v210, %v210
  %v275 = vpack.c.bf16 %v211, %v211
  %v276 = vpack.c.bf16 %v212, %v212
  %v277 = vpack.c.bf16 %v213, %v213
  %v278 = vpack.c.bf16 %v214, %v214
  %v279 = vpack.c.bf16 %v215, %v215
  %v280 = vpack.c.bf16 %v216, %v216
  %v281 = vpack.c.bf16 %v217, %v217
  %v282 = vpack.c.bf16 %v218, %v218
  %v283 = vpack.c.bf16 %v219, %v219
  %284 = vst [vmem:[%s3] sm:$0xf] %v220
  %285 = vst [vmem:[%s3 + $0x4] sm:$0xf] %v221
  %286 = vst [vmem:[%s3 + $0x8] sm:$0xf] %v222
  %287 = vst [vmem:[%s3 + $0xc] sm:$0xf] %v223
  %288 = vst [vmem:[%s3 + $0x10] sm:$0xf] %v224
  %289 = vst [vmem:[%s3 + $0x14] sm:$0xf] %v225
  %290 = vst [vmem:[%s3 + $0x18] sm:$0xf] %v226
  %291 = vst [vmem:[%s3 + $0x1c] sm:$0xf] %v227
  %292 = vst [vmem:[%s3 + $0x20] sm:$0xf] %v228
  %293 = vst [vmem:[%s3 + $0x24] sm:$0xf] %v229
  %294 = vst [vmem:[%s3 + $0x28] sm:$0xf] %v230
  %295 = vst [vmem:[%s3 + $0x2c] sm:$0xf] %v231
  %296 = vst [vmem:[%s3 + $0x30] sm:$0xf] %v232
  %297 = vst [vmem:[%s3 + $0x34] sm:$0xf] %v233
  %298 = vst [vmem:[%s3 + $0x38] sm:$0xf] %v234
  %299 = vst [vmem:[%s3 + $0x3c] sm:$0xf] %v235
  %300 = vst [vmem:[%s3 + $0x40] sm:$0xf] %v236
  %301 = vst [vmem:[%s3 + $0x44] sm:$0xf] %v237
  %302 = vst [vmem:[%s3 + $0x48] sm:$0xf] %v238
  %303 = vst [vmem:[%s3 + $0x4c] sm:$0xf] %v239
  %304 = vst [vmem:[%s3 + $0x50] sm:$0xf] %v240
  %305 = vst [vmem:[%s3 + $0x54] sm:$0xf] %v241
  %306 = vst [vmem:[%s3 + $0x58] sm:$0xf] %v242
  %307 = vst [vmem:[%s3 + $0x5c] sm:$0xf] %v243
  %308 = vst [vmem:[%s3 + $0x60] sm:$0xf] %v244
  %309 = vst [vmem:[%s3 + $0x64] sm:$0xf] %v245
  %310 = vst [vmem:[%s3 + $0x68] sm:$0xf] %v246
  %311 = vst [vmem:[%s3 + $0x6c] sm:$0xf] %v247
  %312 = vst [vmem:[%s3 + $0x70] sm:$0xf] %v248
  %313 = vst [vmem:[%s3 + $0x74] sm:$0xf] %v249
  %314 = vst [vmem:[%s3 + $0x78] sm:$0xf] %v250
  %315 = vst [vmem:[%s3 + $0x7c] sm:$0xf] %v251
  %316 = vst [vmem:[%s3 + $0x80] sm:$0xf] %v252
  %317 = vst [vmem:[%s3 + $0x84] sm:$0xf] %v253
  %318 = vst [vmem:[%s3 + $0x88] sm:$0xf] %v254
  %319 = vst [vmem:[%s3 + $0x8c] sm:$0xf] %v255
  %320 = vst [vmem:[%s3 + $0x90] sm:$0xf] %v256
  %321 = vst [vmem:[%s3 + $0x94] sm:$0xf] %v257
  %322 = vst [vmem:[%s3 + $0x98] sm:$0xf] %v258
  %323 = vst [vmem:[%s3 + $0x9c] sm:$0xf] %v259
  %324 = vst [vmem:[%s3 + $0xa0] sm:$0xf] %v260
  %325 = vst [vmem:[%s3 + $0xa4] sm:$0xf] %v261
  %326 = vst [vmem:[%s3 + $0xa8] sm:$0xf] %v262
  %327 = vst [vmem:[%s3 + $0xac] sm:$0xf] %v263
  %328 = vst [vmem:[%s3 + $0xb0] sm:$0xf] %v264
  %329 = vst [vmem:[%s3 + $0xb4] sm:$0xf] %v265
  %330 = vst [vmem:[%s3 + $0xb8] sm:$0xf] %v266
  %331 = vst [vmem:[%s3 + $0xbc] sm:$0xf] %v267
  %332 = vst [vmem:[%s3 + $0xc0] sm:$0xf] %v268
  %333 = vst [vmem:[%s3 + $0xc4] sm:$0xf] %v269
  %334 = vst [vmem:[%s3 + $0xc8] sm:$0xf] %v270
  %335 = vst [vmem:[%s3 + $0xcc] sm:$0xf] %v271
  %336 = vst [vmem:[%s3 + $0xd0] sm:$0xf] %v272
  %337 = vst [vmem:[%s3 + $0xd4] sm:$0xf] %v273
  %338 = vst [vmem:[%s3 + $0xd8] sm:$0xf] %v274
  %339 = vst [vmem:[%s3 + $0xdc] sm:$0xf] %v275
  %340 = vst [vmem:[%s3 + $0xe0] sm:$0xf] %v276
  %341 = vst [vmem:[%s3 + $0xe4] sm:$0xf] %v277
  %342 = vst [vmem:[%s3 + $0xe8] sm:$0xf] %v278
  %343 = vst [vmem:[%s3 + $0xec] sm:$0xf] %v279
  %344 = vst [vmem:[%s3 + $0xf0] sm:$0xf] %v280
  %345 = vst [vmem:[%s3 + $0xf4] sm:$0xf] %v281
  %346 = vst [vmem:[%s3 + $0xf8] sm:$0xf] %v282
  %347 = vst [vmem:[%s3 + $0xfc] sm:$0xf] %v283
  // Predicated region
  $region14: #{_lambda_.9} parent=0 // pred_check
    _
  $region15: #{_lambda_.9} parent=0 // pred_check_branch
    %349 = sbr.rel (0) target = $region17
  $region16: #{_lambda_.9} parent=0 // pred_region
    _
  $region17: #{_lambda_.9} parent=0 // pred_fallthru
    _
  // Predicated region
  $region18: #{_lambda_.9} parent=0 // pred_check
    _
  $region19: #{_lambda_.9} parent=0 // pred_check_branch
    %351 = sbr.rel (0) target = $region21
  $region20: #{_lambda_.9} parent=0 // pred_region
    _
  $region21: #{_lambda_.9} parent=0 // pred_fallthru
    _

// kernel: _lambda_.11
$region0: #{_lambda_.11}
  #allocation0 [shape = 'u32[]', space=smem, size = 0x4, offset = 0x4, fixed_abs, tag = 'smem constant byte address 0x4 - core index']
  #allocation1 [shape = 'u32[144,128]{1,0:T(1,128)}', space=vmem, size = 0x12000, scoped, tag = 'internal scratch']
  #allocation2 [shape = 'f32[80,128]{1,0:T(8,128)}', space=vmem, size = 0xa000, scoped, tag = 'scratch operand']
  %s0 = inlined_call_operand.vmem [shape: bf16[2,4,110,128], index: 0, kind: input, shape index: {}]
  %s1 = inlined_call_operand.vmem [shape: bf16[9,128,128], index: 1, kind: input, shape index: {}]
  %s2 = inlined_call_operand.vmem [shape: f32[2,4,80,128], index: 2, kind: output, shape index: {0}]
  %s3 = inlined_call_operand.vmem [shape: f32[2,4,2,128], index: 3, kind: output, shape index: {1}]
  %4 = xla_tuple %s2, %s3
  %s5 = sld [smem:[#allocation0]]
  $region57: #{_lambda_.11} parent=0
    _
  %s7 = ssub.s32 1, %s5
  %s8 = scalar_select 0, %s7, %s5
  loop: start=0, step=1, limit=10
  $region2: #{_lambda_.11} parent=0 // loop_pre_header
    _
  $region3: #{_lambda_.11} parent=0 // loop_header
    %s10 = sphi 0, %s14
    %p11 = scmp.ge.s32.totalorder %s10, 10
    %s17 = sphi 0, %s36
    %s18 = sphi 0, %s32
    %s19 = sphi 0, %s28
    %s20 = sphi 0, %s17
    %s21 = sphi 0, %s18
    %s22 = sphi 0, %s19
    %s23 = sphi 0, %s20
    %s24 = sphi 0, %s21
    %s25 = sphi 0, %s22
    %s43 = sphi 0, %s45
    %s46 = sphi 0, %s43
    %s47 = sphi 0, %s46
    %s63 = sphi 0, %s47
    %s67 = sphi 0, %s67
    %s69 = sphi 0, %s67
    %s70 = sphi 0, %s69
    %s84 = sphi 0, %s70
    %s92 = sphi 0, %s94
    %s95 = sphi 0, %s92
    %s96 = sphi 0, %s95
    %s112 = sphi 0, %s96
    %s120 = sphi 0, %s122
    %s123 = sphi 0, %s120
    %s124 = sphi 0, %s123
    %s140 = sphi 0, %s124
  $region4: #{_lambda_.11} parent=0 // loop_header_branch
    %13 = sbr.rel (%p11) target = $region8
  $region5: #{_lambda_.11} parent=0 // loop_body
    %s15 = ssub.s32 %s10, 1
    %s16 = ssub.s32 %s10, 2
    %s26 = sadd.s32 1, %s19
    %p27 = scmp.ge.s32.totalorder %s26, 1
    %s28 = scalar_select %p27, 0, %s26
    %s29 = sadd.s32 1, %s18
    %s30 = scalar_select %p27, %s29, %s18
    %p31 = scmp.ge.s32.totalorder %s30, 4
    %s32 = scalar_select %p31, 0, %s30
    %s33 = sadd.s32 1, %s17
    %s34 = scalar_select %p31, %s33, %s17
    %p35 = scmp.ge.s32.totalorder %s34, 2
    %s36 = scalar_select %p35, 0, %s34
    %s37 = sadd.s32 %s18, %s19
    %s38 = sadd.s32 %s32, %s28
    %s39 = ssub.s32 %s17, %s36
    %s40 = ssub.s32 %s37, %s38
    %s41 = sor.u32 %s39, %s40
    %p42 = scmp.eq.s32.totalorder %s41, 0
    %s44 = sadd.s32 %s43, 1
    %s45 = scalar_select %p42, %s43, %s44
    %p48 = pneg %p42
    %p49 = scmp.eq.s32.totalorder %s10, 7
    %p50 = por %p48, %p49
    %p51 = scmp.ne.s32.totalorder %s43, %s46
    %p52 = scmp.eq.s32.totalorder %s10, 0
    %p53 = por %p51, %p52
    %p54 = scmp.ne.s32.totalorder %s43, %s46
    %p55 = scmp.eq.s32.totalorder %s15, 7
    %p56 = por %p54, %p55
    %p57 = scmp.ne.s32.totalorder %s46, %s47
    %p58 = scmp.eq.s32.totalorder %s15, 0
    %p59 = por %p57, %p58
    %p60 = scmp.ne.s32.totalorder %s46, %s47
    %p61 = scmp.eq.s32.totalorder %s16, 7
    %p62 = por %p60, %p61
    %p64 = scmp.ne.s32.totalorder %s47, %s63
    %p65 = scmp.eq.s32.totalorder %s16, 0
    %p66 = por %p64, %p65
    %s68 = sadd.s32 %s67, 1
    %p71 = scmp.eq.s32.totalorder %s10, 7
    %p72 = scmp.ne.s32.totalorder %s67, %s69
    %p73 = scmp.eq.s32.totalorder %s10, 0
    %p74 = por %p72, %p73
    %p75 = scmp.ne.s32.totalorder %s67, %s69
    %p76 = scmp.eq.s32.totalorder %s15, 7
    %p77 = por %p75, %p76
    %p78 = scmp.ne.s32.totalorder %s69, %s70
    %p79 = scmp.eq.s32.totalorder %s15, 0
    %p80 = por %p78, %p79
    %p81 = scmp.ne.s32.totalorder %s69, %s70
    %p82 = scmp.eq.s32.totalorder %s16, 7
    %p83 = por %p81, %p82
    %p85 = scmp.ne.s32.totalorder %s70, %s84
    %p86 = scmp.eq.s32.totalorder %s16, 0
    %p87 = por %p85, %p86
    %s88 = ssub.s32 %s17, %s36
    %s89 = ssub.s32 %s18, %s32
    %s90 = sor.u32 %s88, %s89
    %p91 = scmp.eq.s32.totalorder %s90, 0
    %s93 = sadd.s32 %s92, 1
    %s94 = scalar_select %p91, %s92, %s93
    %p97 = pneg %p91
    %p98 = scmp.eq.s32.totalorder %s10, 7
    %p99 = por %p97, %p98
    %p100 = scmp.ne.s32.totalorder %s92, %s95
    %p101 = scmp.eq.s32.totalorder %s10, 0
    %p102 = por %p100, %p101
    %p103 = scmp.ne.s32.totalorder %s92, %s95
    %p104 = scmp.eq.s32.totalorder %s15, 7
    %p105 = por %p103, %p104
    %p106 = scmp.ne.s32.totalorder %s95, %s96
    %p107 = scmp.eq.s32.totalorder %s15, 0
    %p108 = por %p106, %p107
    %p109 = scmp.ne.s32.totalorder %s95, %s96
    %p110 = scmp.eq.s32.totalorder %s16, 7
    %p111 = por %p109, %p110
    %p113 = scmp.ne.s32.totalorder %s96, %s112
    %p114 = scmp.eq.s32.totalorder %s16, 0
    %p115 = por %p113, %p114
    %s116 = ssub.s32 %s17, %s36
    %s117 = ssub.s32 %s18, %s32
    %s118 = sor.u32 %s116, %s117
    %p119 = scmp.eq.s32.totalorder %s118, 0
    %s121 = sadd.s32 %s120, 1
    %s122 = scalar_select %p119, %s120, %s121
    %p125 = pneg %p119
    %p126 = scmp.eq.s32.totalorder %s10, 7
    %p127 = por %p125, %p126
    %p128 = scmp.ne.s32.totalorder %s120, %s123
    %p129 = scmp.eq.s32.totalorder %s10, 0
    %p130 = por %p128, %p129
    %p131 = scmp.ne.s32.totalorder %s120, %s123
    %p132 = scmp.eq.s32.totalorder %s15, 7
    %p133 = por %p131, %p132
    %p134 = scmp.ne.s32.totalorder %s123, %s124
    %p135 = scmp.eq.s32.totalorder %s15, 0
    %p136 = por %p134, %p135
    %p137 = scmp.ne.s32.totalorder %s123, %s124
    %p138 = scmp.eq.s32.totalorder %s16, 7
    %p139 = por %p137, %p138
    %p141 = scmp.ne.s32.totalorder %s124, %s140
    %p142 = scmp.eq.s32.totalorder %s16, 0
    %p143 = por %p141, %p142
    %p144 = scmp.le.s32.totalorder 1, %s10
    %p145 = scmp.lt.s32.totalorder %s10, 9
    %p146 = pnand %p144, %p145
    %p147 = pneg %p146
    // Predicated region
    $region9: #{_lambda_.11} parent=5 // pred_check
      _
    $region10: #{_lambda_.11} parent=5 // pred_check_branch
      %149 = sbr.rel (%p146) target = $region12
    $region11: #{_lambda_.11} parent=5 // pred_region
      %s150 = ssub.s32 %s10, 1
      // Predicated region
      $region13: #{_lambda_.11} parent=11 // pred_check
        %p151 = pneg %p80
      $region14: #{_lambda_.11} parent=11 // pred_check_branch
        %153 = sbr.rel (%p151) target = $region16
      $region15: #{_lambda_.11} parent=11 // pred_region
        _
      $region16: #{_lambda_.11} parent=11 // pred_fallthru
        _
    $region12: #{_lambda_.11} parent=5 // pred_fallthru
      _
    %p154 = scmp.lt.s32.totalorder %s10, 8
    // Predicated region
    $region17: #{_lambda_.11} parent=5 // pred_check
      %p155 = pneg %p154
    $region18: #{_lambda_.11} parent=5 // pred_check_branch
      %157 = sbr.rel (%p155) target = $region20
    $region19: #{_lambda_.11} parent=5 // pred_region
      // Predicated region
      $region21: #{_lambda_.11} parent=19 // pred_check
        %p158 = pneg %p53
      $region22: #{_lambda_.11} parent=19 // pred_check_branch
        %160 = sbr.rel (%p158) target = $region24
      $region23: #{_lambda_.11} parent=19 // pred_region
        %s161 = sadd.s32 %s18, %s19
        %p162 = scmp.lt.s32.totalorder %s17, 1
        %s163 = scalar_select %p162, %s17, 1
        %p164 = scmp.lt.s32.totalorder %s161, 3
        %s165 = scalar_select %p164, %s161, 3
        %s166 = smul.addr %s165, 14
        %s167 = smul.addr %s163, 56
        %s168 = sadd.s32 %s166, %s167
        %s169 = smul.addr %s168, 4
        %s170 = scalar_lea.vmem %s0, %s169
        %s171 = sadd.s32 %s18, %s19
      $region24: #{_lambda_.11} parent=19 // pred_fallthru
        _
    $region20: #{_lambda_.11} parent=5 // pred_fallthru
      _
    %p172 = scmp.le.s32.totalorder 1, %s10
    %p173 = scmp.lt.s32.totalorder %s10, 9
    %p174 = pnand %p172, %p173
    %p175 = pneg %p174
    // Predicated region
    $region25: #{_lambda_.11} parent=5 // pred_check
      _
    $region26: #{_lambda_.11} parent=5 // pred_check_branch
      %177 = sbr.rel (%p174) target = $region28
    $region27: #{_lambda_.11} parent=5 // pred_region
      %s178 = ssub.s32 %s10, 1
      %s179 = sadd.s32 %s21, %s22
      %p180 = scmp.lt.s32.totalorder %s20, 1
      %s181 = scalar_select %p180, %s20, 1
      %p182 = scmp.lt.s32.totalorder %s179, 3
      %s183 = scalar_select %p182, %s179, 3
      %s184 = smul.addr %s183, 14
      %s185 = smul.addr %s181, 56
      %s186 = sadd.s32 %s184, %s185
      %s187 = smul.addr %s186, 4
      %s188 = scalar_lea.vmem %s0, %s187
      %p189 = pneg %p59
      %p190 = pneg %p56
      %p191 = pneg %p80
      %p192 = pneg %p77
      %p193 = pneg %p108
      %p194 = pneg %p105
      %p195 = scmp.lt.s32.totalorder %s20, 1
      %s196 = scalar_select %p195, %s20, 1
      %p197 = scmp.lt.s32.totalorder %s21, 3
      %s198 = scalar_select %p197, %s21, 3
      %s199 = smul.addr %s198, 10
      %s200 = smul.addr %s196, 40
      %s201 = sadd.s32 %s199, %s200
      %s202 = smul.addr %s201, 8
      %s203 = scalar_lea.vmem %s2, %s202
      %p204 = pneg %p136
      %p205 = pneg %p133
      %p206 = scmp.lt.s32.totalorder %s20, 1
      %s207 = scalar_select %p206, %s20, 1
      %p208 = scmp.lt.s32.totalorder %s21, 3
      %s209 = scalar_select %p208, %s21, 3
      %s210 = smul.addr %s207, 4
      %s211 = sadd.s32 %s209, %s210
      %s212 = smul.addr %s211, 2
      %s213 = scalar_lea.vmem %s3, %s212
      %s214 = sadd.s32 %s21, %s22
      %p215 = scmp.lt.s32.totalorder %s20, 1
      %s216 = scalar_select %p215, %s20, 1
      %p217 = scmp.lt.s32.totalorder %s214, 3
      %s218 = scalar_select %p217, %s214, 3
      %s219 = smul.addr %s218, 14
      %s220 = smul.addr %s216, 56
      %s221 = sadd.s32 %s219, %s220
      %s222 = smul.addr %s221, 4
      %s223 = scalar_lea.vmem %s0, %s222
      %s224 = sadd.s32 %s21, %s22
      %p225 = scmp.lt.s32.totalorder %s20, 1
      %s226 = scalar_select %p225, %s20, 1
      %p227 = scmp.lt.s32.totalorder %s21, 3
      %s228 = scalar_select %p227, %s21, 3
      %s229 = smul.addr %s228, 10
      %s230 = smul.addr %s226, 40
      %s231 = sadd.s32 %s229, %s230
      %s232 = smul.addr %s231, 8
      %s233 = scalar_lea.vmem %s2, %s232
      %p234 = scmp.lt.s32.totalorder %s20, 1
      %s235 = scalar_select %p234, %s20, 1
      %p236 = scmp.lt.s32.totalorder %s21, 3
      %s237 = scalar_select %p236, %s21, 3
      %s238 = smul.addr %s235, 4
      %s239 = sadd.s32 %s237, %s238
      %s240 = smul.addr %s239, 2
      %s241 = scalar_lea.vmem %s3, %s240
      %p243 = scmp.eq.s32.totalorder %s22, 0
      // Predicated region
      $region29: #{_lambda_.11} parent=27 // pred_check
        %p244 = pneg %p243
      $region30: #{_lambda_.11} parent=27 // pred_check_branch
        %246 = sbr.rel (%p244) target = $region32
      $region31: #{_lambda_.11} parent=27 // pred_region
        %247 = vst [vmem:[#allocation2] sm:$0xff] 0.0
        %248 = vst [vmem:[#allocation2 + $0x8] sm:$0xff] 0.0
        %249 = vst [vmem:[#allocation2 + $0x10] sm:$0xff] 0.0
        %250 = vst [vmem:[#allocation2 + $0x18] sm:$0xff] 0.0
        %251 = vst [vmem:[#allocation2 + $0x20] sm:$0xff] 0.0
        %252 = vst [vmem:[#allocation2 + $0x28] sm:$0xff] 0.0
        %253 = vst [vmem:[#allocation2 + $0x30] sm:$0xff] 0.0
        %254 = vst [vmem:[#allocation2 + $0x38] sm:$0xff] 0.0
        %255 = vst [vmem:[#allocation2 + $0x40] sm:$0xff] 0.0
        %256 = vst [vmem:[#allocation2 + $0x48] sm:$0xff] 0.0
      $region32: #{_lambda_.11} parent=27 // pred_fallthru
        _
      %v257 = vld [vmem:[%s223] sm:$0xf]
      %v258 = vld [vmem:[%s223 + $0x4] sm:$0xf]
      %v259 = vld [vmem:[%s223 + $0x8] sm:$0xf]
      %v260 = vld [vmem:[%s223 + $0xc] sm:$0xf]
      %v261 = vld [vmem:[%s223 + $0x10] sm:$0xf]
      %v262 = vld [vmem:[%s223 + $0x14] sm:$0xf]
      %v263 = vld [vmem:[%s223 + $0x18] sm:$0xf]
      %v264 = vld [vmem:[%s223 + $0x1c] sm:$0xf]
      %v265 = vld [vmem:[%s223 + $0x20] sm:$0xf]
      %v266 = vld [vmem:[%s223 + $0x24] sm:$0xf]
      %s267 = smul.u32 %s22, 9
      %s268 = smul.u32 %s267, 16
      %s269 = smul.addr %s268, 4
      %s270 = scalar_lea.vmem %s1, %s269
      %v271 = vld [vmem:[%s270] sm:$0xf]
      %v272 = vld [vmem:[%s270 + $0x4] sm:$0xf]
      %v273 = vld [vmem:[%s270 + $0x8] sm:$0xf]
      %v274 = vld [vmem:[%s270 + $0xc] sm:$0xf]
      %v275 = vld [vmem:[%s270 + $0x10] sm:$0xf]
      %v276 = vld [vmem:[%s270 + $0x14] sm:$0xf]
      %v277 = vld [vmem:[%s270 + $0x18] sm:$0xf]
      %v278 = vld [vmem:[%s270 + $0x1c] sm:$0xf]
      %v279 = vld [vmem:[%s270 + $0x20] sm:$0xf]
      %v280 = vld [vmem:[%s270 + $0x24] sm:$0xf]
      %v281 = vld [vmem:[%s270 + $0x28] sm:$0xf]
      %v282 = vld [vmem:[%s270 + $0x2c] sm:$0xf]
      %v283 = vld [vmem:[%s270 + $0x30] sm:$0xf]
      %v284 = vld [vmem:[%s270 + $0x34] sm:$0xf]
      %v285 = vld [vmem:[%s270 + $0x38] sm:$0xf]
      %v286 = vld [vmem:[%s270 + $0x3c] sm:$0xf]
      %v287 = vld [vmem:[%s223 + $0x28] sm:$0x1]
      %s288 = sadd.s32 %s267, 1
      %s289 = smul.u32 %s288, 16
      %s290 = smul.addr %s289, 4
      %s291 = scalar_lea.vmem %s1, %s290
      %v292 = vld [vmem:[%s291] sm:$0xf]
      %v293 = vld [vmem:[%s291 + $0x4] sm:$0xf]
      %v294 = vld [vmem:[%s291 + $0x8] sm:$0xf]
      %v295 = vld [vmem:[%s291 + $0xc] sm:$0xf]
      %v296 = vld [vmem:[%s291 + $0x10] sm:$0xf]
      %v297 = vld [vmem:[%s291 + $0x14] sm:$0xf]
      %v298 = vld [vmem:[%s291 + $0x18] sm:$0xf]
      %v299 = vld [vmem:[%s291 + $0x1c] sm:$0xf]
      %v300 = vld [vmem:[%s291 + $0x20] sm:$0xf]
      %v301 = vld [vmem:[%s291 + $0x24] sm:$0xf]
      %v302 = vld [vmem:[%s291 + $0x28] sm:$0xf]
      %v303 = vld [vmem:[%s291 + $0x2c] sm:$0xf]
      %v304 = vld [vmem:[%s291 + $0x30] sm:$0xf]
      %v305 = vld [vmem:[%s291 + $0x34] sm:$0xf]
      %v306 = vld [vmem:[%s291 + $0x38] sm:$0xf]
      %v307 = vld [vmem:[%s291 + $0x3c] sm:$0xf]
      %v319 = vunpack.c.l.b16 %v257
      %v320 = vunpack.c.l.b16 %v258
      %v321 = vunpack.c.l.b16 %v259
      %v322 = vunpack.c.l.b16 %v260
      %v323 = vunpack.c.l.b16 %v261
      %v324 = vunpack.c.l.b16 %v262
      %v325 = vunpack.c.l.b16 %v263
      %v326 = vunpack.c.l.b16 %v264
      %v327 = vunpack.c.l.b16 %v265
      %v328 = vunpack.c.l.b16 %v266
      %v329 = vunpack.c.l.b16 %v287
      %v330 = vpack.c.b16 %v320, %v319
      %v331 = vpack.c.b16 %v322, %v321
      %v332 = vpack.c.b16 %v324, %v323
      %v333 = vpack.c.b16 %v326, %v325
      %v334 = vpack.c.b16 %v328, %v327
      %v335 = vpack.c.b16 %v329, %v329
      %vm336 = vsmask.f32 7424
      %v338 = vshrl.u32 %v330, 16
      %v340 = vshll.u32 %v330, 16
      %v342 = vrot.slane %v340, 1
      %v343 = vor.u32 %v338, %v342
      %v345 = vshll.u32 %v331, 16
      %v347 = vrot.slane %v345, 1
      %v348 = vsel %vm336, %v343, %v347
      %v349 = vshrl.u32 %v331, 16
      %v351 = vor.u32 %v349, %v347
      %v353 = vshll.u32 %v332, 16
      %v355 = vrot.slane %v353, 1
      %v356 = vsel %vm336, %v351, %v355
      %v357 = vshrl.u32 %v332, 16
      %v359 = vor.u32 %v357, %v355
      %v361 = vshll.u32 %v333, 16
      %v363 = vrot.slane %v361, 1
      %v364 = vsel %vm336, %v359, %v363
      %v365 = vshrl.u32 %v333, 16
      %v367 = vor.u32 %v365, %v363
      %v369 = vshll.u32 %v334, 16
      %v371 = vrot.slane %v369, 1
      %v372 = vsel %vm336, %v367, %v371
      %v373 = vshrl.u32 %v334, 16
      %v375 = vor.u32 %v373, %v371
      %v377 = vshll.u32 %v335, 16
      %v379 = vrot.slane %v377, 1
      %v380 = vsel %vm336, %v375, %v379
      %v402 = vunpack.c.l.b16 %v292
      %v403 = vunpack.c.l.b16 %v293
      %v404 = vunpack.c.l.b16 %v294
      %v405 = vunpack.c.l.b16 %v295
      %v406 = vunpack.c.l.b16 %v296
      %v407 = vunpack.c.l.b16 %v297
      %v408 = vunpack.c.l.b16 %v298
      %v409 = vunpack.c.l.b16 %v299
      %v410 = vunpack.c.l.b16 %v300
      %v411 = vunpack.c.l.b16 %v301
      %v412 = vunpack.c.l.b16 %v302
      %v413 = vunpack.c.l.b16 %v303
      %v414 = vunpack.c.l.b16 %v304
      %v415 = vunpack.c.l.b16 %v305
      %v416 = vunpack.c.l.b16 %v306
      %v417 = vunpack.c.l.b16 %v307
      %v418 = vpack.c.b16 %v403, %v402
      %v419 = vpack.c.b16 %v405, %v404
      %v420 = vpack.c.b16 %v407, %v406
      %v421 = vpack.c.b16 %v409, %v408
      %v422 = vpack.c.b16 %v411, %v410
      %v423 = vpack.c.b16 %v413, %v412
      %v424 = vpack.c.b16 %v415, %v414
      %v425 = vpack.c.b16 %v417, %v416
      %434 = vmatprep.subr.bf16.mxu0 0
      %435 = vmatpush1.bf16.msra.mxu0 %v425
      %436 = vmatprep.subr.bf16.mxu0 0
      %437 = vmatpush1.bf16.msra.mxu0 %v424
      %438 = vmatprep.subr.bf16.mxu0 0
      %439 = vmatpush1.bf16.msra.mxu0 %v423
      %440 = vmatprep.subr.bf16.mxu0 0
      %441 = vmatpush1.bf16.msra.mxu0 %v422
      %442 = vmatprep.subr.bf16.mxu0 0
      %443 = vmatpush1.bf16.msra.mxu0 %v421
      %444 = vmatprep.subr.bf16.mxu0 0
      %445 = vmatpush1.bf16.msra.mxu0 %v420
      %446 = vmatprep.subr.bf16.mxu0 0
      %447 = vmatpush1.bf16.msra.mxu0 %v419
      %448 = vmatprep.subr.bf16.mxu0 0
      %449 = vmatpush1.bf16.msra.mxu0 %v418
      %450 = vmatprep.subr.bf16.mxu0 0
      %451 = vmatpush2.bf16.msra.mxu0 0
      %452 = vmatprep.subr.bf16.mxu0 0
      %453 = vmatpush2.bf16.msra.mxu0 0
      %454 = vmatprep.subr.bf16.mxu0 0
      %455 = vmatpush2.bf16.msra.mxu0 0
      %456 = vmatprep.subr.bf16.mxu0 0
      %457 = vmatpush2.bf16.msra.mxu0 0
      %458 = vmatprep.subr.bf16.mxu0 0
      %459 = vmatpush2.bf16.msra.mxu0 0
      %460 = vmatprep.subr.bf16.mxu0 0
      %461 = vmatpush2.bf16.msra.mxu0 0
      %462 = vmatprep.subr.bf16.mxu0 0
      %463 = vmatpush2.bf16.msra.mxu0 0
      %464 = vmatprep.subr.bf16.mxu0 0
      %465 = vmatpush2.bf16.msra.mxu0 0
      %466 = vmatprep.mubr.bf16.mxu0 0
      %467 = vmatmul.mubr.bf16.gmra.mxu0 %v348
      %v468 = vpop.f32.mrf.mxu0
      %v469 = vadd.f32 0.0, %v468
      %v470 = vpop.f32.mrf.mxu0
      %v471 = vpop.f32.mrf.mxu0
      %v472 = vadd.f32 0.0, %v471
      %v473 = vpop.f32.mrf.mxu0
      %474 = vmatprep.mubr.bf16.mxu0 0
      %475 = vmatmul.mubr.bf16.gmra.mxu0 %v356
      %v476 = vpop.f32.mrf.mxu0
      %v477 = vadd.f32 0.0, %v476
      %v478 = vpop.f32.mrf.mxu0
      %v479 = vpop.f32.mrf.mxu0
      %v480 = vadd.f32 0.0, %v479
      %v481 = vpop.f32.mrf.mxu0
      %482 = vmatprep.mubr.bf16.mxu0 0
      %483 = vmatmul.mubr.bf16.gmra.mxu0 %v364
      %v484 = vpop.f32.mrf.mxu0
      %v485 = vadd.f32 0.0, %v484
      %v486 = vpop.f32.mrf.mxu0
      %v487 = vpop.f32.mrf.mxu0
      %v488 = vadd.f32 0.0, %v487
      %v489 = vpop.f32.mrf.mxu0
      %490 = vmatprep.mubr.bf16.mxu0 0
      %491 = vmatmul.mubr.bf16.gmra.mxu0 %v372
      %v492 = vpop.f32.mrf.mxu0
      %v493 = vadd.f32 0.0, %v492
      %v494 = vpop.f32.mrf.mxu0
      %v495 = vpop.f32.mrf.mxu0
      %v496 = vadd.f32 0.0, %v495
      %v497 = vpop.f32.mrf.mxu0
      %498 = vmatprep.mubr.bf16.mxu0 0
      %499 = vmatmul.mubr.bf16.gmra.mxu0 %v380
      %v500 = vpop.f32.mrf.mxu0
      %v501 = vadd.f32 0.0, %v500
      %v502 = vpop.f32.mrf.mxu0
      %v503 = vpop.f32.mrf.mxu0
      %v504 = vadd.f32 0.0, %v503
      %v505 = vpop.f32.mrf.mxu0
      %506 = vdwg.mxu0
      %v528 = vunpack.c.l.b16 %v271
      %v529 = vunpack.c.l.b16 %v272
      %v530 = vunpack.c.l.b16 %v273
      %v531 = vunpack.c.l.b16 %v274
      %v532 = vunpack.c.l.b16 %v275
      %v533 = vunpack.c.l.b16 %v276
      %v534 = vunpack.c.l.b16 %v277
      %v535 = vunpack.c.l.b16 %v278
      %v536 = vunpack.c.l.b16 %v279
      %v537 = vunpack.c.l.b16 %v280
      %v538 = vunpack.c.l.b16 %v281
      %v539 = vunpack.c.l.b16 %v282
      %v540 = vunpack.c.l.b16 %v283
      %v541 = vunpack.c.l.b16 %v284
      %v542 = vunpack.c.l.b16 %v285
      %v543 = vunpack.c.l.b16 %v286
      %v544 = vpack.c.b16 %v529, %v528
      %v545 = vpack.c.b16 %v531, %v530
      %v546 = vpack.c.b16 %v533, %v532
      %v547 = vpack.c.b16 %v535, %v534
      %v548 = vpack.c.b16 %v537, %v536
      %v549 = vpack.c.b16 %v539, %v538
      %v550 = vpack.c.b16 %v541, %v540
      %v551 = vpack.c.b16 %v543, %v542
      %560 = vmatprep.subr.bf16.mxu0 0
      %561 = vmatpush1.bf16.msra.mxu0 %v551
      %562 = vmatprep.subr.bf16.mxu0 0
      %563 = vmatpush1.bf16.msra.mxu0 %v550
      %564 = vmatprep.subr.bf16.mxu0 0
      %565 = vmatpush1.bf16.msra.mxu0 %v549
      %566 = vmatprep.subr.bf16.mxu0 0
      %567 = vmatpush1.bf16.msra.mxu0 %v548
      %568 = vmatprep.subr.bf16.mxu0 0
      %569 = vmatpush1.bf16.msra.mxu0 %v547
      %570 = vmatprep.subr.bf16.mxu0 0
      %571 = vmatpush1.bf16.msra.mxu0 %v546
      %572 = vmatprep.subr.bf16.mxu0 0
      %573 = vmatpush1.bf16.msra.mxu0 %v545
      %574 = vmatprep.subr.bf16.mxu0 0
      %575 = vmatpush1.bf16.msra.mxu0 %v544
      %576 = vmatprep.subr.bf16.mxu0 0
      %577 = vmatpush2.bf16.msra.mxu0 0
      %578 = vmatprep.subr.bf16.mxu0 0
      %579 = vmatpush2.bf16.msra.mxu0 0
      %580 = vmatprep.subr.bf16.mxu0 0
      %581 = vmatpush2.bf16.msra.mxu0 0
      %582 = vmatprep.subr.bf16.mxu0 0
      %583 = vmatpush2.bf16.msra.mxu0 0
      %584 = vmatprep.subr.bf16.mxu0 0
      %585 = vmatpush2.bf16.msra.mxu0 0
      %586 = vmatprep.subr.bf16.mxu0 0
      %587 = vmatpush2.bf16.msra.mxu0 0
      %588 = vmatprep.subr.bf16.mxu0 0
      %589 = vmatpush2.bf16.msra.mxu0 0
      %590 = vmatprep.subr.bf16.mxu0 0
      %591 = vmatpush2.bf16.msra.mxu0 0
      %592 = vmatprep.mubr.bf16.mxu0 0
      %593 = vmatmul.mubr.bf16.gmra.mxu0 %v330
      %v594 = vpop.f32.mrf.mxu0
      %v595 = vadd.f32 %v469, %v594
      %v596 = vpop.f32.mrf.mxu0
      %v597 = vpop.f32.mrf.mxu0
      %v598 = vadd.f32 %v472, %v597
      %v599 = vpop.f32.mrf.mxu0
      %600 = vmatprep.mubr.bf16.mxu0 0
      %601 = vmatmul.mubr.bf16.gmra.mxu0 %v331
      %v602 = vpop.f32.mrf.mxu0
      %v603 = vadd.f32 %v477, %v602
      %v604 = vpop.f32.mrf.mxu0
      %v605 = vpop.f32.mrf.mxu0
      %v606 = vadd.f32 %v480, %v605
      %v607 = vpop.f32.mrf.mxu0
      %608 = vmatprep.mubr.bf16.mxu0 0
      %609 = vmatmul.mubr.bf16.gmra.mxu0 %v332
      %v610 = vpop.f32.mrf.mxu0
      %v611 = vadd.f32 %v485, %v610
      %v612 = vpop.f32.mrf.mxu0
      %v613 = vpop.f32.mrf.mxu0
      %v614 = vadd.f32 %v488, %v613
      %v615 = vpop.f32.mrf.mxu0
      %616 = vmatprep.mubr.bf16.mxu0 0
      %617 = vmatmul.mubr.bf16.gmra.mxu0 %v333
      %v618 = vpop.f32.mrf.mxu0
      %v619 = vadd.f32 %v493, %v618
      %v620 = vpop.f32.mrf.mxu0
      %v621 = vpop.f32.mrf.mxu0
      %v622 = vadd.f32 %v496, %v621
      %v623 = vpop.f32.mrf.mxu0
      %624 = vmatprep.mubr.bf16.mxu0 0
      %625 = vmatmul.mubr.bf16.gmra.mxu0 %v334
      %v626 = vpop.f32.mrf.mxu0
      %v627 = vadd.f32 %v501, %v626
      %v628 = vpop.f32.mrf.mxu0
      %v629 = vpop.f32.mrf.mxu0
      %v630 = vadd.f32 %v504, %v629
      %v631 = vpop.f32.mrf.mxu0
      %632 = vdwg.mxu0
      %v633 = vld [vmem:[%s223] sm:$0xe]
      %s634 = sadd.s32 %s267, 2
      %s635 = smul.u32 %s634, 16
      %s636 = smul.addr %s635, 4
      %s637 = scalar_lea.vmem %s1, %s636
      %v638 = vld [vmem:[%s637] sm:$0xf]
      %v639 = vld [vmem:[%s637 + $0x4] sm:$0xf]
      %v640 = vld [vmem:[%s637 + $0x8] sm:$0xf]
      %v641 = vld [vmem:[%s637 + $0xc] sm:$0xf]
      %v642 = vld [vmem:[%s637 + $0x10] sm:$0xf]
      %v643 = vld [vmem:[%s637 + $0x14] sm:$0xf]
      %v644 = vld [vmem:[%s637 + $0x18] sm:$0xf]
      %v645 = vld [vmem:[%s637 + $0x1c] sm:$0xf]
      %v646 = vld [vmem:[%s637 + $0x20] sm:$0xf]
      %v647 = vld [vmem:[%s637 + $0x24] sm:$0xf]
      %v648 = vld [vmem:[%s637 + $0x28] sm:$0xf]
      %v649 = vld [vmem:[%s637 + $0x2c] sm:$0xf]
      %v650 = vld [vmem:[%s637 + $0x30] sm:$0xf]
      %v651 = vld [vmem:[%s637 + $0x34] sm:$0xf]
      %v652 = vld [vmem:[%s637 + $0x38] sm:$0xf]
      %v653 = vld [vmem:[%s637 + $0x3c] sm:$0xf]
      %v655 = vunpack.c.l.b16 %v633
      %v656 = vpack.c.b16 %v320, %v655
      %vm657 = vcmask 1046528
      %v658 = vrot.slane %v656, 1
      %v659 = vrot.slane %v331, 1
      %v660 = vsel %vm657, %v658, %v659
      %v661 = vrot.slane %v332, 1
      %v662 = vsel %vm657, %v659, %v661
      %v663 = vrot.slane %v333, 1
      %v664 = vsel %vm657, %v661, %v663
      %v665 = vrot.slane %v334, 1
      %v666 = vsel %vm657, %v663, %v665
      %v667 = vrot.slane %v335, 1
      %v668 = vsel %vm657, %v665, %v667
      %v690 = vunpack.c.l.b16 %v638
      %v691 = vunpack.c.l.b16 %v639
      %v692 = vunpack.c.l.b16 %v640
      %v693 = vunpack.c.l.b16 %v641
      %v694 = vunpack.c.l.b16 %v642
      %v695 = vunpack.c.l.b16 %v643
      %v696 = vunpack.c.l.b16 %v644
      %v697 = vunpack.c.l.b16 %v645
      %v698 = vunpack.c.l.b16 %v646
      %v699 = vunpack.c.l.b16 %v647
      %v700 = vunpack.c.l.b16 %v648
      %v701 = vunpack.c.l.b16 %v649
      %v702 = vunpack.c.l.b16 %v650
      %v703 = vunpack.c.l.b16 %v651
      %v704 = vunpack.c.l.b16 %v652
      %v705 = vunpack.c.l.b16 %v653
      %v706 = vpack.c.b16 %v691, %v690
      %v707 = vpack.c.b16 %v693, %v692
      %v708 = vpack.c.b16 %v695, %v694
      %v709 = vpack.c.b16 %v697, %v696
      %v710 = vpack.c.b16 %v699, %v698
      %v711 = vpack.c.b16 %v701, %v700
      %v712 = vpack.c.b16 %v703, %v702
      %v713 = vpack.c.b16 %v705, %v704
      %722 = vmatprep.subr.bf16.mxu0 0
      %723 = vmatpush1.bf16.msra.mxu0 %v713
      %724 = vmatprep.subr.bf16.mxu0 0
      %725 = vmatpush1.bf16.msra.mxu0 %v712
      %726 = vmatprep.subr.bf16.mxu0 0
      %727 = vmatpush1.bf16.msra.mxu0 %v711
      %728 = vmatprep.subr.bf16.mxu0 0
      %729 = vmatpush1.bf16.msra.mxu0 %v710
      %730 = vmatprep.subr.bf16.mxu0 0
      %731 = vmatpush1.bf16.msra.mxu0 %v709
      %732 = vmatprep.subr.bf16.mxu0 0
      %733 = vmatpush1.bf16.msra.mxu0 %v708
      %734 = vmatprep.subr.bf16.mxu0 0
      %735 = vmatpush1.bf16.msra.mxu0 %v707
      %736 = vmatprep.subr.bf16.mxu0 0
      %737 = vmatpush1.bf16.msra.mxu0 %v706
      %738 = vmatprep.subr.bf16.mxu0 0
      %739 = vmatpush2.bf16.msra.mxu0 0
      %740 = vmatprep.subr.bf16.mxu0 0
      %741 = vmatpush2.bf16.msra.mxu0 0
      %742 = vmatprep.subr.bf16.mxu0 0
      %743 = vmatpush2.bf16.msra.mxu0 0
      %744 = vmatprep.subr.bf16.mxu0 0
      %745 = vmatpush2.bf16.msra.mxu0 0
      %746 = vmatprep.subr.bf16.mxu0 0
      %747 = vmatpush2.bf16.msra.mxu0 0
      %748 = vmatprep.subr.bf16.mxu0 0
      %749 = vmatpush2.bf16.msra.mxu0 0
      %750 = vmatprep.subr.bf16.mxu0 0
      %751 = vmatpush2.bf16.msra.mxu0 0
      %752 = vmatprep.subr.bf16.mxu0 0
      %753 = vmatpush2.bf16.msra.mxu0 0
      %754 = vmatprep.mubr.bf16.mxu0 0
      %755 = vmatmul.mubr.bf16.gmra.mxu0 %v660
      %v756 = vpop.f32.mrf.mxu0
      %v757 = vadd.f32 0.0, %v756
      %v758 = vpop.f32.mrf.mxu0
      %v759 = vpop.f32.mrf.mxu0
      %v760 = vadd.f32 0.0, %v759
      %v761 = vpop.f32.mrf.mxu0
      %762 = vmatprep.mubr.bf16.mxu0 0
      %763 = vmatmul.mubr.bf16.gmra.mxu0 %v662
      %v764 = vpop.f32.mrf.mxu0
      %v765 = vadd.f32 0.0, %v764
      %v766 = vpop.f32.mrf.mxu0
      %v767 = vpop.f32.mrf.mxu0
      %v768 = vadd.f32 0.0, %v767
      %v769 = vpop.f32.mrf.mxu0
      %770 = vmatprep.mubr.bf16.mxu0 0
      %771 = vmatmul.mubr.bf16.gmra.mxu0 %v664
      %v772 = vpop.f32.mrf.mxu0
      %v773 = vadd.f32 0.0, %v772
      %v774 = vpop.f32.mrf.mxu0
      %v775 = vpop.f32.mrf.mxu0
      %v776 = vadd.f32 0.0, %v775
      %v777 = vpop.f32.mrf.mxu0
      %778 = vmatprep.mubr.bf16.mxu0 0
      %779 = vmatmul.mubr.bf16.gmra.mxu0 %v666
      %v780 = vpop.f32.mrf.mxu0
      %v781 = vadd.f32 0.0, %v780
      %v782 = vpop.f32.mrf.mxu0
      %v783 = vpop.f32.mrf.mxu0
      %v784 = vadd.f32 0.0, %v783
      %v785 = vpop.f32.mrf.mxu0
      %786 = vmatprep.mubr.bf16.mxu0 0
      %787 = vmatmul.mubr.bf16.gmra.mxu0 %v668
      %v788 = vpop.f32.mrf.mxu0
      %v789 = vadd.f32 0.0, %v788
      %v790 = vpop.f32.mrf.mxu0
      %v791 = vpop.f32.mrf.mxu0
      %v792 = vadd.f32 0.0, %v791
      %v793 = vpop.f32.mrf.mxu0
      %794 = vdwg.mxu0
      %v795 = vadd.f32 %v595, %v757
      %v796 = vadd.f32 %v598, %v760
      %v797 = vadd.f32 %v603, %v765
      %v798 = vadd.f32 %v606, %v768
      %v799 = vadd.f32 %v611, %v773
      %v800 = vadd.f32 %v614, %v776
      %v801 = vadd.f32 %v619, %v781
      %v802 = vadd.f32 %v622, %v784
      %v803 = vadd.f32 %v627, %v789
      %v804 = vadd.f32 %v630, %v792
      %v805 = vld [vmem:[%s223 + $0x4] sm:$0xe]
      %v806 = vld [vmem:[%s223 + $0x8] sm:$0xf]
      %v807 = vld [vmem:[%s223 + $0xc] sm:$0xf]
      %v808 = vld [vmem:[%s223 + $0x10] sm:$0xf]
      %v809 = vld [vmem:[%s223 + $0x14] sm:$0xf]
      %v810 = vld [vmem:[%s223 + $0x18] sm:$0xf]
      %v811 = vld [vmem:[%s223 + $0x1c] sm:$0xf]
      %v812 = vld [vmem:[%s223 + $0x20] sm:$0xf]
      %v813 = vld [vmem:[%s223 + $0x24] sm:$0xf]
      %v814 = vld [vmem:[%s223 + $0x28] sm:$0xf]
      %v815 = vld [vmem:[%s223 + $0x2c] sm:$0x1]
      %s816 = sadd.s32 %s267, 3
      %s817 = smul.u32 %s816, 16
      %s818 = smul.addr %s817, 4
      %s819 = scalar_lea.vmem %s1, %s818
      %v820 = vld [vmem:[%s819] sm:$0xf]
      %v821 = vld [vmem:[%s819 + $0x4] sm:$0xf]
      %v822 = vld [vmem:[%s819 + $0x8] sm:$0xf]
      %v823 = vld [vmem:[%s819 + $0xc] sm:$0xf]
      %v824 = vld [vmem:[%s819 + $0x10] sm:$0xf]
      %v825 = vld [vmem:[%s819 + $0x14] sm:$0xf]
      %v826 = vld [vmem:[%s819 + $0x18] sm:$0xf]
      %v827 = vld [vmem:[%s819 + $0x1c] sm:$0xf]
      %v828 = vld [vmem:[%s819 + $0x20] sm:$0xf]
      %v829 = vld [vmem:[%s819 + $0x24] sm:$0xf]
      %v830 = vld [vmem:[%s819 + $0x28] sm:$0xf]
      %v831 = vld [vmem:[%s819 + $0x2c] sm:$0xf]
      %v832 = vld [vmem:[%s819 + $0x30] sm:$0xf]
      %v833 = vld [vmem:[%s819 + $0x34] sm:$0xf]
      %v834 = vld [vmem:[%s819 + $0x38] sm:$0xf]
      %v835 = vld [vmem:[%s819 + $0x3c] sm:$0xf]
      %v847 = vunpack.c.l.b16 %v805
      %v848 = vunpack.c.l.b16 %v806
      %v849 = vunpack.c.l.b16 %v807
      %v850 = vunpack.c.l.b16 %v808
      %v851 = vunpack.c.l.b16 %v809
      %v852 = vunpack.c.l.b16 %v810
      %v853 = vunpack.c.l.b16 %v811
      %v854 = vunpack.c.l.b16 %v812
      %v855 = vunpack.c.l.b16 %v813
      %v856 = vunpack.c.l.b16 %v814
      %v857 = vunpack.c.l.b16 %v815
      %v858 = vpack.c.b16 %v848, %v847
      %v859 = vpack.c.b16 %v850, %v849
      %v860 = vpack.c.b16 %v852, %v851
      %v861 = vpack.c.b16 %v854, %v853
      %v862 = vpack.c.b16 %v856, %v855
      %v863 = vpack.c.b16 %v857, %v857
      %v864 = vrot.slane %v858, 1
      %v865 = vrot.slane %v859, 1
      %v866 = vsel %vm657, %v864, %v865
      %v867 = vrot.slane %v860, 1
      %v868 = vsel %vm657, %v865, %v867
      %v869 = vrot.slane %v861, 1
      %v870 = vsel %vm657, %v867, %v869
      %v871 = vrot.slane %v862, 1
      %v872 = vsel %vm657, %v869, %v871
      %v873 = vrot.slane %v863, 1
      %v874 = vsel %vm657, %v871, %v873
      %v896 = vunpack.c.l.b16 %v820
      %v897 = vunpack.c.l.b16 %v821
      %v898 = vunpack.c.l.b16 %v822
      %v899 = vunpack.c.l.b16 %v823
      %v900 = vunpack.c.l.b16 %v824
      %v901 = vunpack.c.l.b16 %v825
      %v902 = vunpack.c.l.b16 %v826
      %v903 = vunpack.c.l.b16 %v827
      %v904 = vunpack.c.l.b16 %v828
      %v905 = vunpack.c.l.b16 %v829
      %v906 = vunpack.c.l.b16 %v830
      %v907 = vunpack.c.l.b16 %v831
      %v908 = vunpack.c.l.b16 %v832
      %v909 = vunpack.c.l.b16 %v833
      %v910 = vunpack.c.l.b16 %v834
      %v911 = vunpack.c.l.b16 %v835
      %v912 = vpack.c.b16 %v897, %v896
      %v913 = vpack.c.b16 %v899, %v898
      %v914 = vpack.c.b16 %v901, %v900
      %v915 = vpack.c.b16 %v903, %v902
      %v916 = vpack.c.b16 %v905, %v904
      %v917 = vpack.c.b16 %v907, %v906
      %v918 = vpack.c.b16 %v909, %v908
      %v919 = vpack.c.b16 %v911, %v910
      %928 = vmatprep.subr.bf16.mxu0 0
      %929 = vmatpush1.bf16.msra.mxu0 %v919
      %930 = vmatprep.subr.bf16.mxu0 0
      %931 = vmatpush1.bf16.msra.mxu0 %v918
      %932 = vmatprep.subr.bf16.mxu0 0
      %933 = vmatpush1.bf16.msra.mxu0 %v917
      %934 = vmatprep.subr.bf16.mxu0 0
      %935 = vmatpush1.bf16.msra.mxu0 %v916
      %936 = vmatprep.subr.bf16.mxu0 0
      %937 = vmatpush1.bf16.msra.mxu0 %v915
      %938 = vmatprep.subr.bf16.mxu0 0
      %939 = vmatpush1.bf16.msra.mxu0 %v914
      %940 = vmatprep.subr.bf16.mxu0 0
      %941 = vmatpush1.bf16.msra.mxu0 %v913
      %942 = vmatprep.subr.bf16.mxu0 0
      %943 = vmatpush1.bf16.msra.mxu0 %v912
      %944 = vmatprep.subr.bf16.mxu0 0
      %945 = vmatpush2.bf16.msra.mxu0 0
      %946 = vmatprep.subr.bf16.mxu0 0
      %947 = vmatpush2.bf16.msra.mxu0 0
      %948 = vmatprep.subr.bf16.mxu0 0
      %949 = vmatpush2.bf16.msra.mxu0 0
      %950 = vmatprep.subr.bf16.mxu0 0
      %951 = vmatpush2.bf16.msra.mxu0 0
      %952 = vmatprep.subr.bf16.mxu0 0
      %953 = vmatpush2.bf16.msra.mxu0 0
      %954 = vmatprep.subr.bf16.mxu0 0
      %955 = vmatpush2.bf16.msra.mxu0 0
      %956 = vmatprep.subr.bf16.mxu0 0
      %957 = vmatpush2.bf16.msra.mxu0 0
      %958 = vmatprep.subr.bf16.mxu0 0
      %959 = vmatpush2.bf16.msra.mxu0 0
      %960 = vmatprep.mubr.bf16.mxu0 0
      %961 = vmatmul.mubr.bf16.gmra.mxu0 %v866
      %v962 = vpop.f32.mrf.mxu0
      %v963 = vadd.f32 0.0, %v962
      %v964 = vpop.f32.mrf.mxu0
      %v965 = vpop.f32.mrf.mxu0
      %v966 = vadd.f32 0.0, %v965
      %v967 = vpop.f32.mrf.mxu0
      %968 = vmatprep.mubr.bf16.mxu0 0
      %969 = vmatmul.mubr.bf16.gmra.mxu0 %v868
      %v970 = vpop.f32.mrf.mxu0
      %v971 = vadd.f32 0.0, %v970
      %v972 = vpop.f32.mrf.mxu0
      %v973 = vpop.f32.mrf.mxu0
      %v974 = vadd.f32 0.0, %v973
      %v975 = vpop.f32.mrf.mxu0
      %976 = vmatprep.mubr.bf16.mxu0 0
      %977 = vmatmul.mubr.bf16.gmra.mxu0 %v870
      %v978 = vpop.f32.mrf.mxu0
      %v979 = vadd.f32 0.0, %v978
      %v980 = vpop.f32.mrf.mxu0
      %v981 = vpop.f32.mrf.mxu0
      %v982 = vadd.f32 0.0, %v981
      %v983 = vpop.f32.mrf.mxu0
      %984 = vmatprep.mubr.bf16.mxu0 0
      %985 = vmatmul.mubr.bf16.gmra.mxu0 %v872
      %v986 = vpop.f32.mrf.mxu0
      %v987 = vadd.f32 0.0, %v986
      %v988 = vpop.f32.mrf.mxu0
      %v989 = vpop.f32.mrf.mxu0
      %v990 = vadd.f32 0.0, %v989
      %v991 = vpop.f32.mrf.mxu0
      %992 = vmatprep.mubr.bf16.mxu0 0
      %993 = vmatmul.mubr.bf16.gmra.mxu0 %v874
      %v994 = vpop.f32.mrf.mxu0
      %v995 = vadd.f32 0.0, %v994
      %v996 = vpop.f32.mrf.mxu0
      %v997 = vpop.f32.mrf.mxu0
      %v998 = vadd.f32 0.0, %v997
      %v999 = vpop.f32.mrf.mxu0
      %1000 = vdwg.mxu0
      %v1001 = vadd.f32 %v795, %v963
      %v1002 = vadd.f32 %v796, %v966
      %v1003 = vadd.f32 %v797, %v971
      %v1004 = vadd.f32 %v798, %v974
      %v1005 = vadd.f32 %v799, %v979
      %v1006 = vadd.f32 %v800, %v982
      %v1007 = vadd.f32 %v801, %v987
      %v1008 = vadd.f32 %v802, %v990
      %v1009 = vadd.f32 %v803, %v995
      %v1010 = vadd.f32 %v804, %v998
      %v1011 = vld [vmem:[%s223 + $0x2c] sm:$0x3]
      %s1012 = sadd.s32 %s267, 4
      %s1013 = smul.u32 %s1012, 16
      %s1014 = smul.addr %s1013, 4
      %s1015 = scalar_lea.vmem %s1, %s1014
      %v1016 = vld [vmem:[%s1015] sm:$0xf]
      %v1017 = vld [vmem:[%s1015 + $0x4] sm:$0xf]
      %v1018 = vld [vmem:[%s1015 + $0x8] sm:$0xf]
      %v1019 = vld [vmem:[%s1015 + $0xc] sm:$0xf]
      %v1020 = vld [vmem:[%s1015 + $0x10] sm:$0xf]
      %v1021 = vld [vmem:[%s1015 + $0x14] sm:$0xf]
      %v1022 = vld [vmem:[%s1015 + $0x18] sm:$0xf]
      %v1023 = vld [vmem:[%s1015 + $0x1c] sm:$0xf]
      %v1024 = vld [vmem:[%s1015 + $0x20] sm:$0xf]
      %v1025 = vld [vmem:[%s1015 + $0x24] sm:$0xf]
      %v1026 = vld [vmem:[%s1015 + $0x28] sm:$0xf]
      %v1027 = vld [vmem:[%s1015 + $0x2c] sm:$0xf]
      %v1028 = vld [vmem:[%s1015 + $0x30] sm:$0xf]
      %v1029 = vld [vmem:[%s1015 + $0x34] sm:$0xf]
      %v1030 = vld [vmem:[%s1015 + $0x38] sm:$0xf]
      %v1031 = vld [vmem:[%s1015 + $0x3c] sm:$0xf]
      %v1033 = vunpack.c.l.b16 %v1011
      %v1034 = vpack.c.b16 %v1033, %v1033
      %vm1035 = vsmask.f32 6400
      %v1037 = vshrl.u32 %v858, 16
      %v1039 = vrot.slane %v1037, 1
      %v1040 = vshll.u32 %v858, 16
      %v1042 = vrot.slane %v1040, 2
      %v1043 = vor.u32 %v1039, %v1042
      %v1045 = vshrl.u32 %v859, 16
      %v1047 = vrot.slane %v1045, 1
      %v1048 = vshll.u32 %v859, 16
      %v1050 = vrot.slane %v1048, 2
      %v1051 = vor.u32 %v1047, %v1050
      %v1052 = vsel %vm1035, %v1043, %v1051
      %v1054 = vshrl.u32 %v860, 16
      %v1056 = vrot.slane %v1054, 1
      %v1057 = vshll.u32 %v860, 16
      %v1059 = vrot.slane %v1057, 2
      %v1060 = vor.u32 %v1056, %v1059
      %v1061 = vsel %vm1035, %v1051, %v1060
      %v1063 = vshrl.u32 %v861, 16
      %v1065 = vrot.slane %v1063, 1
      %v1066 = vshll.u32 %v861, 16
      %v1068 = vrot.slane %v1066, 2
      %v1069 = vor.u32 %v1065, %v1068
      %v1070 = vsel %vm1035, %v1060, %v1069
      %v1072 = vshrl.u32 %v862, 16
      %v1074 = vrot.slane %v1072, 1
      %v1075 = vshll.u32 %v862, 16
      %v1077 = vrot.slane %v1075, 2
      %v1078 = vor.u32 %v1074, %v1077
      %v1079 = vsel %vm1035, %v1069, %v1078
      %v1081 = vshrl.u32 %v1034, 16
      %v1083 = vrot.slane %v1081, 1
      %v1084 = vshll.u32 %v1034, 16
      %v1086 = vrot.slane %v1084, 2
      %v1087 = vor.u32 %v1083, %v1086
      %v1088 = vsel %vm1035, %v1078, %v1087
      %v1110 = vunpack.c.l.b16 %v1016
      %v1111 = vunpack.c.l.b16 %v1017
      %v1112 = vunpack.c.l.b16 %v1018
      %v1113 = vunpack.c.l.b16 %v1019
      %v1114 = vunpack.c.l.b16 %v1020
      %v1115 = vunpack.c.l.b16 %v1021
      %v1116 = vunpack.c.l.b16 %v1022
      %v1117 = vunpack.c.l.b16 %v1023
      %v1118 = vunpack.c.l.b16 %v1024
      %v1119 = vunpack.c.l.b16 %v1025
      %v1120 = vunpack.c.l.b16 %v1026
      %v1121 = vunpack.c.l.b16 %v1027
      %v1122 = vunpack.c.l.b16 %v1028
      %v1123 = vunpack.c.l.b16 %v1029
      %v1124 = vunpack.c.l.b16 %v1030
      %v1125 = vunpack.c.l.b16 %v1031
      %v1126 = vpack.c.b16 %v1111, %v1110
      %v1127 = vpack.c.b16 %v1113, %v1112
      %v1128 = vpack.c.b16 %v1115, %v1114
      %v1129 = vpack.c.b16 %v1117, %v1116
      %v1130 = vpack.c.b16 %v1119, %v1118
      %v1131 = vpack.c.b16 %v1121, %v1120
      %v1132 = vpack.c.b16 %v1123, %v1122
      %v1133 = vpack.c.b16 %v1125, %v1124
      %1142 = vmatprep.subr.bf16.mxu0 0
      %1143 = vmatpush1.bf16.msra.mxu0 %v1133
      %1144 = vmatprep.subr.bf16.mxu0 0
      %1145 = vmatpush1.bf16.msra.mxu0 %v1132
      %1146 = vmatprep.subr.bf16.mxu0 0
      %1147 = vmatpush1.bf16.msra.mxu0 %v1131
      %1148 = vmatprep.subr.bf16.mxu0 0
      %1149 = vmatpush1.bf16.msra.mxu0 %v1130
      %1150 = vmatprep.subr.bf16.mxu0 0
      %1151 = vmatpush1.bf16.msra.mxu0 %v1129
      %1152 = vmatprep.subr.bf16.mxu0 0
      %1153 = vmatpush1.bf16.msra.mxu0 %v1128
      %1154 = vmatprep.subr.bf16.mxu0 0
      %1155 = vmatpush1.bf16.msra.mxu0 %v1127
      %1156 = vmatprep.subr.bf16.mxu0 0
      %1157 = vmatpush1.bf16.msra.mxu0 %v1126
      %1158 = vmatprep.subr.bf16.mxu0 0
      %1159 = vmatpush2.bf16.msra.mxu0 0
      %1160 = vmatprep.subr.bf16.mxu0 0
      %1161 = vmatpush2.bf16.msra.mxu0 0
      %1162 = vmatprep.subr.bf16.mxu0 0
      %1163 = vmatpush2.bf16.msra.mxu0 0
      %1164 = vmatprep.subr.bf16.mxu0 0
      %1165 = vmatpush2.bf16.msra.mxu0 0
      %1166 = vmatprep.subr.bf16.mxu0 0
      %1167 = vmatpush2.bf16.msra.mxu0 0
      %1168 = vmatprep.subr.bf16.mxu0 0
      %1169 = vmatpush2.bf16.msra.mxu0 0
      %1170 = vmatprep.subr.bf16.mxu0 0
      %1171 = vmatpush2.bf16.msra.mxu0 0
      %1172 = vmatprep.subr.bf16.mxu0 0
      %1173 = vmatpush2.bf16.msra.mxu0 0
      %1174 = vmatprep.mubr.bf16.mxu0 0
      %1175 = vmatmul.mubr.bf16.gmra.mxu0 %v1052
      %v1176 = vpop.f32.mrf.mxu0
      %v1177 = vadd.f32 0.0, %v1176
      %v1178 = vpop.f32.mrf.mxu0
      %v1179 = vpop.f32.mrf.mxu0
      %v1180 = vadd.f32 0.0, %v1179
      %v1181 = vpop.f32.mrf.mxu0
      %1182 = vmatprep.mubr.bf16.mxu0 0
      %1183 = vmatmul.mubr.bf16.gmra.mxu0 %v1061
      %v1184 = vpop.f32.mrf.mxu0
      %v1185 = vadd.f32 0.0, %v1184
      %v1186 = vpop.f32.mrf.mxu0
      %v1187 = vpop.f32.mrf.mxu0
      %v1188 = vadd.f32 0.0, %v1187
      %v1189 = vpop.f32.mrf.mxu0
      %1190 = vmatprep.mubr.bf16.mxu0 0
      %1191 = vmatmul.mubr.bf16.gmra.mxu0 %v1070
      %v1192 = vpop.f32.mrf.mxu0
      %v1193 = vadd.f32 0.0, %v1192
      %v1194 = vpop.f32.mrf.mxu0
      %v1195 = vpop.f32.mrf.mxu0
      %v1196 = vadd.f32 0.0, %v1195
      %v1197 = vpop.f32.mrf.mxu0
      %1198 = vmatprep.mubr.bf16.mxu0 0
      %1199 = vmatmul.mubr.bf16.gmra.mxu0 %v1079
      %v1200 = vpop.f32.mrf.mxu0
      %v1201 = vadd.f32 0.0, %v1200
      %v1202 = vpop.f32.mrf.mxu0
      %v1203 = vpop.f32.mrf.mxu0
      %v1204 = vadd.f32 0.0, %v1203
      %v1205 = vpop.f32.mrf.mxu0
      %1206 = vmatprep.mubr.bf16.mxu0 0
      %1207 = vmatmul.mubr.bf16.gmra.mxu0 %v1088
      %v1208 = vpop.f32.mrf.mxu0
      %v1209 = vadd.f32 0.0, %v1208
      %v1210 = vpop.f32.mrf.mxu0
      %v1211 = vpop.f32.mrf.mxu0
      %v1212 = vadd.f32 0.0, %v1211
      %v1213 = vpop.f32.mrf.mxu0
      %1214 = vdwg.mxu0
      %v1215 = vadd.f32 %v1001, %v1177
      %v1216 = vadd.f32 %v1002, %v1180
      %v1217 = vadd.f32 %v1003, %v1185
      %v1218 = vadd.f32 %v1004, %v1188
      %v1219 = vadd.f32 %v1005, %v1193
      %v1220 = vadd.f32 %v1006, %v1196
      %v1221 = vadd.f32 %v1007, %v1201
      %v1222 = vadd.f32 %v1008, %v1204
      %v1223 = vadd.f32 %v1009, %v1209
      %v1224 = vadd.f32 %v1010, %v1212
      %v1225 = vld [vmem:[%s223 + $0x4] sm:$0xc]
      %s1226 = sadd.s32 %s267, 5
      %s1227 = smul.u32 %s1226, 16
      %s1228 = smul.addr %s1227, 4
      %s1229 = scalar_lea.vmem %s1, %s1228
      %v1230 = vld [vmem:[%s1229] sm:$0xf]
      %v1231 = vld [vmem:[%s1229 + $0x4] sm:$0xf]
      %v1232 = vld [vmem:[%s1229 + $0x8] sm:$0xf]
      %v1233 = vld [vmem:[%s1229 + $0xc] sm:$0xf]
      %v1234 = vld [vmem:[%s1229 + $0x10] sm:$0xf]
      %v1235 = vld [vmem:[%s1229 + $0x14] sm:$0xf]
      %v1236 = vld [vmem:[%s1229 + $0x18] sm:$0xf]
      %v1237 = vld [vmem:[%s1229 + $0x1c] sm:$0xf]
      %v1238 = vld [vmem:[%s1229 + $0x20] sm:$0xf]
      %v1239 = vld [vmem:[%s1229 + $0x24] sm:$0xf]
      %v1240 = vld [vmem:[%s1229 + $0x28] sm:$0xf]
      %v1241 = vld [vmem:[%s1229 + $0x2c] sm:$0xf]
      %v1242 = vld [vmem:[%s1229 + $0x30] sm:$0xf]
      %v1243 = vld [vmem:[%s1229 + $0x34] sm:$0xf]
      %v1244 = vld [vmem:[%s1229 + $0x38] sm:$0xf]
      %v1245 = vld [vmem:[%s1229 + $0x3c] sm:$0xf]
      %v1247 = vunpack.c.l.b16 %v1225
      %v1248 = vpack.c.b16 %v848, %v1247
      %vm1249 = vcmask 1045504
      %v1250 = vrot.slane %v1248, 2
      %v1251 = vrot.slane %v859, 2
      %v1252 = vsel %vm1249, %v1250, %v1251
      %v1253 = vrot.slane %v860, 2
      %v1254 = vsel %vm1249, %v1251, %v1253
      %v1255 = vrot.slane %v861, 2
      %v1256 = vsel %vm1249, %v1253, %v1255
      %v1257 = vrot.slane %v862, 2
      %v1258 = vsel %vm1249, %v1255, %v1257
      %v1259 = vrot.slane %v1034, 2
      %v1260 = vsel %vm1249, %v1257, %v1259
      %v1282 = vunpack.c.l.b16 %v1230
      %v1283 = vunpack.c.l.b16 %v1231
      %v1284 = vunpack.c.l.b16 %v1232
      %v1285 = vunpack.c.l.b16 %v1233
      %v1286 = vunpack.c.l.b16 %v1234
      %v1287 = vunpack.c.l.b16 %v1235
      %v1288 = vunpack.c.l.b16 %v1236
      %v1289 = vunpack.c.l.b16 %v1237
      %v1290 = vunpack.c.l.b16 %v1238
      %v1291 = vunpack.c.l.b16 %v1239
      %v1292 = vunpack.c.l.b16 %v1240
      %v1293 = vunpack.c.l.b16 %v1241
      %v1294 = vunpack.c.l.b16 %v1242
      %v1295 = vunpack.c.l.b16 %v1243
      %v1296 = vunpack.c.l.b16 %v1244
      %v1297 = vunpack.c.l.b16 %v1245
      %v1298 = vpack.c.b16 %v1283, %v1282
      %v1299 = vpack.c.b16 %v1285, %v1284
      %v1300 = vpack.c.b16 %v1287, %v1286
      %v1301 = vpack.c.b16 %v1289, %v1288
      %v1302 = vpack.c.b16 %v1291, %v1290
      %v1303 = vpack.c.b16 %v1293, %v1292
      %v1304 = vpack.c.b16 %v1295, %v1294
      %v1305 = vpack.c.b16 %v1297, %v1296
      %1314 = vmatprep.subr.bf16.mxu0 0
      %1315 = vmatpush1.bf16.msra.mxu0 %v1305
      %1316 = vmatprep.subr.bf16.mxu0 0
      %1317 = vmatpush1.bf16.msra.mxu0 %v1304
      %1318 = vmatprep.subr.bf16.mxu0 0
      %1319 = vmatpush1.bf16.msra.mxu0 %v1303
      %1320 = vmatprep.subr.bf16.mxu0 0
      %1321 = vmatpush1.bf16.msra.mxu0 %v1302
      %1322 = vmatprep.subr.bf16.mxu0 0
      %1323 = vmatpush1.bf16.msra.mxu0 %v1301
      %1324 = vmatprep.subr.bf16.mxu0 0
      %1325 = vmatpush1.bf16.msra.mxu0 %v1300
      %1326 = vmatprep.subr.bf16.mxu0 0
      %1327 = vmatpush1.bf16.msra.mxu0 %v1299
      %1328 = vmatprep.subr.bf16.mxu0 0
      %1329 = vmatpush1.bf16.msra.mxu0 %v1298
      %1330 = vmatprep.subr.bf16.mxu0 0
      %1331 = vmatpush2.bf16.msra.mxu0 0
      %1332 = vmatprep.subr.bf16.mxu0 0
      %1333 = vmatpush2.bf16.msra.mxu0 0
      %1334 = vmatprep.subr.bf16.mxu0 0
      %1335 = vmatpush2.bf16.msra.mxu0 0
      %1336 = vmatprep.subr.bf16.mxu0 0
      %1337 = vmatpush2.bf16.msra.mxu0 0
      %1338 = vmatprep.subr.bf16.mxu0 0
      %1339 = vmatpush2.bf16.msra.mxu0 0
      %1340 = vmatprep.subr.bf16.mxu0 0
      %1341 = vmatpush2.bf16.msra.mxu0 0
      %1342 = vmatprep.subr.bf16.mxu0 0
      %1343 = vmatpush2.bf16.msra.mxu0 0
      %1344 = vmatprep.subr.bf16.mxu0 0
      %1345 = vmatpush2.bf16.msra.mxu0 0
      %1346 = vmatprep.mubr.bf16.mxu0 0
      %1347 = vmatmul.mubr.bf16.gmra.mxu0 %v1252
      %v1348 = vpop.f32.mrf.mxu0
      %v1349 = vadd.f32 0.0, %v1348
      %v1350 = vpop.f32.mrf.mxu0
      %v1351 = vpop.f32.mrf.mxu0
      %v1352 = vadd.f32 0.0, %v1351
      %v1353 = vpop.f32.mrf.mxu0
      %1354 = vmatprep.mubr.bf16.mxu0 0
      %1355 = vmatmul.mubr.bf16.gmra.mxu0 %v1254
      %v1356 = vpop.f32.mrf.mxu0
      %v1357 = vadd.f32 0.0, %v1356
      %v1358 = vpop.f32.mrf.mxu0
      %v1359 = vpop.f32.mrf.mxu0
      %v1360 = vadd.f32 0.0, %v1359
      %v1361 = vpop.f32.mrf.mxu0
      %1362 = vmatprep.mubr.bf16.mxu0 0
      %1363 = vmatmul.mubr.bf16.gmra.mxu0 %v1256
      %v1364 = vpop.f32.mrf.mxu0
      %v1365 = vadd.f32 0.0, %v1364
      %v1366 = vpop.f32.mrf.mxu0
      %v1367 = vpop.f32.mrf.mxu0
      %v1368 = vadd.f32 0.0, %v1367
      %v1369 = vpop.f32.mrf.mxu0
      %1370 = vmatprep.mubr.bf16.mxu0 0
      %1371 = vmatmul.mubr.bf16.gmra.mxu0 %v1258
      %v1372 = vpop.f32.mrf.mxu0
      %v1373 = vadd.f32 0.0, %v1372
      %v1374 = vpop.f32.mrf.mxu0
      %v1375 = vpop.f32.mrf.mxu0
      %v1376 = vadd.f32 0.0, %v1375
      %v1377 = vpop.f32.mrf.mxu0
      %1378 = vmatprep.mubr.bf16.mxu0 0
      %1379 = vmatmul.mubr.bf16.gmra.mxu0 %v1260
      %v1380 = vpop.f32.mrf.mxu0
      %v1381 = vadd.f32 0.0, %v1380
      %v1382 = vpop.f32.mrf.mxu0
      %v1383 = vpop.f32.mrf.mxu0
      %v1384 = vadd.f32 0.0, %v1383
      %v1385 = vpop.f32.mrf.mxu0
      %1386 = vdwg.mxu0
      %v1387 = vadd.f32 %v1215, %v1349
      %v1388 = vadd.f32 %v1216, %v1352
      %v1389 = vadd.f32 %v1217, %v1357
      %v1390 = vadd.f32 %v1218, %v1360
      %v1391 = vadd.f32 %v1219, %v1365
      %v1392 = vadd.f32 %v1220, %v1368
      %v1393 = vadd.f32 %v1221, %v1373
      %v1394 = vadd.f32 %v1222, %v1376
      %v1395 = vadd.f32 %v1223, %v1381
      %v1396 = vadd.f32 %v1224, %v1384
      %v1397 = vld [vmem:[%s223 + $0x8] sm:$0xc]
      %v1398 = vld [vmem:[%s223 + $0xc] sm:$0xf]
      %v1399 = vld [vmem:[%s223 + $0x10] sm:$0xf]
      %v1400 = vld [vmem:[%s223 + $0x14] sm:$0xf]
      %v1401 = vld [vmem:[%s223 + $0x18] sm:$0xf]
      %v1402 = vld [vmem:[%s223 + $0x1c] sm:$0xf]
      %v1403 = vld [vmem:[%s223 + $0x20] sm:$0xf]
      %v1404 = vld [vmem:[%s223 + $0x24] sm:$0xf]
      %v1405 = vld [vmem:[%s223 + $0x28] sm:$0xf]
      %v1406 = vld [vmem:[%s223 + $0x2c] sm:$0xf]
      %v1407 = vld [vmem:[%s223 + $0x30] sm:$0x3]
      %s1408 = sadd.s32 %s267, 6
      %s1409 = smul.u32 %s1408, 16
      %s1410 = smul.addr %s1409, 4
      %s1411 = scalar_lea.vmem %s1, %s1410
      %v1412 = vld [vmem:[%s1411] sm:$0xf]
      %v1413 = vld [vmem:[%s1411 + $0x4] sm:$0xf]
      %v1414 = vld [vmem:[%s1411 + $0x8] sm:$0xf]
      %v1415 = vld [vmem:[%s1411 + $0xc] sm:$0xf]
      %v1416 = vld [vmem:[%s1411 + $0x10] sm:$0xf]
      %v1417 = vld [vmem:[%s1411 + $0x14] sm:$0xf]
      %v1418 = vld [vmem:[%s1411 + $0x18] sm:$0xf]
      %v1419 = vld [vmem:[%s1411 + $0x1c] sm:$0xf]
      %v1420 = vld [vmem:[%s1411 + $0x20] sm:$0xf]
      %v1421 = vld [vmem:[%s1411 + $0x24] sm:$0xf]
      %v1422 = vld [vmem:[%s1411 + $0x28] sm:$0xf]
      %v1423 = vld [vmem:[%s1411 + $0x2c] sm:$0xf]
      %v1424 = vld [vmem:[%s1411 + $0x30] sm:$0xf]
      %v1425 = vld [vmem:[%s1411 + $0x34] sm:$0xf]
      %v1426 = vld [vmem:[%s1411 + $0x38] sm:$0xf]
      %v1427 = vld [vmem:[%s1411 + $0x3c] sm:$0xf]
      %v1439 = vunpack.c.l.b16 %v1397
      %v1440 = vunpack.c.l.b16 %v1398
      %v1441 = vunpack.c.l.b16 %v1399
      %v1442 = vunpack.c.l.b16 %v1400
      %v1443 = vunpack.c.l.b16 %v1401
      %v1444 = vunpack.c.l.b16 %v1402
      %v1445 = vunpack.c.l.b16 %v1403
      %v1446 = vunpack.c.l.b16 %v1404
      %v1447 = vunpack.c.l.b16 %v1405
      %v1448 = vunpack.c.l.b16 %v1406
      %v1449 = vunpack.c.l.b16 %v1407
      %v1450 = vpack.c.b16 %v1440, %v1439
      %v1451 = vpack.c.b16 %v1442, %v1441
      %v1452 = vpack.c.b16 %v1444, %v1443
      %v1453 = vpack.c.b16 %v1446, %v1445
      %v1454 = vpack.c.b16 %v1448, %v1447
      %v1455 = vpack.c.b16 %v1449, %v1449
      %v1456 = vrot.slane %v1450, 2
      %v1457 = vrot.slane %v1451, 2
      %v1458 = vsel %vm1249, %v1456, %v1457
      %v1459 = vrot.slane %v1452, 2
      %v1460 = vsel %vm1249, %v1457, %v1459
      %v1461 = vrot.slane %v1453, 2
      %v1462 = vsel %vm1249, %v1459, %v1461
      %v1463 = vrot.slane %v1454, 2
      %v1464 = vsel %vm1249, %v1461, %v1463
      %v1465 = vrot.slane %v1455, 2
      %v1466 = vsel %vm1249, %v1463, %v1465
      %v1488 = vunpack.c.l.b16 %v1412
      %v1489 = vunpack.c.l.b16 %v1413
      %v1490 = vunpack.c.l.b16 %v1414
      %v1491 = vunpack.c.l.b16 %v1415
      %v1492 = vunpack.c.l.b16 %v1416
      %v1493 = vunpack.c.l.b16 %v1417
      %v1494 = vunpack.c.l.b16 %v1418
      %v1495 = vunpack.c.l.b16 %v1419
      %v1496 = vunpack.c.l.b16 %v1420
      %v1497 = vunpack.c.l.b16 %v1421
      %v1498 = vunpack.c.l.b16 %v1422
      %v1499 = vunpack.c.l.b16 %v1423
      %v1500 = vunpack.c.l.b16 %v1424
      %v1501 = vunpack.c.l.b16 %v1425
      %v1502 = vunpack.c.l.b16 %v1426
      %v1503 = vunpack.c.l.b16 %v1427
      %v1504 = vpack.c.b16 %v1489, %v1488
      %v1505 = vpack.c.b16 %v1491, %v1490
      %v1506 = vpack.c.b16 %v1493, %v1492
      %v1507 = vpack.c.b16 %v1495, %v1494
      %v1508 = vpack.c.b16 %v1497, %v1496
      %v1509 = vpack.c.b16 %v1499, %v1498
      %v1510 = vpack.c.b16 %v1501, %v1500
      %v1511 = vpack.c.b16 %v1503, %v1502
      %1520 = vmatprep.subr.bf16.mxu0 0
      %1521 = vmatpush1.bf16.msra.mxu0 %v1511
      %1522 = vmatprep.subr.bf16.mxu0 0
      %1523 = vmatpush1.bf16.msra.mxu0 %v1510
      %1524 = vmatprep.subr.bf16.mxu0 0
      %1525 = vmatpush1.bf16.msra.mxu0 %v1509
      %1526 = vmatprep.subr.bf16.mxu0 0
      %1527 = vmatpush1.bf16.msra.mxu0 %v1508
      %1528 = vmatprep.subr.bf16.mxu0 0
      %1529 = vmatpush1.bf16.msra.mxu0 %v1507
      %1530 = vmatprep.subr.bf16.mxu0 0
      %1531 = vmatpush1.bf16.msra.mxu0 %v1506
      %1532 = vmatprep.subr.bf16.mxu0 0
      %1533 = vmatpush1.bf16.msra.mxu0 %v1505
      %1534 = vmatprep.subr.bf16.mxu0 0
      %1535 = vmatpush1.bf16.msra.mxu0 %v1504
      %1536 = vmatprep.subr.bf16.mxu0 0
      %1537 = vmatpush2.bf16.msra.mxu0 0
      %1538 = vmatprep.subr.bf16.mxu0 0
      %1539 = vmatpush2.bf16.msra.mxu0 0
      %1540 = vmatprep.subr.bf16.mxu0 0
      %1541 = vmatpush2.bf16.msra.mxu0 0
      %1542 = vmatprep.subr.bf16.mxu0 0
      %1543 = vmatpush2.bf16.msra.mxu0 0
      %1544 = vmatprep.subr.bf16.mxu0 0
      %1545 = vmatpush2.bf16.msra.mxu0 0
      %1546 = vmatprep.subr.bf16.mxu0 0
      %1547 = vmatpush2.bf16.msra.mxu0 0
      %1548 = vmatprep.subr.bf16.mxu0 0
      %1549 = vmatpush2.bf16.msra.mxu0 0
      %1550 = vmatprep.subr.bf16.mxu0 0
      %1551 = vmatpush2.bf16.msra.mxu0 0
      %1552 = vmatprep.mubr.bf16.mxu0 0
      %1553 = vmatmul.mubr.bf16.gmra.mxu0 %v1458
      %v1554 = vpop.f32.mrf.mxu0
      %v1555 = vadd.f32 0.0, %v1554
      %v1556 = vpop.f32.mrf.mxu0
      %v1557 = vpop.f32.mrf.mxu0
      %v1558 = vadd.f32 0.0, %v1557
      %v1559 = vpop.f32.mrf.mxu0
      %1560 = vmatprep.mubr.bf16.mxu0 0
      %1561 = vmatmul.mubr.bf16.gmra.mxu0 %v1460
      %v1562 = vpop.f32.mrf.mxu0
      %v1563 = vadd.f32 0.0, %v1562
      %v1564 = vpop.f32.mrf.mxu0
      %v1565 = vpop.f32.mrf.mxu0
      %v1566 = vadd.f32 0.0, %v1565
      %v1567 = vpop.f32.mrf.mxu0
      %1568 = vmatprep.mubr.bf16.mxu0 0
      %1569 = vmatmul.mubr.bf16.gmra.mxu0 %v1462
      %v1570 = vpop.f32.mrf.mxu0
      %v1571 = vadd.f32 0.0, %v1570
      %v1572 = vpop.f32.mrf.mxu0
      %v1573 = vpop.f32.mrf.mxu0
      %v1574 = vadd.f32 0.0, %v1573
      %v1575 = vpop.f32.mrf.mxu0
      %1576 = vmatprep.mubr.bf16.mxu0 0
      %1577 = vmatmul.mubr.bf16.gmra.mxu0 %v1464
      %v1578 = vpop.f32.mrf.mxu0
      %v1579 = vadd.f32 0.0, %v1578
      %v1580 = vpop.f32.mrf.mxu0
      %v1581 = vpop.f32.mrf.mxu0
      %v1582 = vadd.f32 0.0, %v1581
      %v1583 = vpop.f32.mrf.mxu0
      %1584 = vmatprep.mubr.bf16.mxu0 0
      %1585 = vmatmul.mubr.bf16.gmra.mxu0 %v1466
      %v1586 = vpop.f32.mrf.mxu0
      %v1587 = vadd.f32 0.0, %v1586
      %v1588 = vpop.f32.mrf.mxu0
      %v1589 = vpop.f32.mrf.mxu0
      %v1590 = vadd.f32 0.0, %v1589
      %v1591 = vpop.f32.mrf.mxu0
      %1592 = vdwg.mxu0
      %v1593 = vadd.f32 %v1387, %v1555
      %v1594 = vadd.f32 %v1388, %v1558
      %v1595 = vadd.f32 %v1389, %v1563
      %v1596 = vadd.f32 %v1390, %v1566
      %v1597 = vadd.f32 %v1391, %v1571
      %v1598 = vadd.f32 %v1392, %v1574
      %v1599 = vadd.f32 %v1393, %v1579
      %v1600 = vadd.f32 %v1394, %v1582
      %v1601 = vadd.f32 %v1395, %v1587
      %v1602 = vadd.f32 %v1396, %v1590
      %v1603 = vld [vmem:[%s223 + $0x30] sm:$0x7]
      %s1604 = sadd.s32 %s267, 7
      %s1605 = smul.u32 %s1604, 16
      %s1606 = smul.addr %s1605, 4
      %s1607 = scalar_lea.vmem %s1, %s1606
      %v1608 = vld [vmem:[%s1607] sm:$0xf]
      %v1609 = vld [vmem:[%s1607 + $0x4] sm:$0xf]
      %v1610 = vld [vmem:[%s1607 + $0x8] sm:$0xf]
      %v1611 = vld [vmem:[%s1607 + $0xc] sm:$0xf]
      %v1612 = vld [vmem:[%s1607 + $0x10] sm:$0xf]
      %v1613 = vld [vmem:[%s1607 + $0x14] sm:$0xf]
      %v1614 = vld [vmem:[%s1607 + $0x18] sm:$0xf]
      %v1615 = vld [vmem:[%s1607 + $0x1c] sm:$0xf]
      %v1616 = vld [vmem:[%s1607 + $0x20] sm:$0xf]
      %v1617 = vld [vmem:[%s1607 + $0x24] sm:$0xf]
      %v1618 = vld [vmem:[%s1607 + $0x28] sm:$0xf]
      %v1619 = vld [vmem:[%s1607 + $0x2c] sm:$0xf]
      %v1620 = vld [vmem:[%s1607 + $0x30] sm:$0xf]
      %v1621 = vld [vmem:[%s1607 + $0x34] sm:$0xf]
      %v1622 = vld [vmem:[%s1607 + $0x38] sm:$0xf]
      %v1623 = vld [vmem:[%s1607 + $0x3c] sm:$0xf]
      %v1625 = vunpack.c.l.b16 %v1603
      %v1626 = vpack.c.b16 %v1625, %v1625
      %vm1627 = vsmask.f32 5376
      %v1629 = vshrl.u32 %v1450, 16
      %v1631 = vrot.slane %v1629, 2
      %v1632 = vshll.u32 %v1450, 16
      %v1634 = vrot.slane %v1632, 3
      %v1635 = vor.u32 %v1631, %v1634
      %v1637 = vshrl.u32 %v1451, 16
      %v1639 = vrot.slane %v1637, 2
      %v1640 = vshll.u32 %v1451, 16
      %v1642 = vrot.slane %v1640, 3
      %v1643 = vor.u32 %v1639, %v1642
      %v1644 = vsel %vm1627, %v1635, %v1643
      %v1646 = vshrl.u32 %v1452, 16
      %v1648 = vrot.slane %v1646, 2
      %v1649 = vshll.u32 %v1452, 16
      %v1651 = vrot.slane %v1649, 3
      %v1652 = vor.u32 %v1648, %v1651
      %v1653 = vsel %vm1627, %v1643, %v1652
      %v1655 = vshrl.u32 %v1453, 16
      %v1657 = vrot.slane %v1655, 2
      %v1658 = vshll.u32 %v1453, 16
      %v1660 = vrot.slane %v1658, 3
      %v1661 = vor.u32 %v1657, %v1660
      %v1662 = vsel %vm1627, %v1652, %v1661
      %v1664 = vshrl.u32 %v1454, 16
      %v1666 = vrot.slane %v1664, 2
      %v1667 = vshll.u32 %v1454, 16
      %v1669 = vrot.slane %v1667, 3
      %v1670 = vor.u32 %v1666, %v1669
      %v1671 = vsel %vm1627, %v1661, %v1670
      %v1673 = vshrl.u32 %v1626, 16
      %v1675 = vrot.slane %v1673, 2
      %v1676 = vshll.u32 %v1626, 16
      %v1678 = vrot.slane %v1676, 3
      %v1679 = vor.u32 %v1675, %v1678
      %v1680 = vsel %vm1627, %v1670, %v1679
      %v1702 = vunpack.c.l.b16 %v1608
      %v1703 = vunpack.c.l.b16 %v1609
      %v1704 = vunpack.c.l.b16 %v1610
      %v1705 = vunpack.c.l.b16 %v1611
      %v1706 = vunpack.c.l.b16 %v1612
      %v1707 = vunpack.c.l.b16 %v1613
      %v1708 = vunpack.c.l.b16 %v1614
      %v1709 = vunpack.c.l.b16 %v1615
      %v1710 = vunpack.c.l.b16 %v1616
      %v1711 = vunpack.c.l.b16 %v1617
      %v1712 = vunpack.c.l.b16 %v1618
      %v1713 = vunpack.c.l.b16 %v1619
      %v1714 = vunpack.c.l.b16 %v1620
      %v1715 = vunpack.c.l.b16 %v1621
      %v1716 = vunpack.c.l.b16 %v1622
      %v1717 = vunpack.c.l.b16 %v1623
      %v1718 = vpack.c.b16 %v1703, %v1702
      %v1719 = vpack.c.b16 %v1705, %v1704
      %v1720 = vpack.c.b16 %v1707, %v1706
      %v1721 = vpack.c.b16 %v1709, %v1708
      %v1722 = vpack.c.b16 %v1711, %v1710
      %v1723 = vpack.c.b16 %v1713, %v1712
      %v1724 = vpack.c.b16 %v1715, %v1714
      %v1725 = vpack.c.b16 %v1717, %v1716
      %1734 = vmatprep.subr.bf16.mxu0 0
      %1735 = vmatpush1.bf16.msra.mxu0 %v1725
      %1736 = vmatprep.subr.bf16.mxu0 0
      %1737 = vmatpush1.bf16.msra.mxu0 %v1724
      %1738 = vmatprep.subr.bf16.mxu0 0
      %1739 = vmatpush1.bf16.msra.mxu0 %v1723
      %1740 = vmatprep.subr.bf16.mxu0 0
      %1741 = vmatpush1.bf16.msra.mxu0 %v1722
      %1742 = vmatprep.subr.bf16.mxu0 0
      %1743 = vmatpush1.bf16.msra.mxu0 %v1721
      %1744 = vmatprep.subr.bf16.mxu0 0
      %1745 = vmatpush1.bf16.msra.mxu0 %v1720
      %1746 = vmatprep.subr.bf16.mxu0 0
      %1747 = vmatpush1.bf16.msra.mxu0 %v1719
      %1748 = vmatprep.subr.bf16.mxu0 0
      %1749 = vmatpush1.bf16.msra.mxu0 %v1718
      %1750 = vmatprep.subr.bf16.mxu0 0
      %1751 = vmatpush2.bf16.msra.mxu0 0
      %1752 = vmatprep.subr.bf16.mxu0 0
      %1753 = vmatpush2.bf16.msra.mxu0 0
      %1754 = vmatprep.subr.bf16.mxu0 0
      %1755 = vmatpush2.bf16.msra.mxu0 0
      %1756 = vmatprep.subr.bf16.mxu0 0
      %1757 = vmatpush2.bf16.msra.mxu0 0
      %1758 = vmatprep.subr.bf16.mxu0 0
      %1759 = vmatpush2.bf16.msra.mxu0 0
      %1760 = vmatprep.subr.bf16.mxu0 0
      %1761 = vmatpush2.bf16.msra.mxu0 0
      %1762 = vmatprep.subr.bf16.mxu0 0
      %1763 = vmatpush2.bf16.msra.mxu0 0
      %1764 = vmatprep.subr.bf16.mxu0 0
      %1765 = vmatpush2.bf16.msra.mxu0 0
      %1766 = vmatprep.mubr.bf16.mxu0 0
      %1767 = vmatmul.mubr.bf16.gmra.mxu0 %v1644
      %v1768 = vpop.f32.mrf.mxu0
      %v1769 = vadd.f32 0.0, %v1768
      %v1770 = vpop.f32.mrf.mxu0
      %v1771 = vpop.f32.mrf.mxu0
      %v1772 = vadd.f32 0.0, %v1771
      %v1773 = vpop.f32.mrf.mxu0
      %1774 = vmatprep.mubr.bf16.mxu0 0
      %1775 = vmatmul.mubr.bf16.gmra.mxu0 %v1653
      %v1776 = vpop.f32.mrf.mxu0
      %v1777 = vadd.f32 0.0, %v1776
      %v1778 = vpop.f32.mrf.mxu0
      %v1779 = vpop.f32.mrf.mxu0
      %v1780 = vadd.f32 0.0, %v1779
      %v1781 = vpop.f32.mrf.mxu0
      %1782 = vmatprep.mubr.bf16.mxu0 0
      %1783 = vmatmul.mubr.bf16.gmra.mxu0 %v1662
      %v1784 = vpop.f32.mrf.mxu0
      %v1785 = vadd.f32 0.0, %v1784
      %v1786 = vpop.f32.mrf.mxu0
      %v1787 = vpop.f32.mrf.mxu0
      %v1788 = vadd.f32 0.0, %v1787
      %v1789 = vpop.f32.mrf.mxu0
      %1790 = vmatprep.mubr.bf16.mxu0 0
      %1791 = vmatmul.mubr.bf16.gmra.mxu0 %v1671
      %v1792 = vpop.f32.mrf.mxu0
      %v1793 = vadd.f32 0.0, %v1792
      %v1794 = vpop.f32.mrf.mxu0
      %v1795 = vpop.f32.mrf.mxu0
      %v1796 = vadd.f32 0.0, %v1795
      %v1797 = vpop.f32.mrf.mxu0
      %1798 = vmatprep.mubr.bf16.mxu0 0
      %1799 = vmatmul.mubr.bf16.gmra.mxu0 %v1680
      %v1800 = vpop.f32.mrf.mxu0
      %v1801 = vadd.f32 0.0, %v1800
      %v1802 = vpop.f32.mrf.mxu0
      %v1803 = vpop.f32.mrf.mxu0
      %v1804 = vadd.f32 0.0, %v1803
      %v1805 = vpop.f32.mrf.mxu0
      %1806 = vdwg.mxu0
      %v1807 = vadd.f32 %v1593, %v1769
      %v1808 = vadd.f32 %v1594, %v1772
      %v1809 = vadd.f32 %v1595, %v1777
      %v1810 = vadd.f32 %v1596, %v1780
      %v1811 = vadd.f32 %v1597, %v1785
      %v1812 = vadd.f32 %v1598, %v1788
      %v1813 = vadd.f32 %v1599, %v1793
      %v1814 = vadd.f32 %v1600, %v1796
      %v1815 = vadd.f32 %v1601, %v1801
      %v1816 = vadd.f32 %v1602, %v1804
      %v1817 = vld [vmem:[%s223 + $0x8] sm:$0x8]
      %s1818 = sadd.s32 %s267, 8
      %s1819 = smul.u32 %s1818, 16
      %s1820 = smul.addr %s1819, 4
      %s1821 = scalar_lea.vmem %s1, %s1820
      %v1822 = vld [vmem:[%s1821] sm:$0xf]
      %v1823 = vld [vmem:[%s1821 + $0x4] sm:$0xf]
      %v1824 = vld [vmem:[%s1821 + $0x8] sm:$0xf]
      %v1825 = vld [vmem:[%s1821 + $0xc] sm:$0xf]
      %v1826 = vld [vmem:[%s1821 + $0x10] sm:$0xf]
      %v1827 = vld [vmem:[%s1821 + $0x14] sm:$0xf]
      %v1828 = vld [vmem:[%s1821 + $0x18] sm:$0xf]
      %v1829 = vld [vmem:[%s1821 + $0x1c] sm:$0xf]
      %v1830 = vld [vmem:[%s1821 + $0x20] sm:$0xf]
      %v1831 = vld [vmem:[%s1821 + $0x24] sm:$0xf]
      %v1832 = vld [vmem:[%s1821 + $0x28] sm:$0xf]
      %v1833 = vld [vmem:[%s1821 + $0x2c] sm:$0xf]
      %v1834 = vld [vmem:[%s1821 + $0x30] sm:$0xf]
      %v1835 = vld [vmem:[%s1821 + $0x34] sm:$0xf]
      %v1836 = vld [vmem:[%s1821 + $0x38] sm:$0xf]
      %v1837 = vld [vmem:[%s1821 + $0x3c] sm:$0xf]
      %v1839 = vunpack.c.l.b16 %v1817
      %v1840 = vpack.c.b16 %v1440, %v1839
      %vm1841 = vcmask 1044480
      %v1842 = vrot.slane %v1840, 3
      %v1843 = vrot.slane %v1451, 3
      %v1844 = vsel %vm1841, %v1842, %v1843
      %v1845 = vrot.slane %v1452, 3
      %v1846 = vsel %vm1841, %v1843, %v1845
      %v1847 = vrot.slane %v1453, 3
      %v1848 = vsel %vm1841, %v1845, %v1847
      %v1849 = vrot.slane %v1454, 3
      %v1850 = vsel %vm1841, %v1847, %v1849
      %v1851 = vrot.slane %v1626, 3
      %v1852 = vsel %vm1841, %v1849, %v1851
      %v1874 = vunpack.c.l.b16 %v1822
      %v1875 = vunpack.c.l.b16 %v1823
      %v1876 = vunpack.c.l.b16 %v1824
      %v1877 = vunpack.c.l.b16 %v1825
      %v1878 = vunpack.c.l.b16 %v1826
      %v1879 = vunpack.c.l.b16 %v1827
      %v1880 = vunpack.c.l.b16 %v1828
      %v1881 = vunpack.c.l.b16 %v1829
      %v1882 = vunpack.c.l.b16 %v1830
      %v1883 = vunpack.c.l.b16 %v1831
      %v1884 = vunpack.c.l.b16 %v1832
      %v1885 = vunpack.c.l.b16 %v1833
      %v1886 = vunpack.c.l.b16 %v1834
      %v1887 = vunpack.c.l.b16 %v1835
      %v1888 = vunpack.c.l.b16 %v1836
      %v1889 = vunpack.c.l.b16 %v1837
      %v1890 = vpack.c.b16 %v1875, %v1874
      %v1891 = vpack.c.b16 %v1877, %v1876
      %v1892 = vpack.c.b16 %v1879, %v1878
      %v1893 = vpack.c.b16 %v1881, %v1880
      %v1894 = vpack.c.b16 %v1883, %v1882
      %v1895 = vpack.c.b16 %v1885, %v1884
      %v1896 = vpack.c.b16 %v1887, %v1886
      %v1897 = vpack.c.b16 %v1889, %v1888
      %1906 = vmatprep.subr.bf16.mxu0 0
      %1907 = vmatpush1.bf16.msra.mxu0 %v1897
      %1908 = vmatprep.subr.bf16.mxu0 0
      %1909 = vmatpush1.bf16.msra.mxu0 %v1896
      %1910 = vmatprep.subr.bf16.mxu0 0
      %1911 = vmatpush1.bf16.msra.mxu0 %v1895
      %1912 = vmatprep.subr.bf16.mxu0 0
      %1913 = vmatpush1.bf16.msra.mxu0 %v1894
      %1914 = vmatprep.subr.bf16.mxu0 0
      %1915 = vmatpush1.bf16.msra.mxu0 %v1893
      %1916 = vmatprep.subr.bf16.mxu0 0
      %1917 = vmatpush1.bf16.msra.mxu0 %v1892
      %1918 = vmatprep.subr.bf16.mxu0 0
      %1919 = vmatpush1.bf16.msra.mxu0 %v1891
      %1920 = vmatprep.subr.bf16.mxu0 0
      %1921 = vmatpush1.bf16.msra.mxu0 %v1890
      %1922 = vmatprep.subr.bf16.mxu0 0
      %1923 = vmatpush2.bf16.msra.mxu0 0
      %1924 = vmatprep.subr.bf16.mxu0 0
      %1925 = vmatpush2.bf16.msra.mxu0 0
      %1926 = vmatprep.subr.bf16.mxu0 0
      %1927 = vmatpush2.bf16.msra.mxu0 0
      %1928 = vmatprep.subr.bf16.mxu0 0
      %1929 = vmatpush2.bf16.msra.mxu0 0
      %1930 = vmatprep.subr.bf16.mxu0 0
      %1931 = vmatpush2.bf16.msra.mxu0 0
      %1932 = vmatprep.subr.bf16.mxu0 0
      %1933 = vmatpush2.bf16.msra.mxu0 0
      %1934 = vmatprep.subr.bf16.mxu0 0
      %1935 = vmatpush2.bf16.msra.mxu0 0
      %1936 = vmatprep.subr.bf16.mxu0 0
      %1937 = vmatpush2.bf16.msra.mxu0 0
      %1938 = vmatprep.mubr.bf16.mxu0 0
      %1939 = vmatmul.mubr.bf16.gmra.mxu0 %v1844
      %v1940 = vpop.f32.mrf.mxu0
      %v1941 = vadd.f32 0.0, %v1940
      %v1942 = vpop.f32.mrf.mxu0
      %v1943 = vpop.f32.mrf.mxu0
      %v1944 = vadd.f32 0.0, %v1943
      %v1945 = vpop.f32.mrf.mxu0
      %1946 = vmatprep.mubr.bf16.mxu0 0
      %1947 = vmatmul.mubr.bf16.gmra.mxu0 %v1846
      %v1948 = vpop.f32.mrf.mxu0
      %v1949 = vadd.f32 0.0, %v1948
      %v1950 = vpop.f32.mrf.mxu0
      %v1951 = vpop.f32.mrf.mxu0
      %v1952 = vadd.f32 0.0, %v1951
      %v1953 = vpop.f32.mrf.mxu0
      %1954 = vmatprep.mubr.bf16.mxu0 0
      %1955 = vmatmul.mubr.bf16.gmra.mxu0 %v1848
      %v1956 = vpop.f32.mrf.mxu0
      %v1957 = vadd.f32 0.0, %v1956
      %v1958 = vpop.f32.mrf.mxu0
      %v1959 = vpop.f32.mrf.mxu0
      %v1960 = vadd.f32 0.0, %v1959
      %v1961 = vpop.f32.mrf.mxu0
      %1962 = vmatprep.mubr.bf16.mxu0 0
      %1963 = vmatmul.mubr.bf16.gmra.mxu0 %v1850
      %v1964 = vpop.f32.mrf.mxu0
      %v1965 = vadd.f32 0.0, %v1964
      %v1966 = vpop.f32.mrf.mxu0
      %v1967 = vpop.f32.mrf.mxu0
      %v1968 = vadd.f32 0.0, %v1967
      %v1969 = vpop.f32.mrf.mxu0
      %1970 = vmatprep.mubr.bf16.mxu0 0
      %1971 = vmatmul.mubr.bf16.gmra.mxu0 %v1852
      %v1972 = vpop.f32.mrf.mxu0
      %v1973 = vadd.f32 0.0, %v1972
      %v1974 = vpop.f32.mrf.mxu0
      %v1975 = vpop.f32.mrf.mxu0
      %v1976 = vadd.f32 0.0, %v1975
      %v1977 = vpop.f32.mrf.mxu0
      %1978 = vdwg.mxu0
      %v1979 = vadd.f32 %v1807, %v1941
      %v1980 = vadd.f32 %v1808, %v1944
      %v1981 = vadd.f32 %v1809, %v1949
      %v1982 = vadd.f32 %v1810, %v1952
      %v1983 = vadd.f32 %v1811, %v1957
      %v1984 = vadd.f32 %v1812, %v1960
      %v1985 = vadd.f32 %v1813, %v1965
      %v1986 = vadd.f32 %v1814, %v1968
      %v1987 = vadd.f32 %v1815, %v1973
      %v1988 = vadd.f32 %v1816, %v1976
      %v1989 = vld [vmem:[#allocation2] sm:$0xff]
      %v1990 = vld [vmem:[#allocation2 + $0x8] sm:$0xff]
      %v1991 = vld [vmem:[#allocation2 + $0x10] sm:$0xff]
      %v1992 = vld [vmem:[#allocation2 + $0x18] sm:$0xff]
      %v1993 = vld [vmem:[#allocation2 + $0x20] sm:$0xff]
      %v1994 = vld [vmem:[#allocation2 + $0x28] sm:$0xff]
      %v1995 = vld [vmem:[#allocation2 + $0x30] sm:$0xff]
      %v1996 = vld [vmem:[#allocation2 + $0x38] sm:$0xff]
      %v1997 = vld [vmem:[#allocation2 + $0x40] sm:$0xff]
      %v1998 = vld [vmem:[#allocation2 + $0x48] sm:$0xff]
      %v1999 = vadd.f32 %v1989, %v1979
      %v2000 = vadd.f32 %v1990, %v1980
      %v2001 = vadd.f32 %v1991, %v1981
      %v2002 = vadd.f32 %v1992, %v1982
      %v2003 = vadd.f32 %v1993, %v1983
      %v2004 = vadd.f32 %v1994, %v1984
      %v2005 = vadd.f32 %v1995, %v1985
      %v2006 = vadd.f32 %v1996, %v1986
      %v2007 = vadd.f32 %v1997, %v1987
      %v2008 = vadd.f32 %v1998, %v1988
      %2009 = vst [vmem:[#allocation2] sm:$0xff] %v1999
      %2010 = vst [vmem:[#allocation2 + $0x8] sm:$0xff] %v2000
      %2011 = vst [vmem:[#allocation2 + $0x10] sm:$0xff] %v2001
      %2012 = vst [vmem:[#allocation2 + $0x18] sm:$0xff] %v2002
      %2013 = vst [vmem:[#allocation2 + $0x20] sm:$0xff] %v2003
      %2014 = vst [vmem:[#allocation2 + $0x28] sm:$0xff] %v2004
      %2015 = vst [vmem:[#allocation2 + $0x30] sm:$0xff] %v2005
      %2016 = vst [vmem:[#allocation2 + $0x38] sm:$0xff] %v2006
      %2017 = vst [vmem:[#allocation2 + $0x40] sm:$0xff] %v2007
      %2018 = vst [vmem:[#allocation2 + $0x48] sm:$0xff] %v2008
      // Predicated region
      $region33: #{_lambda_.11} parent=27 // pred_check
        %p2019 = pneg %p243
      $region34: #{_lambda_.11} parent=27 // pred_check_branch
        %2021 = sbr.rel (%p2019) target = $region36
      $region35: #{_lambda_.11} parent=27 // pred_region
        %v2022 = vld [vmem:[#allocation2] sm:$0xff]
        %v2023 = vld [vmem:[#allocation2 + $0x8] sm:$0xff]
        %v2024 = vld [vmem:[#allocation2 + $0x10] sm:$0xff]
        %v2025 = vld [vmem:[#allocation2 + $0x18] sm:$0xff]
        %v2026 = vld [vmem:[#allocation2 + $0x20] sm:$0xff]
        %v2027 = vld [vmem:[#allocation2 + $0x28] sm:$0xff]
        %v2028 = vld [vmem:[#allocation2 + $0x30] sm:$0xff]
        %v2029 = vld [vmem:[#allocation2 + $0x38] sm:$0xff]
        %v2030 = vld [vmem:[#allocation2 + $0x40] sm:$0xff]
        %v2031 = vld [vmem:[#allocation2 + $0x48] sm:$0xff]
        %vm2032 = vcmp.ge.f32.partialorder %v2022, 0.0
        %vm2033 = vcmp.ge.f32.partialorder %v2023, 0.0
        %vm2034 = vcmp.ge.f32.partialorder %v2024, 0.0
        %vm2035 = vcmp.ge.f32.partialorder %v2025, 0.0
        %vm2036 = vcmp.ge.f32.partialorder %v2026, 0.0
        %vm2037 = vcmp.ge.f32.partialorder %v2027, 0.0
        %vm2038 = vcmp.ge.f32.partialorder %v2028, 0.0
        %vm2039 = vcmp.ge.f32.partialorder %v2029, 0.0
        %vm2040 = vcmp.ge.f32.partialorder %v2030, 0.0
        %vm2041 = vcmp.ge.f32.partialorder %v2031, 0.0
        %v2042 = vmul.f32 %v2022, 0.01
        %v2043 = vmul.f32 %v2023, 0.01
        %v2044 = vmul.f32 %v2024, 0.01
        %v2045 = vmul.f32 %v2025, 0.01
        %v2046 = vmul.f32 %v2026, 0.01
        %v2047 = vmul.f32 %v2027, 0.01
        %v2048 = vmul.f32 %v2028, 0.01
        %v2049 = vmul.f32 %v2029, 0.01
        %v2050 = vmul.f32 %v2030, 0.01
        %v2051 = vmul.f32 %v2031, 0.01
        %v2052 = vsel %vm2032, %v2022, %v2042
        %v2053 = vsel %vm2033, %v2023, %v2043
        %v2054 = vsel %vm2034, %v2024, %v2044
        %v2055 = vsel %vm2035, %v2025, %v2045
        %v2056 = vsel %vm2036, %v2026, %v2046
        %v2057 = vsel %vm2037, %v2027, %v2047
        %v2058 = vsel %vm2038, %v2028, %v2048
        %v2059 = vsel %vm2039, %v2029, %v2049
        %v2060 = vsel %vm2040, %v2030, %v2050
        %v2061 = vsel %vm2041, %v2031, %v2051
        %2062 = vst [vmem:[%s233] sm:$0xff] %v2052
        %2063 = vst [vmem:[%s233 + $0x8] sm:$0xff] %v2053
        %2064 = vst [vmem:[%s233 + $0x10] sm:$0xff] %v2054
        %2065 = vst [vmem:[%s233 + $0x18] sm:$0xff] %v2055
        %2066 = vst [vmem:[%s233 + $0x20] sm:$0xff] %v2056
        %2067 = vst [vmem:[%s233 + $0x28] sm:$0xff] %v2057
        %2068 = vst [vmem:[%s233 + $0x30] sm:$0xff] %v2058
        %2069 = vst [vmem:[%s233 + $0x38] sm:$0xff] %v2059
        %2070 = vst [vmem:[%s233 + $0x40] sm:$0xff] %v2060
        %2071 = vst [vmem:[%s233 + $0x48] sm:$0xff] %v2061
        %v2072 = vlaneseq
        %v2073 = vshrl.u32 %v2072, 7
        %v2074 = vadd.s32 %v2073, 8
        %v2075 = vadd.s32 %v2073, 16
        %v2076 = vadd.s32 %v2073, 24
        %v2077 = vadd.s32 %v2073, 32
        %v2078 = vadd.s32 %v2073, 40
        %v2079 = vadd.s32 %v2073, 48
        %v2080 = vadd.s32 %v2073, 56
        %v2081 = vadd.s32 %v2073, 64
        %v2082 = vadd.s32 %v2073, 72
        %vm2083 = vcmp.lt.s32.totalorder %v2073, 0
        %v2084 = vsub.s32 0, %v2073
        %v2085 = vsel %vm2083, %v2084, %v2073
        %v2086 = vmul.u32.u64.compose %v2085, 3435973837
        %v2087 = vextract.low.u32 %v2086
        %v2088 = vextract.high.u32 %v2086
        %v2089 = vshrl.u32 %v2088, 3
        %v2090 = vmul.u32 %v2089, 10
        %v2091 = vsub.s32 %v2085, %v2090
        %v2092 = vsub.s32 0, %v2091
        %v2093 = vsel %vm2083, %v2092, %v2091
        %vm2094 = vcmp.lt.s32.totalorder %v2074, 0
        %v2095 = vsub.s32 0, %v2074
        %v2096 = vsel %vm2094, %v2095, %v2074
        %v2097 = vmul.u32.u64.compose %v2096, 3435973837
        %v2098 = vextract.low.u32 %v2097
        %v2099 = vextract.high.u32 %v2097
        %v2100 = vshrl.u32 %v2099, 3
        %v2101 = vmul.u32 %v2100, 10
        %v2102 = vsub.s32 %v2096, %v2101
        %v2103 = vsub.s32 0, %v2102
        %v2104 = vsel %vm2094, %v2103, %v2102
        %vm2105 = vcmp.lt.s32.totalorder %v2075, 0
        %v2106 = vsub.s32 0, %v2075
        %v2107 = vsel %vm2105, %v2106, %v2075
        %v2108 = vmul.u32.u64.compose %v2107, 3435973837
        %v2109 = vextract.low.u32 %v2108
        %v2110 = vextract.high.u32 %v2108
        %v2111 = vshrl.u32 %v2110, 3
        %v2112 = vmul.u32 %v2111, 10
        %v2113 = vsub.s32 %v2107, %v2112
        %v2114 = vsub.s32 0, %v2113
        %v2115 = vsel %vm2105, %v2114, %v2113
        %vm2116 = vcmp.lt.s32.totalorder %v2076, 0
        %v2117 = vsub.s32 0, %v2076
        %v2118 = vsel %vm2116, %v2117, %v2076
        %v2119 = vmul.u32.u64.compose %v2118, 3435973837
        %v2120 = vextract.low.u32 %v2119
        %v2121 = vextract.high.u32 %v2119
        %v2122 = vshrl.u32 %v2121, 3
        %v2123 = vmul.u32 %v2122, 10
        %v2124 = vsub.s32 %v2118, %v2123
        %v2125 = vsub.s32 0, %v2124
        %v2126 = vsel %vm2116, %v2125, %v2124
        %vm2127 = vcmp.lt.s32.totalorder %v2077, 0
        %v2128 = vsub.s32 0, %v2077
        %v2129 = vsel %vm2127, %v2128, %v2077
        %v2130 = vmul.u32.u64.compose %v2129, 3435973837
        %v2131 = vextract.low.u32 %v2130
        %v2132 = vextract.high.u32 %v2130
        %v2133 = vshrl.u32 %v2132, 3
        %v2134 = vmul.u32 %v2133, 10
        %v2135 = vsub.s32 %v2129, %v2134
        %v2136 = vsub.s32 0, %v2135
        %v2137 = vsel %vm2127, %v2136, %v2135
        %vm2138 = vcmp.lt.s32.totalorder %v2078, 0
        %v2139 = vsub.s32 0, %v2078
        %v2140 = vsel %vm2138, %v2139, %v2078
        %v2141 = vmul.u32.u64.compose %v2140, 3435973837
        %v2142 = vextract.low.u32 %v2141
        %v2143 = vextract.high.u32 %v2141
        %v2144 = vshrl.u32 %v2143, 3
        %v2145 = vmul.u32 %v2144, 10
        %v2146 = vsub.s32 %v2140, %v2145
        %v2147 = vsub.s32 0, %v2146
        %v2148 = vsel %vm2138, %v2147, %v2146
        %vm2149 = vcmp.lt.s32.totalorder %v2079, 0
        %v2150 = vsub.s32 0, %v2079
        %v2151 = vsel %vm2149, %v2150, %v2079
        %v2152 = vmul.u32.u64.compose %v2151, 3435973837
        %v2153 = vextract.low.u32 %v2152
        %v2154 = vextract.high.u32 %v2152
        %v2155 = vshrl.u32 %v2154, 3
        %v2156 = vmul.u32 %v2155, 10
        %v2157 = vsub.s32 %v2151, %v2156
        %v2158 = vsub.s32 0, %v2157
        %v2159 = vsel %vm2149, %v2158, %v2157
        %vm2160 = vcmp.lt.s32.totalorder %v2080, 0
        %v2161 = vsub.s32 0, %v2080
        %v2162 = vsel %vm2160, %v2161, %v2080
        %v2163 = vmul.u32.u64.compose %v2162, 3435973837
        %v2164 = vextract.low.u32 %v2163
        %v2165 = vextract.high.u32 %v2163
        %v2166 = vshrl.u32 %v2165, 3
        %v2167 = vmul.u32 %v2166, 10
        %v2168 = vsub.s32 %v2162, %v2167
        %v2169 = vsub.s32 0, %v2168
        %v2170 = vsel %vm2160, %v2169, %v2168
        %vm2171 = vcmp.lt.s32.totalorder %v2081, 0
        %v2172 = vsub.s32 0, %v2081
        %v2173 = vsel %vm2171, %v2172, %v2081
        %v2174 = vmul.u32.u64.compose %v2173, 3435973837
        %v2175 = vextract.low.u32 %v2174
        %v2176 = vextract.high.u32 %v2174
        %v2177 = vshrl.u32 %v2176, 3
        %v2178 = vmul.u32 %v2177, 10
        %v2179 = vsub.s32 %v2173, %v2178
        %v2180 = vsub.s32 0, %v2179
        %v2181 = vsel %vm2171, %v2180, %v2179
        %vm2182 = vcmp.lt.s32.totalorder %v2082, 0
        %v2183 = vsub.s32 0, %v2082
        %v2184 = vsel %vm2182, %v2183, %v2082
        %v2185 = vmul.u32.u64.compose %v2184, 3435973837
        %v2186 = vextract.low.u32 %v2185
        %v2187 = vextract.high.u32 %v2185
        %v2188 = vshrl.u32 %v2187, 3
        %v2189 = vmul.u32 %v2188, 10
        %v2190 = vsub.s32 %v2184, %v2189
        %v2191 = vsub.s32 0, %v2190
        %v2192 = vsel %vm2182, %v2191, %v2190
        %vm2193 = vcmp.ne.s32.totalorder %v2093, 0
        %vm2194 = vcmp.ne.s32.totalorder %v2104, 0
        %vm2195 = vcmp.ne.s32.totalorder %v2115, 0
        %vm2196 = vcmp.ne.s32.totalorder %v2126, 0
        %vm2197 = vcmp.ne.s32.totalorder %v2137, 0
        %vm2198 = vcmp.ne.s32.totalorder %v2148, 0
        %vm2199 = vcmp.ne.s32.totalorder %v2159, 0
        %vm2200 = vcmp.ne.s32.totalorder %v2170, 0
        %vm2201 = vcmp.ne.s32.totalorder %v2181, 0
        %vm2202 = vcmp.ne.s32.totalorder %v2192, 0
        %vm2203 = vcmp.lt.s32.totalorder %v2093, 0
        %vm2204 = vcmp.lt.s32.totalorder %v2104, 0
        %vm2205 = vcmp.lt.s32.totalorder %v2115, 0
        %vm2206 = vcmp.lt.s32.totalorder %v2126, 0
        %vm2207 = vcmp.lt.s32.totalorder %v2137, 0
        %vm2208 = vcmp.lt.s32.totalorder %v2148, 0
        %vm2209 = vcmp.lt.s32.totalorder %v2159, 0
        %vm2210 = vcmp.lt.s32.totalorder %v2170, 0
        %vm2211 = vcmp.lt.s32.totalorder %v2181, 0
        %vm2212 = vcmp.lt.s32.totalorder %v2192, 0
        %vm2213 = vmand %vm2203, %vm2193
        %vm2214 = vmand %vm2204, %vm2194
        %vm2215 = vmand %vm2205, %vm2195
        %vm2216 = vmand %vm2206, %vm2196
        %vm2217 = vmand %vm2207, %vm2197
        %vm2218 = vmand %vm2208, %vm2198
        %vm2219 = vmand %vm2209, %vm2199
        %vm2220 = vmand %vm2210, %vm2200
        %vm2221 = vmand %vm2211, %vm2201
        %vm2222 = vmand %vm2212, %vm2202
        %v2223 = vadd.s32 %v2093, 10
        %v2224 = vadd.s32 %v2104, 10
        %v2225 = vadd.s32 %v2115, 10
        %v2226 = vadd.s32 %v2126, 10
        %v2227 = vadd.s32 %v2137, 10
        %v2228 = vadd.s32 %v2148, 10
        %v2229 = vadd.s32 %v2159, 10
        %v2230 = vadd.s32 %v2170, 10
        %v2231 = vadd.s32 %v2181, 10
        %v2232 = vadd.s32 %v2192, 10
        %v2233 = vsel %vm2213, %v2223, %v2093
        %v2234 = vsel %vm2214, %v2224, %v2104
        %v2235 = vsel %vm2215, %v2225, %v2115
        %v2236 = vsel %vm2216, %v2226, %v2126
        %v2237 = vsel %vm2217, %v2227, %v2137
        %v2238 = vsel %vm2218, %v2228, %v2148
        %v2239 = vsel %vm2219, %v2229, %v2159
        %v2240 = vsel %vm2220, %v2230, %v2170
        %v2241 = vsel %vm2221, %v2231, %v2181
        %v2242 = vsel %vm2222, %v2232, %v2192
        %vm2243 = vcmp.lt.s32.totalorder %v2233, 8
        %vm2244 = vcmp.lt.s32.totalorder %v2234, 8
        %vm2245 = vcmp.lt.s32.totalorder %v2235, 8
        %vm2246 = vcmp.lt.s32.totalorder %v2236, 8
        %vm2247 = vcmp.lt.s32.totalorder %v2237, 8
        %vm2248 = vcmp.lt.s32.totalorder %v2238, 8
        %vm2249 = vcmp.lt.s32.totalorder %v2239, 8
        %vm2250 = vcmp.lt.s32.totalorder %v2240, 8
        %vm2251 = vcmp.lt.s32.totalorder %v2241, 8
        %vm2252 = vcmp.lt.s32.totalorder %v2242, 8
        %v2253 = vsel %vm2243, 1, 0
        %v2254 = vsel %vm2244, 1, 0
        %v2255 = vsel %vm2245, 1, 0
        %v2256 = vsel %vm2246, 1, 0
        %v2257 = vsel %vm2247, 1, 0
        %v2258 = vsel %vm2248, 1, 0
        %v2259 = vsel %vm2249, 1, 0
        %v2260 = vsel %vm2250, 1, 0
        %v2261 = vsel %vm2251, 1, 0
        %v2262 = vsel %vm2252, 1, 0
        %vm2263 = vcmp.eq.s32.totalorder %v2253, 1
        %vm2264 = vcmp.eq.s32.totalorder %v2254, 1
        %vm2265 = vcmp.eq.s32.totalorder %v2255, 1
        %vm2266 = vcmp.eq.s32.totalorder %v2256, 1
        %vm2267 = vcmp.eq.s32.totalorder %v2257, 1
        %vm2268 = vcmp.eq.s32.totalorder %v2258, 1
        %vm2269 = vcmp.eq.s32.totalorder %v2259, 1
        %vm2270 = vcmp.eq.s32.totalorder %v2260, 1
        %vm2271 = vcmp.eq.s32.totalorder %v2261, 1
        %vm2272 = vcmp.eq.s32.totalorder %v2262, 1
        %v2273 = vsel %vm2263, %v2052, 0.0
        %v2274 = vsel %vm2264, %v2053, 0.0
        %v2275 = vsel %vm2265, %v2054, 0.0
        %v2276 = vsel %vm2266, %v2055, 0.0
        %v2277 = vsel %vm2267, %v2056, 0.0
        %v2278 = vsel %vm2268, %v2057, 0.0
        %v2279 = vsel %vm2269, %v2058, 0.0
        %v2280 = vsel %vm2270, %v2059, 0.0
        %v2281 = vsel %vm2271, %v2060, 0.0
        %v2282 = vsel %vm2272, %v2061, 0.0
        %v2283 = vadd.f32 %v2273, %v2274
        %v2284 = vadd.f32 %v2283, %v2275
        %v2285 = vadd.f32 %v2284, %v2276
        %v2286 = vadd.f32 %v2285, %v2277
        %v2287 = vadd.f32 %v2286, %v2278
        %v2288 = vadd.f32 %v2287, %v2279
        %v2289 = vadd.f32 %v2288, %v2280
        %v2290 = vadd.f32 %v2289, %v2281
        %v2291 = vadd.f32 %v2290, %v2282
        %v2292 = vrot.slane %v2291, 4
        %v2293 = vadd.f32 %v2291, %v2292
        %v2294 = vrot.slane %v2293, 2
        %v2295 = vadd.f32 %v2293, %v2294
        %v2296 = vrot.slane %v2295, 1
        %v2297 = vadd.f32 %v2295, %v2296
        %2298 = vst [vmem:[%s241] sm:$0x1] %v2297
        %v2299 = vmul.f32 %v2273, %v2273
        %v2300 = vmul.f32 %v2274, %v2274
        %v2301 = vmul.f32 %v2275, %v2275
        %v2302 = vmul.f32 %v2276, %v2276
        %v2303 = vmul.f32 %v2277, %v2277
        %v2304 = vmul.f32 %v2278, %v2278
        %v2305 = vmul.f32 %v2279, %v2279
        %v2306 = vmul.f32 %v2280, %v2280
        %v2307 = vmul.f32 %v2281, %v2281
        %v2308 = vmul.f32 %v2282, %v2282
        %v2309 = vadd.f32 %v2299, %v2300
        %v2310 = vadd.f32 %v2309, %v2301
        %v2311 = vadd.f32 %v2310, %v2302
        %v2312 = vadd.f32 %v2311, %v2303
        %v2313 = vadd.f32 %v2312, %v2304
        %v2314 = vadd.f32 %v2313, %v2305
        %v2315 = vadd.f32 %v2314, %v2306
        %v2316 = vadd.f32 %v2315, %v2307
        %v2317 = vadd.f32 %v2316, %v2308
        %v2318 = vrot.slane %v2317, 4
        %v2319 = vadd.f32 %v2317, %v2318
        %v2320 = vrot.slane %v2319, 2
        %v2321 = vadd.f32 %v2319, %v2320
        %v2322 = vrot.slane %v2321, 1
        %v2323 = vadd.f32 %v2321, %v2322
        %2324 = vst [vmem:[%s241 + $0x1] sm:$0x1] %v2323
      $region36: #{_lambda_.11} parent=27 // pred_fallthru
        _
      %p2325 = scmp.lt.s32.totalorder %s20, 1
      %s2326 = scalar_select %p2325, %s20, 1
      %p2327 = scmp.lt.s32.totalorder %s21, 3
      %s2328 = scalar_select %p2327, %s21, 3
      %s2329 = smul.addr %s2328, 10
      %s2330 = smul.addr %s2326, 40
      %s2331 = sadd.s32 %s2329, %s2330
      %s2332 = smul.addr %s2331, 8
      %s2333 = scalar_lea.vmem %s2, %s2332
      %p2334 = scmp.lt.s32.totalorder %s20, 1
      %s2335 = scalar_select %p2334, %s20, 1
      %p2336 = scmp.lt.s32.totalorder %s21, 3
      %s2337 = scalar_select %p2336, %s21, 3
      %s2338 = smul.addr %s2335, 4
      %s2339 = sadd.s32 %s2337, %s2338
      %s2340 = smul.addr %s2339, 2
      %s2341 = scalar_lea.vmem %s3, %s2340
      // Predicated region
      $region37: #{_lambda_.11} parent=27 // pred_check
        %p2342 = pneg %p105
      $region38: #{_lambda_.11} parent=27 // pred_check_branch
        %2344 = sbr.rel (%p2342) target = $region40
      $region39: #{_lambda_.11} parent=27 // pred_region
        _
      $region40: #{_lambda_.11} parent=27 // pred_fallthru
        _
      // Predicated region
      $region41: #{_lambda_.11} parent=27 // pred_check
        %p2345 = pneg %p133
      $region42: #{_lambda_.11} parent=27 // pred_check_branch
        %2347 = sbr.rel (%p2345) target = $region44
      $region43: #{_lambda_.11} parent=27 // pred_region
        _
      $region44: #{_lambda_.11} parent=27 // pred_fallthru
        _
    $region28: #{_lambda_.11} parent=5 // pred_fallthru
      _
    %p2348 = scmp.le.s32.totalorder 2, %s10
    // Predicated region
    $region45: #{_lambda_.11} parent=5 // pred_check
      %p2349 = pneg %p2348
    $region46: #{_lambda_.11} parent=5 // pred_check_branch
      %2351 = sbr.rel (%p2349) target = $region48
    $region47: #{_lambda_.11} parent=5 // pred_region
      %s2352 = ssub.s32 %s10, 2
      // Predicated region
      $region49: #{_lambda_.11} parent=47 // pred_check
        %p2353 = pneg %p111
      $region50: #{_lambda_.11} parent=47 // pred_check_branch
        %2355 = sbr.rel (%p2353) target = $region52
      $region51: #{_lambda_.11} parent=47 // pred_region
        %p2356 = scmp.lt.s32.totalorder %s23, 1
        %s2357 = scalar_select %p2356, %s23, 1
        %p2358 = scmp.lt.s32.totalorder %s24, 3
        %s2359 = scalar_select %p2358, %s24, 3
        %s2360 = smul.addr %s2359, 10
        %s2361 = smul.addr %s2357, 40
        %s2362 = sadd.s32 %s2360, %s2361
        %s2363 = smul.addr %s2362, 8
        %s2364 = scalar_lea.vmem %s2, %s2363
      $region52: #{_lambda_.11} parent=47 // pred_fallthru
        _
      // Predicated region
      $region53: #{_lambda_.11} parent=47 // pred_check
        %p2365 = pneg %p139
      $region54: #{_lambda_.11} parent=47 // pred_check_branch
        %2367 = sbr.rel (%p2365) target = $region56
      $region55: #{_lambda_.11} parent=47 // pred_region
        %p2368 = scmp.lt.s32.totalorder %s23, 1
        %s2369 = scalar_select %p2368, %s23, 1
        %p2370 = scmp.lt.s32.totalorder %s24, 3
        %s2371 = scalar_select %p2370, %s24, 3
        %s2372 = smul.addr %s2369, 4
        %s2373 = sadd.s32 %s2371, %s2372
        %s2374 = smul.addr %s2373, 2
        %s2375 = scalar_lea.vmem %s3, %s2374
      $region56: #{_lambda_.11} parent=47 // pred_fallthru
        _
    $region48: #{_lambda_.11} parent=5 // pred_fallthru
      _
  $region6: #{_lambda_.11} parent=0 // loop_footer
    %s14 = sadd.s32 1, %s10
  $region7: #{_lambda_.11} parent=0 // loop_footer_branch
    %9 = sbr.rel target = $region3
  $region8: #{_lambda_.11} parent=0 // loop_exit
    _

// kernel: _lambda_.14
$region0: #{_lambda_.14}
  #allocation0 [shape = 'u32[]', space=smem, size = 0x4, offset = 0x4, fixed_abs, tag = 'smem constant byte address 0x4 - core index']
  #allocation1 [shape = 'u32[144,128]{1,0:T(1,128)}', space=vmem, size = 0x12000, scoped, tag = 'internal scratch']
  %s0 = inlined_call_operand.vmem [shape: f32[64,10,128], index: 0, kind: input, shape index: {}]
  %s1 = inlined_call_operand.vmem [shape: f32[64,10,128], index: 1, kind: input, shape index: {}]
  %s2 = inlined_call_operand.vmem [shape: f32[1,1,128], index: 2, kind: input, shape index: {}]
  %s3 = inlined_call_operand.vmem [shape: f32[1,1,128], index: 3, kind: input, shape index: {}]
  %s4 = inlined_call_operand.vmem [shape: f32[1,1,128], index: 4, kind: input, shape index: {}]
  %s5 = inlined_call_operand.vmem [shape: f32[1,1,128], index: 5, kind: input, shape index: {}]
  %s6 = inlined_call_operand.vmem [shape: f32[64,8,128], index: 6, kind: output, shape index: {}]
  %s7 = sld [smem:[#allocation0]]
  $region34: #{_lambda_.14} parent=0
    _
  %s9 = ssub.s32 1, %s7
  %s10 = scalar_select 0, %s9, %s7
  // Predicated region
  $region2: #{_lambda_.14} parent=0 // pred_check
    _
  $region3: #{_lambda_.14} parent=0 // pred_check_branch
    %12 = sbr.rel (0) target = $region5
  $region4: #{_lambda_.14} parent=0 // pred_region
    _
  $region5: #{_lambda_.14} parent=0 // pred_fallthru
    _
  // Predicated region
  $region6: #{_lambda_.14} parent=0 // pred_check
    _
  $region7: #{_lambda_.14} parent=0 // pred_check_branch
    %14 = sbr.rel (0) target = $region9
  $region8: #{_lambda_.14} parent=0 // pred_region
    _
  $region9: #{_lambda_.14} parent=0 // pred_fallthru
    _
  // Predicated region
  $region10: #{_lambda_.14} parent=0 // pred_check
    _
  $region11: #{_lambda_.14} parent=0 // pred_check_branch
    %16 = sbr.rel (0) target = $region13
  $region12: #{_lambda_.14} parent=0 // pred_region
    _
  $region13: #{_lambda_.14} parent=0 // pred_fallthru
    _
  // Predicated region
  $region14: #{_lambda_.14} parent=0 // pred_check
    _
  $region15: #{_lambda_.14} parent=0 // pred_check_branch
    %18 = sbr.rel (0) target = $region17
  $region16: #{_lambda_.14} parent=0 // pred_region
    _
  $region17: #{_lambda_.14} parent=0 // pred_fallthru
    _
  // Predicated region
  $region18: #{_lambda_.14} parent=0 // pred_check
    _
  $region19: #{_lambda_.14} parent=0 // pred_check_branch
    %20 = sbr.rel (0) target = $region21
  $region20: #{_lambda_.14} parent=0 // pred_region
    _
  $region21: #{_lambda_.14} parent=0 // pred_fallthru
    _
  // Predicated region
  $region22: #{_lambda_.14} parent=0 // pred_check
    _
  $region23: #{_lambda_.14} parent=0 // pred_check_branch
    %22 = sbr.rel (0) target = $region25
  $region24: #{_lambda_.14} parent=0 // pred_region
    _
  $region25: #{_lambda_.14} parent=0 // pred_fallthru
    _
  %v23 = vld [vmem:[%s0] sm:$0xff]
  %v24 = vld [vmem:[%s0 + $0x10] sm:$0xff]
  %v25 = vld [vmem:[%s0 + $0x20] sm:$0xff]
  %v26 = vld [vmem:[%s0 + $0x30] sm:$0xff]
  %v27 = vld [vmem:[%s0 + $0x40] sm:$0xff]
  %v28 = vld [vmem:[%s0 + $0x50] sm:$0xff]
  %v29 = vld [vmem:[%s0 + $0x60] sm:$0xff]
  %v30 = vld [vmem:[%s0 + $0x70] sm:$0xff]
  %v31 = vld [vmem:[%s0 + $0x80] sm:$0xff]
  %v32 = vld [vmem:[%s0 + $0x90] sm:$0xff]
  %v33 = vld [vmem:[%s0 + $0xa0] sm:$0xff]
  %v34 = vld [vmem:[%s0 + $0xb0] sm:$0xff]
  %v35 = vld [vmem:[%s0 + $0xc0] sm:$0xff]
  %v36 = vld [vmem:[%s0 + $0xd0] sm:$0xff]
  %v37 = vld [vmem:[%s0 + $0xe0] sm:$0xff]
  %v38 = vld [vmem:[%s0 + $0xf0] sm:$0xff]
  %v39 = vld [vmem:[%s0 + $0x100] sm:$0xff]
  %v40 = vld [vmem:[%s0 + $0x110] sm:$0xff]
  %v41 = vld [vmem:[%s0 + $0x120] sm:$0xff]
  %v42 = vld [vmem:[%s0 + $0x130] sm:$0xff]
  %v43 = vld [vmem:[%s0 + $0x140] sm:$0xff]
  %v44 = vld [vmem:[%s0 + $0x150] sm:$0xff]
  %v45 = vld [vmem:[%s0 + $0x160] sm:$0xff]
  %v46 = vld [vmem:[%s0 + $0x170] sm:$0xff]
  %v47 = vld [vmem:[%s0 + $0x180] sm:$0xff]
  %v48 = vld [vmem:[%s0 + $0x190] sm:$0xff]
  %v49 = vld [vmem:[%s0 + $0x1a0] sm:$0xff]
  %v50 = vld [vmem:[%s0 + $0x1b0] sm:$0xff]
  %v51 = vld [vmem:[%s0 + $0x1c0] sm:$0xff]
  %v52 = vld [vmem:[%s0 + $0x1d0] sm:$0xff]
  %v53 = vld [vmem:[%s0 + $0x1e0] sm:$0xff]
  %v54 = vld [vmem:[%s0 + $0x1f0] sm:$0xff]
  %v55 = vld [vmem:[%s0 + $0x200] sm:$0xff]
  %v56 = vld [vmem:[%s0 + $0x210] sm:$0xff]
  %v57 = vld [vmem:[%s0 + $0x220] sm:$0xff]
  %v58 = vld [vmem:[%s0 + $0x230] sm:$0xff]
  %v59 = vld [vmem:[%s0 + $0x240] sm:$0xff]
  %v60 = vld [vmem:[%s0 + $0x250] sm:$0xff]
  %v61 = vld [vmem:[%s0 + $0x260] sm:$0xff]
  %v62 = vld [vmem:[%s0 + $0x270] sm:$0xff]
  %v63 = vld [vmem:[%s0 + $0x280] sm:$0xff]
  %v64 = vld [vmem:[%s0 + $0x290] sm:$0xff]
  %v65 = vld [vmem:[%s0 + $0x2a0] sm:$0xff]
  %v66 = vld [vmem:[%s0 + $0x2b0] sm:$0xff]
  %v67 = vld [vmem:[%s0 + $0x2c0] sm:$0xff]
  %v68 = vld [vmem:[%s0 + $0x2d0] sm:$0xff]
  %v69 = vld [vmem:[%s0 + $0x2e0] sm:$0xff]
  %v70 = vld [vmem:[%s0 + $0x2f0] sm:$0xff]
  %v71 = vld [vmem:[%s0 + $0x300] sm:$0xff]
  %v72 = vld [vmem:[%s0 + $0x310] sm:$0xff]
  %v73 = vld [vmem:[%s0 + $0x320] sm:$0xff]
  %v74 = vld [vmem:[%s0 + $0x330] sm:$0xff]
  %v75 = vld [vmem:[%s0 + $0x340] sm:$0xff]
  %v76 = vld [vmem:[%s0 + $0x350] sm:$0xff]
  %v77 = vld [vmem:[%s0 + $0x360] sm:$0xff]
  %v78 = vld [vmem:[%s0 + $0x370] sm:$0xff]
  %v79 = vld [vmem:[%s0 + $0x380] sm:$0xff]
  %v80 = vld [vmem:[%s0 + $0x390] sm:$0xff]
  %v81 = vld [vmem:[%s0 + $0x3a0] sm:$0xff]
  %v82 = vld [vmem:[%s0 + $0x3b0] sm:$0xff]
  %v83 = vld [vmem:[%s0 + $0x3c0] sm:$0xff]
  %v84 = vld [vmem:[%s0 + $0x3d0] sm:$0xff]
  %v85 = vld [vmem:[%s0 + $0x3e0] sm:$0xff]
  %v86 = vld [vmem:[%s0 + $0x3f0] sm:$0xff]
  %v87 = vld [vmem:[%s2] sm:$0x1]
  %v89 = vlaneseq
  %v90 = vshrl.u32 %v89, 7
  %v91 = vsub.s32 0, %v90
  %v92 = vrot.slane %v87, %v91
  %v94 = vsub.f32 %v23, %v92
  %v95 = vsub.f32 %v24, %v92
  %v96 = vsub.f32 %v25, %v92
  %v97 = vsub.f32 %v26, %v92
  %v98 = vsub.f32 %v27, %v92
  %v99 = vsub.f32 %v28, %v92
  %v100 = vsub.f32 %v29, %v92
  %v101 = vsub.f32 %v30, %v92
  %v102 = vsub.f32 %v31, %v92
  %v103 = vsub.f32 %v32, %v92
  %v104 = vsub.f32 %v33, %v92
  %v105 = vsub.f32 %v34, %v92
  %v106 = vsub.f32 %v35, %v92
  %v107 = vsub.f32 %v36, %v92
  %v108 = vsub.f32 %v37, %v92
  %v109 = vsub.f32 %v38, %v92
  %v110 = vsub.f32 %v39, %v92
  %v111 = vsub.f32 %v40, %v92
  %v112 = vsub.f32 %v41, %v92
  %v113 = vsub.f32 %v42, %v92
  %v114 = vsub.f32 %v43, %v92
  %v115 = vsub.f32 %v44, %v92
  %v116 = vsub.f32 %v45, %v92
  %v117 = vsub.f32 %v46, %v92
  %v118 = vsub.f32 %v47, %v92
  %v119 = vsub.f32 %v48, %v92
  %v120 = vsub.f32 %v49, %v92
  %v121 = vsub.f32 %v50, %v92
  %v122 = vsub.f32 %v51, %v92
  %v123 = vsub.f32 %v52, %v92
  %v124 = vsub.f32 %v53, %v92
  %v125 = vsub.f32 %v54, %v92
  %v126 = vsub.f32 %v55, %v92
  %v127 = vsub.f32 %v56, %v92
  %v128 = vsub.f32 %v57, %v92
  %v129 = vsub.f32 %v58, %v92
  %v130 = vsub.f32 %v59, %v92
  %v131 = vsub.f32 %v60, %v92
  %v132 = vsub.f32 %v61, %v92
  %v133 = vsub.f32 %v62, %v92
  %v134 = vsub.f32 %v63, %v92
  %v135 = vsub.f32 %v64, %v92
  %v136 = vsub.f32 %v65, %v92
  %v137 = vsub.f32 %v66, %v92
  %v138 = vsub.f32 %v67, %v92
  %v139 = vsub.f32 %v68, %v92
  %v140 = vsub.f32 %v69, %v92
  %v141 = vsub.f32 %v70, %v92
  %v142 = vsub.f32 %v71, %v92
  %v143 = vsub.f32 %v72, %v92
  %v144 = vsub.f32 %v73, %v92
  %v145 = vsub.f32 %v74, %v92
  %v146 = vsub.f32 %v75, %v92
  %v147 = vsub.f32 %v76, %v92
  %v148 = vsub.f32 %v77, %v92
  %v149 = vsub.f32 %v78, %v92
  %v150 = vsub.f32 %v79, %v92
  %v151 = vsub.f32 %v80, %v92
  %v152 = vsub.f32 %v81, %v92
  %v153 = vsub.f32 %v82, %v92
  %v154 = vsub.f32 %v83, %v92
  %v155 = vsub.f32 %v84, %v92
  %v156 = vsub.f32 %v85, %v92
  %v157 = vsub.f32 %v86, %v92
  %v158 = vld [vmem:[%s3] sm:$0x1]
  %v160 = vlaneseq
  %v161 = vshrl.u32 %v160, 7
  %v162 = vsub.s32 0, %v161
  %v163 = vrot.slane %v158, %v162
  %v165 = vmul.f32 %v94, %v163
  %v166 = vmul.f32 %v95, %v163
  %v167 = vmul.f32 %v96, %v163
  %v168 = vmul.f32 %v97, %v163
  %v169 = vmul.f32 %v98, %v163
  %v170 = vmul.f32 %v99, %v163
  %v171 = vmul.f32 %v100, %v163
  %v172 = vmul.f32 %v101, %v163
  %v173 = vmul.f32 %v102, %v163
  %v174 = vmul.f32 %v103, %v163
  %v175 = vmul.f32 %v104, %v163
  %v176 = vmul.f32 %v105, %v163
  %v177 = vmul.f32 %v106, %v163
  %v178 = vmul.f32 %v107, %v163
  %v179 = vmul.f32 %v108, %v163
  %v180 = vmul.f32 %v109, %v163
  %v181 = vmul.f32 %v110, %v163
  %v182 = vmul.f32 %v111, %v163
  %v183 = vmul.f32 %v112, %v163
  %v184 = vmul.f32 %v113, %v163
  %v185 = vmul.f32 %v114, %v163
  %v186 = vmul.f32 %v115, %v163
  %v187 = vmul.f32 %v116, %v163
  %v188 = vmul.f32 %v117, %v163
  %v189 = vmul.f32 %v118, %v163
  %v190 = vmul.f32 %v119, %v163
  %v191 = vmul.f32 %v120, %v163
  %v192 = vmul.f32 %v121, %v163
  %v193 = vmul.f32 %v122, %v163
  %v194 = vmul.f32 %v123, %v163
  %v195 = vmul.f32 %v124, %v163
  %v196 = vmul.f32 %v125, %v163
  %v197 = vmul.f32 %v126, %v163
  %v198 = vmul.f32 %v127, %v163
  %v199 = vmul.f32 %v128, %v163
  %v200 = vmul.f32 %v129, %v163
  %v201 = vmul.f32 %v130, %v163
  %v202 = vmul.f32 %v131, %v163
  %v203 = vmul.f32 %v132, %v163
  %v204 = vmul.f32 %v133, %v163
  %v205 = vmul.f32 %v134, %v163
  %v206 = vmul.f32 %v135, %v163
  %v207 = vmul.f32 %v136, %v163
  %v208 = vmul.f32 %v137, %v163
  %v209 = vmul.f32 %v138, %v163
  %v210 = vmul.f32 %v139, %v163
  %v211 = vmul.f32 %v140, %v163
  %v212 = vmul.f32 %v141, %v163
  %v213 = vmul.f32 %v142, %v163
  %v214 = vmul.f32 %v143, %v163
  %v215 = vmul.f32 %v144, %v163
  %v216 = vmul.f32 %v145, %v163
  %v217 = vmul.f32 %v146, %v163
  %v218 = vmul.f32 %v147, %v163
  %v219 = vmul.f32 %v148, %v163
  %v220 = vmul.f32 %v149, %v163
  %v221 = vmul.f32 %v150, %v163
  %v222 = vmul.f32 %v151, %v163
  %v223 = vmul.f32 %v152, %v163
  %v224 = vmul.f32 %v153, %v163
  %v225 = vmul.f32 %v154, %v163
  %v226 = vmul.f32 %v155, %v163
  %v227 = vmul.f32 %v156, %v163
  %v228 = vmul.f32 %v157, %v163
  %v229 = vld [vmem:[%s1] sm:$0xff]
  %v230 = vld [vmem:[%s1 + $0x10] sm:$0xff]
  %v231 = vld [vmem:[%s1 + $0x20] sm:$0xff]
  %v232 = vld [vmem:[%s1 + $0x30] sm:$0xff]
  %v233 = vld [vmem:[%s1 + $0x40] sm:$0xff]
  %v234 = vld [vmem:[%s1 + $0x50] sm:$0xff]
  %v235 = vld [vmem:[%s1 + $0x60] sm:$0xff]
  %v236 = vld [vmem:[%s1 + $0x70] sm:$0xff]
  %v237 = vld [vmem:[%s1 + $0x80] sm:$0xff]
  %v238 = vld [vmem:[%s1 + $0x90] sm:$0xff]
  %v239 = vld [vmem:[%s1 + $0xa0] sm:$0xff]
  %v240 = vld [vmem:[%s1 + $0xb0] sm:$0xff]
  %v241 = vld [vmem:[%s1 + $0xc0] sm:$0xff]
  %v242 = vld [vmem:[%s1 + $0xd0] sm:$0xff]
  %v243 = vld [vmem:[%s1 + $0xe0] sm:$0xff]
  %v244 = vld [vmem:[%s1 + $0xf0] sm:$0xff]
  %v245 = vld [vmem:[%s1 + $0x100] sm:$0xff]
  %v246 = vld [vmem:[%s1 + $0x110] sm:$0xff]
  %v247 = vld [vmem:[%s1 + $0x120] sm:$0xff]
  %v248 = vld [vmem:[%s1 + $0x130] sm:$0xff]
  %v249 = vld [vmem:[%s1 + $0x140] sm:$0xff]
  %v250 = vld [vmem:[%s1 + $0x150] sm:$0xff]
  %v251 = vld [vmem:[%s1 + $0x160] sm:$0xff]
  %v252 = vld [vmem:[%s1 + $0x170] sm:$0xff]
  %v253 = vld [vmem:[%s1 + $0x180] sm:$0xff]
  %v254 = vld [vmem:[%s1 + $0x190] sm:$0xff]
  %v255 = vld [vmem:[%s1 + $0x1a0] sm:$0xff]
  %v256 = vld [vmem:[%s1 + $0x1b0] sm:$0xff]
  %v257 = vld [vmem:[%s1 + $0x1c0] sm:$0xff]
  %v258 = vld [vmem:[%s1 + $0x1d0] sm:$0xff]
  %v259 = vld [vmem:[%s1 + $0x1e0] sm:$0xff]
  %v260 = vld [vmem:[%s1 + $0x1f0] sm:$0xff]
  %v261 = vld [vmem:[%s1 + $0x200] sm:$0xff]
  %v262 = vld [vmem:[%s1 + $0x210] sm:$0xff]
  %v263 = vld [vmem:[%s1 + $0x220] sm:$0xff]
  %v264 = vld [vmem:[%s1 + $0x230] sm:$0xff]
  %v265 = vld [vmem:[%s1 + $0x240] sm:$0xff]
  %v266 = vld [vmem:[%s1 + $0x250] sm:$0xff]
  %v267 = vld [vmem:[%s1 + $0x260] sm:$0xff]
  %v268 = vld [vmem:[%s1 + $0x270] sm:$0xff]
  %v269 = vld [vmem:[%s1 + $0x280] sm:$0xff]
  %v270 = vld [vmem:[%s1 + $0x290] sm:$0xff]
  %v271 = vld [vmem:[%s1 + $0x2a0] sm:$0xff]
  %v272 = vld [vmem:[%s1 + $0x2b0] sm:$0xff]
  %v273 = vld [vmem:[%s1 + $0x2c0] sm:$0xff]
  %v274 = vld [vmem:[%s1 + $0x2d0] sm:$0xff]
  %v275 = vld [vmem:[%s1 + $0x2e0] sm:$0xff]
  %v276 = vld [vmem:[%s1 + $0x2f0] sm:$0xff]
  %v277 = vld [vmem:[%s1 + $0x300] sm:$0xff]
  %v278 = vld [vmem:[%s1 + $0x310] sm:$0xff]
  %v279 = vld [vmem:[%s1 + $0x320] sm:$0xff]
  %v280 = vld [vmem:[%s1 + $0x330] sm:$0xff]
  %v281 = vld [vmem:[%s1 + $0x340] sm:$0xff]
  %v282 = vld [vmem:[%s1 + $0x350] sm:$0xff]
  %v283 = vld [vmem:[%s1 + $0x360] sm:$0xff]
  %v284 = vld [vmem:[%s1 + $0x370] sm:$0xff]
  %v285 = vld [vmem:[%s1 + $0x380] sm:$0xff]
  %v286 = vld [vmem:[%s1 + $0x390] sm:$0xff]
  %v287 = vld [vmem:[%s1 + $0x3a0] sm:$0xff]
  %v288 = vld [vmem:[%s1 + $0x3b0] sm:$0xff]
  %v289 = vld [vmem:[%s1 + $0x3c0] sm:$0xff]
  %v290 = vld [vmem:[%s1 + $0x3d0] sm:$0xff]
  %v291 = vld [vmem:[%s1 + $0x3e0] sm:$0xff]
  %v292 = vld [vmem:[%s1 + $0x3f0] sm:$0xff]
  %v293 = vld [vmem:[%s4] sm:$0x1]
  %v295 = vlaneseq
  %v296 = vshrl.u32 %v295, 7
  %v297 = vsub.s32 0, %v296
  %v298 = vrot.slane %v293, %v297
  %v300 = vsub.f32 %v229, %v298
  %v301 = vsub.f32 %v230, %v298
  %v302 = vsub.f32 %v231, %v298
  %v303 = vsub.f32 %v232, %v298
  %v304 = vsub.f32 %v233, %v298
  %v305 = vsub.f32 %v234, %v298
  %v306 = vsub.f32 %v235, %v298
  %v307 = vsub.f32 %v236, %v298
  %v308 = vsub.f32 %v237, %v298
  %v309 = vsub.f32 %v238, %v298
  %v310 = vsub.f32 %v239, %v298
  %v311 = vsub.f32 %v240, %v298
  %v312 = vsub.f32 %v241, %v298
  %v313 = vsub.f32 %v242, %v298
  %v314 = vsub.f32 %v243, %v298
  %v315 = vsub.f32 %v244, %v298
  %v316 = vsub.f32 %v245, %v298
  %v317 = vsub.f32 %v246, %v298
  %v318 = vsub.f32 %v247, %v298
  %v319 = vsub.f32 %v248, %v298
  %v320 = vsub.f32 %v249, %v298
  %v321 = vsub.f32 %v250, %v298
  %v322 = vsub.f32 %v251, %v298
  %v323 = vsub.f32 %v252, %v298
  %v324 = vsub.f32 %v253, %v298
  %v325 = vsub.f32 %v254, %v298
  %v326 = vsub.f32 %v255, %v298
  %v327 = vsub.f32 %v256, %v298
  %v328 = vsub.f32 %v257, %v298
  %v329 = vsub.f32 %v258, %v298
  %v330 = vsub.f32 %v259, %v298
  %v331 = vsub.f32 %v260, %v298
  %v332 = vsub.f32 %v261, %v298
  %v333 = vsub.f32 %v262, %v298
  %v334 = vsub.f32 %v263, %v298
  %v335 = vsub.f32 %v264, %v298
  %v336 = vsub.f32 %v265, %v298
  %v337 = vsub.f32 %v266, %v298
  %v338 = vsub.f32 %v267, %v298
  %v339 = vsub.f32 %v268, %v298
  %v340 = vsub.f32 %v269, %v298
  %v341 = vsub.f32 %v270, %v298
  %v342 = vsub.f32 %v271, %v298
  %v343 = vsub.f32 %v272, %v298
  %v344 = vsub.f32 %v273, %v298
  %v345 = vsub.f32 %v274, %v298
  %v346 = vsub.f32 %v275, %v298
  %v347 = vsub.f32 %v276, %v298
  %v348 = vsub.f32 %v277, %v298
  %v349 = vsub.f32 %v278, %v298
  %v350 = vsub.f32 %v279, %v298
  %v351 = vsub.f32 %v280, %v298
  %v352 = vsub.f32 %v281, %v298
  %v353 = vsub.f32 %v282, %v298
  %v354 = vsub.f32 %v283, %v298
  %v355 = vsub.f32 %v284, %v298
  %v356 = vsub.f32 %v285, %v298
  %v357 = vsub.f32 %v286, %v298
  %v358 = vsub.f32 %v287, %v298
  %v359 = vsub.f32 %v288, %v298
  %v360 = vsub.f32 %v289, %v298
  %v361 = vsub.f32 %v290, %v298
  %v362 = vsub.f32 %v291, %v298
  %v363 = vsub.f32 %v292, %v298
  %v364 = vld [vmem:[%s5] sm:$0x1]
  %v366 = vlaneseq
  %v367 = vshrl.u32 %v366, 7
  %v368 = vsub.s32 0, %v367
  %v369 = vrot.slane %v364, %v368
  %v371 = vmul.f32 %v300, %v369
  %v372 = vmul.f32 %v301, %v369
  %v373 = vmul.f32 %v302, %v369
  %v374 = vmul.f32 %v303, %v369
  %v375 = vmul.f32 %v304, %v369
  %v376 = vmul.f32 %v305, %v369
  %v377 = vmul.f32 %v306, %v369
  %v378 = vmul.f32 %v307, %v369
  %v379 = vmul.f32 %v308, %v369
  %v380 = vmul.f32 %v309, %v369
  %v381 = vmul.f32 %v310, %v369
  %v382 = vmul.f32 %v311, %v369
  %v383 = vmul.f32 %v312, %v369
  %v384 = vmul.f32 %v313, %v369
  %v385 = vmul.f32 %v314, %v369
  %v386 = vmul.f32 %v315, %v369
  %v387 = vmul.f32 %v316, %v369
  %v388 = vmul.f32 %v317, %v369
  %v389 = vmul.f32 %v318, %v369
  %v390 = vmul.f32 %v319, %v369
  %v391 = vmul.f32 %v320, %v369
  %v392 = vmul.f32 %v321, %v369
  %v393 = vmul.f32 %v322, %v369
  %v394 = vmul.f32 %v323, %v369
  %v395 = vmul.f32 %v324, %v369
  %v396 = vmul.f32 %v325, %v369
  %v397 = vmul.f32 %v326, %v369
  %v398 = vmul.f32 %v327, %v369
  %v399 = vmul.f32 %v328, %v369
  %v400 = vmul.f32 %v329, %v369
  %v401 = vmul.f32 %v330, %v369
  %v402 = vmul.f32 %v331, %v369
  %v403 = vmul.f32 %v332, %v369
  %v404 = vmul.f32 %v333, %v369
  %v405 = vmul.f32 %v334, %v369
  %v406 = vmul.f32 %v335, %v369
  %v407 = vmul.f32 %v336, %v369
  %v408 = vmul.f32 %v337, %v369
  %v409 = vmul.f32 %v338, %v369
  %v410 = vmul.f32 %v339, %v369
  %v411 = vmul.f32 %v340, %v369
  %v412 = vmul.f32 %v341, %v369
  %v413 = vmul.f32 %v342, %v369
  %v414 = vmul.f32 %v343, %v369
  %v415 = vmul.f32 %v344, %v369
  %v416 = vmul.f32 %v345, %v369
  %v417 = vmul.f32 %v346, %v369
  %v418 = vmul.f32 %v347, %v369
  %v419 = vmul.f32 %v348, %v369
  %v420 = vmul.f32 %v349, %v369
  %v421 = vmul.f32 %v350, %v369
  %v422 = vmul.f32 %v351, %v369
  %v423 = vmul.f32 %v352, %v369
  %v424 = vmul.f32 %v353, %v369
  %v425 = vmul.f32 %v354, %v369
  %v426 = vmul.f32 %v355, %v369
  %v427 = vmul.f32 %v356, %v369
  %v428 = vmul.f32 %v357, %v369
  %v429 = vmul.f32 %v358, %v369
  %v430 = vmul.f32 %v359, %v369
  %v431 = vmul.f32 %v360, %v369
  %v432 = vmul.f32 %v361, %v369
  %v433 = vmul.f32 %v362, %v369
  %v434 = vmul.f32 %v363, %v369
  %v435 = vadd.f32 %v165, %v371
  %v436 = vadd.f32 %v166, %v372
  %v437 = vadd.f32 %v167, %v373
  %v438 = vadd.f32 %v168, %v374
  %v439 = vadd.f32 %v169, %v375
  %v440 = vadd.f32 %v170, %v376
  %v441 = vadd.f32 %v171, %v377
  %v442 = vadd.f32 %v172, %v378
  %v443 = vadd.f32 %v173, %v379
  %v444 = vadd.f32 %v174, %v380
  %v445 = vadd.f32 %v175, %v381
  %v446 = vadd.f32 %v176, %v382
  %v447 = vadd.f32 %v177, %v383
  %v448 = vadd.f32 %v178, %v384
  %v449 = vadd.f32 %v179, %v385
  %v450 = vadd.f32 %v180, %v386
  %v451 = vadd.f32 %v181, %v387
  %v452 = vadd.f32 %v182, %v388
  %v453 = vadd.f32 %v183, %v389
  %v454 = vadd.f32 %v184, %v390
  %v455 = vadd.f32 %v185, %v391
  %v456 = vadd.f32 %v186, %v392
  %v457 = vadd.f32 %v187, %v393
  %v458 = vadd.f32 %v188, %v394
  %v459 = vadd.f32 %v189, %v395
  %v460 = vadd.f32 %v190, %v396
  %v461 = vadd.f32 %v191, %v397
  %v462 = vadd.f32 %v192, %v398
  %v463 = vadd.f32 %v193, %v399
  %v464 = vadd.f32 %v194, %v400
  %v465 = vadd.f32 %v195, %v401
  %v466 = vadd.f32 %v196, %v402
  %v467 = vadd.f32 %v197, %v403
  %v468 = vadd.f32 %v198, %v404
  %v469 = vadd.f32 %v199, %v405
  %v470 = vadd.f32 %v200, %v406
  %v471 = vadd.f32 %v201, %v407
  %v472 = vadd.f32 %v202, %v408
  %v473 = vadd.f32 %v203, %v409
  %v474 = vadd.f32 %v204, %v410
  %v475 = vadd.f32 %v205, %v411
  %v476 = vadd.f32 %v206, %v412
  %v477 = vadd.f32 %v207, %v413
  %v478 = vadd.f32 %v208, %v414
  %v479 = vadd.f32 %v209, %v415
  %v480 = vadd.f32 %v210, %v416
  %v481 = vadd.f32 %v211, %v417
  %v482 = vadd.f32 %v212, %v418
  %v483 = vadd.f32 %v213, %v419
  %v484 = vadd.f32 %v214, %v420
  %v485 = vadd.f32 %v215, %v421
  %v486 = vadd.f32 %v216, %v422
  %v487 = vadd.f32 %v217, %v423
  %v488 = vadd.f32 %v218, %v424
  %v489 = vadd.f32 %v219, %v425
  %v490 = vadd.f32 %v220, %v426
  %v491 = vadd.f32 %v221, %v427
  %v492 = vadd.f32 %v222, %v428
  %v493 = vadd.f32 %v223, %v429
  %v494 = vadd.f32 %v224, %v430
  %v495 = vadd.f32 %v225, %v431
  %v496 = vadd.f32 %v226, %v432
  %v497 = vadd.f32 %v227, %v433
  %v498 = vadd.f32 %v228, %v434
  %499 = vst [vmem:[%s6] sm:$0xff] %v435
  %500 = vst [vmem:[%s6 + $0x8] sm:$0xff] %v436
  %501 = vst [vmem:[%s6 + $0x10] sm:$0xff] %v437
  %502 = vst [vmem:[%s6 + $0x18] sm:$0xff] %v438
  %503 = vst [vmem:[%s6 + $0x20] sm:$0xff] %v439
  %504 = vst [vmem:[%s6 + $0x28] sm:$0xff] %v440
  %505 = vst [vmem:[%s6 + $0x30] sm:$0xff] %v441
  %506 = vst [vmem:[%s6 + $0x38] sm:$0xff] %v442
  %507 = vst [vmem:[%s6 + $0x40] sm:$0xff] %v443
  %508 = vst [vmem:[%s6 + $0x48] sm:$0xff] %v444
  %509 = vst [vmem:[%s6 + $0x50] sm:$0xff] %v445
  %510 = vst [vmem:[%s6 + $0x58] sm:$0xff] %v446
  %511 = vst [vmem:[%s6 + $0x60] sm:$0xff] %v447
  %512 = vst [vmem:[%s6 + $0x68] sm:$0xff] %v448
  %513 = vst [vmem:[%s6 + $0x70] sm:$0xff] %v449
  %514 = vst [vmem:[%s6 + $0x78] sm:$0xff] %v450
  %515 = vst [vmem:[%s6 + $0x80] sm:$0xff] %v451
  %516 = vst [vmem:[%s6 + $0x88] sm:$0xff] %v452
  %517 = vst [vmem:[%s6 + $0x90] sm:$0xff] %v453
  %518 = vst [vmem:[%s6 + $0x98] sm:$0xff] %v454
  %519 = vst [vmem:[%s6 + $0xa0] sm:$0xff] %v455
  %520 = vst [vmem:[%s6 + $0xa8] sm:$0xff] %v456
  %521 = vst [vmem:[%s6 + $0xb0] sm:$0xff] %v457
  %522 = vst [vmem:[%s6 + $0xb8] sm:$0xff] %v458
  %523 = vst [vmem:[%s6 + $0xc0] sm:$0xff] %v459
  %524 = vst [vmem:[%s6 + $0xc8] sm:$0xff] %v460
  %525 = vst [vmem:[%s6 + $0xd0] sm:$0xff] %v461
  %526 = vst [vmem:[%s6 + $0xd8] sm:$0xff] %v462
  %527 = vst [vmem:[%s6 + $0xe0] sm:$0xff] %v463
  %528 = vst [vmem:[%s6 + $0xe8] sm:$0xff] %v464
  %529 = vst [vmem:[%s6 + $0xf0] sm:$0xff] %v465
  %530 = vst [vmem:[%s6 + $0xf8] sm:$0xff] %v466
  %531 = vst [vmem:[%s6 + $0x100] sm:$0xff] %v467
  %532 = vst [vmem:[%s6 + $0x108] sm:$0xff] %v468
  %533 = vst [vmem:[%s6 + $0x110] sm:$0xff] %v469
  %534 = vst [vmem:[%s6 + $0x118] sm:$0xff] %v470
  %535 = vst [vmem:[%s6 + $0x120] sm:$0xff] %v471
  %536 = vst [vmem:[%s6 + $0x128] sm:$0xff] %v472
  %537 = vst [vmem:[%s6 + $0x130] sm:$0xff] %v473
  %538 = vst [vmem:[%s6 + $0x138] sm:$0xff] %v474
  %539 = vst [vmem:[%s6 + $0x140] sm:$0xff] %v475
  %540 = vst [vmem:[%s6 + $0x148] sm:$0xff] %v476
  %541 = vst [vmem:[%s6 + $0x150] sm:$0xff] %v477
  %542 = vst [vmem:[%s6 + $0x158] sm:$0xff] %v478
  %543 = vst [vmem:[%s6 + $0x160] sm:$0xff] %v479
  %544 = vst [vmem:[%s6 + $0x168] sm:$0xff] %v480
  %545 = vst [vmem:[%s6 + $0x170] sm:$0xff] %v481
  %546 = vst [vmem:[%s6 + $0x178] sm:$0xff] %v482
  %547 = vst [vmem:[%s6 + $0x180] sm:$0xff] %v483
  %548 = vst [vmem:[%s6 + $0x188] sm:$0xff] %v484
  %549 = vst [vmem:[%s6 + $0x190] sm:$0xff] %v485
  %550 = vst [vmem:[%s6 + $0x198] sm:$0xff] %v486
  %551 = vst [vmem:[%s6 + $0x1a0] sm:$0xff] %v487
  %552 = vst [vmem:[%s6 + $0x1a8] sm:$0xff] %v488
  %553 = vst [vmem:[%s6 + $0x1b0] sm:$0xff] %v489
  %554 = vst [vmem:[%s6 + $0x1b8] sm:$0xff] %v490
  %555 = vst [vmem:[%s6 + $0x1c0] sm:$0xff] %v491
  %556 = vst [vmem:[%s6 + $0x1c8] sm:$0xff] %v492
  %557 = vst [vmem:[%s6 + $0x1d0] sm:$0xff] %v493
  %558 = vst [vmem:[%s6 + $0x1d8] sm:$0xff] %v494
  %559 = vst [vmem:[%s6 + $0x1e0] sm:$0xff] %v495
  %560 = vst [vmem:[%s6 + $0x1e8] sm:$0xff] %v496
  %561 = vst [vmem:[%s6 + $0x1f0] sm:$0xff] %v497
  %562 = vst [vmem:[%s6 + $0x1f8] sm:$0xff] %v498
  // Predicated region
  $region26: #{_lambda_.14} parent=0 // pred_check
    _
  $region27: #{_lambda_.14} parent=0 // pred_check_branch
    %564 = sbr.rel (0) target = $region29
  $region28: #{_lambda_.14} parent=0 // pred_region
    _
  $region29: #{_lambda_.14} parent=0 // pred_fallthru
    _
  // Predicated region
  $region30: #{_lambda_.14} parent=0 // pred_check
    _
  $region31: #{_lambda_.14} parent=0 // pred_check_branch
    %566 = sbr.rel (0) target = $region33
  $region32: #{_lambda_.14} parent=0 // pred_region
    _
  $region33: #{_lambda_.14} parent=0 // pred_fallthru
    _

// kernel: _lambda_.15
$region0: #{_lambda_.15}
  #allocation0 [shape = 'u32[]', space=smem, size = 0x4, offset = 0x4, fixed_abs, tag = 'smem constant byte address 0x4 - core index']
  #allocation1 [shape = 'u32[144,128]{1,0:T(1,128)}', space=vmem, size = 0x12000, scoped, tag = 'internal scratch']
  #allocation2 [shape = 'f32[80,128]{1,0:T(8,128)}', space=vmem, size = 0xa000, scoped, tag = 'scratch operand']
  %s0 = inlined_call_operand.vmem [shape: bf16[2,6,120,128], index: 0, kind: input, shape index: {}]
  %s1 = inlined_call_operand.vmem [shape: bf16[27,128,128], index: 1, kind: input, shape index: {}]
  %s2 = inlined_call_operand.vmem [shape: f32[2,2,80,128], index: 2, kind: output, shape index: {}]
  %s3 = sld [smem:[#allocation0]]
  $region49: #{_lambda_.15} parent=0
    _
  %s5 = ssub.s32 1, %s3
  %s6 = scalar_select 0, %s5, %s3
  loop: start=0, step=1, limit=14
  $region2: #{_lambda_.15} parent=0 // loop_pre_header
    _
  $region3: #{_lambda_.15} parent=0 // loop_header
    %s8 = sphi 0, %s12
    %p9 = scmp.ge.s32.totalorder %s8, 14
    %s15 = sphi 0, %s34
    %s16 = sphi 0, %s30
    %s17 = sphi 0, %s26
    %s18 = sphi 0, %s15
    %s19 = sphi 0, %s16
    %s20 = sphi 0, %s17
    %s21 = sphi 0, %s18
    %s22 = sphi 0, %s19
    %s23 = sphi 0, %s20
    %s43 = sphi 0, %s45
    %s46 = sphi 0, %s43
    %s47 = sphi 0, %s46
    %s63 = sphi 0, %s47
    %s67 = sphi 0, %s67
    %s69 = sphi 0, %s67
    %s70 = sphi 0, %s69
    %s84 = sphi 0, %s70
    %s92 = sphi 0, %s94
    %s95 = sphi 0, %s92
    %s96 = sphi 0, %s95
    %s112 = sphi 0, %s96
  $region4: #{_lambda_.15} parent=0 // loop_header_branch
    %11 = sbr.rel (%p9) target = $region8
  $region5: #{_lambda_.15} parent=0 // loop_body
    %s13 = ssub.s32 %s8, 1
    %s14 = ssub.s32 %s8, 2
    %s24 = sadd.s32 1, %s17
    %p25 = scmp.ge.s32.totalorder %s24, 3
    %s26 = scalar_select %p25, 0, %s24
    %s27 = sadd.s32 1, %s16
    %s28 = scalar_select %p25, %s27, %s16
    %p29 = scmp.ge.s32.totalorder %s28, 2
    %s30 = scalar_select %p29, 0, %s28
    %s31 = sadd.s32 1, %s15
    %s32 = scalar_select %p29, %s31, %s15
    %p33 = scmp.ge.s32.totalorder %s32, 2
    %s34 = scalar_select %p33, 0, %s32
    %s35 = smul.u32 %s16, 2
    %s36 = sadd.s32 %s35, %s17
    %s37 = smul.u32 %s30, 2
    %s38 = sadd.s32 %s37, %s26
    %s39 = ssub.s32 %s15, %s34
    %s40 = ssub.s32 %s36, %s38
    %s41 = sor.u32 %s39, %s40
    %p42 = scmp.eq.s32.totalorder %s41, 0
    %s44 = sadd.s32 %s43, 1
    %s45 = scalar_select %p42, %s43, %s44
    %p48 = pneg %p42
    %p49 = scmp.eq.s32.totalorder %s8, 11
    %p50 = por %p48, %p49
    %p51 = scmp.ne.s32.totalorder %s43, %s46
    %p52 = scmp.eq.s32.totalorder %s8, 0
    %p53 = por %p51, %p52
    %p54 = scmp.ne.s32.totalorder %s43, %s46
    %p55 = scmp.eq.s32.totalorder %s13, 11
    %p56 = por %p54, %p55
    %p57 = scmp.ne.s32.totalorder %s46, %s47
    %p58 = scmp.eq.s32.totalorder %s13, 0
    %p59 = por %p57, %p58
    %p60 = scmp.ne.s32.totalorder %s46, %s47
    %p61 = scmp.eq.s32.totalorder %s14, 11
    %p62 = por %p60, %p61
    %p64 = scmp.ne.s32.totalorder %s47, %s63
    %p65 = scmp.eq.s32.totalorder %s14, 0
    %p66 = por %p64, %p65
    %s68 = sadd.s32 %s67, 1
    %p71 = scmp.eq.s32.totalorder %s8, 11
    %p72 = scmp.ne.s32.totalorder %s67, %s69
    %p73 = scmp.eq.s32.totalorder %s8, 0
    %p74 = por %p72, %p73
    %p75 = scmp.ne.s32.totalorder %s67, %s69
    %p76 = scmp.eq.s32.totalorder %s13, 11
    %p77 = por %p75, %p76
    %p78 = scmp.ne.s32.totalorder %s69, %s70
    %p79 = scmp.eq.s32.totalorder %s13, 0
    %p80 = por %p78, %p79
    %p81 = scmp.ne.s32.totalorder %s69, %s70
    %p82 = scmp.eq.s32.totalorder %s14, 11
    %p83 = por %p81, %p82
    %p85 = scmp.ne.s32.totalorder %s70, %s84
    %p86 = scmp.eq.s32.totalorder %s14, 0
    %p87 = por %p85, %p86
    %s88 = ssub.s32 %s15, %s34
    %s89 = ssub.s32 %s16, %s30
    %s90 = sor.u32 %s88, %s89
    %p91 = scmp.eq.s32.totalorder %s90, 0
    %s93 = sadd.s32 %s92, 1
    %s94 = scalar_select %p91, %s92, %s93
    %p97 = pneg %p91
    %p98 = scmp.eq.s32.totalorder %s8, 11
    %p99 = por %p97, %p98
    %p100 = scmp.ne.s32.totalorder %s92, %s95
    %p101 = scmp.eq.s32.totalorder %s8, 0
    %p102 = por %p100, %p101
    %p103 = scmp.ne.s32.totalorder %s92, %s95
    %p104 = scmp.eq.s32.totalorder %s13, 11
    %p105 = por %p103, %p104
    %p106 = scmp.ne.s32.totalorder %s95, %s96
    %p107 = scmp.eq.s32.totalorder %s13, 0
    %p108 = por %p106, %p107
    %p109 = scmp.ne.s32.totalorder %s95, %s96
    %p110 = scmp.eq.s32.totalorder %s14, 11
    %p111 = por %p109, %p110
    %p113 = scmp.ne.s32.totalorder %s96, %s112
    %p114 = scmp.eq.s32.totalorder %s14, 0
    %p115 = por %p113, %p114
    %p116 = scmp.le.s32.totalorder 1, %s8
    %p117 = scmp.lt.s32.totalorder %s8, 13
    %p118 = pnand %p116, %p117
    %p119 = pneg %p118
    // Predicated region
    $region9: #{_lambda_.15} parent=5 // pred_check
      _
    $region10: #{_lambda_.15} parent=5 // pred_check_branch
      %121 = sbr.rel (%p118) target = $region12
    $region11: #{_lambda_.15} parent=5 // pred_region
      %s122 = ssub.s32 %s8, 1
      // Predicated region
      $region13: #{_lambda_.15} parent=11 // pred_check
        %p123 = pneg %p80
      $region14: #{_lambda_.15} parent=11 // pred_check_branch
        %125 = sbr.rel (%p123) target = $region16
      $region15: #{_lambda_.15} parent=11 // pred_region
        _
      $region16: #{_lambda_.15} parent=11 // pred_fallthru
        _
    $region12: #{_lambda_.15} parent=5 // pred_fallthru
      _
    %p126 = scmp.lt.s32.totalorder %s8, 12
    // Predicated region
    $region17: #{_lambda_.15} parent=5 // pred_check
      %p127 = pneg %p126
    $region18: #{_lambda_.15} parent=5 // pred_check_branch
      %129 = sbr.rel (%p127) target = $region20
    $region19: #{_lambda_.15} parent=5 // pred_region
      // Predicated region
      $region21: #{_lambda_.15} parent=19 // pred_check
        %p130 = pneg %p53
      $region22: #{_lambda_.15} parent=19 // pred_check_branch
        %132 = sbr.rel (%p130) target = $region24
      $region23: #{_lambda_.15} parent=19 // pred_region
        %s133 = smul.u32 %s16, 2
        %s134 = sadd.s32 %s133, %s17
        %p135 = scmp.lt.s32.totalorder %s15, 1
        %s136 = scalar_select %p135, %s15, 1
        %p137 = scmp.lt.s32.totalorder %s134, 5
        %s138 = scalar_select %p137, %s134, 5
        %s139 = smul.addr %s138, 15
        %s140 = smul.addr %s136, 90
        %s141 = sadd.s32 %s139, %s140
        %s142 = smul.addr %s141, 4
        %s143 = scalar_lea.vmem %s0, %s142
        %s144 = smul.u32 %s16, 2
        %s145 = sadd.s32 %s144, %s17
      $region24: #{_lambda_.15} parent=19 // pred_fallthru
        _
    $region20: #{_lambda_.15} parent=5 // pred_fallthru
      _
    %p146 = scmp.le.s32.totalorder 1, %s8
    %p147 = scmp.lt.s32.totalorder %s8, 13
    %p148 = pnand %p146, %p147
    %p149 = pneg %p148
    // Predicated region
    $region25: #{_lambda_.15} parent=5 // pred_check
      _
    $region26: #{_lambda_.15} parent=5 // pred_check_branch
      %151 = sbr.rel (%p148) target = $region28
    $region27: #{_lambda_.15} parent=5 // pred_region
      %s152 = ssub.s32 %s8, 1
      %s153 = smul.u32 %s19, 2
      %s154 = sadd.s32 %s153, %s20
      %p155 = scmp.lt.s32.totalorder %s18, 1
      %s156 = scalar_select %p155, %s18, 1
      %p157 = scmp.lt.s32.totalorder %s154, 5
      %s158 = scalar_select %p157, %s154, 5
      %s159 = smul.addr %s158, 15
      %s160 = smul.addr %s156, 90
      %s161 = sadd.s32 %s159, %s160
      %s162 = smul.addr %s161, 4
      %s163 = scalar_lea.vmem %s0, %s162
      %p164 = pneg %p59
      %p165 = pneg %p56
      %p166 = pneg %p80
      %p167 = pneg %p77
      %p168 = pneg %p108
      %p169 = pneg %p105
      %p170 = scmp.lt.s32.totalorder %s18, 1
      %s171 = scalar_select %p170, %s18, 1
      %p172 = scmp.lt.s32.totalorder %s19, 1
      %s173 = scalar_select %p172, %s19, 1
      %s174 = smul.addr %s173, 10
      %s175 = smul.addr %s171, 20
      %s176 = sadd.s32 %s174, %s175
      %s177 = smul.addr %s176, 8
      %s178 = scalar_lea.vmem %s2, %s177
      %s179 = smul.u32 %s19, 2
      %s180 = sadd.s32 %s179, %s20
      %p181 = scmp.lt.s32.totalorder %s18, 1
      %s182 = scalar_select %p181, %s18, 1
      %p183 = scmp.lt.s32.totalorder %s180, 5
      %s184 = scalar_select %p183, %s180, 5
      %s185 = smul.addr %s184, 15
      %s186 = smul.addr %s182, 90
      %s187 = sadd.s32 %s185, %s186
      %s188 = smul.addr %s187, 4
      %s189 = scalar_lea.vmem %s0, %s188
      %s190 = smul.u32 %s19, 2
      %s191 = sadd.s32 %s190, %s20
      %p192 = scmp.lt.s32.totalorder %s18, 1
      %s193 = scalar_select %p192, %s18, 1
      %p194 = scmp.lt.s32.totalorder %s19, 1
      %s195 = scalar_select %p194, %s19, 1
      %s196 = smul.addr %s195, 10
      %s197 = smul.addr %s193, 20
      %s198 = sadd.s32 %s196, %s197
      %s199 = smul.addr %s198, 8
      %s200 = scalar_lea.vmem %s2, %s199
      %p202 = scmp.eq.s32.totalorder %s20, 0
      // Predicated region
      $region29: #{_lambda_.15} parent=27 // pred_check
        %p203 = pneg %p202
      $region30: #{_lambda_.15} parent=27 // pred_check_branch
        %205 = sbr.rel (%p203) target = $region32
      $region31: #{_lambda_.15} parent=27 // pred_region
        %206 = vst [vmem:[#allocation2] sm:$0xff] 0.0
        %207 = vst [vmem:[#allocation2 + $0x8] sm:$0xff] 0.0
        %208 = vst [vmem:[#allocation2 + $0x10] sm:$0xff] 0.0
        %209 = vst [vmem:[#allocation2 + $0x18] sm:$0xff] 0.0
        %210 = vst [vmem:[#allocation2 + $0x20] sm:$0xff] 0.0
        %211 = vst [vmem:[#allocation2 + $0x28] sm:$0xff] 0.0
        %212 = vst [vmem:[#allocation2 + $0x30] sm:$0xff] 0.0
        %213 = vst [vmem:[#allocation2 + $0x38] sm:$0xff] 0.0
        %214 = vst [vmem:[#allocation2 + $0x40] sm:$0xff] 0.0
        %215 = vst [vmem:[#allocation2 + $0x48] sm:$0xff] 0.0
      $region32: #{_lambda_.15} parent=27 // pred_fallthru
        _
      %v216 = vld [vmem:[%s189] sm:$0xf]
      %v217 = vld [vmem:[%s189 + $0x4] sm:$0xf]
      %v218 = vld [vmem:[%s189 + $0x8] sm:$0xf]
      %v219 = vld [vmem:[%s189 + $0xc] sm:$0xf]
      %v220 = vld [vmem:[%s189 + $0x10] sm:$0xf]
      %v221 = vld [vmem:[%s189 + $0x14] sm:$0xf]
      %v222 = vld [vmem:[%s189 + $0x18] sm:$0xf]
      %v223 = vld [vmem:[%s189 + $0x1c] sm:$0xf]
      %v224 = vld [vmem:[%s189 + $0x20] sm:$0xf]
      %v225 = vld [vmem:[%s189 + $0x24] sm:$0xf]
      %s226 = smul.u32 %s20, 9
      %s227 = smul.u32 %s226, 16
      %s228 = smul.addr %s227, 4
      %s229 = scalar_lea.vmem %s1, %s228
      %v230 = vld [vmem:[%s229] sm:$0xf]
      %v231 = vld [vmem:[%s229 + $0x4] sm:$0xf]
      %v232 = vld [vmem:[%s229 + $0x8] sm:$0xf]
      %v233 = vld [vmem:[%s229 + $0xc] sm:$0xf]
      %v234 = vld [vmem:[%s229 + $0x10] sm:$0xf]
      %v235 = vld [vmem:[%s229 + $0x14] sm:$0xf]
      %v236 = vld [vmem:[%s229 + $0x18] sm:$0xf]
      %v237 = vld [vmem:[%s229 + $0x1c] sm:$0xf]
      %v238 = vld [vmem:[%s229 + $0x20] sm:$0xf]
      %v239 = vld [vmem:[%s229 + $0x24] sm:$0xf]
      %v240 = vld [vmem:[%s229 + $0x28] sm:$0xf]
      %v241 = vld [vmem:[%s229 + $0x2c] sm:$0xf]
      %v242 = vld [vmem:[%s229 + $0x30] sm:$0xf]
      %v243 = vld [vmem:[%s229 + $0x34] sm:$0xf]
      %v244 = vld [vmem:[%s229 + $0x38] sm:$0xf]
      %v245 = vld [vmem:[%s229 + $0x3c] sm:$0xf]
      %v246 = vld [vmem:[%s189 + $0x28] sm:$0x1]
      %s247 = sadd.s32 %s226, 1
      %s248 = smul.u32 %s247, 16
      %s249 = smul.addr %s248, 4
      %s250 = scalar_lea.vmem %s1, %s249
      %v251 = vld [vmem:[%s250] sm:$0xf]
      %v252 = vld [vmem:[%s250 + $0x4] sm:$0xf]
      %v253 = vld [vmem:[%s250 + $0x8] sm:$0xf]
      %v254 = vld [vmem:[%s250 + $0xc] sm:$0xf]
      %v255 = vld [vmem:[%s250 + $0x10] sm:$0xf]
      %v256 = vld [vmem:[%s250 + $0x14] sm:$0xf]
      %v257 = vld [vmem:[%s250 + $0x18] sm:$0xf]
      %v258 = vld [vmem:[%s250 + $0x1c] sm:$0xf]
      %v259 = vld [vmem:[%s250 + $0x20] sm:$0xf]
      %v260 = vld [vmem:[%s250 + $0x24] sm:$0xf]
      %v261 = vld [vmem:[%s250 + $0x28] sm:$0xf]
      %v262 = vld [vmem:[%s250 + $0x2c] sm:$0xf]
      %v263 = vld [vmem:[%s250 + $0x30] sm:$0xf]
      %v264 = vld [vmem:[%s250 + $0x34] sm:$0xf]
      %v265 = vld [vmem:[%s250 + $0x38] sm:$0xf]
      %v266 = vld [vmem:[%s250 + $0x3c] sm:$0xf]
      %v278 = vunpack.c.l.b16 %v216
      %v279 = vunpack.c.l.b16 %v217
      %v280 = vunpack.c.l.b16 %v218
      %v281 = vunpack.c.l.b16 %v219
      %v282 = vunpack.c.l.b16 %v220
      %v283 = vunpack.c.l.b16 %v221
      %v284 = vunpack.c.l.b16 %v222
      %v285 = vunpack.c.l.b16 %v223
      %v286 = vunpack.c.l.b16 %v224
      %v287 = vunpack.c.l.b16 %v225
      %v288 = vunpack.c.l.b16 %v246
      %v289 = vpack.c.b16 %v279, %v278
      %v290 = vpack.c.b16 %v281, %v280
      %v291 = vpack.c.b16 %v283, %v282
      %v292 = vpack.c.b16 %v285, %v284
      %v293 = vpack.c.b16 %v287, %v286
      %v294 = vpack.c.b16 %v288, %v288
      %vm295 = vsmask.f32 7424
      %v297 = vshrl.u32 %v289, 16
      %v299 = vshll.u32 %v289, 16
      %v301 = vrot.slane %v299, 1
      %v302 = vor.u32 %v297, %v301
      %v304 = vshll.u32 %v290, 16
      %v306 = vrot.slane %v304, 1
      %v307 = vsel %vm295, %v302, %v306
      %v308 = vshrl.u32 %v290, 16
      %v310 = vor.u32 %v308, %v306
      %v312 = vshll.u32 %v291, 16
      %v314 = vrot.slane %v312, 1
      %v315 = vsel %vm295, %v310, %v314
      %v316 = vshrl.u32 %v291, 16
      %v318 = vor.u32 %v316, %v314
      %v320 = vshll.u32 %v292, 16
      %v322 = vrot.slane %v320, 1
      %v323 = vsel %vm295, %v318, %v322
      %v324 = vshrl.u32 %v292, 16
      %v326 = vor.u32 %v324, %v322
      %v328 = vshll.u32 %v293, 16
      %v330 = vrot.slane %v328, 1
      %v331 = vsel %vm295, %v326, %v330
      %v332 = vshrl.u32 %v293, 16
      %v334 = vor.u32 %v332, %v330
      %v336 = vshll.u32 %v294, 16
      %v338 = vrot.slane %v336, 1
      %v339 = vsel %vm295, %v334, %v338
      %v361 = vunpack.c.l.b16 %v251
      %v362 = vunpack.c.l.b16 %v252
      %v363 = vunpack.c.l.b16 %v253
      %v364 = vunpack.c.l.b16 %v254
      %v365 = vunpack.c.l.b16 %v255
      %v366 = vunpack.c.l.b16 %v256
      %v367 = vunpack.c.l.b16 %v257
      %v368 = vunpack.c.l.b16 %v258
      %v369 = vunpack.c.l.b16 %v259
      %v370 = vunpack.c.l.b16 %v260
      %v371 = vunpack.c.l.b16 %v261
      %v372 = vunpack.c.l.b16 %v262
      %v373 = vunpack.c.l.b16 %v263
      %v374 = vunpack.c.l.b16 %v264
      %v375 = vunpack.c.l.b16 %v265
      %v376 = vunpack.c.l.b16 %v266
      %v377 = vpack.c.b16 %v362, %v361
      %v378 = vpack.c.b16 %v364, %v363
      %v379 = vpack.c.b16 %v366, %v365
      %v380 = vpack.c.b16 %v368, %v367
      %v381 = vpack.c.b16 %v370, %v369
      %v382 = vpack.c.b16 %v372, %v371
      %v383 = vpack.c.b16 %v374, %v373
      %v384 = vpack.c.b16 %v376, %v375
      %393 = vmatprep.subr.bf16.mxu0 0
      %394 = vmatpush1.bf16.msra.mxu0 %v384
      %395 = vmatprep.subr.bf16.mxu0 0
      %396 = vmatpush1.bf16.msra.mxu0 %v383
      %397 = vmatprep.subr.bf16.mxu0 0
      %398 = vmatpush1.bf16.msra.mxu0 %v382
      %399 = vmatprep.subr.bf16.mxu0 0
      %400 = vmatpush1.bf16.msra.mxu0 %v381
      %401 = vmatprep.subr.bf16.mxu0 0
      %402 = vmatpush1.bf16.msra.mxu0 %v380
      %403 = vmatprep.subr.bf16.mxu0 0
      %404 = vmatpush1.bf16.msra.mxu0 %v379
      %405 = vmatprep.subr.bf16.mxu0 0
      %406 = vmatpush1.bf16.msra.mxu0 %v378
      %407 = vmatprep.subr.bf16.mxu0 0
      %408 = vmatpush1.bf16.msra.mxu0 %v377
      %409 = vmatprep.subr.bf16.mxu0 0
      %410 = vmatpush2.bf16.msra.mxu0 0
      %411 = vmatprep.subr.bf16.mxu0 0
      %412 = vmatpush2.bf16.msra.mxu0 0
      %413 = vmatprep.subr.bf16.mxu0 0
      %414 = vmatpush2.bf16.msra.mxu0 0
      %415 = vmatprep.subr.bf16.mxu0 0
      %416 = vmatpush2.bf16.msra.mxu0 0
      %417 = vmatprep.subr.bf16.mxu0 0
      %418 = vmatpush2.bf16.msra.mxu0 0
      %419 = vmatprep.subr.bf16.mxu0 0
      %420 = vmatpush2.bf16.msra.mxu0 0
      %421 = vmatprep.subr.bf16.mxu0 0
      %422 = vmatpush2.bf16.msra.mxu0 0
      %423 = vmatprep.subr.bf16.mxu0 0
      %424 = vmatpush2.bf16.msra.mxu0 0
      %425 = vmatprep.mubr.bf16.mxu0 0
      %426 = vmatmul.mubr.bf16.gmra.mxu0 %v307
      %v427 = vpop.f32.mrf.mxu0
      %v428 = vadd.f32 0.0, %v427
      %v429 = vpop.f32.mrf.mxu0
      %v430 = vpop.f32.mrf.mxu0
      %v431 = vadd.f32 0.0, %v430
      %v432 = vpop.f32.mrf.mxu0
      %433 = vmatprep.mubr.bf16.mxu0 0
      %434 = vmatmul.mubr.bf16.gmra.mxu0 %v315
      %v435 = vpop.f32.mrf.mxu0
      %v436 = vadd.f32 0.0, %v435
      %v437 = vpop.f32.mrf.mxu0
      %v438 = vpop.f32.mrf.mxu0
      %v439 = vadd.f32 0.0, %v438
      %v440 = vpop.f32.mrf.mxu0
      %441 = vmatprep.mubr.bf16.mxu0 0
      %442 = vmatmul.mubr.bf16.gmra.mxu0 %v323
      %v443 = vpop.f32.mrf.mxu0
      %v444 = vadd.f32 0.0, %v443
      %v445 = vpop.f32.mrf.mxu0
      %v446 = vpop.f32.mrf.mxu0
      %v447 = vadd.f32 0.0, %v446
      %v448 = vpop.f32.mrf.mxu0
      %449 = vmatprep.mubr.bf16.mxu0 0
      %450 = vmatmul.mubr.bf16.gmra.mxu0 %v331
      %v451 = vpop.f32.mrf.mxu0
      %v452 = vadd.f32 0.0, %v451
      %v453 = vpop.f32.mrf.mxu0
      %v454 = vpop.f32.mrf.mxu0
      %v455 = vadd.f32 0.0, %v454
      %v456 = vpop.f32.mrf.mxu0
      %457 = vmatprep.mubr.bf16.mxu0 0
      %458 = vmatmul.mubr.bf16.gmra.mxu0 %v339
      %v459 = vpop.f32.mrf.mxu0
      %v460 = vadd.f32 0.0, %v459
      %v461 = vpop.f32.mrf.mxu0
      %v462 = vpop.f32.mrf.mxu0
      %v463 = vadd.f32 0.0, %v462
      %v464 = vpop.f32.mrf.mxu0
      %465 = vdwg.mxu0
      %v487 = vunpack.c.l.b16 %v230
      %v488 = vunpack.c.l.b16 %v231
      %v489 = vunpack.c.l.b16 %v232
      %v490 = vunpack.c.l.b16 %v233
      %v491 = vunpack.c.l.b16 %v234
      %v492 = vunpack.c.l.b16 %v235
      %v493 = vunpack.c.l.b16 %v236
      %v494 = vunpack.c.l.b16 %v237
      %v495 = vunpack.c.l.b16 %v238
      %v496 = vunpack.c.l.b16 %v239
      %v497 = vunpack.c.l.b16 %v240
      %v498 = vunpack.c.l.b16 %v241
      %v499 = vunpack.c.l.b16 %v242
      %v500 = vunpack.c.l.b16 %v243
      %v501 = vunpack.c.l.b16 %v244
      %v502 = vunpack.c.l.b16 %v245
      %v503 = vpack.c.b16 %v488, %v487
      %v504 = vpack.c.b16 %v490, %v489
      %v505 = vpack.c.b16 %v492, %v491
      %v506 = vpack.c.b16 %v494, %v493
      %v507 = vpack.c.b16 %v496, %v495
      %v508 = vpack.c.b16 %v498, %v497
      %v509 = vpack.c.b16 %v500, %v499
      %v510 = vpack.c.b16 %v502, %v501
      %519 = vmatprep.subr.bf16.mxu0 0
      %520 = vmatpush1.bf16.msra.mxu0 %v510
      %521 = vmatprep.subr.bf16.mxu0 0
      %522 = vmatpush1.bf16.msra.mxu0 %v509
      %523 = vmatprep.subr.bf16.mxu0 0
      %524 = vmatpush1.bf16.msra.mxu0 %v508
      %525 = vmatprep.subr.bf16.mxu0 0
      %526 = vmatpush1.bf16.msra.mxu0 %v507
      %527 = vmatprep.subr.bf16.mxu0 0
      %528 = vmatpush1.bf16.msra.mxu0 %v506
      %529 = vmatprep.subr.bf16.mxu0 0
      %530 = vmatpush1.bf16.msra.mxu0 %v505
      %531 = vmatprep.subr.bf16.mxu0 0
      %532 = vmatpush1.bf16.msra.mxu0 %v504
      %533 = vmatprep.subr.bf16.mxu0 0
      %534 = vmatpush1.bf16.msra.mxu0 %v503
      %535 = vmatprep.subr.bf16.mxu0 0
      %536 = vmatpush2.bf16.msra.mxu0 0
      %537 = vmatprep.subr.bf16.mxu0 0
      %538 = vmatpush2.bf16.msra.mxu0 0
      %539 = vmatprep.subr.bf16.mxu0 0
      %540 = vmatpush2.bf16.msra.mxu0 0
      %541 = vmatprep.subr.bf16.mxu0 0
      %542 = vmatpush2.bf16.msra.mxu0 0
      %543 = vmatprep.subr.bf16.mxu0 0
      %544 = vmatpush2.bf16.msra.mxu0 0
      %545 = vmatprep.subr.bf16.mxu0 0
      %546 = vmatpush2.bf16.msra.mxu0 0
      %547 = vmatprep.subr.bf16.mxu0 0
      %548 = vmatpush2.bf16.msra.mxu0 0
      %549 = vmatprep.subr.bf16.mxu0 0
      %550 = vmatpush2.bf16.msra.mxu0 0
      %551 = vmatprep.mubr.bf16.mxu0 0
      %552 = vmatmul.mubr.bf16.gmra.mxu0 %v289
      %v553 = vpop.f32.mrf.mxu0
      %v554 = vadd.f32 %v428, %v553
      %v555 = vpop.f32.mrf.mxu0
      %v556 = vpop.f32.mrf.mxu0
      %v557 = vadd.f32 %v431, %v556
      %v558 = vpop.f32.mrf.mxu0
      %559 = vmatprep.mubr.bf16.mxu0 0
      %560 = vmatmul.mubr.bf16.gmra.mxu0 %v290
      %v561 = vpop.f32.mrf.mxu0
      %v562 = vadd.f32 %v436, %v561
      %v563 = vpop.f32.mrf.mxu0
      %v564 = vpop.f32.mrf.mxu0
      %v565 = vadd.f32 %v439, %v564
      %v566 = vpop.f32.mrf.mxu0
      %567 = vmatprep.mubr.bf16.mxu0 0
      %568 = vmatmul.mubr.bf16.gmra.mxu0 %v291
      %v569 = vpop.f32.mrf.mxu0
      %v570 = vadd.f32 %v444, %v569
      %v571 = vpop.f32.mrf.mxu0
      %v572 = vpop.f32.mrf.mxu0
      %v573 = vadd.f32 %v447, %v572
      %v574 = vpop.f32.mrf.mxu0
      %575 = vmatprep.mubr.bf16.mxu0 0
      %576 = vmatmul.mubr.bf16.gmra.mxu0 %v292
      %v577 = vpop.f32.mrf.mxu0
      %v578 = vadd.f32 %v452, %v577
      %v579 = vpop.f32.mrf.mxu0
      %v580 = vpop.f32.mrf.mxu0
      %v581 = vadd.f32 %v455, %v580
      %v582 = vpop.f32.mrf.mxu0
      %583 = vmatprep.mubr.bf16.mxu0 0
      %584 = vmatmul.mubr.bf16.gmra.mxu0 %v293
      %v585 = vpop.f32.mrf.mxu0
      %v586 = vadd.f32 %v460, %v585
      %v587 = vpop.f32.mrf.mxu0
      %v588 = vpop.f32.mrf.mxu0
      %v589 = vadd.f32 %v463, %v588
      %v590 = vpop.f32.mrf.mxu0
      %591 = vdwg.mxu0
      %v592 = vld [vmem:[%s189] sm:$0xe]
      %s593 = sadd.s32 %s226, 2
      %s594 = smul.u32 %s593, 16
      %s595 = smul.addr %s594, 4
      %s596 = scalar_lea.vmem %s1, %s595
      %v597 = vld [vmem:[%s596] sm:$0xf]
      %v598 = vld [vmem:[%s596 + $0x4] sm:$0xf]
      %v599 = vld [vmem:[%s596 + $0x8] sm:$0xf]
      %v600 = vld [vmem:[%s596 + $0xc] sm:$0xf]
      %v601 = vld [vmem:[%s596 + $0x10] sm:$0xf]
      %v602 = vld [vmem:[%s596 + $0x14] sm:$0xf]
      %v603 = vld [vmem:[%s596 + $0x18] sm:$0xf]
      %v604 = vld [vmem:[%s596 + $0x1c] sm:$0xf]
      %v605 = vld [vmem:[%s596 + $0x20] sm:$0xf]
      %v606 = vld [vmem:[%s596 + $0x24] sm:$0xf]
      %v607 = vld [vmem:[%s596 + $0x28] sm:$0xf]
      %v608 = vld [vmem:[%s596 + $0x2c] sm:$0xf]
      %v609 = vld [vmem:[%s596 + $0x30] sm:$0xf]
      %v610 = vld [vmem:[%s596 + $0x34] sm:$0xf]
      %v611 = vld [vmem:[%s596 + $0x38] sm:$0xf]
      %v612 = vld [vmem:[%s596 + $0x3c] sm:$0xf]
      %v614 = vunpack.c.l.b16 %v592
      %v615 = vpack.c.b16 %v279, %v614
      %vm616 = vcmask 1046528
      %v617 = vrot.slane %v615, 1
      %v618 = vrot.slane %v290, 1
      %v619 = vsel %vm616, %v617, %v618
      %v620 = vrot.slane %v291, 1
      %v621 = vsel %vm616, %v618, %v620
      %v622 = vrot.slane %v292, 1
      %v623 = vsel %vm616, %v620, %v622
      %v624 = vrot.slane %v293, 1
      %v625 = vsel %vm616, %v622, %v624
      %v626 = vrot.slane %v294, 1
      %v627 = vsel %vm616, %v624, %v626
      %v649 = vunpack.c.l.b16 %v597
      %v650 = vunpack.c.l.b16 %v598
      %v651 = vunpack.c.l.b16 %v599
      %v652 = vunpack.c.l.b16 %v600
      %v653 = vunpack.c.l.b16 %v601
      %v654 = vunpack.c.l.b16 %v602
      %v655 = vunpack.c.l.b16 %v603
      %v656 = vunpack.c.l.b16 %v604
      %v657 = vunpack.c.l.b16 %v605
      %v658 = vunpack.c.l.b16 %v606
      %v659 = vunpack.c.l.b16 %v607
      %v660 = vunpack.c.l.b16 %v608
      %v661 = vunpack.c.l.b16 %v609
      %v662 = vunpack.c.l.b16 %v610
      %v663 = vunpack.c.l.b16 %v611
      %v664 = vunpack.c.l.b16 %v612
      %v665 = vpack.c.b16 %v650, %v649
      %v666 = vpack.c.b16 %v652, %v651
      %v667 = vpack.c.b16 %v654, %v653
      %v668 = vpack.c.b16 %v656, %v655
      %v669 = vpack.c.b16 %v658, %v657
      %v670 = vpack.c.b16 %v660, %v659
      %v671 = vpack.c.b16 %v662, %v661
      %v672 = vpack.c.b16 %v664, %v663
      %681 = vmatprep.subr.bf16.mxu0 0
      %682 = vmatpush1.bf16.msra.mxu0 %v672
      %683 = vmatprep.subr.bf16.mxu0 0
      %684 = vmatpush1.bf16.msra.mxu0 %v671
      %685 = vmatprep.subr.bf16.mxu0 0
      %686 = vmatpush1.bf16.msra.mxu0 %v670
      %687 = vmatprep.subr.bf16.mxu0 0
      %688 = vmatpush1.bf16.msra.mxu0 %v669
      %689 = vmatprep.subr.bf16.mxu0 0
      %690 = vmatpush1.bf16.msra.mxu0 %v668
      %691 = vmatprep.subr.bf16.mxu0 0
      %692 = vmatpush1.bf16.msra.mxu0 %v667
      %693 = vmatprep.subr.bf16.mxu0 0
      %694 = vmatpush1.bf16.msra.mxu0 %v666
      %695 = vmatprep.subr.bf16.mxu0 0
      %696 = vmatpush1.bf16.msra.mxu0 %v665
      %697 = vmatprep.subr.bf16.mxu0 0
      %698 = vmatpush2.bf16.msra.mxu0 0
      %699 = vmatprep.subr.bf16.mxu0 0
      %700 = vmatpush2.bf16.msra.mxu0 0
      %701 = vmatprep.subr.bf16.mxu0 0
      %702 = vmatpush2.bf16.msra.mxu0 0
      %703 = vmatprep.subr.bf16.mxu0 0
      %704 = vmatpush2.bf16.msra.mxu0 0
      %705 = vmatprep.subr.bf16.mxu0 0
      %706 = vmatpush2.bf16.msra.mxu0 0
      %707 = vmatprep.subr.bf16.mxu0 0
      %708 = vmatpush2.bf16.msra.mxu0 0
      %709 = vmatprep.subr.bf16.mxu0 0
      %710 = vmatpush2.bf16.msra.mxu0 0
      %711 = vmatprep.subr.bf16.mxu0 0
      %712 = vmatpush2.bf16.msra.mxu0 0
      %713 = vmatprep.mubr.bf16.mxu0 0
      %714 = vmatmul.mubr.bf16.gmra.mxu0 %v619
      %v715 = vpop.f32.mrf.mxu0
      %v716 = vadd.f32 0.0, %v715
      %v717 = vpop.f32.mrf.mxu0
      %v718 = vpop.f32.mrf.mxu0
      %v719 = vadd.f32 0.0, %v718
      %v720 = vpop.f32.mrf.mxu0
      %721 = vmatprep.mubr.bf16.mxu0 0
      %722 = vmatmul.mubr.bf16.gmra.mxu0 %v621
      %v723 = vpop.f32.mrf.mxu0
      %v724 = vadd.f32 0.0, %v723
      %v725 = vpop.f32.mrf.mxu0
      %v726 = vpop.f32.mrf.mxu0
      %v727 = vadd.f32 0.0, %v726
      %v728 = vpop.f32.mrf.mxu0
      %729 = vmatprep.mubr.bf16.mxu0 0
      %730 = vmatmul.mubr.bf16.gmra.mxu0 %v623
      %v731 = vpop.f32.mrf.mxu0
      %v732 = vadd.f32 0.0, %v731
      %v733 = vpop.f32.mrf.mxu0
      %v734 = vpop.f32.mrf.mxu0
      %v735 = vadd.f32 0.0, %v734
      %v736 = vpop.f32.mrf.mxu0
      %737 = vmatprep.mubr.bf16.mxu0 0
      %738 = vmatmul.mubr.bf16.gmra.mxu0 %v625
      %v739 = vpop.f32.mrf.mxu0
      %v740 = vadd.f32 0.0, %v739
      %v741 = vpop.f32.mrf.mxu0
      %v742 = vpop.f32.mrf.mxu0
      %v743 = vadd.f32 0.0, %v742
      %v744 = vpop.f32.mrf.mxu0
      %745 = vmatprep.mubr.bf16.mxu0 0
      %746 = vmatmul.mubr.bf16.gmra.mxu0 %v627
      %v747 = vpop.f32.mrf.mxu0
      %v748 = vadd.f32 0.0, %v747
      %v749 = vpop.f32.mrf.mxu0
      %v750 = vpop.f32.mrf.mxu0
      %v751 = vadd.f32 0.0, %v750
      %v752 = vpop.f32.mrf.mxu0
      %753 = vdwg.mxu0
      %v754 = vadd.f32 %v554, %v716
      %v755 = vadd.f32 %v557, %v719
      %v756 = vadd.f32 %v562, %v724
      %v757 = vadd.f32 %v565, %v727
      %v758 = vadd.f32 %v570, %v732
      %v759 = vadd.f32 %v573, %v735
      %v760 = vadd.f32 %v578, %v740
      %v761 = vadd.f32 %v581, %v743
      %v762 = vadd.f32 %v586, %v748
      %v763 = vadd.f32 %v589, %v751
      %v764 = vld [vmem:[%s189 + $0x4] sm:$0xe]
      %v765 = vld [vmem:[%s189 + $0x8] sm:$0xf]
      %v766 = vld [vmem:[%s189 + $0xc] sm:$0xf]
      %v767 = vld [vmem:[%s189 + $0x10] sm:$0xf]
      %v768 = vld [vmem:[%s189 + $0x14] sm:$0xf]
      %v769 = vld [vmem:[%s189 + $0x18] sm:$0xf]
      %v770 = vld [vmem:[%s189 + $0x1c] sm:$0xf]
      %v771 = vld [vmem:[%s189 + $0x20] sm:$0xf]
      %v772 = vld [vmem:[%s189 + $0x24] sm:$0xf]
      %v773 = vld [vmem:[%s189 + $0x28] sm:$0xf]
      %v774 = vld [vmem:[%s189 + $0x2c] sm:$0x1]
      %s775 = sadd.s32 %s226, 3
      %s776 = smul.u32 %s775, 16
      %s777 = smul.addr %s776, 4
      %s778 = scalar_lea.vmem %s1, %s777
      %v779 = vld [vmem:[%s778] sm:$0xf]
      %v780 = vld [vmem:[%s778 + $0x4] sm:$0xf]
      %v781 = vld [vmem:[%s778 + $0x8] sm:$0xf]
      %v782 = vld [vmem:[%s778 + $0xc] sm:$0xf]
      %v783 = vld [vmem:[%s778 + $0x10] sm:$0xf]
      %v784 = vld [vmem:[%s778 + $0x14] sm:$0xf]
      %v785 = vld [vmem:[%s778 + $0x18] sm:$0xf]
      %v786 = vld [vmem:[%s778 + $0x1c] sm:$0xf]
      %v787 = vld [vmem:[%s778 + $0x20] sm:$0xf]
      %v788 = vld [vmem:[%s778 + $0x24] sm:$0xf]
      %v789 = vld [vmem:[%s778 + $0x28] sm:$0xf]
      %v790 = vld [vmem:[%s778 + $0x2c] sm:$0xf]
      %v791 = vld [vmem:[%s778 + $0x30] sm:$0xf]
      %v792 = vld [vmem:[%s778 + $0x34] sm:$0xf]
      %v793 = vld [vmem:[%s778 + $0x38] sm:$0xf]
      %v794 = vld [vmem:[%s778 + $0x3c] sm:$0xf]
      %v806 = vunpack.c.l.b16 %v764
      %v807 = vunpack.c.l.b16 %v765
      %v808 = vunpack.c.l.b16 %v766
      %v809 = vunpack.c.l.b16 %v767
      %v810 = vunpack.c.l.b16 %v768
      %v811 = vunpack.c.l.b16 %v769
      %v812 = vunpack.c.l.b16 %v770
      %v813 = vunpack.c.l.b16 %v771
      %v814 = vunpack.c.l.b16 %v772
      %v815 = vunpack.c.l.b16 %v773
      %v816 = vunpack.c.l.b16 %v774
      %v817 = vpack.c.b16 %v807, %v806
      %v818 = vpack.c.b16 %v809, %v808
      %v819 = vpack.c.b16 %v811, %v810
      %v820 = vpack.c.b16 %v813, %v812
      %v821 = vpack.c.b16 %v815, %v814
      %v822 = vpack.c.b16 %v816, %v816
      %v823 = vrot.slane %v817, 1
      %v824 = vrot.slane %v818, 1
      %v825 = vsel %vm616, %v823, %v824
      %v826 = vrot.slane %v819, 1
      %v827 = vsel %vm616, %v824, %v826
      %v828 = vrot.slane %v820, 1
      %v829 = vsel %vm616, %v826, %v828
      %v830 = vrot.slane %v821, 1
      %v831 = vsel %vm616, %v828, %v830
      %v832 = vrot.slane %v822, 1
      %v833 = vsel %vm616, %v830, %v832
      %v855 = vunpack.c.l.b16 %v779
      %v856 = vunpack.c.l.b16 %v780
      %v857 = vunpack.c.l.b16 %v781
      %v858 = vunpack.c.l.b16 %v782
      %v859 = vunpack.c.l.b16 %v783
      %v860 = vunpack.c.l.b16 %v784
      %v861 = vunpack.c.l.b16 %v785
      %v862 = vunpack.c.l.b16 %v786
      %v863 = vunpack.c.l.b16 %v787
      %v864 = vunpack.c.l.b16 %v788
      %v865 = vunpack.c.l.b16 %v789
      %v866 = vunpack.c.l.b16 %v790
      %v867 = vunpack.c.l.b16 %v791
      %v868 = vunpack.c.l.b16 %v792
      %v869 = vunpack.c.l.b16 %v793
      %v870 = vunpack.c.l.b16 %v794
      %v871 = vpack.c.b16 %v856, %v855
      %v872 = vpack.c.b16 %v858, %v857
      %v873 = vpack.c.b16 %v860, %v859
      %v874 = vpack.c.b16 %v862, %v861
      %v875 = vpack.c.b16 %v864, %v863
      %v876 = vpack.c.b16 %v866, %v865
      %v877 = vpack.c.b16 %v868, %v867
      %v878 = vpack.c.b16 %v870, %v869
      %887 = vmatprep.subr.bf16.mxu0 0
      %888 = vmatpush1.bf16.msra.mxu0 %v878
      %889 = vmatprep.subr.bf16.mxu0 0
      %890 = vmatpush1.bf16.msra.mxu0 %v877
      %891 = vmatprep.subr.bf16.mxu0 0
      %892 = vmatpush1.bf16.msra.mxu0 %v876
      %893 = vmatprep.subr.bf16.mxu0 0
      %894 = vmatpush1.bf16.msra.mxu0 %v875
      %895 = vmatprep.subr.bf16.mxu0 0
      %896 = vmatpush1.bf16.msra.mxu0 %v874
      %897 = vmatprep.subr.bf16.mxu0 0
      %898 = vmatpush1.bf16.msra.mxu0 %v873
      %899 = vmatprep.subr.bf16.mxu0 0
      %900 = vmatpush1.bf16.msra.mxu0 %v872
      %901 = vmatprep.subr.bf16.mxu0 0
      %902 = vmatpush1.bf16.msra.mxu0 %v871
      %903 = vmatprep.subr.bf16.mxu0 0
      %904 = vmatpush2.bf16.msra.mxu0 0
      %905 = vmatprep.subr.bf16.mxu0 0
      %906 = vmatpush2.bf16.msra.mxu0 0
      %907 = vmatprep.subr.bf16.mxu0 0
      %908 = vmatpush2.bf16.msra.mxu0 0
      %909 = vmatprep.subr.bf16.mxu0 0
      %910 = vmatpush2.bf16.msra.mxu0 0
      %911 = vmatprep.subr.bf16.mxu0 0
      %912 = vmatpush2.bf16.msra.mxu0 0
      %913 = vmatprep.subr.bf16.mxu0 0
      %914 = vmatpush2.bf16.msra.mxu0 0
      %915 = vmatprep.subr.bf16.mxu0 0
      %916 = vmatpush2.bf16.msra.mxu0 0
      %917 = vmatprep.subr.bf16.mxu0 0
      %918 = vmatpush2.bf16.msra.mxu0 0
      %919 = vmatprep.mubr.bf16.mxu0 0
      %920 = vmatmul.mubr.bf16.gmra.mxu0 %v825
      %v921 = vpop.f32.mrf.mxu0
      %v922 = vadd.f32 0.0, %v921
      %v923 = vpop.f32.mrf.mxu0
      %v924 = vpop.f32.mrf.mxu0
      %v925 = vadd.f32 0.0, %v924
      %v926 = vpop.f32.mrf.mxu0
      %927 = vmatprep.mubr.bf16.mxu0 0
      %928 = vmatmul.mubr.bf16.gmra.mxu0 %v827
      %v929 = vpop.f32.mrf.mxu0
      %v930 = vadd.f32 0.0, %v929
      %v931 = vpop.f32.mrf.mxu0
      %v932 = vpop.f32.mrf.mxu0
      %v933 = vadd.f32 0.0, %v932
      %v934 = vpop.f32.mrf.mxu0
      %935 = vmatprep.mubr.bf16.mxu0 0
      %936 = vmatmul.mubr.bf16.gmra.mxu0 %v829
      %v937 = vpop.f32.mrf.mxu0
      %v938 = vadd.f32 0.0, %v937
      %v939 = vpop.f32.mrf.mxu0
      %v940 = vpop.f32.mrf.mxu0
      %v941 = vadd.f32 0.0, %v940
      %v942 = vpop.f32.mrf.mxu0
      %943 = vmatprep.mubr.bf16.mxu0 0
      %944 = vmatmul.mubr.bf16.gmra.mxu0 %v831
      %v945 = vpop.f32.mrf.mxu0
      %v946 = vadd.f32 0.0, %v945
      %v947 = vpop.f32.mrf.mxu0
      %v948 = vpop.f32.mrf.mxu0
      %v949 = vadd.f32 0.0, %v948
      %v950 = vpop.f32.mrf.mxu0
      %951 = vmatprep.mubr.bf16.mxu0 0
      %952 = vmatmul.mubr.bf16.gmra.mxu0 %v833
      %v953 = vpop.f32.mrf.mxu0
      %v954 = vadd.f32 0.0, %v953
      %v955 = vpop.f32.mrf.mxu0
      %v956 = vpop.f32.mrf.mxu0
      %v957 = vadd.f32 0.0, %v956
      %v958 = vpop.f32.mrf.mxu0
      %959 = vdwg.mxu0
      %v960 = vadd.f32 %v754, %v922
      %v961 = vadd.f32 %v755, %v925
      %v962 = vadd.f32 %v756, %v930
      %v963 = vadd.f32 %v757, %v933
      %v964 = vadd.f32 %v758, %v938
      %v965 = vadd.f32 %v759, %v941
      %v966 = vadd.f32 %v760, %v946
      %v967 = vadd.f32 %v761, %v949
      %v968 = vadd.f32 %v762, %v954
      %v969 = vadd.f32 %v763, %v957
      %v970 = vld [vmem:[%s189 + $0x2c] sm:$0x3]
      %s971 = sadd.s32 %s226, 4
      %s972 = smul.u32 %s971, 16
      %s973 = smul.addr %s972, 4
      %s974 = scalar_lea.vmem %s1, %s973
      %v975 = vld [vmem:[%s974] sm:$0xf]
      %v976 = vld [vmem:[%s974 + $0x4] sm:$0xf]
      %v977 = vld [vmem:[%s974 + $0x8] sm:$0xf]
      %v978 = vld [vmem:[%s974 + $0xc] sm:$0xf]
      %v979 = vld [vmem:[%s974 + $0x10] sm:$0xf]
      %v980 = vld [vmem:[%s974 + $0x14] sm:$0xf]
      %v981 = vld [vmem:[%s974 + $0x18] sm:$0xf]
      %v982 = vld [vmem:[%s974 + $0x1c] sm:$0xf]
      %v983 = vld [vmem:[%s974 + $0x20] sm:$0xf]
      %v984 = vld [vmem:[%s974 + $0x24] sm:$0xf]
      %v985 = vld [vmem:[%s974 + $0x28] sm:$0xf]
      %v986 = vld [vmem:[%s974 + $0x2c] sm:$0xf]
      %v987 = vld [vmem:[%s974 + $0x30] sm:$0xf]
      %v988 = vld [vmem:[%s974 + $0x34] sm:$0xf]
      %v989 = vld [vmem:[%s974 + $0x38] sm:$0xf]
      %v990 = vld [vmem:[%s974 + $0x3c] sm:$0xf]
      %v992 = vunpack.c.l.b16 %v970
      %v993 = vpack.c.b16 %v992, %v992
      %vm994 = vsmask.f32 6400
      %v996 = vshrl.u32 %v817, 16
      %v998 = vrot.slane %v996, 1
      %v999 = vshll.u32 %v817, 16
      %v1001 = vrot.slane %v999, 2
      %v1002 = vor.u32 %v998, %v1001
      %v1004 = vshrl.u32 %v818, 16
      %v1006 = vrot.slane %v1004, 1
      %v1007 = vshll.u32 %v818, 16
      %v1009 = vrot.slane %v1007, 2
      %v1010 = vor.u32 %v1006, %v1009
      %v1011 = vsel %vm994, %v1002, %v1010
      %v1013 = vshrl.u32 %v819, 16
      %v1015 = vrot.slane %v1013, 1
      %v1016 = vshll.u32 %v819, 16
      %v1018 = vrot.slane %v1016, 2
      %v1019 = vor.u32 %v1015, %v1018
      %v1020 = vsel %vm994, %v1010, %v1019
      %v1022 = vshrl.u32 %v820, 16
      %v1024 = vrot.slane %v1022, 1
      %v1025 = vshll.u32 %v820, 16
      %v1027 = vrot.slane %v1025, 2
      %v1028 = vor.u32 %v1024, %v1027
      %v1029 = vsel %vm994, %v1019, %v1028
      %v1031 = vshrl.u32 %v821, 16
      %v1033 = vrot.slane %v1031, 1
      %v1034 = vshll.u32 %v821, 16
      %v1036 = vrot.slane %v1034, 2
      %v1037 = vor.u32 %v1033, %v1036
      %v1038 = vsel %vm994, %v1028, %v1037
      %v1040 = vshrl.u32 %v993, 16
      %v1042 = vrot.slane %v1040, 1
      %v1043 = vshll.u32 %v993, 16
      %v1045 = vrot.slane %v1043, 2
      %v1046 = vor.u32 %v1042, %v1045
      %v1047 = vsel %vm994, %v1037, %v1046
      %v1069 = vunpack.c.l.b16 %v975
      %v1070 = vunpack.c.l.b16 %v976
      %v1071 = vunpack.c.l.b16 %v977
      %v1072 = vunpack.c.l.b16 %v978
      %v1073 = vunpack.c.l.b16 %v979
      %v1074 = vunpack.c.l.b16 %v980
      %v1075 = vunpack.c.l.b16 %v981
      %v1076 = vunpack.c.l.b16 %v982
      %v1077 = vunpack.c.l.b16 %v983
      %v1078 = vunpack.c.l.b16 %v984
      %v1079 = vunpack.c.l.b16 %v985
      %v1080 = vunpack.c.l.b16 %v986
      %v1081 = vunpack.c.l.b16 %v987
      %v1082 = vunpack.c.l.b16 %v988
      %v1083 = vunpack.c.l.b16 %v989
      %v1084 = vunpack.c.l.b16 %v990
      %v1085 = vpack.c.b16 %v1070, %v1069
      %v1086 = vpack.c.b16 %v1072, %v1071
      %v1087 = vpack.c.b16 %v1074, %v1073
      %v1088 = vpack.c.b16 %v1076, %v1075
      %v1089 = vpack.c.b16 %v1078, %v1077
      %v1090 = vpack.c.b16 %v1080, %v1079
      %v1091 = vpack.c.b16 %v1082, %v1081
      %v1092 = vpack.c.b16 %v1084, %v1083
      %1101 = vmatprep.subr.bf16.mxu0 0
      %1102 = vmatpush1.bf16.msra.mxu0 %v1092
      %1103 = vmatprep.subr.bf16.mxu0 0
      %1104 = vmatpush1.bf16.msra.mxu0 %v1091
      %1105 = vmatprep.subr.bf16.mxu0 0
      %1106 = vmatpush1.bf16.msra.mxu0 %v1090
      %1107 = vmatprep.subr.bf16.mxu0 0
      %1108 = vmatpush1.bf16.msra.mxu0 %v1089
      %1109 = vmatprep.subr.bf16.mxu0 0
      %1110 = vmatpush1.bf16.msra.mxu0 %v1088
      %1111 = vmatprep.subr.bf16.mxu0 0
      %1112 = vmatpush1.bf16.msra.mxu0 %v1087
      %1113 = vmatprep.subr.bf16.mxu0 0
      %1114 = vmatpush1.bf16.msra.mxu0 %v1086
      %1115 = vmatprep.subr.bf16.mxu0 0
      %1116 = vmatpush1.bf16.msra.mxu0 %v1085
      %1117 = vmatprep.subr.bf16.mxu0 0
      %1118 = vmatpush2.bf16.msra.mxu0 0
      %1119 = vmatprep.subr.bf16.mxu0 0
      %1120 = vmatpush2.bf16.msra.mxu0 0
      %1121 = vmatprep.subr.bf16.mxu0 0
      %1122 = vmatpush2.bf16.msra.mxu0 0
      %1123 = vmatprep.subr.bf16.mxu0 0
      %1124 = vmatpush2.bf16.msra.mxu0 0
      %1125 = vmatprep.subr.bf16.mxu0 0
      %1126 = vmatpush2.bf16.msra.mxu0 0
      %1127 = vmatprep.subr.bf16.mxu0 0
      %1128 = vmatpush2.bf16.msra.mxu0 0
      %1129 = vmatprep.subr.bf16.mxu0 0
      %1130 = vmatpush2.bf16.msra.mxu0 0
      %1131 = vmatprep.subr.bf16.mxu0 0
      %1132 = vmatpush2.bf16.msra.mxu0 0
      %1133 = vmatprep.mubr.bf16.mxu0 0
      %1134 = vmatmul.mubr.bf16.gmra.mxu0 %v1011
      %v1135 = vpop.f32.mrf.mxu0
      %v1136 = vadd.f32 0.0, %v1135
      %v1137 = vpop.f32.mrf.mxu0
      %v1138 = vpop.f32.mrf.mxu0
      %v1139 = vadd.f32 0.0, %v1138
      %v1140 = vpop.f32.mrf.mxu0
      %1141 = vmatprep.mubr.bf16.mxu0 0
      %1142 = vmatmul.mubr.bf16.gmra.mxu0 %v1020
      %v1143 = vpop.f32.mrf.mxu0
      %v1144 = vadd.f32 0.0, %v1143
      %v1145 = vpop.f32.mrf.mxu0
      %v1146 = vpop.f32.mrf.mxu0
      %v1147 = vadd.f32 0.0, %v1146
      %v1148 = vpop.f32.mrf.mxu0
      %1149 = vmatprep.mubr.bf16.mxu0 0
      %1150 = vmatmul.mubr.bf16.gmra.mxu0 %v1029
      %v1151 = vpop.f32.mrf.mxu0
      %v1152 = vadd.f32 0.0, %v1151
      %v1153 = vpop.f32.mrf.mxu0
      %v1154 = vpop.f32.mrf.mxu0
      %v1155 = vadd.f32 0.0, %v1154
      %v1156 = vpop.f32.mrf.mxu0
      %1157 = vmatprep.mubr.bf16.mxu0 0
      %1158 = vmatmul.mubr.bf16.gmra.mxu0 %v1038
      %v1159 = vpop.f32.mrf.mxu0
      %v1160 = vadd.f32 0.0, %v1159
      %v1161 = vpop.f32.mrf.mxu0
      %v1162 = vpop.f32.mrf.mxu0
      %v1163 = vadd.f32 0.0, %v1162
      %v1164 = vpop.f32.mrf.mxu0
      %1165 = vmatprep.mubr.bf16.mxu0 0
      %1166 = vmatmul.mubr.bf16.gmra.mxu0 %v1047
      %v1167 = vpop.f32.mrf.mxu0
      %v1168 = vadd.f32 0.0, %v1167
      %v1169 = vpop.f32.mrf.mxu0
      %v1170 = vpop.f32.mrf.mxu0
      %v1171 = vadd.f32 0.0, %v1170
      %v1172 = vpop.f32.mrf.mxu0
      %1173 = vdwg.mxu0
      %v1174 = vadd.f32 %v960, %v1136
      %v1175 = vadd.f32 %v961, %v1139
      %v1176 = vadd.f32 %v962, %v1144
      %v1177 = vadd.f32 %v963, %v1147
      %v1178 = vadd.f32 %v964, %v1152
      %v1179 = vadd.f32 %v965, %v1155
      %v1180 = vadd.f32 %v966, %v1160
      %v1181 = vadd.f32 %v967, %v1163
      %v1182 = vadd.f32 %v968, %v1168
      %v1183 = vadd.f32 %v969, %v1171
      %v1184 = vld [vmem:[%s189 + $0x4] sm:$0xc]
      %s1185 = sadd.s32 %s226, 5
      %s1186 = smul.u32 %s1185, 16
      %s1187 = smul.addr %s1186, 4
      %s1188 = scalar_lea.vmem %s1, %s1187
      %v1189 = vld [vmem:[%s1188] sm:$0xf]
      %v1190 = vld [vmem:[%s1188 + $0x4] sm:$0xf]
      %v1191 = vld [vmem:[%s1188 + $0x8] sm:$0xf]
      %v1192 = vld [vmem:[%s1188 + $0xc] sm:$0xf]
      %v1193 = vld [vmem:[%s1188 + $0x10] sm:$0xf]
      %v1194 = vld [vmem:[%s1188 + $0x14] sm:$0xf]
      %v1195 = vld [vmem:[%s1188 + $0x18] sm:$0xf]
      %v1196 = vld [vmem:[%s1188 + $0x1c] sm:$0xf]
      %v1197 = vld [vmem:[%s1188 + $0x20] sm:$0xf]
      %v1198 = vld [vmem:[%s1188 + $0x24] sm:$0xf]
      %v1199 = vld [vmem:[%s1188 + $0x28] sm:$0xf]
      %v1200 = vld [vmem:[%s1188 + $0x2c] sm:$0xf]
      %v1201 = vld [vmem:[%s1188 + $0x30] sm:$0xf]
      %v1202 = vld [vmem:[%s1188 + $0x34] sm:$0xf]
      %v1203 = vld [vmem:[%s1188 + $0x38] sm:$0xf]
      %v1204 = vld [vmem:[%s1188 + $0x3c] sm:$0xf]
      %v1206 = vunpack.c.l.b16 %v1184
      %v1207 = vpack.c.b16 %v807, %v1206
      %vm1208 = vcmask 1045504
      %v1209 = vrot.slane %v1207, 2
      %v1210 = vrot.slane %v818, 2
      %v1211 = vsel %vm1208, %v1209, %v1210
      %v1212 = vrot.slane %v819, 2
      %v1213 = vsel %vm1208, %v1210, %v1212
      %v1214 = vrot.slane %v820, 2
      %v1215 = vsel %vm1208, %v1212, %v1214
      %v1216 = vrot.slane %v821, 2
      %v1217 = vsel %vm1208, %v1214, %v1216
      %v1218 = vrot.slane %v993, 2
      %v1219 = vsel %vm1208, %v1216, %v1218
      %v1241 = vunpack.c.l.b16 %v1189
      %v1242 = vunpack.c.l.b16 %v1190
      %v1243 = vunpack.c.l.b16 %v1191
      %v1244 = vunpack.c.l.b16 %v1192
      %v1245 = vunpack.c.l.b16 %v1193
      %v1246 = vunpack.c.l.b16 %v1194
      %v1247 = vunpack.c.l.b16 %v1195
      %v1248 = vunpack.c.l.b16 %v1196
      %v1249 = vunpack.c.l.b16 %v1197
      %v1250 = vunpack.c.l.b16 %v1198
      %v1251 = vunpack.c.l.b16 %v1199
      %v1252 = vunpack.c.l.b16 %v1200
      %v1253 = vunpack.c.l.b16 %v1201
      %v1254 = vunpack.c.l.b16 %v1202
      %v1255 = vunpack.c.l.b16 %v1203
      %v1256 = vunpack.c.l.b16 %v1204
      %v1257 = vpack.c.b16 %v1242, %v1241
      %v1258 = vpack.c.b16 %v1244, %v1243
      %v1259 = vpack.c.b16 %v1246, %v1245
      %v1260 = vpack.c.b16 %v1248, %v1247
      %v1261 = vpack.c.b16 %v1250, %v1249
      %v1262 = vpack.c.b16 %v1252, %v1251
      %v1263 = vpack.c.b16 %v1254, %v1253
      %v1264 = vpack.c.b16 %v1256, %v1255
      %1273 = vmatprep.subr.bf16.mxu0 0
      %1274 = vmatpush1.bf16.msra.mxu0 %v1264
      %1275 = vmatprep.subr.bf16.mxu0 0
      %1276 = vmatpush1.bf16.msra.mxu0 %v1263
      %1277 = vmatprep.subr.bf16.mxu0 0
      %1278 = vmatpush1.bf16.msra.mxu0 %v1262
      %1279 = vmatprep.subr.bf16.mxu0 0
      %1280 = vmatpush1.bf16.msra.mxu0 %v1261
      %1281 = vmatprep.subr.bf16.mxu0 0
      %1282 = vmatpush1.bf16.msra.mxu0 %v1260
      %1283 = vmatprep.subr.bf16.mxu0 0
      %1284 = vmatpush1.bf16.msra.mxu0 %v1259
      %1285 = vmatprep.subr.bf16.mxu0 0
      %1286 = vmatpush1.bf16.msra.mxu0 %v1258
      %1287 = vmatprep.subr.bf16.mxu0 0
      %1288 = vmatpush1.bf16.msra.mxu0 %v1257
      %1289 = vmatprep.subr.bf16.mxu0 0
      %1290 = vmatpush2.bf16.msra.mxu0 0
      %1291 = vmatprep.subr.bf16.mxu0 0
      %1292 = vmatpush2.bf16.msra.mxu0 0
      %1293 = vmatprep.subr.bf16.mxu0 0
      %1294 = vmatpush2.bf16.msra.mxu0 0
      %1295 = vmatprep.subr.bf16.mxu0 0
      %1296 = vmatpush2.bf16.msra.mxu0 0
      %1297 = vmatprep.subr.bf16.mxu0 0
      %1298 = vmatpush2.bf16.msra.mxu0 0
      %1299 = vmatprep.subr.bf16.mxu0 0
      %1300 = vmatpush2.bf16.msra.mxu0 0
      %1301 = vmatprep.subr.bf16.mxu0 0
      %1302 = vmatpush2.bf16.msra.mxu0 0
      %1303 = vmatprep.subr.bf16.mxu0 0
      %1304 = vmatpush2.bf16.msra.mxu0 0
      %1305 = vmatprep.mubr.bf16.mxu0 0
      %1306 = vmatmul.mubr.bf16.gmra.mxu0 %v1211
      %v1307 = vpop.f32.mrf.mxu0
      %v1308 = vadd.f32 0.0, %v1307
      %v1309 = vpop.f32.mrf.mxu0
      %v1310 = vpop.f32.mrf.mxu0
      %v1311 = vadd.f32 0.0, %v1310
      %v1312 = vpop.f32.mrf.mxu0
      %1313 = vmatprep.mubr.bf16.mxu0 0
      %1314 = vmatmul.mubr.bf16.gmra.mxu0 %v1213
      %v1315 = vpop.f32.mrf.mxu0
      %v1316 = vadd.f32 0.0, %v1315
      %v1317 = vpop.f32.mrf.mxu0
      %v1318 = vpop.f32.mrf.mxu0
      %v1319 = vadd.f32 0.0, %v1318
      %v1320 = vpop.f32.mrf.mxu0
      %1321 = vmatprep.mubr.bf16.mxu0 0
      %1322 = vmatmul.mubr.bf16.gmra.mxu0 %v1215
      %v1323 = vpop.f32.mrf.mxu0
      %v1324 = vadd.f32 0.0, %v1323
      %v1325 = vpop.f32.mrf.mxu0
      %v1326 = vpop.f32.mrf.mxu0
      %v1327 = vadd.f32 0.0, %v1326
      %v1328 = vpop.f32.mrf.mxu0
      %1329 = vmatprep.mubr.bf16.mxu0 0
      %1330 = vmatmul.mubr.bf16.gmra.mxu0 %v1217
      %v1331 = vpop.f32.mrf.mxu0
      %v1332 = vadd.f32 0.0, %v1331
      %v1333 = vpop.f32.mrf.mxu0
      %v1334 = vpop.f32.mrf.mxu0
      %v1335 = vadd.f32 0.0, %v1334
      %v1336 = vpop.f32.mrf.mxu0
      %1337 = vmatprep.mubr.bf16.mxu0 0
      %1338 = vmatmul.mubr.bf16.gmra.mxu0 %v1219
      %v1339 = vpop.f32.mrf.mxu0
      %v1340 = vadd.f32 0.0, %v1339
      %v1341 = vpop.f32.mrf.mxu0
      %v1342 = vpop.f32.mrf.mxu0
      %v1343 = vadd.f32 0.0, %v1342
      %v1344 = vpop.f32.mrf.mxu0
      %1345 = vdwg.mxu0
      %v1346 = vadd.f32 %v1174, %v1308
      %v1347 = vadd.f32 %v1175, %v1311
      %v1348 = vadd.f32 %v1176, %v1316
      %v1349 = vadd.f32 %v1177, %v1319
      %v1350 = vadd.f32 %v1178, %v1324
      %v1351 = vadd.f32 %v1179, %v1327
      %v1352 = vadd.f32 %v1180, %v1332
      %v1353 = vadd.f32 %v1181, %v1335
      %v1354 = vadd.f32 %v1182, %v1340
      %v1355 = vadd.f32 %v1183, %v1343
      %v1356 = vld [vmem:[%s189 + $0x8] sm:$0xc]
      %v1357 = vld [vmem:[%s189 + $0xc] sm:$0xf]
      %v1358 = vld [vmem:[%s189 + $0x10] sm:$0xf]
      %v1359 = vld [vmem:[%s189 + $0x14] sm:$0xf]
      %v1360 = vld [vmem:[%s189 + $0x18] sm:$0xf]
      %v1361 = vld [vmem:[%s189 + $0x1c] sm:$0xf]
      %v1362 = vld [vmem:[%s189 + $0x20] sm:$0xf]
      %v1363 = vld [vmem:[%s189 + $0x24] sm:$0xf]
      %v1364 = vld [vmem:[%s189 + $0x28] sm:$0xf]
      %v1365 = vld [vmem:[%s189 + $0x2c] sm:$0xf]
      %v1366 = vld [vmem:[%s189 + $0x30] sm:$0x3]
      %s1367 = sadd.s32 %s226, 6
      %s1368 = smul.u32 %s1367, 16
      %s1369 = smul.addr %s1368, 4
      %s1370 = scalar_lea.vmem %s1, %s1369
      %v1371 = vld [vmem:[%s1370] sm:$0xf]
      %v1372 = vld [vmem:[%s1370 + $0x4] sm:$0xf]
      %v1373 = vld [vmem:[%s1370 + $0x8] sm:$0xf]
      %v1374 = vld [vmem:[%s1370 + $0xc] sm:$0xf]
      %v1375 = vld [vmem:[%s1370 + $0x10] sm:$0xf]
      %v1376 = vld [vmem:[%s1370 + $0x14] sm:$0xf]
      %v1377 = vld [vmem:[%s1370 + $0x18] sm:$0xf]
      %v1378 = vld [vmem:[%s1370 + $0x1c] sm:$0xf]
      %v1379 = vld [vmem:[%s1370 + $0x20] sm:$0xf]
      %v1380 = vld [vmem:[%s1370 + $0x24] sm:$0xf]
      %v1381 = vld [vmem:[%s1370 + $0x28] sm:$0xf]
      %v1382 = vld [vmem:[%s1370 + $0x2c] sm:$0xf]
      %v1383 = vld [vmem:[%s1370 + $0x30] sm:$0xf]
      %v1384 = vld [vmem:[%s1370 + $0x34] sm:$0xf]
      %v1385 = vld [vmem:[%s1370 + $0x38] sm:$0xf]
      %v1386 = vld [vmem:[%s1370 + $0x3c] sm:$0xf]
      %v1398 = vunpack.c.l.b16 %v1356
      %v1399 = vunpack.c.l.b16 %v1357
      %v1400 = vunpack.c.l.b16 %v1358
      %v1401 = vunpack.c.l.b16 %v1359
      %v1402 = vunpack.c.l.b16 %v1360
      %v1403 = vunpack.c.l.b16 %v1361
      %v1404 = vunpack.c.l.b16 %v1362
      %v1405 = vunpack.c.l.b16 %v1363
      %v1406 = vunpack.c.l.b16 %v1364
      %v1407 = vunpack.c.l.b16 %v1365
      %v1408 = vunpack.c.l.b16 %v1366
      %v1409 = vpack.c.b16 %v1399, %v1398
      %v1410 = vpack.c.b16 %v1401, %v1400
      %v1411 = vpack.c.b16 %v1403, %v1402
      %v1412 = vpack.c.b16 %v1405, %v1404
      %v1413 = vpack.c.b16 %v1407, %v1406
      %v1414 = vpack.c.b16 %v1408, %v1408
      %v1415 = vrot.slane %v1409, 2
      %v1416 = vrot.slane %v1410, 2
      %v1417 = vsel %vm1208, %v1415, %v1416
      %v1418 = vrot.slane %v1411, 2
      %v1419 = vsel %vm1208, %v1416, %v1418
      %v1420 = vrot.slane %v1412, 2
      %v1421 = vsel %vm1208, %v1418, %v1420
      %v1422 = vrot.slane %v1413, 2
      %v1423 = vsel %vm1208, %v1420, %v1422
      %v1424 = vrot.slane %v1414, 2
      %v1425 = vsel %vm1208, %v1422, %v1424
      %v1447 = vunpack.c.l.b16 %v1371
      %v1448 = vunpack.c.l.b16 %v1372
      %v1449 = vunpack.c.l.b16 %v1373
      %v1450 = vunpack.c.l.b16 %v1374
      %v1451 = vunpack.c.l.b16 %v1375
      %v1452 = vunpack.c.l.b16 %v1376
      %v1453 = vunpack.c.l.b16 %v1377
      %v1454 = vunpack.c.l.b16 %v1378
      %v1455 = vunpack.c.l.b16 %v1379
      %v1456 = vunpack.c.l.b16 %v1380
      %v1457 = vunpack.c.l.b16 %v1381
      %v1458 = vunpack.c.l.b16 %v1382
      %v1459 = vunpack.c.l.b16 %v1383
      %v1460 = vunpack.c.l.b16 %v1384
      %v1461 = vunpack.c.l.b16 %v1385
      %v1462 = vunpack.c.l.b16 %v1386
      %v1463 = vpack.c.b16 %v1448, %v1447
      %v1464 = vpack.c.b16 %v1450, %v1449
      %v1465 = vpack.c.b16 %v1452, %v1451
      %v1466 = vpack.c.b16 %v1454, %v1453
      %v1467 = vpack.c.b16 %v1456, %v1455
      %v1468 = vpack.c.b16 %v1458, %v1457
      %v1469 = vpack.c.b16 %v1460, %v1459
      %v1470 = vpack.c.b16 %v1462, %v1461
      %1479 = vmatprep.subr.bf16.mxu0 0
      %1480 = vmatpush1.bf16.msra.mxu0 %v1470
      %1481 = vmatprep.subr.bf16.mxu0 0
      %1482 = vmatpush1.bf16.msra.mxu0 %v1469
      %1483 = vmatprep.subr.bf16.mxu0 0
      %1484 = vmatpush1.bf16.msra.mxu0 %v1468
      %1485 = vmatprep.subr.bf16.mxu0 0
      %1486 = vmatpush1.bf16.msra.mxu0 %v1467
      %1487 = vmatprep.subr.bf16.mxu0 0
      %1488 = vmatpush1.bf16.msra.mxu0 %v1466
      %1489 = vmatprep.subr.bf16.mxu0 0
      %1490 = vmatpush1.bf16.msra.mxu0 %v1465
      %1491 = vmatprep.subr.bf16.mxu0 0
      %1492 = vmatpush1.bf16.msra.mxu0 %v1464
      %1493 = vmatprep.subr.bf16.mxu0 0
      %1494 = vmatpush1.bf16.msra.mxu0 %v1463
      %1495 = vmatprep.subr.bf16.mxu0 0
      %1496 = vmatpush2.bf16.msra.mxu0 0
      %1497 = vmatprep.subr.bf16.mxu0 0
      %1498 = vmatpush2.bf16.msra.mxu0 0
      %1499 = vmatprep.subr.bf16.mxu0 0
      %1500 = vmatpush2.bf16.msra.mxu0 0
      %1501 = vmatprep.subr.bf16.mxu0 0
      %1502 = vmatpush2.bf16.msra.mxu0 0
      %1503 = vmatprep.subr.bf16.mxu0 0
      %1504 = vmatpush2.bf16.msra.mxu0 0
      %1505 = vmatprep.subr.bf16.mxu0 0
      %1506 = vmatpush2.bf16.msra.mxu0 0
      %1507 = vmatprep.subr.bf16.mxu0 0
      %1508 = vmatpush2.bf16.msra.mxu0 0
      %1509 = vmatprep.subr.bf16.mxu0 0
      %1510 = vmatpush2.bf16.msra.mxu0 0
      %1511 = vmatprep.mubr.bf16.mxu0 0
      %1512 = vmatmul.mubr.bf16.gmra.mxu0 %v1417
      %v1513 = vpop.f32.mrf.mxu0
      %v1514 = vadd.f32 0.0, %v1513
      %v1515 = vpop.f32.mrf.mxu0
      %v1516 = vpop.f32.mrf.mxu0
      %v1517 = vadd.f32 0.0, %v1516
      %v1518 = vpop.f32.mrf.mxu0
      %1519 = vmatprep.mubr.bf16.mxu0 0
      %1520 = vmatmul.mubr.bf16.gmra.mxu0 %v1419
      %v1521 = vpop.f32.mrf.mxu0
      %v1522 = vadd.f32 0.0, %v1521
      %v1523 = vpop.f32.mrf.mxu0
      %v1524 = vpop.f32.mrf.mxu0
      %v1525 = vadd.f32 0.0, %v1524
      %v1526 = vpop.f32.mrf.mxu0
      %1527 = vmatprep.mubr.bf16.mxu0 0
      %1528 = vmatmul.mubr.bf16.gmra.mxu0 %v1421
      %v1529 = vpop.f32.mrf.mxu0
      %v1530 = vadd.f32 0.0, %v1529
      %v1531 = vpop.f32.mrf.mxu0
      %v1532 = vpop.f32.mrf.mxu0
      %v1533 = vadd.f32 0.0, %v1532
      %v1534 = vpop.f32.mrf.mxu0
      %1535 = vmatprep.mubr.bf16.mxu0 0
      %1536 = vmatmul.mubr.bf16.gmra.mxu0 %v1423
      %v1537 = vpop.f32.mrf.mxu0
      %v1538 = vadd.f32 0.0, %v1537
      %v1539 = vpop.f32.mrf.mxu0
      %v1540 = vpop.f32.mrf.mxu0
      %v1541 = vadd.f32 0.0, %v1540
      %v1542 = vpop.f32.mrf.mxu0
      %1543 = vmatprep.mubr.bf16.mxu0 0
      %1544 = vmatmul.mubr.bf16.gmra.mxu0 %v1425
      %v1545 = vpop.f32.mrf.mxu0
      %v1546 = vadd.f32 0.0, %v1545
      %v1547 = vpop.f32.mrf.mxu0
      %v1548 = vpop.f32.mrf.mxu0
      %v1549 = vadd.f32 0.0, %v1548
      %v1550 = vpop.f32.mrf.mxu0
      %1551 = vdwg.mxu0
      %v1552 = vadd.f32 %v1346, %v1514
      %v1553 = vadd.f32 %v1347, %v1517
      %v1554 = vadd.f32 %v1348, %v1522
      %v1555 = vadd.f32 %v1349, %v1525
      %v1556 = vadd.f32 %v1350, %v1530
      %v1557 = vadd.f32 %v1351, %v1533
      %v1558 = vadd.f32 %v1352, %v1538
      %v1559 = vadd.f32 %v1353, %v1541
      %v1560 = vadd.f32 %v1354, %v1546
      %v1561 = vadd.f32 %v1355, %v1549
      %v1562 = vld [vmem:[%s189 + $0x30] sm:$0x7]
      %s1563 = sadd.s32 %s226, 7
      %s1564 = smul.u32 %s1563, 16
      %s1565 = smul.addr %s1564, 4
      %s1566 = scalar_lea.vmem %s1, %s1565
      %v1567 = vld [vmem:[%s1566] sm:$0xf]
      %v1568 = vld [vmem:[%s1566 + $0x4] sm:$0xf]
      %v1569 = vld [vmem:[%s1566 + $0x8] sm:$0xf]
      %v1570 = vld [vmem:[%s1566 + $0xc] sm:$0xf]
      %v1571 = vld [vmem:[%s1566 + $0x10] sm:$0xf]
      %v1572 = vld [vmem:[%s1566 + $0x14] sm:$0xf]
      %v1573 = vld [vmem:[%s1566 + $0x18] sm:$0xf]
      %v1574 = vld [vmem:[%s1566 + $0x1c] sm:$0xf]
      %v1575 = vld [vmem:[%s1566 + $0x20] sm:$0xf]
      %v1576 = vld [vmem:[%s1566 + $0x24] sm:$0xf]
      %v1577 = vld [vmem:[%s1566 + $0x28] sm:$0xf]
      %v1578 = vld [vmem:[%s1566 + $0x2c] sm:$0xf]
      %v1579 = vld [vmem:[%s1566 + $0x30] sm:$0xf]
      %v1580 = vld [vmem:[%s1566 + $0x34] sm:$0xf]
      %v1581 = vld [vmem:[%s1566 + $0x38] sm:$0xf]
      %v1582 = vld [vmem:[%s1566 + $0x3c] sm:$0xf]
      %v1584 = vunpack.c.l.b16 %v1562
      %v1585 = vpack.c.b16 %v1584, %v1584
      %vm1586 = vsmask.f32 5376
      %v1588 = vshrl.u32 %v1409, 16
      %v1590 = vrot.slane %v1588, 2
      %v1591 = vshll.u32 %v1409, 16
      %v1593 = vrot.slane %v1591, 3
      %v1594 = vor.u32 %v1590, %v1593
      %v1596 = vshrl.u32 %v1410, 16
      %v1598 = vrot.slane %v1596, 2
      %v1599 = vshll.u32 %v1410, 16
      %v1601 = vrot.slane %v1599, 3
      %v1602 = vor.u32 %v1598, %v1601
      %v1603 = vsel %vm1586, %v1594, %v1602
      %v1605 = vshrl.u32 %v1411, 16
      %v1607 = vrot.slane %v1605, 2
      %v1608 = vshll.u32 %v1411, 16
      %v1610 = vrot.slane %v1608, 3
      %v1611 = vor.u32 %v1607, %v1610
      %v1612 = vsel %vm1586, %v1602, %v1611
      %v1614 = vshrl.u32 %v1412, 16
      %v1616 = vrot.slane %v1614, 2
      %v1617 = vshll.u32 %v1412, 16
      %v1619 = vrot.slane %v1617, 3
      %v1620 = vor.u32 %v1616, %v1619
      %v1621 = vsel %vm1586, %v1611, %v1620
      %v1623 = vshrl.u32 %v1413, 16
      %v1625 = vrot.slane %v1623, 2
      %v1626 = vshll.u32 %v1413, 16
      %v1628 = vrot.slane %v1626, 3
      %v1629 = vor.u32 %v1625, %v1628
      %v1630 = vsel %vm1586, %v1620, %v1629
      %v1632 = vshrl.u32 %v1585, 16
      %v1634 = vrot.slane %v1632, 2
      %v1635 = vshll.u32 %v1585, 16
      %v1637 = vrot.slane %v1635, 3
      %v1638 = vor.u32 %v1634, %v1637
      %v1639 = vsel %vm1586, %v1629, %v1638
      %v1661 = vunpack.c.l.b16 %v1567
      %v1662 = vunpack.c.l.b16 %v1568
      %v1663 = vunpack.c.l.b16 %v1569
      %v1664 = vunpack.c.l.b16 %v1570
      %v1665 = vunpack.c.l.b16 %v1571
      %v1666 = vunpack.c.l.b16 %v1572
      %v1667 = vunpack.c.l.b16 %v1573
      %v1668 = vunpack.c.l.b16 %v1574
      %v1669 = vunpack.c.l.b16 %v1575
      %v1670 = vunpack.c.l.b16 %v1576
      %v1671 = vunpack.c.l.b16 %v1577
      %v1672 = vunpack.c.l.b16 %v1578
      %v1673 = vunpack.c.l.b16 %v1579
      %v1674 = vunpack.c.l.b16 %v1580
      %v1675 = vunpack.c.l.b16 %v1581
      %v1676 = vunpack.c.l.b16 %v1582
      %v1677 = vpack.c.b16 %v1662, %v1661
      %v1678 = vpack.c.b16 %v1664, %v1663
      %v1679 = vpack.c.b16 %v1666, %v1665
      %v1680 = vpack.c.b16 %v1668, %v1667
      %v1681 = vpack.c.b16 %v1670, %v1669
      %v1682 = vpack.c.b16 %v1672, %v1671
      %v1683 = vpack.c.b16 %v1674, %v1673
      %v1684 = vpack.c.b16 %v1676, %v1675
      %1693 = vmatprep.subr.bf16.mxu0 0
      %1694 = vmatpush1.bf16.msra.mxu0 %v1684
      %1695 = vmatprep.subr.bf16.mxu0 0
      %1696 = vmatpush1.bf16.msra.mxu0 %v1683
      %1697 = vmatprep.subr.bf16.mxu0 0
      %1698 = vmatpush1.bf16.msra.mxu0 %v1682
      %1699 = vmatprep.subr.bf16.mxu0 0
      %1700 = vmatpush1.bf16.msra.mxu0 %v1681
      %1701 = vmatprep.subr.bf16.mxu0 0
      %1702 = vmatpush1.bf16.msra.mxu0 %v1680
      %1703 = vmatprep.subr.bf16.mxu0 0
      %1704 = vmatpush1.bf16.msra.mxu0 %v1679
      %1705 = vmatprep.subr.bf16.mxu0 0
      %1706 = vmatpush1.bf16.msra.mxu0 %v1678
      %1707 = vmatprep.subr.bf16.mxu0 0
      %1708 = vmatpush1.bf16.msra.mxu0 %v1677
      %1709 = vmatprep.subr.bf16.mxu0 0
      %1710 = vmatpush2.bf16.msra.mxu0 0
      %1711 = vmatprep.subr.bf16.mxu0 0
      %1712 = vmatpush2.bf16.msra.mxu0 0
      %1713 = vmatprep.subr.bf16.mxu0 0
      %1714 = vmatpush2.bf16.msra.mxu0 0
      %1715 = vmatprep.subr.bf16.mxu0 0
      %1716 = vmatpush2.bf16.msra.mxu0 0
      %1717 = vmatprep.subr.bf16.mxu0 0
      %1718 = vmatpush2.bf16.msra.mxu0 0
      %1719 = vmatprep.subr.bf16.mxu0 0
      %1720 = vmatpush2.bf16.msra.mxu0 0
      %1721 = vmatprep.subr.bf16.mxu0 0
      %1722 = vmatpush2.bf16.msra.mxu0 0
      %1723 = vmatprep.subr.bf16.mxu0 0
      %1724 = vmatpush2.bf16.msra.mxu0 0
      %1725 = vmatprep.mubr.bf16.mxu0 0
      %1726 = vmatmul.mubr.bf16.gmra.mxu0 %v1603
      %v1727 = vpop.f32.mrf.mxu0
      %v1728 = vadd.f32 0.0, %v1727
      %v1729 = vpop.f32.mrf.mxu0
      %v1730 = vpop.f32.mrf.mxu0
      %v1731 = vadd.f32 0.0, %v1730
      %v1732 = vpop.f32.mrf.mxu0
      %1733 = vmatprep.mubr.bf16.mxu0 0
      %1734 = vmatmul.mubr.bf16.gmra.mxu0 %v1612
      %v1735 = vpop.f32.mrf.mxu0
      %v1736 = vadd.f32 0.0, %v1735
      %v1737 = vpop.f32.mrf.mxu0
      %v1738 = vpop.f32.mrf.mxu0
      %v1739 = vadd.f32 0.0, %v1738
      %v1740 = vpop.f32.mrf.mxu0
      %1741 = vmatprep.mubr.bf16.mxu0 0
      %1742 = vmatmul.mubr.bf16.gmra.mxu0 %v1621
      %v1743 = vpop.f32.mrf.mxu0
      %v1744 = vadd.f32 0.0, %v1743
      %v1745 = vpop.f32.mrf.mxu0
      %v1746 = vpop.f32.mrf.mxu0
      %v1747 = vadd.f32 0.0, %v1746
      %v1748 = vpop.f32.mrf.mxu0
      %1749 = vmatprep.mubr.bf16.mxu0 0
      %1750 = vmatmul.mubr.bf16.gmra.mxu0 %v1630
      %v1751 = vpop.f32.mrf.mxu0
      %v1752 = vadd.f32 0.0, %v1751
      %v1753 = vpop.f32.mrf.mxu0
      %v1754 = vpop.f32.mrf.mxu0
      %v1755 = vadd.f32 0.0, %v1754
      %v1756 = vpop.f32.mrf.mxu0
      %1757 = vmatprep.mubr.bf16.mxu0 0
      %1758 = vmatmul.mubr.bf16.gmra.mxu0 %v1639
      %v1759 = vpop.f32.mrf.mxu0
      %v1760 = vadd.f32 0.0, %v1759
      %v1761 = vpop.f32.mrf.mxu0
      %v1762 = vpop.f32.mrf.mxu0
      %v1763 = vadd.f32 0.0, %v1762
      %v1764 = vpop.f32.mrf.mxu0
      %1765 = vdwg.mxu0
      %v1766 = vadd.f32 %v1552, %v1728
      %v1767 = vadd.f32 %v1553, %v1731
      %v1768 = vadd.f32 %v1554, %v1736
      %v1769 = vadd.f32 %v1555, %v1739
      %v1770 = vadd.f32 %v1556, %v1744
      %v1771 = vadd.f32 %v1557, %v1747
      %v1772 = vadd.f32 %v1558, %v1752
      %v1773 = vadd.f32 %v1559, %v1755
      %v1774 = vadd.f32 %v1560, %v1760
      %v1775 = vadd.f32 %v1561, %v1763
      %v1776 = vld [vmem:[%s189 + $0x8] sm:$0x8]
      %s1777 = sadd.s32 %s226, 8
      %s1778 = smul.u32 %s1777, 16
      %s1779 = smul.addr %s1778, 4
      %s1780 = scalar_lea.vmem %s1, %s1779
      %v1781 = vld [vmem:[%s1780] sm:$0xf]
      %v1782 = vld [vmem:[%s1780 + $0x4] sm:$0xf]
      %v1783 = vld [vmem:[%s1780 + $0x8] sm:$0xf]
      %v1784 = vld [vmem:[%s1780 + $0xc] sm:$0xf]
      %v1785 = vld [vmem:[%s1780 + $0x10] sm:$0xf]
      %v1786 = vld [vmem:[%s1780 + $0x14] sm:$0xf]
      %v1787 = vld [vmem:[%s1780 + $0x18] sm:$0xf]
      %v1788 = vld [vmem:[%s1780 + $0x1c] sm:$0xf]
      %v1789 = vld [vmem:[%s1780 + $0x20] sm:$0xf]
      %v1790 = vld [vmem:[%s1780 + $0x24] sm:$0xf]
      %v1791 = vld [vmem:[%s1780 + $0x28] sm:$0xf]
      %v1792 = vld [vmem:[%s1780 + $0x2c] sm:$0xf]
      %v1793 = vld [vmem:[%s1780 + $0x30] sm:$0xf]
      %v1794 = vld [vmem:[%s1780 + $0x34] sm:$0xf]
      %v1795 = vld [vmem:[%s1780 + $0x38] sm:$0xf]
      %v1796 = vld [vmem:[%s1780 + $0x3c] sm:$0xf]
      %v1798 = vunpack.c.l.b16 %v1776
      %v1799 = vpack.c.b16 %v1399, %v1798
      %vm1800 = vcmask 1044480
      %v1801 = vrot.slane %v1799, 3
      %v1802 = vrot.slane %v1410, 3
      %v1803 = vsel %vm1800, %v1801, %v1802
      %v1804 = vrot.slane %v1411, 3
      %v1805 = vsel %vm1800, %v1802, %v1804
      %v1806 = vrot.slane %v1412, 3
      %v1807 = vsel %vm1800, %v1804, %v1806
      %v1808 = vrot.slane %v1413, 3
      %v1809 = vsel %vm1800, %v1806, %v1808
      %v1810 = vrot.slane %v1585, 3
      %v1811 = vsel %vm1800, %v1808, %v1810
      %v1833 = vunpack.c.l.b16 %v1781
      %v1834 = vunpack.c.l.b16 %v1782
      %v1835 = vunpack.c.l.b16 %v1783
      %v1836 = vunpack.c.l.b16 %v1784
      %v1837 = vunpack.c.l.b16 %v1785
      %v1838 = vunpack.c.l.b16 %v1786
      %v1839 = vunpack.c.l.b16 %v1787
      %v1840 = vunpack.c.l.b16 %v1788
      %v1841 = vunpack.c.l.b16 %v1789
      %v1842 = vunpack.c.l.b16 %v1790
      %v1843 = vunpack.c.l.b16 %v1791
      %v1844 = vunpack.c.l.b16 %v1792
      %v1845 = vunpack.c.l.b16 %v1793
      %v1846 = vunpack.c.l.b16 %v1794
      %v1847 = vunpack.c.l.b16 %v1795
      %v1848 = vunpack.c.l.b16 %v1796
      %v1849 = vpack.c.b16 %v1834, %v1833
      %v1850 = vpack.c.b16 %v1836, %v1835
      %v1851 = vpack.c.b16 %v1838, %v1837
      %v1852 = vpack.c.b16 %v1840, %v1839
      %v1853 = vpack.c.b16 %v1842, %v1841
      %v1854 = vpack.c.b16 %v1844, %v1843
      %v1855 = vpack.c.b16 %v1846, %v1845
      %v1856 = vpack.c.b16 %v1848, %v1847
      %1865 = vmatprep.subr.bf16.mxu0 0
      %1866 = vmatpush1.bf16.msra.mxu0 %v1856
      %1867 = vmatprep.subr.bf16.mxu0 0
      %1868 = vmatpush1.bf16.msra.mxu0 %v1855
      %1869 = vmatprep.subr.bf16.mxu0 0
      %1870 = vmatpush1.bf16.msra.mxu0 %v1854
      %1871 = vmatprep.subr.bf16.mxu0 0
      %1872 = vmatpush1.bf16.msra.mxu0 %v1853
      %1873 = vmatprep.subr.bf16.mxu0 0
      %1874 = vmatpush1.bf16.msra.mxu0 %v1852
      %1875 = vmatprep.subr.bf16.mxu0 0
      %1876 = vmatpush1.bf16.msra.mxu0 %v1851
      %1877 = vmatprep.subr.bf16.mxu0 0
      %1878 = vmatpush1.bf16.msra.mxu0 %v1850
      %1879 = vmatprep.subr.bf16.mxu0 0
      %1880 = vmatpush1.bf16.msra.mxu0 %v1849
      %1881 = vmatprep.subr.bf16.mxu0 0
      %1882 = vmatpush2.bf16.msra.mxu0 0
      %1883 = vmatprep.subr.bf16.mxu0 0
      %1884 = vmatpush2.bf16.msra.mxu0 0
      %1885 = vmatprep.subr.bf16.mxu0 0
      %1886 = vmatpush2.bf16.msra.mxu0 0
      %1887 = vmatprep.subr.bf16.mxu0 0
      %1888 = vmatpush2.bf16.msra.mxu0 0
      %1889 = vmatprep.subr.bf16.mxu0 0
      %1890 = vmatpush2.bf16.msra.mxu0 0
      %1891 = vmatprep.subr.bf16.mxu0 0
      %1892 = vmatpush2.bf16.msra.mxu0 0
      %1893 = vmatprep.subr.bf16.mxu0 0
      %1894 = vmatpush2.bf16.msra.mxu0 0
      %1895 = vmatprep.subr.bf16.mxu0 0
      %1896 = vmatpush2.bf16.msra.mxu0 0
      %1897 = vmatprep.mubr.bf16.mxu0 0
      %1898 = vmatmul.mubr.bf16.gmra.mxu0 %v1803
      %v1899 = vpop.f32.mrf.mxu0
      %v1900 = vadd.f32 0.0, %v1899
      %v1901 = vpop.f32.mrf.mxu0
      %v1902 = vpop.f32.mrf.mxu0
      %v1903 = vadd.f32 0.0, %v1902
      %v1904 = vpop.f32.mrf.mxu0
      %1905 = vmatprep.mubr.bf16.mxu0 0
      %1906 = vmatmul.mubr.bf16.gmra.mxu0 %v1805
      %v1907 = vpop.f32.mrf.mxu0
      %v1908 = vadd.f32 0.0, %v1907
      %v1909 = vpop.f32.mrf.mxu0
      %v1910 = vpop.f32.mrf.mxu0
      %v1911 = vadd.f32 0.0, %v1910
      %v1912 = vpop.f32.mrf.mxu0
      %1913 = vmatprep.mubr.bf16.mxu0 0
      %1914 = vmatmul.mubr.bf16.gmra.mxu0 %v1807
      %v1915 = vpop.f32.mrf.mxu0
      %v1916 = vadd.f32 0.0, %v1915
      %v1917 = vpop.f32.mrf.mxu0
      %v1918 = vpop.f32.mrf.mxu0
      %v1919 = vadd.f32 0.0, %v1918
      %v1920 = vpop.f32.mrf.mxu0
      %1921 = vmatprep.mubr.bf16.mxu0 0
      %1922 = vmatmul.mubr.bf16.gmra.mxu0 %v1809
      %v1923 = vpop.f32.mrf.mxu0
      %v1924 = vadd.f32 0.0, %v1923
      %v1925 = vpop.f32.mrf.mxu0
      %v1926 = vpop.f32.mrf.mxu0
      %v1927 = vadd.f32 0.0, %v1926
      %v1928 = vpop.f32.mrf.mxu0
      %1929 = vmatprep.mubr.bf16.mxu0 0
      %1930 = vmatmul.mubr.bf16.gmra.mxu0 %v1811
      %v1931 = vpop.f32.mrf.mxu0
      %v1932 = vadd.f32 0.0, %v1931
      %v1933 = vpop.f32.mrf.mxu0
      %v1934 = vpop.f32.mrf.mxu0
      %v1935 = vadd.f32 0.0, %v1934
      %v1936 = vpop.f32.mrf.mxu0
      %1937 = vdwg.mxu0
      %v1938 = vadd.f32 %v1766, %v1900
      %v1939 = vadd.f32 %v1767, %v1903
      %v1940 = vadd.f32 %v1768, %v1908
      %v1941 = vadd.f32 %v1769, %v1911
      %v1942 = vadd.f32 %v1770, %v1916
      %v1943 = vadd.f32 %v1771, %v1919
      %v1944 = vadd.f32 %v1772, %v1924
      %v1945 = vadd.f32 %v1773, %v1927
      %v1946 = vadd.f32 %v1774, %v1932
      %v1947 = vadd.f32 %v1775, %v1935
      %v1948 = vld [vmem:[#allocation2] sm:$0xff]
      %v1949 = vld [vmem:[#allocation2 + $0x8] sm:$0xff]
      %v1950 = vld [vmem:[#allocation2 + $0x10] sm:$0xff]
      %v1951 = vld [vmem:[#allocation2 + $0x18] sm:$0xff]
      %v1952 = vld [vmem:[#allocation2 + $0x20] sm:$0xff]
      %v1953 = vld [vmem:[#allocation2 + $0x28] sm:$0xff]
      %v1954 = vld [vmem:[#allocation2 + $0x30] sm:$0xff]
      %v1955 = vld [vmem:[#allocation2 + $0x38] sm:$0xff]
      %v1956 = vld [vmem:[#allocation2 + $0x40] sm:$0xff]
      %v1957 = vld [vmem:[#allocation2 + $0x48] sm:$0xff]
      %v1958 = vadd.f32 %v1948, %v1938
      %v1959 = vadd.f32 %v1949, %v1939
      %v1960 = vadd.f32 %v1950, %v1940
      %v1961 = vadd.f32 %v1951, %v1941
      %v1962 = vadd.f32 %v1952, %v1942
      %v1963 = vadd.f32 %v1953, %v1943
      %v1964 = vadd.f32 %v1954, %v1944
      %v1965 = vadd.f32 %v1955, %v1945
      %v1966 = vadd.f32 %v1956, %v1946
      %v1967 = vadd.f32 %v1957, %v1947
      %1968 = vst [vmem:[#allocation2] sm:$0xff] %v1958
      %1969 = vst [vmem:[#allocation2 + $0x8] sm:$0xff] %v1959
      %1970 = vst [vmem:[#allocation2 + $0x10] sm:$0xff] %v1960
      %1971 = vst [vmem:[#allocation2 + $0x18] sm:$0xff] %v1961
      %1972 = vst [vmem:[#allocation2 + $0x20] sm:$0xff] %v1962
      %1973 = vst [vmem:[#allocation2 + $0x28] sm:$0xff] %v1963
      %1974 = vst [vmem:[#allocation2 + $0x30] sm:$0xff] %v1964
      %1975 = vst [vmem:[#allocation2 + $0x38] sm:$0xff] %v1965
      %1976 = vst [vmem:[#allocation2 + $0x40] sm:$0xff] %v1966
      %1977 = vst [vmem:[#allocation2 + $0x48] sm:$0xff] %v1967
      %p1978 = scmp.eq.s32.totalorder %s20, 2
      // Predicated region
      $region33: #{_lambda_.15} parent=27 // pred_check
        %p1979 = pneg %p1978
      $region34: #{_lambda_.15} parent=27 // pred_check_branch
        %1981 = sbr.rel (%p1979) target = $region36
      $region35: #{_lambda_.15} parent=27 // pred_region
        %v1982 = vld [vmem:[#allocation2] sm:$0xff]
        %v1983 = vld [vmem:[#allocation2 + $0x8] sm:$0xff]
        %v1984 = vld [vmem:[#allocation2 + $0x10] sm:$0xff]
        %v1985 = vld [vmem:[#allocation2 + $0x18] sm:$0xff]
        %v1986 = vld [vmem:[#allocation2 + $0x20] sm:$0xff]
        %v1987 = vld [vmem:[#allocation2 + $0x28] sm:$0xff]
        %v1988 = vld [vmem:[#allocation2 + $0x30] sm:$0xff]
        %v1989 = vld [vmem:[#allocation2 + $0x38] sm:$0xff]
        %v1990 = vld [vmem:[#allocation2 + $0x40] sm:$0xff]
        %v1991 = vld [vmem:[#allocation2 + $0x48] sm:$0xff]
        %1992 = vst [vmem:[%s200] sm:$0xff] %v1982
        %1993 = vst [vmem:[%s200 + $0x8] sm:$0xff] %v1983
        %1994 = vst [vmem:[%s200 + $0x10] sm:$0xff] %v1984
        %1995 = vst [vmem:[%s200 + $0x18] sm:$0xff] %v1985
        %1996 = vst [vmem:[%s200 + $0x20] sm:$0xff] %v1986
        %1997 = vst [vmem:[%s200 + $0x28] sm:$0xff] %v1987
        %1998 = vst [vmem:[%s200 + $0x30] sm:$0xff] %v1988
        %1999 = vst [vmem:[%s200 + $0x38] sm:$0xff] %v1989
        %2000 = vst [vmem:[%s200 + $0x40] sm:$0xff] %v1990
        %2001 = vst [vmem:[%s200 + $0x48] sm:$0xff] %v1991
      $region36: #{_lambda_.15} parent=27 // pred_fallthru
        _
      %p2002 = scmp.lt.s32.totalorder %s18, 1
      %s2003 = scalar_select %p2002, %s18, 1
      %p2004 = scmp.lt.s32.totalorder %s19, 1
      %s2005 = scalar_select %p2004, %s19, 1
      %s2006 = smul.addr %s2005, 10
      %s2007 = smul.addr %s2003, 20
      %s2008 = sadd.s32 %s2006, %s2007
      %s2009 = smul.addr %s2008, 8
      %s2010 = scalar_lea.vmem %s2, %s2009
      // Predicated region
      $region37: #{_lambda_.15} parent=27 // pred_check
        %p2011 = pneg %p105
      $region38: #{_lambda_.15} parent=27 // pred_check_branch
        %2013 = sbr.rel (%p2011) target = $region40
      $region39: #{_lambda_.15} parent=27 // pred_region
        _
      $region40: #{_lambda_.15} parent=27 // pred_fallthru
        _
    $region28: #{_lambda_.15} parent=5 // pred_fallthru
      _
    %p2014 = scmp.le.s32.totalorder 2, %s8
    // Predicated region
    $region41: #{_lambda_.15} parent=5 // pred_check
      %p2015 = pneg %p2014
    $region42: #{_lambda_.15} parent=5 // pred_check_branch
      %2017 = sbr.rel (%p2015) target = $region44
    $region43: #{_lambda_.15} parent=5 // pred_region
      %s2018 = ssub.s32 %s8, 2
      // Predicated region
      $region45: #{_lambda_.15} parent=43 // pred_check
        %p2019 = pneg %p111
      $region46: #{_lambda_.15} parent=43 // pred_check_branch
        %2021 = sbr.rel (%p2019) target = $region48
      $region47: #{_lambda_.15} parent=43 // pred_region
        %p2022 = scmp.lt.s32.totalorder %s21, 1
        %s2023 = scalar_select %p2022, %s21, 1
        %p2024 = scmp.lt.s32.totalorder %s22, 1
        %s2025 = scalar_select %p2024, %s22, 1
        %s2026 = smul.addr %s2025, 10
        %s2027 = smul.addr %s2023, 20
        %s2028 = sadd.s32 %s2026, %s2027
        %s2029 = smul.addr %s2028, 8
        %s2030 = scalar_lea.vmem %s2, %s2029
      $region48: #{_lambda_.15} parent=43 // pred_fallthru
        _
    $region44: #{_lambda_.15} parent=5 // pred_fallthru
      _
  $region6: #{_lambda_.15} parent=0 // loop_footer
    %s12 = sadd.s32 1, %s8
  $region7: #{_lambda_.15} parent=0 // loop_footer_branch
    %7 = sbr.rel target = $region3
  $region8: #{_lambda_.15} parent=0 // loop_exit
    _

</llo_original>
